<compile_context>
chip_gen: v7x
topology: tpu7x:2x2x1
jax: 0.10.0
libtpu: 0.0.40
codegen_flags: <defaults>
</compile_context>

<pallas_src>
import functools

import jax
import jax.numpy as jnp
from jax import lax
from jax.experimental import pallas as pl
from jax.experimental.pallas import tpu as pltpu

BN_EPS = 1e-5
VMEM_LIMIT = 32 * 1024 * 1024  # explicit, portable across v5e/v6e/v7x

# Conv stack config: (C_in, C_out, k, stride, pad)  -- static Python constants.
CONV_CFG = [
    (1, 32, 5, 2, 2),
    (32, 64, 5, 2, 2),
    (64, 64, 5, 2, 2),
    (64, 64, 3, 1, 0),
]
FC_IN_H, FC_IN_W, FC_IN_C = 6, 6, 64          # conv output spatial/channels
FC_IN = FC_IN_H * FC_IN_W * FC_IN_C           # 2304
FC_HID = 512
FC_OUT = 64


def _round_up(x, m):
    return (x + m - 1) // m * m


# ----------------------------------------------------------------------------
# Pallas kernel 1: fused matmul  out = act((x @ w) + shift)
#   x: (TM, K) bf16   w: (K, Np) bf16 (BN scale pre-folded)   shift: (1, Np) f32
# ----------------------------------------------------------------------------
def _matmul_bias_act_kernel(x_ref, w_ref, b_ref, o_ref, *, activation):
    acc = jnp.dot(x_ref[...], w_ref[...], preferred_element_type=jnp.float32)
    out = acc + b_ref[...]
    if activation == "relu":
        out = jnp.maximum(out, 0.0)
    elif activation == "sigmoid":
        out = pl.reciprocal(1.0 + jnp.exp(-out), approx=True)
    o_ref[...] = out.astype(o_ref.dtype)


def fused_matmul(x, w_pad, shift_pad, n_out, activation, out_dtype=jnp.bfloat16):
    """act(x @ w_pad + shift_pad)[:, :n_out]; w/shift already padded+cast at prep."""
    M, K = x.shape
    Kw, Np = w_pad.shape
    assert K == Kw, (K, Kw)

    # ~2 even grid steps when there is enough M to split (megacore on v7x);
    # a single step otherwise.  No K padding: blocks span the full K dim.
    if M >= 128:
        TM = min(1024, _round_up(-(-M // 2), 8))
    else:
        TM = _round_up(M, 8)
    Mp = _round_up(M, TM)

    xb = x.astype(jnp.bfloat16)
    if Mp > M:
        xb = jnp.pad(xb, ((0, Mp - M), (0, 0)))

    kernel = functools.partial(_matmul_bias_act_kernel, activation=activation)
    out = pl.pallas_call(
        kernel,
        out_shape=jax.ShapeDtypeStruct((Mp, Np), out_dtype),
        grid=(Mp // TM,),
        in_specs=[
            pl.BlockSpec((TM, K), lambda i: (i, 0)),    # streamed patch tile
            pl.BlockSpec((K, Np), lambda i: (0, 0)),    # resident weight
            pl.BlockSpec((1, Np), lambda i: (0, 0)),    # resident shift
        ],
        out_specs=pl.BlockSpec((TM, Np), lambda i: (i, 0)),
        compiler_params=pltpu.CompilerParams(
            dimension_semantics=("parallel",),
            vmem_limit_bytes=VMEM_LIMIT,
        ),
    )(xb, w_pad, shift_pad)

    if Mp > M:
        out = out[:M]
    if Np > n_out:
        out = out[:, :n_out]
    return out


# ----------------------------------------------------------------------------
# Pallas kernel 2: fused FC head  sigmoid(relu(x @ W1 + b1) @ W2 + b2)
#   Grid streams 256-column tiles of W1 (reduction axis for the final output).
# ----------------------------------------------------------------------------
def _fc_head_kernel(x_ref, w1_ref, b1_ref, w2_ref, b2_ref, o_ref, acc_ref):
    j = pl.program_id(0)

    @pl.when(j == 0)
    def _():
        acc_ref[...] = jnp.zeros_like(acc_ref)

    h = jnp.dot(x_ref[...], w1_ref[...], preferred_element_type=jnp.float32)
    h = jnp.maximum(h + b1_ref[...], 0.0)
    acc_ref[...] += jnp.dot(h.astype(w2_ref.dtype), w2_ref[...],
                            preferred_element_type=jnp.float32)

    @pl.when(j == pl.num_programs(0) - 1)
    def _():
        z = acc_ref[...] + b2_ref[...]
        o_ref[...] = pl.reciprocal(1.0 + jnp.exp(-z), approx=True).astype(o_ref.dtype)


def fc_head(x, w1, b1, w2, b2, n_out, *, tn=256):
    """x: (B, K1) bf16-castable; w1: (K1, H) bf16; w2: (H, N2p) bf16 (prepped)."""
    B, K1 = x.shape
    K1w, H = w1.shape
    Hw, N2p = w2.shape
    assert K1 == K1w and H == Hw and H % tn == 0

    Bp = _round_up(B, 8)
    xb = x.astype(jnp.bfloat16)
    if Bp > B:
        xb = jnp.pad(xb, ((0, Bp - B), (0, 0)))

    out = pl.pallas_call(
        _fc_head_kernel,
        out_shape=jax.ShapeDtypeStruct((Bp, N2p), jnp.float32),
        grid=(H // tn,),
        in_specs=[
            pl.BlockSpec((Bp, K1), lambda j: (0, 0)),   # resident activations
            pl.BlockSpec((K1, tn), lambda j: (0, j)),   # streamed W1 column tile
            pl.BlockSpec((1, tn), lambda j: (0, j)),
            pl.BlockSpec((tn, N2p), lambda j: (j, 0)),  # streamed W2 row tile
            pl.BlockSpec((1, N2p), lambda j: (0, 0)),
        ],
        out_specs=pl.BlockSpec((Bp, N2p), lambda j: (0, 0)),
        scratch_shapes=[pltpu.VMEM((Bp, N2p), jnp.float32)],
        compiler_params=pltpu.CompilerParams(
            dimension_semantics=("arbitrary",),
            vmem_limit_bytes=VMEM_LIMIT,
        ),
    )(xb, w1, b1, w2, b2)
    return out[:B, :n_out]


# ----------------------------------------------------------------------------
# Plain-JAX glue: NHWC im2col (feature order = (kh, kw, C))
# ----------------------------------------------------------------------------
def im2col_nhwc(x, kh, kw, stride, pad):
    B, H, W, C = x.shape
    if pad:
        x = jnp.pad(x, ((0, 0), (pad, pad), (pad, pad), (0, 0)))
    Hp, Wp = H + 2 * pad, W + 2 * pad
    Ho = (Hp - kh) // stride + 1
    Wo = (Wp - kw) // stride + 1
    cols = []
    for i in range(kh):
        for j in range(kw):
            cols.append(x[:, i:i + stride * Ho:stride, j:j + stride * Wo:stride, :])
    p = jnp.stack(cols, axis=3)                       # (B, Ho, Wo, kh*kw, C)
    return p.reshape(B * Ho * Wo, kh * kw * C), Ho, Wo


# ----------------------------------------------------------------------------
# One-time parameter prep (hoisted out of the per-call path).
# Only jnp arrays go into the prepared pytree (static config stays in CONV_CFG).
# ----------------------------------------------------------------------------
def prepare_params(params):
    prep = {"conv": []}
    for i, (cin, cout, k, _, _) in enumerate(CONV_CFG):
        p = params["conv"][i]
        inv_std = 1.0 / jnp.sqrt(p["var"] + BN_EPS)
        scale = p["gamma"] * inv_std                               # (Cout,)
        shift = p["beta"] + (p["b"] - p["mean"]) * scale           # (Cout,)
        # (Cout, Cin, kh, kw) -> (kh, kw, Cin, Cout) -> (K, Cout); fold BN in f32.
        w_mat = p["w"].transpose(2, 3, 1, 0).reshape(k * k * cin, cout)
        w_mat = w_mat * scale[None, :]
        Np = _round_up(cout, 128)                                  # lane-dense N
        w_mat = jnp.pad(w_mat, ((0, 0), (0, Np - cout))).astype(jnp.bfloat16)
        shift = jnp.pad(shift.reshape(1, cout).astype(jnp.float32),
                        ((0, 0), (0, Np - cout)))
        prep["conv"].append({"w": w_mat, "shift": shift})

    # FC1: permute K axis from PyTorch's (C,H,W) flatten order to our NHWC
    # (H,W,C) flatten order, so no runtime transpose is needed before the FC.
    w1 = params["fc1"]["w"].reshape(FC_HID, FC_IN_C, FC_IN_H, FC_IN_W)
    w1 = w1.transpose(0, 2, 3, 1).reshape(FC_HID, FC_IN)           # (H, W, C) order
    prep["fc1_w"] = w1.T.astype(jnp.bfloat16)                      # (2304, 512)
    prep["fc1_b"] = params["fc1"]["b"].reshape(1, FC_HID).astype(jnp.float32)

    N2p = _round_up(FC_OUT, 128)
    prep["fc2_w"] = jnp.pad(params["fc2"]["w"].T,
                            ((0, 0), (0, N2p - FC_OUT))).astype(jnp.bfloat16)
    prep["fc2_b"] = jnp.pad(params["fc2"]["b"].reshape(1, FC_OUT).astype(jnp.float32),
                            ((0, 0), (0, N2p - FC_OUT)))
    return prep


# ----------------------------------------------------------------------------
# TempEmbed forward (activations only; all weight prep done in prepare_params)
# ----------------------------------------------------------------------------
def temp_embed_forward(x_nchw, prep):
    B = x_nchw.shape[0]
    out = x_nchw.transpose(0, 2, 3, 1)                 # NCHW -> NHWC once
    for i, (_, cout, k, stride, pad) in enumerate(CONV_CFG):
        patches, Ho, Wo = im2col_nhwc(out, k, k, stride, pad)
        pc = prep["conv"][i]
        y = fused_matmul(patches, pc["w"], pc["shift"], cout, "relu",
                         out_dtype=jnp.bfloat16)
        out = y.reshape(B, Ho, Wo, cout)               # stays NHWC
    flat = out.reshape(B, FC_IN)                       # NHWC flatten; FC1 K-perm matches
    return fc_head(flat, prep["fc1_w"], prep["fc1_b"],
                   prep["fc2_w"], prep["fc2_b"], FC_OUT)


# ----------------------------------------------------------------------------
# Deterministic parameter init (synthetic; mirrors the module's shapes)
# ----------------------------------------------------------------------------
def init_params(key):
    params = {"conv": []}
    for (cin, cout, k, _, _) in CONV_CFG:
        key, kw_, kb_, kg_, kbe_, km_, kv_ = jax.random.split(key, 7)
        params["conv"].append({
            "w": 0.05 * jax.random.normal(kw_, (cout, cin, k, k), jnp.float32),
            "b": 0.05 * jax.random.normal(kb_, (cout,), jnp.float32),
            "gamma": 1.0 + 0.1 * jax.random.normal(kg_, (cout,), jnp.float32),
            "beta": 0.1 * jax.random.normal(kbe_, (cout,), jnp.float32),
            "mean": 0.1 * jax.random.normal(km_, (cout,), jnp.float32),
            "var": 0.5 + jnp.abs(jax.random.normal(kv_, (cout,), jnp.float32)),
        })
    key, k1w, k1b, k2w, k2b = jax.random.split(key, 5)
    params["fc1"] = {
        "w": 0.02 * jax.random.normal(k1w, (FC_HID, FC_IN), jnp.float32),
        "b": 0.02 * jax.random.normal(k1b, (FC_HID,), jnp.float32),
    }
    params["fc2"] = {
        "w": 0.02 * jax.random.normal(k2w, (FC_OUT, FC_HID), jnp.float32),
        "b": 0.02 * jax.random.normal(k2b, (FC_OUT,), jnp.float32),
    }
    return params


# ----------------------------------------------------------------------------
# Pure-JAX f32 reference (semantics check; kernels use bf16 MXU operands)
# ----------------------------------------------------------------------------
def reference_forward(x, params):
    out = x
    for i, (_, _, _, stride, pad) in enumerate(CONV_CFG):
        p = params["conv"][i]
        out = lax.conv_general_dilated(
            out, p["w"], (stride, stride), ((pad, pad), (pad, pad)),
            dimension_numbers=("NCHW", "OIHW", "NCHW"))
        out = out + p["b"].reshape(1, -1, 1, 1)
        out = (out - p["mean"].reshape(1, -1, 1, 1)) * (
            p["gamma"].reshape(1, -1, 1, 1)
            / jnp.sqrt(p["var"].reshape(1, -1, 1, 1) + BN_EPS)
        ) + p["beta"].reshape(1, -1, 1, 1)
        out = jnp.maximum(out, 0.0)
    flat = out.reshape(x.shape[0], FC_IN)
    h = jnp.maximum(flat @ params["fc1"]["w"].T + params["fc1"]["b"], 0.0)
    return jax.nn.sigmoid(h @ params["fc2"]["w"].T + params["fc2"]["b"])


if __name__ == "__main__":
    key = jax.random.PRNGKey(0)
    key, kx, kp = jax.random.split(key, 3)
    # Input must be (B, 1, 64, 64) so the conv stack flattens to 2304 features.
    x = jax.random.normal(kx, (2, 1, 64, 64), jnp.float32)
    params = init_params(kp)
    prep = jax.block_until_ready(prepare_params(params))   # one-time weight prep

    fwd = jax.jit(temp_embed_forward)
    out = jax.block_until_ready(fwd(x, prep))

    ref = jax.block_until_ready(reference_forward(x, params))
    assert out.shape == (2, FC_OUT), out.shape
    # bf16 MXU operands + approx-reciprocal sigmoid => relaxed tolerance vs f32 ref.
    max_err = float(jnp.max(jnp.abs(out - ref)))
    assert max_err < 4e-2, max_err
    print("KERNEL_OK")
</pallas_src>

<mosaic_0001>
module attributes {stable_mosaic.version = 11 : i64} {
  func.func @_matmul_bias_act_kernel(%arg0: i32, %arg1: memref<1024x25xbf16, #tpu.memory_space<vmem>>, %arg2: memref<25x128xbf16, #tpu.memory_space<vmem>>, %arg3: memref<1x128xf32, #tpu.memory_space<vmem>>, %arg4: memref<1024x128xbf16, #tpu.memory_space<vmem>>) attributes {dimension_semantics = [#tpu.dimension_semantics<parallel>], iteration_bounds = array<i64: 2>, scalar_prefetch = 0 : i64, scratch_operands = 0 : i64, tpu.core_type = #tpu.core_type<tc>, window_params = [{transform_indices = @transform_0, window_bounds = array<i64: 1024, 25>}, {pipeline_mode = #tpu.pipeline_mode<synchronous>, transform_indices = @transform_1, window_bounds = array<i64: 25, 128>}, {pipeline_mode = #tpu.pipeline_mode<synchronous>, transform_indices = @transform_2, window_bounds = array<i64: 1, 128>}, {transform_indices = @transform_3, window_bounds = array<i64: 1024, 128>}]} {
    %c0 = arith.constant 0 : index
    %c0_0 = arith.constant 0 : index
    %0 = vector.load %arg1[%c0, %c0_0] : memref<1024x25xbf16, #tpu.memory_space<vmem>>, vector<1024x25xbf16>
    %c0_1 = arith.constant 0 : index
    %c0_2 = arith.constant 0 : index
    %1 = vector.load %arg2[%c0_1, %c0_2] : memref<25x128xbf16, #tpu.memory_space<vmem>>, vector<25x128xbf16>
    %cst = arith.constant dense<0.000000e+00> : vector<1024x128xf32>
    %2 = tpu.matmul %0, %1, %cst {dimension_numbers = #tpu.dot_dimension_numbers<[1], [0], [0], [1], [0, 0, 1, 1], [], []>} : vector<1024x25xbf16>, vector<25x128xbf16>, vector<1024x128xf32> -> vector<1024x128xf32>
    %c0_3 = arith.constant 0 : index
    %c0_4 = arith.constant 0 : index
    %3 = vector.load %arg3[%c0_3, %c0_4] : memref<1x128xf32, #tpu.memory_space<vmem>>, vector<1x128xf32>
    %4 = vector.broadcast %3 : vector<1x128xf32> to vector<1024x128xf32>
    %5 = arith.addf %2, %4 : vector<1024x128xf32>
    %cst_5 = arith.constant 0.000000e+00 : f32
    %6 = vector.broadcast %cst_5 : f32 to vector<1024x128xf32>
    %7 = arith.maximumf %5, %6 : vector<1024x128xf32>
    %8 = arith.truncf %7 : vector<1024x128xf32> to vector<1024x128xbf16>
    %c0_6 = arith.constant 0 : index
    %c0_7 = arith.constant 0 : index
    %9 = vector.load %arg4[%c0_6, %c0_7] : memref<1024x128xbf16, #tpu.memory_space<vmem>>, vector<1024x128xbf16>
    tpu.vector_store %arg4[%c0_6, %c0_7], %8 {strides = array<i32>} : memref<1024x128xbf16, #tpu.memory_space<vmem>>, vector<1024x128xbf16>,
    return
  }
  func.func @transform_0(%arg0: i32) -> (i32, i32) {
    %c0_i32 = arith.constant 0 : i32
    %c0_i32_0 = arith.constant 0 : i32
    return %arg0, %c0_i32 : i32, i32
  }
  func.func @transform_1(%arg0: i32) -> (i32, i32) {
    %c0_i32 = arith.constant 0 : i32
    %c0_i32_0 = arith.constant 0 : i32
    %c0_i32_1 = arith.constant 0 : i32
    return %c0_i32, %c0_i32_0 : i32, i32
  }
  func.func @transform_2(%arg0: i32) -> (i32, i32) {
    %c0_i32 = arith.constant 0 : i32
    %c0_i32_0 = arith.constant 0 : i32
    %c0_i32_1 = arith.constant 0 : i32
    return %c0_i32, %c0_i32_0 : i32, i32
  }
  func.func @transform_3(%arg0: i32) -> (i32, i32) {
    %c0_i32 = arith.constant 0 : i32
    %c0_i32_0 = arith.constant 0 : i32
    return %arg0, %c0_i32 : i32, i32
  }
}

module attributes {stable_mosaic.version = 11 : i64} {
  func.func @_matmul_bias_act_kernel(%arg0: i32, %arg1: memref<256x800xbf16, #tpu.memory_space<vmem>>, %arg2: memref<800x128xbf16, #tpu.memory_space<vmem>>, %arg3: memref<1x128xf32, #tpu.memory_space<vmem>>, %arg4: memref<256x128xbf16, #tpu.memory_space<vmem>>) attributes {dimension_semantics = [#tpu.dimension_semantics<parallel>], iteration_bounds = array<i64: 2>, scalar_prefetch = 0 : i64, scratch_operands = 0 : i64, tpu.core_type = #tpu.core_type<tc>, window_params = [{transform_indices = @transform_0, window_bounds = array<i64: 256, 800>}, {pipeline_mode = #tpu.pipeline_mode<synchronous>, transform_indices = @transform_1, window_bounds = array<i64: 800, 128>}, {pipeline_mode = #tpu.pipeline_mode<synchronous>, transform_indices = @transform_2, window_bounds = array<i64: 1, 128>}, {transform_indices = @transform_3, window_bounds = array<i64: 256, 128>}]} {
    %c0 = arith.constant 0 : index
    %c0_0 = arith.constant 0 : index
    %0 = vector.load %arg1[%c0, %c0_0] : memref<256x800xbf16, #tpu.memory_space<vmem>>, vector<256x800xbf16>
    %c0_1 = arith.constant 0 : index
    %c0_2 = arith.constant 0 : index
    %1 = vector.load %arg2[%c0_1, %c0_2] : memref<800x128xbf16, #tpu.memory_space<vmem>>, vector<800x128xbf16>
    %cst = arith.constant dense<0.000000e+00> : vector<256x128xf32>
    %2 = tpu.matmul %0, %1, %cst {dimension_numbers = #tpu.dot_dimension_numbers<[1], [0], [0], [1], [0, 0, 1, 1], [], []>} : vector<256x800xbf16>, vector<800x128xbf16>, vector<256x128xf32> -> vector<256x128xf32>
    %c0_3 = arith.constant 0 : index
    %c0_4 = arith.constant 0 : index
    %3 = vector.load %arg3[%c0_3, %c0_4] : memref<1x128xf32, #tpu.memory_space<vmem>>, vector<1x128xf32>
    %4 = vector.broadcast %3 : vector<1x128xf32> to vector<256x128xf32>
    %5 = arith.addf %2, %4 : vector<256x128xf32>
    %cst_5 = arith.constant 0.000000e+00 : f32
    %6 = vector.broadcast %cst_5 : f32 to vector<256x128xf32>
    %7 = arith.maximumf %5, %6 : vector<256x128xf32>
    %8 = arith.truncf %7 : vector<256x128xf32> to vector<256x128xbf16>
    %c0_6 = arith.constant 0 : index
    %c0_7 = arith.constant 0 : index
    %9 = vector.load %arg4[%c0_6, %c0_7] : memref<256x128xbf16, #tpu.memory_space<vmem>>, vector<256x128xbf16>
    tpu.vector_store %arg4[%c0_6, %c0_7], %8 {strides = array<i32>} : memref<256x128xbf16, #tpu.memory_space<vmem>>, vector<256x128xbf16>,
    return
  }
  func.func @transform_0(%arg0: i32) -> (i32, i32) {
    %c0_i32 = arith.constant 0 : i32
    %c0_i32_0 = arith.constant 0 : i32
    return %arg0, %c0_i32 : i32, i32
  }
  func.func @transform_1(%arg0: i32) -> (i32, i32) {
    %c0_i32 = arith.constant 0 : i32
    %c0_i32_0 = arith.constant 0 : i32
    %c0_i32_1 = arith.constant 0 : i32
    return %c0_i32, %c0_i32_0 : i32, i32
  }
  func.func @transform_2(%arg0: i32) -> (i32, i32) {
    %c0_i32 = arith.constant 0 : i32
    %c0_i32_0 = arith.constant 0 : i32
    %c0_i32_1 = arith.constant 0 : i32
    return %c0_i32, %c0_i32_0 : i32, i32
  }
  func.func @transform_3(%arg0: i32) -> (i32, i32) {
    %c0_i32 = arith.constant 0 : i32
    %c0_i32_0 = arith.constant 0 : i32
    return %arg0, %c0_i32 : i32, i32
  }
}

module attributes {stable_mosaic.version = 11 : i64} {
  func.func @_matmul_bias_act_kernel(%arg0: i32, %arg1: memref<64x1600xbf16, #tpu.memory_space<vmem>>, %arg2: memref<1600x128xbf16, #tpu.memory_space<vmem>>, %arg3: memref<1x128xf32, #tpu.memory_space<vmem>>, %arg4: memref<64x128xbf16, #tpu.memory_space<vmem>>) attributes {dimension_semantics = [#tpu.dimension_semantics<parallel>], iteration_bounds = array<i64: 2>, scalar_prefetch = 0 : i64, scratch_operands = 0 : i64, tpu.core_type = #tpu.core_type<tc>, window_params = [{transform_indices = @transform_0, window_bounds = array<i64: 64, 1600>}, {pipeline_mode = #tpu.pipeline_mode<synchronous>, transform_indices = @transform_1, window_bounds = array<i64: 1600, 128>}, {pipeline_mode = #tpu.pipeline_mode<synchronous>, transform_indices = @transform_2, window_bounds = array<i64: 1, 128>}, {transform_indices = @transform_3, window_bounds = array<i64: 64, 128>}]} {
    %c0 = arith.constant 0 : index
    %c0_0 = arith.constant 0 : index
    %0 = vector.load %arg1[%c0, %c0_0] : memref<64x1600xbf16, #tpu.memory_space<vmem>>, vector<64x1600xbf16>
    %c0_1 = arith.constant 0 : index
    %c0_2 = arith.constant 0 : index
    %1 = vector.load %arg2[%c0_1, %c0_2] : memref<1600x128xbf16, #tpu.memory_space<vmem>>, vector<1600x128xbf16>
    %cst = arith.constant dense<0.000000e+00> : vector<64x128xf32>
    %2 = tpu.matmul %0, %1, %cst {dimension_numbers = #tpu.dot_dimension_numbers<[1], [0], [0], [1], [0, 0, 1, 1], [], []>} : vector<64x1600xbf16>, vector<1600x128xbf16>, vector<64x128xf32> -> vector<64x128xf32>
    %c0_3 = arith.constant 0 : index
    %c0_4 = arith.constant 0 : index
    %3 = vector.load %arg3[%c0_3, %c0_4] : memref<1x128xf32, #tpu.memory_space<vmem>>, vector<1x128xf32>
    %4 = vector.broadcast %3 : vector<1x128xf32> to vector<64x128xf32>
    %5 = arith.addf %2, %4 : vector<64x128xf32>
    %cst_5 = arith.constant 0.000000e+00 : f32
    %6 = vector.broadcast %cst_5 : f32 to vector<64x128xf32>
    %7 = arith.maximumf %5, %6 : vector<64x128xf32>
    %8 = arith.truncf %7 : vector<64x128xf32> to vector<64x128xbf16>
    %c0_6 = arith.constant 0 : index
    %c0_7 = arith.constant 0 : index
    %9 = vector.load %arg4[%c0_6, %c0_7] : memref<64x128xbf16, #tpu.memory_space<vmem>>, vector<64x128xbf16>
    tpu.vector_store %arg4[%c0_6, %c0_7], %8 {strides = array<i32>} : memref<64x128xbf16, #tpu.memory_space<vmem>>, vector<64x128xbf16>,
    return
  }
  func.func @transform_0(%arg0: i32) -> (i32, i32) {
    %c0_i32 = arith.constant 0 : i32
    %c0_i32_0 = arith.constant 0 : i32
    return %arg0, %c0_i32 : i32, i32
  }
  func.func @transform_1(%arg0: i32) -> (i32, i32) {
    %c0_i32 = arith.constant 0 : i32
    %c0_i32_0 = arith.constant 0 : i32
    %c0_i32_1 = arith.constant 0 : i32
    return %c0_i32, %c0_i32_0 : i32, i32
  }
  func.func @transform_2(%arg0: i32) -> (i32, i32) {
    %c0_i32 = arith.constant 0 : i32
    %c0_i32_0 = arith.constant 0 : i32
    %c0_i32_1 = arith.constant 0 : i32
    return %c0_i32, %c0_i32_0 : i32, i32
  }
  func.func @transform_3(%arg0: i32) -> (i32, i32) {
    %c0_i32 = arith.constant 0 : i32
    %c0_i32_0 = arith.constant 0 : i32
    return %arg0, %c0_i32 : i32, i32
  }
}

module attributes {stable_mosaic.version = 11 : i64} {
  func.func @_matmul_bias_act_kernel(%arg0: i32, %arg1: memref<72x576xbf16, #tpu.memory_space<vmem>>, %arg2: memref<576x128xbf16, #tpu.memory_space<vmem>>, %arg3: memref<1x128xf32, #tpu.memory_space<vmem>>, %arg4: memref<72x128xbf16, #tpu.memory_space<vmem>>) attributes {dimension_semantics = [#tpu.dimension_semantics<parallel>], iteration_bounds = array<i64: 1>, scalar_prefetch = 0 : i64, scratch_operands = 0 : i64, tpu.core_type = #tpu.core_type<tc>, window_params = [{transform_indices = @transform_0, window_bounds = array<i64: 72, 576>}, {pipeline_mode = #tpu.pipeline_mode<synchronous>, transform_indices = @transform_1, window_bounds = array<i64: 576, 128>}, {pipeline_mode = #tpu.pipeline_mode<synchronous>, transform_indices = @transform_2, window_bounds = array<i64: 1, 128>}, {transform_indices = @transform_3, window_bounds = array<i64: 72, 128>}]} {
    %c0 = arith.constant 0 : index
    %c0_0 = arith.constant 0 : index
    %0 = vector.load %arg1[%c0, %c0_0] : memref<72x576xbf16, #tpu.memory_space<vmem>>, vector<72x576xbf16>
    %c0_1 = arith.constant 0 : index
    %c0_2 = arith.constant 0 : index
    %1 = vector.load %arg2[%c0_1, %c0_2] : memref<576x128xbf16, #tpu.memory_space<vmem>>, vector<576x128xbf16>
    %cst = arith.constant dense<0.000000e+00> : vector<72x128xf32>
    %2 = tpu.matmul %0, %1, %cst {dimension_numbers = #tpu.dot_dimension_numbers<[1], [0], [0], [1], [0, 0, 1, 1], [], []>} : vector<72x576xbf16>, vector<576x128xbf16>, vector<72x128xf32> -> vector<72x128xf32>
    %c0_3 = arith.constant 0 : index
    %c0_4 = arith.constant 0 : index
    %3 = vector.load %arg3[%c0_3, %c0_4] : memref<1x128xf32, #tpu.memory_space<vmem>>, vector<1x128xf32>
    %4 = vector.broadcast %3 : vector<1x128xf32> to vector<72x128xf32>
    %5 = arith.addf %2, %4 : vector<72x128xf32>
    %cst_5 = arith.constant 0.000000e+00 : f32
    %6 = vector.broadcast %cst_5 : f32 to vector<72x128xf32>
    %7 = arith.maximumf %5, %6 : vector<72x128xf32>
    %8 = arith.truncf %7 : vector<72x128xf32> to vector<72x128xbf16>
    %c0_6 = arith.constant 0 : index
    %c0_7 = arith.constant 0 : index
    %9 = vector.load %arg4[%c0_6, %c0_7] : memref<72x128xbf16, #tpu.memory_space<vmem>>, vector<72x128xbf16>
    tpu.vector_store %arg4[%c0_6, %c0_7], %8 {strides = array<i32>} : memref<72x128xbf16, #tpu.memory_space<vmem>>, vector<72x128xbf16>,
    return
  }
  func.func @transform_0(%arg0: i32) -> (i32, i32) {
    %c0_i32 = arith.constant 0 : i32
    %c0_i32_0 = arith.constant 0 : i32
    return %arg0, %c0_i32 : i32, i32
  }
  func.func @transform_1(%arg0: i32) -> (i32, i32) {
    %c0_i32 = arith.constant 0 : i32
    %c0_i32_0 = arith.constant 0 : i32
    %c0_i32_1 = arith.constant 0 : i32
    return %c0_i32, %c0_i32_0 : i32, i32
  }
  func.func @transform_2(%arg0: i32) -> (i32, i32) {
    %c0_i32 = arith.constant 0 : i32
    %c0_i32_0 = arith.constant 0 : i32
    %c0_i32_1 = arith.constant 0 : i32
    return %c0_i32, %c0_i32_0 : i32, i32
  }
  func.func @transform_3(%arg0: i32) -> (i32, i32) {
    %c0_i32 = arith.constant 0 : i32
    %c0_i32_0 = arith.constant 0 : i32
    return %arg0, %c0_i32 : i32, i32
  }
}

module attributes {stable_mosaic.version = 11 : i64} {
  func.func @_fc_head_kernel(%arg0: i32, %arg1: memref<8x2304xbf16, #tpu.memory_space<vmem>>, %arg2: memref<2304x256xbf16, #tpu.memory_space<vmem>>, %arg3: memref<1x256xf32, #tpu.memory_space<vmem>>, %arg4: memref<256x128xbf16, #tpu.memory_space<vmem>>, %arg5: memref<1x128xf32, #tpu.memory_space<vmem>>, %arg6: memref<8x128xf32, #tpu.memory_space<vmem>>, %arg7: memref<8x128xf32, #tpu.memory_space<vmem>>) attributes {dimension_semantics = [#tpu.dimension_semantics<arbitrary>], iteration_bounds = array<i64: 2>, scalar_prefetch = 0 : i64, scratch_operands = 1 : i64, tpu.core_type = #tpu.core_type<tc>, window_params = [{pipeline_mode = #tpu.pipeline_mode<synchronous>, transform_indices = @transform_0, window_bounds = array<i64: 8, 2304>}, {transform_indices = @transform_1, window_bounds = array<i64: 2304, 256>}, {transform_indices = @transform_2, window_bounds = array<i64: 1, 256>}, {transform_indices = @transform_3, window_bounds = array<i64: 256, 128>}, {pipeline_mode = #tpu.pipeline_mode<synchronous>, transform_indices = @transform_4, window_bounds = array<i64: 1, 128>}, {pipeline_mode = #tpu.pipeline_mode<synchronous>, transform_indices = @transform_5, window_bounds = array<i64: 8, 128>}]} {
    %c0_i32 = arith.constant 0 : i32
    %0 = arith.cmpi eq, %arg0, %c0_i32 : i32
    %1 = arith.extui %0 : i1 to i32
    %c0_i32_0 = arith.constant 0 : i32
    %2 = arith.cmpi ne, %1, %c0_i32_0 : i32
    scf.if %2 {
      %cst_15 = arith.constant 0.000000e+00 : f32
      %20 = vector.broadcast %cst_15 : f32 to vector<8x128xf32>
      %c0_16 = arith.constant 0 : index
      %c0_17 = arith.constant 0 : index
      %21 = vector.load %arg7[%c0_16, %c0_17] : memref<8x128xf32, #tpu.memory_space<vmem>>, vector<8x128xf32>
      tpu.vector_store %arg7[%c0_16, %c0_17], %20 {strides = array<i32>} : memref<8x128xf32, #tpu.memory_space<vmem>>, vector<8x128xf32>,
    } else {
    }
    %c0 = arith.constant 0 : index
    %c0_1 = arith.constant 0 : index
    %3 = vector.load %arg1[%c0, %c0_1] : memref<8x2304xbf16, #tpu.memory_space<vmem>>, vector<8x2304xbf16>
    %c0_2 = arith.constant 0 : index
    %c0_3 = arith.constant 0 : index
    %4 = vector.load %arg2[%c0_2, %c0_3] : memref<2304x256xbf16, #tpu.memory_space<vmem>>, vector<2304x256xbf16>
    %cst = arith.constant dense<0.000000e+00> : vector<8x256xf32>
    %5 = tpu.matmul %3, %4, %cst {dimension_numbers = #tpu.dot_dimension_numbers<[1], [0], [0], [1], [0, 0, 1, 1], [], []>} : vector<8x2304xbf16>, vector<2304x256xbf16>, vector<8x256xf32> -> vector<8x256xf32>
    %c0_4 = arith.constant 0 : index
    %c0_5 = arith.constant 0 : index
    %6 = vector.load %arg3[%c0_4, %c0_5] : memref<1x256xf32, #tpu.memory_space<vmem>>, vector<1x256xf32>
    %7 = vector.broadcast %6 : vector<1x256xf32> to vector<8x256xf32>
    %8 = arith.addf %5, %7 : vector<8x256xf32>
    %cst_6 = arith.constant 0.000000e+00 : f32
    %9 = vector.broadcast %cst_6 : f32 to vector<8x256xf32>
    %10 = arith.maximumf %8, %9 : vector<8x256xf32>
    %c0_7 = arith.constant 0 : index
    %c0_8 = arith.constant 0 : index
    %11 = vector.load %arg7[%c0_7, %c0_8] : memref<8x128xf32, #tpu.memory_space<vmem>>, vector<8x128xf32>
    %12 = arith.truncf %10 : vector<8x256xf32> to vector<8x256xbf16>
    %c0_9 = arith.constant 0 : index
    %c0_10 = arith.constant 0 : index
    %13 = vector.load %arg4[%c0_9, %c0_10] : memref<256x128xbf16, #tpu.memory_space<vmem>>, vector<256x128xbf16>
    %cst_11 = arith.constant dense<0.000000e+00> : vector<8x128xf32>
    %14 = tpu.matmul %12, %13, %cst_11 {dimension_numbers = #tpu.dot_dimension_numbers<[1], [0], [0], [1], [0, 0, 1, 1], [], []>} : vector<8x256xbf16>, vector<256x128xbf16>, vector<8x128xf32> -> vector<8x128xf32>
    %15 = arith.addf %11, %14 : vector<8x128xf32>
    %c0_12 = arith.constant 0 : index
    %c0_13 = arith.constant 0 : index
    %16 = vector.load %arg7[%c0_12, %c0_13] : memref<8x128xf32, #tpu.memory_space<vmem>>, vector<8x128xf32>
    tpu.vector_store %arg7[%c0_12, %c0_13], %15 {strides = array<i32>} : memref<8x128xf32, #tpu.memory_space<vmem>>, vector<8x128xf32>,
    %c1_i32 = arith.constant 1 : i32
    %17 = arith.cmpi eq, %arg0, %c1_i32 : i32
    %18 = arith.extui %17 : i1 to i32
    %c0_i32_14 = arith.constant 0 : i32
    %19 = arith.cmpi ne, %18, %c0_i32_14 : i32
    scf.if %19 {
      %c0_15 = arith.constant 0 : index
      %c0_16 = arith.constant 0 : index
      %20 = vector.load %arg7[%c0_15, %c0_16] : memref<8x128xf32, #tpu.memory_space<vmem>>, vector<8x128xf32>
      %c0_17 = arith.constant 0 : index
      %c0_18 = arith.constant 0 : index
      %21 = vector.load %arg5[%c0_17, %c0_18] : memref<1x128xf32, #tpu.memory_space<vmem>>, vector<1x128xf32>
      %22 = vector.broadcast %21 : vector<1x128xf32> to vector<8x128xf32>
      %23 = arith.addf %20, %22 : vector<8x128xf32>
      %cst_19 = arith.constant 0.000000e+00 : f32
      %24 = vector.broadcast %cst_19 : f32 to vector<8x128xf32>
      %25 = arith.subf %24, %23 : vector<8x128xf32>
      %26 = math.exp %25 : vector<8x128xf32>
      %cst_20 = arith.constant 1.000000e+00 : f32
      %27 = vector.broadcast %cst_20 : f32 to vector<8x128xf32>
      %28 = arith.addf %27, %26 : vector<8x128xf32>
      %29 = tpu.reciprocal %28 {approx = true} : vector<8x128xf32> -> vector<8x128xf32>
      %c0_21 = arith.constant 0 : index
      %c0_22 = arith.constant 0 : index
      %30 = vector.load %arg6[%c0_21, %c0_22] : memref<8x128xf32, #tpu.memory_space<vmem>>, vector<8x128xf32>
      tpu.vector_store %arg6[%c0_21, %c0_22], %29 {strides = array<i32>} : memref<8x128xf32, #tpu.memory_space<vmem>>, vector<8x128xf32>,
    } else {
    }
    return
  }
  func.func @transform_0(%arg0: i32) -> (i32, i32) {
    %c0_i32 = arith.constant 0 : i32
    %c0_i32_0 = arith.constant 0 : i32
    %c0_i32_1 = arith.constant 0 : i32
    return %c0_i32, %c0_i32_0 : i32, i32
  }
  func.func @transform_1(%arg0: i32) -> (i32, i32) {
    %c0_i32 = arith.constant 0 : i32
    %c0_i32_0 = arith.constant 0 : i32
    return %c0_i32, %arg0 : i32, i32
  }
  func.func @transform_2(%arg0: i32) -> (i32, i32) {
    %c0_i32 = arith.constant 0 : i32
    %c0_i32_0 = arith.constant 0 : i32
    return %c0_i32, %arg0 : i32, i32
  }
  func.func @transform_3(%arg0: i32) -> (i32, i32) {
    %c0_i32 = arith.constant 0 : i32
    %c0_i32_0 = arith.constant 0 : i32
    return %arg0, %c0_i32 : i32, i32
  }
  func.func @transform_4(%arg0: i32) -> (i32, i32) {
    %c0_i32 = arith.constant 0 : i32
    %c0_i32_0 = arith.constant 0 : i32
    %c0_i32_1 = arith.constant 0 : i32
    return %c0_i32, %c0_i32_0 : i32, i32
  }
  func.func @transform_5(%arg0: i32) -> (i32, i32) {
    %c0_i32 = arith.constant 0 : i32
    %c0_i32_0 = arith.constant 0 : i32
    %c0_i32_1 = arith.constant 0 : i32
    return %c0_i32, %c0_i32_0 : i32, i32
  }
}

</mosaic_0001>

<llo_original>
// kernel: temp_embed_forward.5
$region0: #{temp_embed_forward.5}
  #allocation0 [shape = 'u32[]', space=smem, size = 0x4, offset = 0x4, fixed_abs, tag = 'smem constant byte address 0x4 - core index']
  #allocation1 [shape = 'u32[144,128]{1,0:T(1,128)}', space=vmem, size = 0x12000, scoped, tag = 'internal scratch']
  %s0 = inlined_call_operand.vmem [shape: bf16[2048,25], index: 0, kind: input, shape index: {}]
  %s1 = inlined_call_operand.hbm [shape: bf16[25,128], index: 1, kind: input, shape index: {}]
  %s2 = inlined_call_operand.hbm [shape: f32[1,128], index: 2, kind: input, shape index: {}]
  %s3 = inlined_call_operand.vmem [shape: bf16[2048,128], index: 3, kind: output, shape index: {}]
  %s4 = sld [smem:[#allocation0]]
  $region53: #{temp_embed_forward.5} parent=0
    _
  %s6 = ssub.s32 1, %s4
  %s7 = scalar_select 0, %s6, %s4
  $region1: #{temp_embed_forward.5} parent=0
    #allocation2 [shape = 'u8[8192]{0}', space=vmem, size = 0x2000, scoped, tag = 'input window, operand 1, single buffered']
    #allocation3 [shape = 's32[2]{0}', space=sflag, size = 0x8, scoped, tag = 'scoped memory for temp_embed_forward.5']
    #allocation4 [shape = 'u8[512]{0}', space=vmem, size = 0x400, scoped, tag = 'input window, operand 2, single buffered']
    #allocation5 [shape = 's32[1]{0}', space=sflag, size = 0x4, scoped, tag = 'scoped memory for temp_embed_forward.5']
    %8 = vsyncpa [#allocation3], 0
    %9 = vsyncpa [#allocation5], 0
    loop: start=0, step=1, limit=4
    $region2: #{temp_embed_forward.5} parent=1 // loop_pre_header
      _
    $region3: #{temp_embed_forward.5} parent=1 // loop_header
      %s11 = sphi 0, %s15
      %p12 = scmp.ge.s32.totalorder %s11, 4
      %s21 = sphi 0, %s23
      %s24 = sphi 0, %s21
      %s25 = sphi 0, %s24
      %s41 = sphi 0, %s25
      %s45 = sphi 0, %s45
      %s47 = sphi 0, %s45
      %s48 = sphi 0, %s47
      %s62 = sphi 0, %s48
      %s66 = sphi 0, %s66
      %s68 = sphi 0, %s66
      %s69 = sphi 0, %s68
      %s83 = sphi 0, %s69
      %s89 = sphi 0, %s91
      %s92 = sphi 0, %s89
      %s93 = sphi 0, %s92
      %s109 = sphi 0, %s93
    $region4: #{temp_embed_forward.5} parent=1 // loop_header_branch
      %14 = sbr.rel (%p12) target = $region8
    $region5: #{temp_embed_forward.5} parent=1 // loop_body
      %s16 = ssub.s32 %s11, 1
      %s17 = ssub.s32 %s11, 2
      %s18 = sadd.s32 %s11, 1
      %s19 = ssub.s32 %s11, %s18
      %p20 = scmp.eq.s32.totalorder %s19, 0
      %s22 = sadd.s32 %s21, 1
      %s23 = scalar_select %p20, %s21, %s22
      %p26 = pneg %p20
      %p27 = scmp.eq.s32.totalorder %s11, 1
      %p28 = por %p26, %p27
      %p29 = scmp.ne.s32.totalorder %s21, %s24
      %p30 = scmp.eq.s32.totalorder %s11, 0
      %p31 = por %p29, %p30
      %p32 = scmp.ne.s32.totalorder %s21, %s24
      %p33 = scmp.eq.s32.totalorder %s16, 1
      %p34 = por %p32, %p33
      %p35 = scmp.ne.s32.totalorder %s24, %s25
      %p36 = scmp.eq.s32.totalorder %s16, 0
      %p37 = por %p35, %p36
      %p38 = scmp.ne.s32.totalorder %s24, %s25
      %p39 = scmp.eq.s32.totalorder %s17, 1
      %p40 = por %p38, %p39
      %p42 = scmp.ne.s32.totalorder %s25, %s41
      %p43 = scmp.eq.s32.totalorder %s17, 0
      %p44 = por %p42, %p43
      %s46 = sadd.s32 %s45, 1
      %p49 = scmp.eq.s32.totalorder %s11, 1
      %p50 = scmp.ne.s32.totalorder %s45, %s47
      %p51 = scmp.eq.s32.totalorder %s11, 0
      %p52 = por %p50, %p51
      %p53 = scmp.ne.s32.totalorder %s45, %s47
      %p54 = scmp.eq.s32.totalorder %s16, 1
      %p55 = por %p53, %p54
      %p56 = scmp.ne.s32.totalorder %s47, %s48
      %p57 = scmp.eq.s32.totalorder %s16, 0
      %p58 = por %p56, %p57
      %p59 = scmp.ne.s32.totalorder %s47, %s48
      %p60 = scmp.eq.s32.totalorder %s17, 1
      %p61 = por %p59, %p60
      %p63 = scmp.ne.s32.totalorder %s48, %s62
      %p64 = scmp.eq.s32.totalorder %s17, 0
      %p65 = por %p63, %p64
      %s67 = sadd.s32 %s66, 1
      %p70 = scmp.eq.s32.totalorder %s11, 1
      %p71 = scmp.ne.s32.totalorder %s66, %s68
      %p72 = scmp.eq.s32.totalorder %s11, 0
      %p73 = por %p71, %p72
      %p74 = scmp.ne.s32.totalorder %s66, %s68
      %p75 = scmp.eq.s32.totalorder %s16, 1
      %p76 = por %p74, %p75
      %p77 = scmp.ne.s32.totalorder %s68, %s69
      %p78 = scmp.eq.s32.totalorder %s16, 0
      %p79 = por %p77, %p78
      %p80 = scmp.ne.s32.totalorder %s68, %s69
      %p81 = scmp.eq.s32.totalorder %s17, 1
      %p82 = por %p80, %p81
      %p84 = scmp.ne.s32.totalorder %s69, %s83
      %p85 = scmp.eq.s32.totalorder %s17, 0
      %p86 = por %p84, %p85
      %s87 = ssub.s32 %s11, %s18
      %p88 = scmp.eq.s32.totalorder %s87, 0
      %s90 = sadd.s32 %s89, 1
      %s91 = scalar_select %p88, %s89, %s90
      %p94 = pneg %p88
      %p95 = scmp.eq.s32.totalorder %s11, 1
      %p96 = por %p94, %p95
      %p97 = scmp.ne.s32.totalorder %s89, %s92
      %p98 = scmp.eq.s32.totalorder %s11, 0
      %p99 = por %p97, %p98
      %p100 = scmp.ne.s32.totalorder %s89, %s92
      %p101 = scmp.eq.s32.totalorder %s16, 1
      %p102 = por %p100, %p101
      %p103 = scmp.ne.s32.totalorder %s92, %s93
      %p104 = scmp.eq.s32.totalorder %s16, 0
      %p105 = por %p103, %p104
      %p106 = scmp.ne.s32.totalorder %s92, %s93
      %p107 = scmp.eq.s32.totalorder %s17, 1
      %p108 = por %p106, %p107
      %p110 = scmp.ne.s32.totalorder %s93, %s109
      %p111 = scmp.eq.s32.totalorder %s17, 0
      %p112 = por %p110, %p111
      %p113 = scmp.le.s32.totalorder 1, %s11
      %p114 = scmp.lt.s32.totalorder %s11, 3
      %p115 = pnand %p113, %p114
      %p116 = pneg %p115
      // Predicated region
      $region9: #{temp_embed_forward.5} parent=5 // pred_check
        _
      $region10: #{temp_embed_forward.5} parent=5 // pred_check_branch
        %118 = sbr.rel (%p115) target = $region12
      $region11: #{temp_embed_forward.5} parent=5 // pred_region
        %s119 = ssub.s32 %s11, 1
        // Predicated region
        $region13: #{temp_embed_forward.5} parent=11 // pred_check
          %p120 = pneg %p58
        $region14: #{temp_embed_forward.5} parent=11 // pred_check_branch
          %122 = sbr.rel (%p120) target = $region16
        $region15: #{temp_embed_forward.5} parent=11 // pred_region
          %s124 = ssub.s32 256, 256
          %125 = vsyncadd [#allocation3], %s124
          %s126 = sshll.u32 [#allocation2], 4
          %s127 = int_to_ptr.vmem [resolvable:$true] %s126
          %132 = dma.hbm_to_vmem [thread:$0]  %s1, 256, %s127, [#allocation3], 64, 64, 4
        $region16: #{temp_embed_forward.5} parent=11 // pred_fallthru
          _
        // Predicated region
        $region17: #{temp_embed_forward.5} parent=11 // pred_check
          %p133 = pneg %p79
        $region18: #{temp_embed_forward.5} parent=11 // pred_check_branch
          %135 = sbr.rel (%p133) target = $region20
        $region19: #{temp_embed_forward.5} parent=11 // pred_region
          %s137 = ssub.s32 16, 16
          %138 = vsyncadd [#allocation5], %s137
          %s140 = sshll.u32 [#allocation4], 4
          %s141 = int_to_ptr.vmem [resolvable:$true] %s140
          %143 = dma.hbm_to_vmem [thread:$0]  %s2, 16, %s141, [#allocation5]
        $region20: #{temp_embed_forward.5} parent=11 // pred_fallthru
          _
      $region12: #{temp_embed_forward.5} parent=5 // pred_fallthru
        _
      %p144 = scmp.lt.s32.totalorder %s11, 2
      // Predicated region
      $region21: #{temp_embed_forward.5} parent=5 // pred_check
        %p145 = pneg %p144
      $region22: #{temp_embed_forward.5} parent=5 // pred_check_branch
        %147 = sbr.rel (%p145) target = $region24
      $region23: #{temp_embed_forward.5} parent=5 // pred_region
        // Predicated region
        $region25: #{temp_embed_forward.5} parent=23 // pred_check
          %p148 = pneg %p31
        $region26: #{temp_embed_forward.5} parent=23 // pred_check_branch
          %150 = sbr.rel (%p148) target = $region28
        $region27: #{temp_embed_forward.5} parent=23 // pred_region
          %s151 = smul.u32 128, %s11
          %p152 = scmp.lt.s32.totalorder %s151, 255
          %s153 = scalar_select %p152, %s151, 255
          %s154 = smul.addr %s153, 4
          %s155 = scalar_lea.vmem %s0, %s154
          %s156 = smul.u32 128, %s11
        $region28: #{temp_embed_forward.5} parent=23 // pred_fallthru
          _
      $region24: #{temp_embed_forward.5} parent=5 // pred_fallthru
        _
      %p157 = scmp.le.s32.totalorder 1, %s11
      %p158 = scmp.lt.s32.totalorder %s11, 3
      %p159 = pnand %p157, %p158
      %p160 = pneg %p159
      // Predicated region
      $region29: #{temp_embed_forward.5} parent=5 // pred_check
        _
      $region30: #{temp_embed_forward.5} parent=5 // pred_check_branch
        %162 = sbr.rel (%p159) target = $region32
      $region31: #{temp_embed_forward.5} parent=5 // pred_region
        %s163 = ssub.s32 %s11, 1
        // Predicated region
        $region33: #{temp_embed_forward.5} parent=31 // pred_check
          %p164 = pneg %p58
        $region34: #{temp_embed_forward.5} parent=31 // pred_check_branch
          %166 = sbr.rel (%p164) target = $region36
        $region35: #{temp_embed_forward.5} parent=31 // pred_region
          %167 = dma.done [#allocation3], 256
        $region36: #{temp_embed_forward.5} parent=31 // pred_fallthru
          _
        // Predicated region
        $region37: #{temp_embed_forward.5} parent=31 // pred_check
          %p168 = pneg %p79
        $region38: #{temp_embed_forward.5} parent=31 // pred_check_branch
          %170 = sbr.rel (%p168) target = $region40
        $region39: #{temp_embed_forward.5} parent=31 // pred_region
          %171 = dma.done [#allocation5], 16
        $region40: #{temp_embed_forward.5} parent=31 // pred_fallthru
          _
        %s172 = smul.u32 128, %s16
        %p173 = scmp.lt.s32.totalorder %s172, 255
        %s174 = scalar_select %p173, %s172, 255
        %s175 = smul.addr %s174, 4
        %s176 = scalar_lea.vmem %s0, %s175
        %p177 = pneg %p37
        %p178 = pneg %p34
        %p179 = pneg %p58
        %p180 = pneg %p55
        %p181 = pneg %p79
        %p182 = pneg %p76
        %p183 = pneg %p105
        %p184 = pneg %p102
        %s185 = smul.u32 128, %s16
        %p186 = scmp.lt.s32.totalorder %s185, 255
        %s187 = scalar_select %p186, %s185, 255
        %s188 = smul.addr %s187, 4
        %s189 = scalar_lea.vmem %s3, %s188
        %s190 = smul.u32 128, %s16
        %p191 = scmp.lt.s32.totalorder %s190, 255
        %s192 = scalar_select %p191, %s190, 255
        %s193 = smul.addr %s192, 4
        %s194 = scalar_lea.vmem %s0, %s193
        %s195 = smul.u32 128, %s16
        %s196 = smul.u32 128, %s16
        %p197 = scmp.lt.s32.totalorder %s196, 255
        %s198 = scalar_select %p197, %s196, 255
        %s199 = smul.addr %s198, 4
        %s200 = scalar_lea.vmem %s3, %s199
        %s201 = smul.u32 128, %s16
        %v203 = vld [vmem:[%s194] sm:$0xf]
        %v204 = vld [vmem:[%s194 + $0x4] sm:$0xf]
        %v205 = vld [vmem:[%s194 + $0x8] sm:$0xf]
        %v206 = vld [vmem:[%s194 + $0xc] sm:$0xf]
        %v207 = vld [vmem:[%s194 + $0x10] sm:$0xf]
        %v208 = vld [vmem:[%s194 + $0x14] sm:$0xf]
        %v209 = vld [vmem:[%s194 + $0x18] sm:$0xf]
        %v210 = vld [vmem:[%s194 + $0x1c] sm:$0xf]
        %v211 = vld [vmem:[%s194 + $0x20] sm:$0xf]
        %v212 = vld [vmem:[%s194 + $0x24] sm:$0xf]
        %v213 = vld [vmem:[%s194 + $0x28] sm:$0xf]
        %v214 = vld [vmem:[%s194 + $0x2c] sm:$0xf]
        %v215 = vld [vmem:[%s194 + $0x30] sm:$0xf]
        %v216 = vld [vmem:[%s194 + $0x34] sm:$0xf]
        %v217 = vld [vmem:[%s194 + $0x38] sm:$0xf]
        %v218 = vld [vmem:[%s194 + $0x3c] sm:$0xf]
        %v219 = vld [vmem:[%s194 + $0x40] sm:$0xf]
        %v220 = vld [vmem:[%s194 + $0x44] sm:$0xf]
        %v221 = vld [vmem:[%s194 + $0x48] sm:$0xf]
        %v222 = vld [vmem:[%s194 + $0x4c] sm:$0xf]
        %v223 = vld [vmem:[%s194 + $0x50] sm:$0xf]
        %v224 = vld [vmem:[%s194 + $0x54] sm:$0xf]
        %v225 = vld [vmem:[%s194 + $0x58] sm:$0xf]
        %v226 = vld [vmem:[%s194 + $0x5c] sm:$0xf]
        %v227 = vld [vmem:[%s194 + $0x60] sm:$0xf]
        %v228 = vld [vmem:[%s194 + $0x64] sm:$0xf]
        %v229 = vld [vmem:[%s194 + $0x68] sm:$0xf]
        %v230 = vld [vmem:[%s194 + $0x6c] sm:$0xf]
        %v231 = vld [vmem:[%s194 + $0x70] sm:$0xf]
        %v232 = vld [vmem:[%s194 + $0x74] sm:$0xf]
        %v233 = vld [vmem:[%s194 + $0x78] sm:$0xf]
        %v234 = vld [vmem:[%s194 + $0x7c] sm:$0xf]
        %v235 = vld [vmem:[%s194 + $0x80] sm:$0xf]
        %v236 = vld [vmem:[%s194 + $0x84] sm:$0xf]
        %v237 = vld [vmem:[%s194 + $0x88] sm:$0xf]
        %v238 = vld [vmem:[%s194 + $0x8c] sm:$0xf]
        %v239 = vld [vmem:[%s194 + $0x90] sm:$0xf]
        %v240 = vld [vmem:[%s194 + $0x94] sm:$0xf]
        %v241 = vld [vmem:[%s194 + $0x98] sm:$0xf]
        %v242 = vld [vmem:[%s194 + $0x9c] sm:$0xf]
        %v243 = vld [vmem:[%s194 + $0xa0] sm:$0xf]
        %v244 = vld [vmem:[%s194 + $0xa4] sm:$0xf]
        %v245 = vld [vmem:[%s194 + $0xa8] sm:$0xf]
        %v246 = vld [vmem:[%s194 + $0xac] sm:$0xf]
        %v247 = vld [vmem:[%s194 + $0xb0] sm:$0xf]
        %v248 = vld [vmem:[%s194 + $0xb4] sm:$0xf]
        %v249 = vld [vmem:[%s194 + $0xb8] sm:$0xf]
        %v250 = vld [vmem:[%s194 + $0xbc] sm:$0xf]
        %v251 = vld [vmem:[%s194 + $0xc0] sm:$0xf]
        %v252 = vld [vmem:[%s194 + $0xc4] sm:$0xf]
        %v253 = vld [vmem:[%s194 + $0xc8] sm:$0xf]
        %v254 = vld [vmem:[%s194 + $0xcc] sm:$0xf]
        %v255 = vld [vmem:[%s194 + $0xd0] sm:$0xf]
        %v256 = vld [vmem:[%s194 + $0xd4] sm:$0xf]
        %v257 = vld [vmem:[%s194 + $0xd8] sm:$0xf]
        %v258 = vld [vmem:[%s194 + $0xdc] sm:$0xf]
        %v259 = vld [vmem:[%s194 + $0xe0] sm:$0xf]
        %v260 = vld [vmem:[%s194 + $0xe4] sm:$0xf]
        %v261 = vld [vmem:[%s194 + $0xe8] sm:$0xf]
        %v262 = vld [vmem:[%s194 + $0xec] sm:$0xf]
        %v263 = vld [vmem:[%s194 + $0xf0] sm:$0xf]
        %v264 = vld [vmem:[%s194 + $0xf4] sm:$0xf]
        %v265 = vld [vmem:[%s194 + $0xf8] sm:$0xf]
        %v266 = vld [vmem:[%s194 + $0xfc] sm:$0xf]
        %v267 = vld [vmem:[%s194 + $0x100] sm:$0xf]
        %v268 = vld [vmem:[%s194 + $0x104] sm:$0xf]
        %v269 = vld [vmem:[%s194 + $0x108] sm:$0xf]
        %v270 = vld [vmem:[%s194 + $0x10c] sm:$0xf]
        %v271 = vld [vmem:[%s194 + $0x110] sm:$0xf]
        %v272 = vld [vmem:[%s194 + $0x114] sm:$0xf]
        %v273 = vld [vmem:[%s194 + $0x118] sm:$0xf]
        %v274 = vld [vmem:[%s194 + $0x11c] sm:$0xf]
        %v275 = vld [vmem:[%s194 + $0x120] sm:$0xf]
        %v276 = vld [vmem:[%s194 + $0x124] sm:$0xf]
        %v277 = vld [vmem:[%s194 + $0x128] sm:$0xf]
        %v278 = vld [vmem:[%s194 + $0x12c] sm:$0xf]
        %v279 = vld [vmem:[%s194 + $0x130] sm:$0xf]
        %v280 = vld [vmem:[%s194 + $0x134] sm:$0xf]
        %v281 = vld [vmem:[%s194 + $0x138] sm:$0xf]
        %v282 = vld [vmem:[%s194 + $0x13c] sm:$0xf]
        %v283 = vld [vmem:[%s194 + $0x140] sm:$0xf]
        %v284 = vld [vmem:[%s194 + $0x144] sm:$0xf]
        %v285 = vld [vmem:[%s194 + $0x148] sm:$0xf]
        %v286 = vld [vmem:[%s194 + $0x14c] sm:$0xf]
        %v287 = vld [vmem:[%s194 + $0x150] sm:$0xf]
        %v288 = vld [vmem:[%s194 + $0x154] sm:$0xf]
        %v289 = vld [vmem:[%s194 + $0x158] sm:$0xf]
        %v290 = vld [vmem:[%s194 + $0x15c] sm:$0xf]
        %v291 = vld [vmem:[%s194 + $0x160] sm:$0xf]
        %v292 = vld [vmem:[%s194 + $0x164] sm:$0xf]
        %v293 = vld [vmem:[%s194 + $0x168] sm:$0xf]
        %v294 = vld [vmem:[%s194 + $0x16c] sm:$0xf]
        %v295 = vld [vmem:[%s194 + $0x170] sm:$0xf]
        %v296 = vld [vmem:[%s194 + $0x174] sm:$0xf]
        %v297 = vld [vmem:[%s194 + $0x178] sm:$0xf]
        %v298 = vld [vmem:[%s194 + $0x17c] sm:$0xf]
        %v299 = vld [vmem:[%s194 + $0x180] sm:$0xf]
        %v300 = vld [vmem:[%s194 + $0x184] sm:$0xf]
        %v301 = vld [vmem:[%s194 + $0x188] sm:$0xf]
        %v302 = vld [vmem:[%s194 + $0x18c] sm:$0xf]
        %v303 = vld [vmem:[%s194 + $0x190] sm:$0xf]
        %v304 = vld [vmem:[%s194 + $0x194] sm:$0xf]
        %v305 = vld [vmem:[%s194 + $0x198] sm:$0xf]
        %v306 = vld [vmem:[%s194 + $0x19c] sm:$0xf]
        %v307 = vld [vmem:[%s194 + $0x1a0] sm:$0xf]
        %v308 = vld [vmem:[%s194 + $0x1a4] sm:$0xf]
        %v309 = vld [vmem:[%s194 + $0x1a8] sm:$0xf]
        %v310 = vld [vmem:[%s194 + $0x1ac] sm:$0xf]
        %v311 = vld [vmem:[%s194 + $0x1b0] sm:$0xf]
        %v312 = vld [vmem:[%s194 + $0x1b4] sm:$0xf]
        %v313 = vld [vmem:[%s194 + $0x1b8] sm:$0xf]
        %v314 = vld [vmem:[%s194 + $0x1bc] sm:$0xf]
        %v315 = vld [vmem:[%s194 + $0x1c0] sm:$0xf]
        %v316 = vld [vmem:[%s194 + $0x1c4] sm:$0xf]
        %v317 = vld [vmem:[%s194 + $0x1c8] sm:$0xf]
        %v318 = vld [vmem:[%s194 + $0x1cc] sm:$0xf]
        %v319 = vld [vmem:[%s194 + $0x1d0] sm:$0xf]
        %v320 = vld [vmem:[%s194 + $0x1d4] sm:$0xf]
        %v321 = vld [vmem:[%s194 + $0x1d8] sm:$0xf]
        %v322 = vld [vmem:[%s194 + $0x1dc] sm:$0xf]
        %v323 = vld [vmem:[%s194 + $0x1e0] sm:$0xf]
        %v324 = vld [vmem:[%s194 + $0x1e4] sm:$0xf]
        %v325 = vld [vmem:[%s194 + $0x1e8] sm:$0xf]
        %v326 = vld [vmem:[%s194 + $0x1ec] sm:$0xf]
        %v327 = vld [vmem:[%s194 + $0x1f0] sm:$0xf]
        %v328 = vld [vmem:[%s194 + $0x1f4] sm:$0xf]
        %v329 = vld [vmem:[%s194 + $0x1f8] sm:$0xf]
        %v330 = vld [vmem:[%s194 + $0x1fc] sm:$0xf]
        %v331 = vld [vmem:[#allocation2] sm:$0xf]
        %v332 = vld [vmem:[#allocation2 + $0x4] sm:$0xf]
        %v333 = vld [vmem:[#allocation2 + $0x8] sm:$0xf]
        %v334 = vld [vmem:[#allocation2 + $0xc] sm:$0x1]
        %v335 = vld [vmem:[#allocation4] sm:$0x1]
        %v337 = vlaneseq
        %v338 = vshrl.u32 %v337, 7
        %v339 = vsub.s32 0, %v338
        %v340 = vrot.slane %v335, %v339
        %v470 = vunpack.c.l.b16 %v203
        %v471 = vunpack.c.l.b16 %v204
        %v472 = vunpack.c.l.b16 %v205
        %v473 = vunpack.c.l.b16 %v206
        %v474 = vunpack.c.l.b16 %v207
        %v475 = vunpack.c.l.b16 %v208
        %v476 = vunpack.c.l.b16 %v209
        %v477 = vunpack.c.l.b16 %v210
        %v478 = vunpack.c.l.b16 %v211
        %v479 = vunpack.c.l.b16 %v212
        %v480 = vunpack.c.l.b16 %v213
        %v481 = vunpack.c.l.b16 %v214
        %v482 = vunpack.c.l.b16 %v215
        %v483 = vunpack.c.l.b16 %v216
        %v484 = vunpack.c.l.b16 %v217
        %v485 = vunpack.c.l.b16 %v218
        %v486 = vunpack.c.l.b16 %v219
        %v487 = vunpack.c.l.b16 %v220
        %v488 = vunpack.c.l.b16 %v221
        %v489 = vunpack.c.l.b16 %v222
        %v490 = vunpack.c.l.b16 %v223
        %v491 = vunpack.c.l.b16 %v224
        %v492 = vunpack.c.l.b16 %v225
        %v493 = vunpack.c.l.b16 %v226
        %v494 = vunpack.c.l.b16 %v227
        %v495 = vunpack.c.l.b16 %v228
        %v496 = vunpack.c.l.b16 %v229
        %v497 = vunpack.c.l.b16 %v230
        %v498 = vunpack.c.l.b16 %v231
        %v499 = vunpack.c.l.b16 %v232
        %v500 = vunpack.c.l.b16 %v233
        %v501 = vunpack.c.l.b16 %v234
        %v502 = vunpack.c.l.b16 %v235
        %v503 = vunpack.c.l.b16 %v236
        %v504 = vunpack.c.l.b16 %v237
        %v505 = vunpack.c.l.b16 %v238
        %v506 = vunpack.c.l.b16 %v239
        %v507 = vunpack.c.l.b16 %v240
        %v508 = vunpack.c.l.b16 %v241
        %v509 = vunpack.c.l.b16 %v242
        %v510 = vunpack.c.l.b16 %v243
        %v511 = vunpack.c.l.b16 %v244
        %v512 = vunpack.c.l.b16 %v245
        %v513 = vunpack.c.l.b16 %v246
        %v514 = vunpack.c.l.b16 %v247
        %v515 = vunpack.c.l.b16 %v248
        %v516 = vunpack.c.l.b16 %v249
        %v517 = vunpack.c.l.b16 %v250
        %v518 = vunpack.c.l.b16 %v251
        %v519 = vunpack.c.l.b16 %v252
        %v520 = vunpack.c.l.b16 %v253
        %v521 = vunpack.c.l.b16 %v254
        %v522 = vunpack.c.l.b16 %v255
        %v523 = vunpack.c.l.b16 %v256
        %v524 = vunpack.c.l.b16 %v257
        %v525 = vunpack.c.l.b16 %v258
        %v526 = vunpack.c.l.b16 %v259
        %v527 = vunpack.c.l.b16 %v260
        %v528 = vunpack.c.l.b16 %v261
        %v529 = vunpack.c.l.b16 %v262
        %v530 = vunpack.c.l.b16 %v263
        %v531 = vunpack.c.l.b16 %v264
        %v532 = vunpack.c.l.b16 %v265
        %v533 = vunpack.c.l.b16 %v266
        %v534 = vunpack.c.l.b16 %v267
        %v535 = vunpack.c.l.b16 %v268
        %v536 = vunpack.c.l.b16 %v269
        %v537 = vunpack.c.l.b16 %v270
        %v538 = vunpack.c.l.b16 %v271
        %v539 = vunpack.c.l.b16 %v272
        %v540 = vunpack.c.l.b16 %v273
        %v541 = vunpack.c.l.b16 %v274
        %v542 = vunpack.c.l.b16 %v275
        %v543 = vunpack.c.l.b16 %v276
        %v544 = vunpack.c.l.b16 %v277
        %v545 = vunpack.c.l.b16 %v278
        %v546 = vunpack.c.l.b16 %v279
        %v547 = vunpack.c.l.b16 %v280
        %v548 = vunpack.c.l.b16 %v281
        %v549 = vunpack.c.l.b16 %v282
        %v550 = vunpack.c.l.b16 %v283
        %v551 = vunpack.c.l.b16 %v284
        %v552 = vunpack.c.l.b16 %v285
        %v553 = vunpack.c.l.b16 %v286
        %v554 = vunpack.c.l.b16 %v287
        %v555 = vunpack.c.l.b16 %v288
        %v556 = vunpack.c.l.b16 %v289
        %v557 = vunpack.c.l.b16 %v290
        %v558 = vunpack.c.l.b16 %v291
        %v559 = vunpack.c.l.b16 %v292
        %v560 = vunpack.c.l.b16 %v293
        %v561 = vunpack.c.l.b16 %v294
        %v562 = vunpack.c.l.b16 %v295
        %v563 = vunpack.c.l.b16 %v296
        %v564 = vunpack.c.l.b16 %v297
        %v565 = vunpack.c.l.b16 %v298
        %v566 = vunpack.c.l.b16 %v299
        %v567 = vunpack.c.l.b16 %v300
        %v568 = vunpack.c.l.b16 %v301
        %v569 = vunpack.c.l.b16 %v302
        %v570 = vunpack.c.l.b16 %v303
        %v571 = vunpack.c.l.b16 %v304
        %v572 = vunpack.c.l.b16 %v305
        %v573 = vunpack.c.l.b16 %v306
        %v574 = vunpack.c.l.b16 %v307
        %v575 = vunpack.c.l.b16 %v308
        %v576 = vunpack.c.l.b16 %v309
        %v577 = vunpack.c.l.b16 %v310
        %v578 = vunpack.c.l.b16 %v311
        %v579 = vunpack.c.l.b16 %v312
        %v580 = vunpack.c.l.b16 %v313
        %v581 = vunpack.c.l.b16 %v314
        %v582 = vunpack.c.l.b16 %v315
        %v583 = vunpack.c.l.b16 %v316
        %v584 = vunpack.c.l.b16 %v317
        %v585 = vunpack.c.l.b16 %v318
        %v586 = vunpack.c.l.b16 %v319
        %v587 = vunpack.c.l.b16 %v320
        %v588 = vunpack.c.l.b16 %v321
        %v589 = vunpack.c.l.b16 %v322
        %v590 = vunpack.c.l.b16 %v323
        %v591 = vunpack.c.l.b16 %v324
        %v592 = vunpack.c.l.b16 %v325
        %v593 = vunpack.c.l.b16 %v326
        %v594 = vunpack.c.l.b16 %v327
        %v595 = vunpack.c.l.b16 %v328
        %v596 = vunpack.c.l.b16 %v329
        %v597 = vunpack.c.l.b16 %v330
        %v598 = vpack.c.b16 %v471, %v470
        %v599 = vpack.c.b16 %v473, %v472
        %v600 = vpack.c.b16 %v475, %v474
        %v601 = vpack.c.b16 %v477, %v476
        %v602 = vpack.c.b16 %v479, %v478
        %v603 = vpack.c.b16 %v481, %v480
        %v604 = vpack.c.b16 %v483, %v482
        %v605 = vpack.c.b16 %v485, %v484
        %v606 = vpack.c.b16 %v487, %v486
        %v607 = vpack.c.b16 %v489, %v488
        %v608 = vpack.c.b16 %v491, %v490
        %v609 = vpack.c.b16 %v493, %v492
        %v610 = vpack.c.b16 %v495, %v494
        %v611 = vpack.c.b16 %v497, %v496
        %v612 = vpack.c.b16 %v499, %v498
        %v613 = vpack.c.b16 %v501, %v500
        %v614 = vpack.c.b16 %v503, %v502
        %v615 = vpack.c.b16 %v505, %v504
        %v616 = vpack.c.b16 %v507, %v506
        %v617 = vpack.c.b16 %v509, %v508
        %v618 = vpack.c.b16 %v511, %v510
        %v619 = vpack.c.b16 %v513, %v512
        %v620 = vpack.c.b16 %v515, %v514
        %v621 = vpack.c.b16 %v517, %v516
        %v622 = vpack.c.b16 %v519, %v518
        %v623 = vpack.c.b16 %v521, %v520
        %v624 = vpack.c.b16 %v523, %v522
        %v625 = vpack.c.b16 %v525, %v524
        %v626 = vpack.c.b16 %v527, %v526
        %v627 = vpack.c.b16 %v529, %v528
        %v628 = vpack.c.b16 %v531, %v530
        %v629 = vpack.c.b16 %v533, %v532
        %v630 = vpack.c.b16 %v535, %v534
        %v631 = vpack.c.b16 %v537, %v536
        %v632 = vpack.c.b16 %v539, %v538
        %v633 = vpack.c.b16 %v541, %v540
        %v634 = vpack.c.b16 %v543, %v542
        %v635 = vpack.c.b16 %v545, %v544
        %v636 = vpack.c.b16 %v547, %v546
        %v637 = vpack.c.b16 %v549, %v548
        %v638 = vpack.c.b16 %v551, %v550
        %v639 = vpack.c.b16 %v553, %v552
        %v640 = vpack.c.b16 %v555, %v554
        %v641 = vpack.c.b16 %v557, %v556
        %v642 = vpack.c.b16 %v559, %v558
        %v643 = vpack.c.b16 %v561, %v560
        %v644 = vpack.c.b16 %v563, %v562
        %v645 = vpack.c.b16 %v565, %v564
        %v646 = vpack.c.b16 %v567, %v566
        %v647 = vpack.c.b16 %v569, %v568
        %v648 = vpack.c.b16 %v571, %v570
        %v649 = vpack.c.b16 %v573, %v572
        %v650 = vpack.c.b16 %v575, %v574
        %v651 = vpack.c.b16 %v577, %v576
        %v652 = vpack.c.b16 %v579, %v578
        %v653 = vpack.c.b16 %v581, %v580
        %v654 = vpack.c.b16 %v583, %v582
        %v655 = vpack.c.b16 %v585, %v584
        %v656 = vpack.c.b16 %v587, %v586
        %v657 = vpack.c.b16 %v589, %v588
        %v658 = vpack.c.b16 %v591, %v590
        %v659 = vpack.c.b16 %v593, %v592
        %v660 = vpack.c.b16 %v595, %v594
        %v661 = vpack.c.b16 %v597, %v596
        %v666 = vunpack.c.l.b16 %v331
        %v667 = vunpack.c.l.b16 %v332
        %v668 = vunpack.c.l.b16 %v333
        %v669 = vunpack.c.l.b16 %v334
        %v670 = vpack.c.b16 %v667, %v666
        %v671 = vpack.c.b16 %v669, %v668
        %vm673 = vcmask 203776
        %v675 = vsel %vm673, %v598, 0
        %v678 = vsel %vm673, %v599, 0
        %v681 = vsel %vm673, %v600, 0
        %v684 = vsel %vm673, %v601, 0
        %v687 = vsel %vm673, %v602, 0
        %v690 = vsel %vm673, %v603, 0
        %v693 = vsel %vm673, %v604, 0
        %v696 = vsel %vm673, %v605, 0
        %v699 = vsel %vm673, %v606, 0
        %v702 = vsel %vm673, %v607, 0
        %v705 = vsel %vm673, %v608, 0
        %v708 = vsel %vm673, %v609, 0
        %v711 = vsel %vm673, %v610, 0
        %v714 = vsel %vm673, %v611, 0
        %v717 = vsel %vm673, %v612, 0
        %v720 = vsel %vm673, %v613, 0
        %v723 = vsel %vm673, %v614, 0
        %v726 = vsel %vm673, %v615, 0
        %v729 = vsel %vm673, %v616, 0
        %v732 = vsel %vm673, %v617, 0
        %v735 = vsel %vm673, %v618, 0
        %v738 = vsel %vm673, %v619, 0
        %v741 = vsel %vm673, %v620, 0
        %v744 = vsel %vm673, %v621, 0
        %v747 = vsel %vm673, %v622, 0
        %v750 = vsel %vm673, %v623, 0
        %v753 = vsel %vm673, %v624, 0
        %v756 = vsel %vm673, %v625, 0
        %v759 = vsel %vm673, %v626, 0
        %v762 = vsel %vm673, %v627, 0
        %v765 = vsel %vm673, %v628, 0
        %v768 = vsel %vm673, %v629, 0
        %v771 = vsel %vm673, %v630, 0
        %v774 = vsel %vm673, %v631, 0
        %v777 = vsel %vm673, %v632, 0
        %v780 = vsel %vm673, %v633, 0
        %v783 = vsel %vm673, %v634, 0
        %v786 = vsel %vm673, %v635, 0
        %v789 = vsel %vm673, %v636, 0
        %v792 = vsel %vm673, %v637, 0
        %v795 = vsel %vm673, %v638, 0
        %v798 = vsel %vm673, %v639, 0
        %v801 = vsel %vm673, %v640, 0
        %v804 = vsel %vm673, %v641, 0
        %v807 = vsel %vm673, %v642, 0
        %v810 = vsel %vm673, %v643, 0
        %v813 = vsel %vm673, %v644, 0
        %v816 = vsel %vm673, %v645, 0
        %v819 = vsel %vm673, %v646, 0
        %v822 = vsel %vm673, %v647, 0
        %v825 = vsel %vm673, %v648, 0
        %v828 = vsel %vm673, %v649, 0
        %v831 = vsel %vm673, %v650, 0
        %v834 = vsel %vm673, %v651, 0
        %v837 = vsel %vm673, %v652, 0
        %v840 = vsel %vm673, %v653, 0
        %v843 = vsel %vm673, %v654, 0
        %v846 = vsel %vm673, %v655, 0
        %v849 = vsel %vm673, %v656, 0
        %v852 = vsel %vm673, %v657, 0
        %v855 = vsel %vm673, %v658, 0
        %v858 = vsel %vm673, %v659, 0
        %v861 = vsel %vm673, %v660, 0
        %v864 = vsel %vm673, %v661, 0
        %vm866 = vcmask 1043456
        %vm867 = vcmask 1044480
        %v868 = vsel %vm866, 4294967295, 65535
        %v869 = vsel %vm867, %v868, 0
        %v871 = vand.u32 %v671, %v869
        %873 = vmatprep.subr.bf16.mxu0 0
        %874 = vmatpush1.bf16.msra.mxu0 %v670
        %875 = vmatprep.subr.bf16.mxu0 0
        %876 = vmatpush1.bf16.msra.mxu0 %v871
        %877 = vmatprep.subr.bf16.mxu0 0
        %878 = vmatpush1.bf16.msra.mxu0 0
        %879 = vmatprep.subr.bf16.mxu0 0
        %880 = vmatpush1.bf16.msra.mxu0 0
        %881 = vmatprep.subr.bf16.mxu0 0
        %882 = vmatpush1.bf16.msra.mxu0 0
        %883 = vmatprep.subr.bf16.mxu0 0
        %884 = vmatpush1.bf16.msra.mxu0 0
        %885 = vmatprep.subr.bf16.mxu0 0
        %886 = vmatpush1.bf16.msra.mxu0 0
        %887 = vmatprep.subr.bf16.mxu0 0
        %888 = vmatpush1.bf16.msra.mxu0 0
        %889 = vmatprep.subr.bf16.mxu0 0
        %890 = vmatpush1.bf16.msra.mxu0 0
        %891 = vmatprep.subr.bf16.mxu0 0
        %892 = vmatpush1.bf16.msra.mxu0 0
        %893 = vmatprep.subr.bf16.mxu0 0
        %894 = vmatpush1.bf16.msra.mxu0 0
        %895 = vmatprep.subr.bf16.mxu0 0
        %896 = vmatpush1.bf16.msra.mxu0 0
        %897 = vmatprep.subr.bf16.mxu0 0
        %898 = vmatpush1.bf16.msra.mxu0 0
        %899 = vmatprep.subr.bf16.mxu0 0
        %900 = vmatpush1.bf16.msra.mxu0 0
        %901 = vmatprep.subr.bf16.mxu0 0
        %902 = vmatpush1.bf16.msra.mxu0 0
        %903 = vmatprep.subr.bf16.mxu0 0
        %904 = vmatpush1.bf16.msra.mxu0 0
        %905 = vmatprep.mubr.bf16.mxu0 0
        %906 = vmatmul.mubr.bf16.gmra.mrb[0].mxu0 %v675
        %v907 = vpop.f32.mrb[0].mxu0
        %v908 = vadd.f32 %v340, %v907
        %v909 = vpop.f32.mrb[0].mxu0
        %v910 = vpop.f32.mrb[0].mxu0
        %v911 = vadd.f32 %v340, %v910
        %v912 = vpop.f32.mrb[0].mxu0
        %913 = vmatprep.mubr.bf16.mxu0 0
        %914 = vmatmul.mubr.bf16.gmra.mrb[0].mxu0 %v678
        %v915 = vpop.f32.mrb[0].mxu0
        %v916 = vadd.f32 %v340, %v915
        %v917 = vpop.f32.mrb[0].mxu0
        %v918 = vpop.f32.mrb[0].mxu0
        %v919 = vadd.f32 %v340, %v918
        %v920 = vpop.f32.mrb[0].mxu0
        %921 = vmatprep.mubr.bf16.mxu0 0
        %922 = vmatmul.mubr.bf16.gmra.mrb[0].mxu0 %v681
        %v923 = vpop.f32.mrb[0].mxu0
        %v924 = vadd.f32 %v340, %v923
        %v925 = vpop.f32.mrb[0].mxu0
        %v926 = vpop.f32.mrb[0].mxu0
        %v927 = vadd.f32 %v340, %v926
        %v928 = vpop.f32.mrb[0].mxu0
        %929 = vmatprep.mubr.bf16.mxu0 0
        %930 = vmatmul.mubr.bf16.gmra.mrb[0].mxu0 %v684
        %v931 = vpop.f32.mrb[0].mxu0
        %v932 = vadd.f32 %v340, %v931
        %v933 = vpop.f32.mrb[0].mxu0
        %v934 = vpop.f32.mrb[0].mxu0
        %v935 = vadd.f32 %v340, %v934
        %v936 = vpop.f32.mrb[0].mxu0
        %937 = vmatprep.mubr.bf16.mxu0 0
        %938 = vmatmul.mubr.bf16.gmra.mrb[0].mxu0 %v687
        %v939 = vpop.f32.mrb[0].mxu0
        %v940 = vadd.f32 %v340, %v939
        %v941 = vpop.f32.mrb[0].mxu0
        %v942 = vpop.f32.mrb[0].mxu0
        %v943 = vadd.f32 %v340, %v942
        %v944 = vpop.f32.mrb[0].mxu0
        %945 = vmatprep.mubr.bf16.mxu0 0
        %946 = vmatmul.mubr.bf16.gmra.mrb[0].mxu0 %v690
        %v947 = vpop.f32.mrb[0].mxu0
        %v948 = vadd.f32 %v340, %v947
        %v949 = vpop.f32.mrb[0].mxu0
        %v950 = vpop.f32.mrb[0].mxu0
        %v951 = vadd.f32 %v340, %v950
        %v952 = vpop.f32.mrb[0].mxu0
        %953 = vmatprep.mubr.bf16.mxu0 0
        %954 = vmatmul.mubr.bf16.gmra.mrb[0].mxu0 %v693
        %v955 = vpop.f32.mrb[0].mxu0
        %v956 = vadd.f32 %v340, %v955
        %v957 = vpop.f32.mrb[0].mxu0
        %v958 = vpop.f32.mrb[0].mxu0
        %v959 = vadd.f32 %v340, %v958
        %v960 = vpop.f32.mrb[0].mxu0
        %961 = vmatprep.mubr.bf16.mxu0 0
        %962 = vmatmul.mubr.bf16.gmra.mrb[0].mxu0 %v696
        %v963 = vpop.f32.mrb[0].mxu0
        %v964 = vadd.f32 %v340, %v963
        %v965 = vpop.f32.mrb[0].mxu0
        %v966 = vpop.f32.mrb[0].mxu0
        %v967 = vadd.f32 %v340, %v966
        %v968 = vpop.f32.mrb[0].mxu0
        %969 = vmatprep.mubr.bf16.mxu0 0
        %970 = vmatmul.mubr.bf16.gmra.mrb[0].mxu0 %v699
        %v971 = vpop.f32.mrb[0].mxu0
        %v972 = vadd.f32 %v340, %v971
        %v973 = vpop.f32.mrb[0].mxu0
        %v974 = vpop.f32.mrb[0].mxu0
        %v975 = vadd.f32 %v340, %v974
        %v976 = vpop.f32.mrb[0].mxu0
        %977 = vmatprep.mubr.bf16.mxu0 0
        %978 = vmatmul.mubr.bf16.gmra.mrb[0].mxu0 %v702
        %v979 = vpop.f32.mrb[0].mxu0
        %v980 = vadd.f32 %v340, %v979
        %v981 = vpop.f32.mrb[0].mxu0
        %v982 = vpop.f32.mrb[0].mxu0
        %v983 = vadd.f32 %v340, %v982
        %v984 = vpop.f32.mrb[0].mxu0
        %985 = vmatprep.mubr.bf16.mxu0 0
        %986 = vmatmul.mubr.bf16.gmra.mrb[0].mxu0 %v705
        %v987 = vpop.f32.mrb[0].mxu0
        %v988 = vadd.f32 %v340, %v987
        %v989 = vpop.f32.mrb[0].mxu0
        %v990 = vpop.f32.mrb[0].mxu0
        %v991 = vadd.f32 %v340, %v990
        %v992 = vpop.f32.mrb[0].mxu0
        %993 = vmatprep.mubr.bf16.mxu0 0
        %994 = vmatmul.mubr.bf16.gmra.mrb[0].mxu0 %v708
        %v995 = vpop.f32.mrb[0].mxu0
        %v996 = vadd.f32 %v340, %v995
        %v997 = vpop.f32.mrb[0].mxu0
        %v998 = vpop.f32.mrb[0].mxu0
        %v999 = vadd.f32 %v340, %v998
        %v1000 = vpop.f32.mrb[0].mxu0
        %1001 = vmatprep.mubr.bf16.mxu0 0
        %1002 = vmatmul.mubr.bf16.gmra.mrb[0].mxu0 %v711
        %v1003 = vpop.f32.mrb[0].mxu0
        %v1004 = vadd.f32 %v340, %v1003
        %v1005 = vpop.f32.mrb[0].mxu0
        %v1006 = vpop.f32.mrb[0].mxu0
        %v1007 = vadd.f32 %v340, %v1006
        %v1008 = vpop.f32.mrb[0].mxu0
        %1009 = vmatprep.mubr.bf16.mxu0 0
        %1010 = vmatmul.mubr.bf16.gmra.mrb[0].mxu0 %v714
        %v1011 = vpop.f32.mrb[0].mxu0
        %v1012 = vadd.f32 %v340, %v1011
        %v1013 = vpop.f32.mrb[0].mxu0
        %v1014 = vpop.f32.mrb[0].mxu0
        %v1015 = vadd.f32 %v340, %v1014
        %v1016 = vpop.f32.mrb[0].mxu0
        %1017 = vmatprep.mubr.bf16.mxu0 0
        %1018 = vmatmul.mubr.bf16.gmra.mrb[0].mxu0 %v717
        %v1019 = vpop.f32.mrb[0].mxu0
        %v1020 = vadd.f32 %v340, %v1019
        %v1021 = vpop.f32.mrb[0].mxu0
        %v1022 = vpop.f32.mrb[0].mxu0
        %v1023 = vadd.f32 %v340, %v1022
        %v1024 = vpop.f32.mrb[0].mxu0
        %1025 = vmatprep.mubr.bf16.mxu0 0
        %1026 = vmatmul.mubr.bf16.gmra.mrb[0].mxu0 %v720
        %v1027 = vpop.f32.mrb[0].mxu0
        %v1028 = vadd.f32 %v340, %v1027
        %v1029 = vpop.f32.mrb[0].mxu0
        %v1030 = vpop.f32.mrb[0].mxu0
        %v1031 = vadd.f32 %v340, %v1030
        %v1032 = vpop.f32.mrb[0].mxu0
        %1033 = vmatprep.mubr.bf16.mxu0 0
        %1034 = vmatmul.mubr.bf16.gmra.mrb[0].mxu0 %v723
        %v1035 = vpop.f32.mrb[0].mxu0
        %v1036 = vadd.f32 %v340, %v1035
        %v1037 = vpop.f32.mrb[0].mxu0
        %v1038 = vpop.f32.mrb[0].mxu0
        %v1039 = vadd.f32 %v340, %v1038
        %v1040 = vpop.f32.mrb[0].mxu0
        %1041 = vmatprep.mubr.bf16.mxu0 0
        %1042 = vmatmul.mubr.bf16.gmra.mrb[0].mxu0 %v726
        %v1043 = vpop.f32.mrb[0].mxu0
        %v1044 = vadd.f32 %v340, %v1043
        %v1045 = vpop.f32.mrb[0].mxu0
        %v1046 = vpop.f32.mrb[0].mxu0
        %v1047 = vadd.f32 %v340, %v1046
        %v1048 = vpop.f32.mrb[0].mxu0
        %1049 = vmatprep.mubr.bf16.mxu0 0
        %1050 = vmatmul.mubr.bf16.gmra.mrb[0].mxu0 %v729
        %v1051 = vpop.f32.mrb[0].mxu0
        %v1052 = vadd.f32 %v340, %v1051
        %v1053 = vpop.f32.mrb[0].mxu0
        %v1054 = vpop.f32.mrb[0].mxu0
        %v1055 = vadd.f32 %v340, %v1054
        %v1056 = vpop.f32.mrb[0].mxu0
        %1057 = vmatprep.mubr.bf16.mxu0 0
        %1058 = vmatmul.mubr.bf16.gmra.mrb[0].mxu0 %v732
        %v1059 = vpop.f32.mrb[0].mxu0
        %v1060 = vadd.f32 %v340, %v1059
        %v1061 = vpop.f32.mrb[0].mxu0
        %v1062 = vpop.f32.mrb[0].mxu0
        %v1063 = vadd.f32 %v340, %v1062
        %v1064 = vpop.f32.mrb[0].mxu0
        %1065 = vmatprep.mubr.bf16.mxu0 0
        %1066 = vmatmul.mubr.bf16.gmra.mrb[0].mxu0 %v735
        %v1067 = vpop.f32.mrb[0].mxu0
        %v1068 = vadd.f32 %v340, %v1067
        %v1069 = vpop.f32.mrb[0].mxu0
        %v1070 = vpop.f32.mrb[0].mxu0
        %v1071 = vadd.f32 %v340, %v1070
        %v1072 = vpop.f32.mrb[0].mxu0
        %1073 = vmatprep.mubr.bf16.mxu0 0
        %1074 = vmatmul.mubr.bf16.gmra.mrb[0].mxu0 %v738
        %v1075 = vpop.f32.mrb[0].mxu0
        %v1076 = vadd.f32 %v340, %v1075
        %v1077 = vpop.f32.mrb[0].mxu0
        %v1078 = vpop.f32.mrb[0].mxu0
        %v1079 = vadd.f32 %v340, %v1078
        %v1080 = vpop.f32.mrb[0].mxu0
        %1081 = vmatprep.mubr.bf16.mxu0 0
        %1082 = vmatmul.mubr.bf16.gmra.mrb[0].mxu0 %v741
        %v1083 = vpop.f32.mrb[0].mxu0
        %v1084 = vadd.f32 %v340, %v1083
        %v1085 = vpop.f32.mrb[0].mxu0
        %v1086 = vpop.f32.mrb[0].mxu0
        %v1087 = vadd.f32 %v340, %v1086
        %v1088 = vpop.f32.mrb[0].mxu0
        %1089 = vmatprep.mubr.bf16.mxu0 0
        %1090 = vmatmul.mubr.bf16.gmra.mrb[0].mxu0 %v744
        %v1091 = vpop.f32.mrb[0].mxu0
        %v1092 = vadd.f32 %v340, %v1091
        %v1093 = vpop.f32.mrb[0].mxu0
        %v1094 = vpop.f32.mrb[0].mxu0
        %v1095 = vadd.f32 %v340, %v1094
        %v1096 = vpop.f32.mrb[0].mxu0
        %1097 = vmatprep.mubr.bf16.mxu0 0
        %1098 = vmatmul.mubr.bf16.gmra.mrb[0].mxu0 %v747
        %v1099 = vpop.f32.mrb[0].mxu0
        %v1100 = vadd.f32 %v340, %v1099
        %v1101 = vpop.f32.mrb[0].mxu0
        %v1102 = vpop.f32.mrb[0].mxu0
        %v1103 = vadd.f32 %v340, %v1102
        %v1104 = vpop.f32.mrb[0].mxu0
        %1105 = vmatprep.mubr.bf16.mxu0 0
        %1106 = vmatmul.mubr.bf16.gmra.mrb[0].mxu0 %v750
        %v1107 = vpop.f32.mrb[0].mxu0
        %v1108 = vadd.f32 %v340, %v1107
        %v1109 = vpop.f32.mrb[0].mxu0
        %v1110 = vpop.f32.mrb[0].mxu0
        %v1111 = vadd.f32 %v340, %v1110
        %v1112 = vpop.f32.mrb[0].mxu0
        %1113 = vmatprep.mubr.bf16.mxu0 0
        %1114 = vmatmul.mubr.bf16.gmra.mrb[0].mxu0 %v753
        %v1115 = vpop.f32.mrb[0].mxu0
        %v1116 = vadd.f32 %v340, %v1115
        %v1117 = vpop.f32.mrb[0].mxu0
        %v1118 = vpop.f32.mrb[0].mxu0
        %v1119 = vadd.f32 %v340, %v1118
        %v1120 = vpop.f32.mrb[0].mxu0
        %1121 = vmatprep.mubr.bf16.mxu0 0
        %1122 = vmatmul.mubr.bf16.gmra.mrb[0].mxu0 %v756
        %v1123 = vpop.f32.mrb[0].mxu0
        %v1124 = vadd.f32 %v340, %v1123
        %v1125 = vpop.f32.mrb[0].mxu0
        %v1126 = vpop.f32.mrb[0].mxu0
        %v1127 = vadd.f32 %v340, %v1126
        %v1128 = vpop.f32.mrb[0].mxu0
        %1129 = vmatprep.mubr.bf16.mxu0 0
        %1130 = vmatmul.mubr.bf16.gmra.mrb[0].mxu0 %v759
        %v1131 = vpop.f32.mrb[0].mxu0
        %v1132 = vadd.f32 %v340, %v1131
        %v1133 = vpop.f32.mrb[0].mxu0
        %v1134 = vpop.f32.mrb[0].mxu0
        %v1135 = vadd.f32 %v340, %v1134
        %v1136 = vpop.f32.mrb[0].mxu0
        %1137 = vmatprep.mubr.bf16.mxu0 0
        %1138 = vmatmul.mubr.bf16.gmra.mrb[0].mxu0 %v762
        %v1139 = vpop.f32.mrb[0].mxu0
        %v1140 = vadd.f32 %v340, %v1139
        %v1141 = vpop.f32.mrb[0].mxu0
        %v1142 = vpop.f32.mrb[0].mxu0
        %v1143 = vadd.f32 %v340, %v1142
        %v1144 = vpop.f32.mrb[0].mxu0
        %1145 = vmatprep.mubr.bf16.mxu0 0
        %1146 = vmatmul.mubr.bf16.gmra.mrb[0].mxu0 %v765
        %v1147 = vpop.f32.mrb[0].mxu0
        %v1148 = vadd.f32 %v340, %v1147
        %v1149 = vpop.f32.mrb[0].mxu0
        %v1150 = vpop.f32.mrb[0].mxu0
        %v1151 = vadd.f32 %v340, %v1150
        %v1152 = vpop.f32.mrb[0].mxu0
        %1153 = vmatprep.mubr.bf16.mxu0 0
        %1154 = vmatmul.mubr.bf16.gmra.mrb[0].mxu0 %v768
        %v1155 = vpop.f32.mrb[0].mxu0
        %v1156 = vadd.f32 %v340, %v1155
        %v1157 = vpop.f32.mrb[0].mxu0
        %v1158 = vpop.f32.mrb[0].mxu0
        %v1159 = vadd.f32 %v340, %v1158
        %v1160 = vpop.f32.mrb[0].mxu0
        %1161 = vmatprep.mubr.bf16.mxu0 0
        %1162 = vmatmul.mubr.bf16.gmra.mrb[0].mxu0 %v771
        %v1163 = vpop.f32.mrb[0].mxu0
        %v1164 = vadd.f32 %v340, %v1163
        %v1165 = vpop.f32.mrb[0].mxu0
        %v1166 = vpop.f32.mrb[0].mxu0
        %v1167 = vadd.f32 %v340, %v1166
        %v1168 = vpop.f32.mrb[0].mxu0
        %1169 = vmatprep.mubr.bf16.mxu0 0
        %1170 = vmatmul.mubr.bf16.gmra.mrb[0].mxu0 %v774
        %v1171 = vpop.f32.mrb[0].mxu0
        %v1172 = vadd.f32 %v340, %v1171
        %v1173 = vpop.f32.mrb[0].mxu0
        %v1174 = vpop.f32.mrb[0].mxu0
        %v1175 = vadd.f32 %v340, %v1174
        %v1176 = vpop.f32.mrb[0].mxu0
        %1177 = vmatprep.mubr.bf16.mxu0 0
        %1178 = vmatmul.mubr.bf16.gmra.mrb[0].mxu0 %v777
        %v1179 = vpop.f32.mrb[0].mxu0
        %v1180 = vadd.f32 %v340, %v1179
        %v1181 = vpop.f32.mrb[0].mxu0
        %v1182 = vpop.f32.mrb[0].mxu0
        %v1183 = vadd.f32 %v340, %v1182
        %v1184 = vpop.f32.mrb[0].mxu0
        %1185 = vmatprep.mubr.bf16.mxu0 0
        %1186 = vmatmul.mubr.bf16.gmra.mrb[0].mxu0 %v780
        %v1187 = vpop.f32.mrb[0].mxu0
        %v1188 = vadd.f32 %v340, %v1187
        %v1189 = vpop.f32.mrb[0].mxu0
        %v1190 = vpop.f32.mrb[0].mxu0
        %v1191 = vadd.f32 %v340, %v1190
        %v1192 = vpop.f32.mrb[0].mxu0
        %1193 = vmatprep.mubr.bf16.mxu0 0
        %1194 = vmatmul.mubr.bf16.gmra.mrb[0].mxu0 %v783
        %v1195 = vpop.f32.mrb[0].mxu0
        %v1196 = vadd.f32 %v340, %v1195
        %v1197 = vpop.f32.mrb[0].mxu0
        %v1198 = vpop.f32.mrb[0].mxu0
        %v1199 = vadd.f32 %v340, %v1198
        %v1200 = vpop.f32.mrb[0].mxu0
        %1201 = vmatprep.mubr.bf16.mxu0 0
        %1202 = vmatmul.mubr.bf16.gmra.mrb[0].mxu0 %v786
        %v1203 = vpop.f32.mrb[0].mxu0
        %v1204 = vadd.f32 %v340, %v1203
        %v1205 = vpop.f32.mrb[0].mxu0
        %v1206 = vpop.f32.mrb[0].mxu0
        %v1207 = vadd.f32 %v340, %v1206
        %v1208 = vpop.f32.mrb[0].mxu0
        %1209 = vmatprep.mubr.bf16.mxu0 0
        %1210 = vmatmul.mubr.bf16.gmra.mrb[0].mxu0 %v789
        %v1211 = vpop.f32.mrb[0].mxu0
        %v1212 = vadd.f32 %v340, %v1211
        %v1213 = vpop.f32.mrb[0].mxu0
        %v1214 = vpop.f32.mrb[0].mxu0
        %v1215 = vadd.f32 %v340, %v1214
        %v1216 = vpop.f32.mrb[0].mxu0
        %1217 = vmatprep.mubr.bf16.mxu0 0
        %1218 = vmatmul.mubr.bf16.gmra.mrb[0].mxu0 %v792
        %v1219 = vpop.f32.mrb[0].mxu0
        %v1220 = vadd.f32 %v340, %v1219
        %v1221 = vpop.f32.mrb[0].mxu0
        %v1222 = vpop.f32.mrb[0].mxu0
        %v1223 = vadd.f32 %v340, %v1222
        %v1224 = vpop.f32.mrb[0].mxu0
        %1225 = vmatprep.mubr.bf16.mxu0 0
        %1226 = vmatmul.mubr.bf16.gmra.mrb[0].mxu0 %v795
        %v1227 = vpop.f32.mrb[0].mxu0
        %v1228 = vadd.f32 %v340, %v1227
        %v1229 = vpop.f32.mrb[0].mxu0
        %v1230 = vpop.f32.mrb[0].mxu0
        %v1231 = vadd.f32 %v340, %v1230
        %v1232 = vpop.f32.mrb[0].mxu0
        %1233 = vmatprep.mubr.bf16.mxu0 0
        %1234 = vmatmul.mubr.bf16.gmra.mrb[0].mxu0 %v798
        %v1235 = vpop.f32.mrb[0].mxu0
        %v1236 = vadd.f32 %v340, %v1235
        %v1237 = vpop.f32.mrb[0].mxu0
        %v1238 = vpop.f32.mrb[0].mxu0
        %v1239 = vadd.f32 %v340, %v1238
        %v1240 = vpop.f32.mrb[0].mxu0
        %1241 = vmatprep.mubr.bf16.mxu0 0
        %1242 = vmatmul.mubr.bf16.gmra.mrb[0].mxu0 %v801
        %v1243 = vpop.f32.mrb[0].mxu0
        %v1244 = vadd.f32 %v340, %v1243
        %v1245 = vpop.f32.mrb[0].mxu0
        %v1246 = vpop.f32.mrb[0].mxu0
        %v1247 = vadd.f32 %v340, %v1246
        %v1248 = vpop.f32.mrb[0].mxu0
        %1249 = vmatprep.mubr.bf16.mxu0 0
        %1250 = vmatmul.mubr.bf16.gmra.mrb[0].mxu0 %v804
        %v1251 = vpop.f32.mrb[0].mxu0
        %v1252 = vadd.f32 %v340, %v1251
        %v1253 = vpop.f32.mrb[0].mxu0
        %v1254 = vpop.f32.mrb[0].mxu0
        %v1255 = vadd.f32 %v340, %v1254
        %v1256 = vpop.f32.mrb[0].mxu0
        %1257 = vmatprep.mubr.bf16.mxu0 0
        %1258 = vmatmul.mubr.bf16.gmra.mrb[0].mxu0 %v807
        %v1259 = vpop.f32.mrb[0].mxu0
        %v1260 = vadd.f32 %v340, %v1259
        %v1261 = vpop.f32.mrb[0].mxu0
        %v1262 = vpop.f32.mrb[0].mxu0
        %v1263 = vadd.f32 %v340, %v1262
        %v1264 = vpop.f32.mrb[0].mxu0
        %1265 = vmatprep.mubr.bf16.mxu0 0
        %1266 = vmatmul.mubr.bf16.gmra.mrb[0].mxu0 %v810
        %v1267 = vpop.f32.mrb[0].mxu0
        %v1268 = vadd.f32 %v340, %v1267
        %v1269 = vpop.f32.mrb[0].mxu0
        %v1270 = vpop.f32.mrb[0].mxu0
        %v1271 = vadd.f32 %v340, %v1270
        %v1272 = vpop.f32.mrb[0].mxu0
        %1273 = vmatprep.mubr.bf16.mxu0 0
        %1274 = vmatmul.mubr.bf16.gmra.mrb[0].mxu0 %v813
        %v1275 = vpop.f32.mrb[0].mxu0
        %v1276 = vadd.f32 %v340, %v1275
        %v1277 = vpop.f32.mrb[0].mxu0
        %v1278 = vpop.f32.mrb[0].mxu0
        %v1279 = vadd.f32 %v340, %v1278
        %v1280 = vpop.f32.mrb[0].mxu0
        %1281 = vmatprep.mubr.bf16.mxu0 0
        %1282 = vmatmul.mubr.bf16.gmra.mrb[0].mxu0 %v816
        %v1283 = vpop.f32.mrb[0].mxu0
        %v1284 = vadd.f32 %v340, %v1283
        %v1285 = vpop.f32.mrb[0].mxu0
        %v1286 = vpop.f32.mrb[0].mxu0
        %v1287 = vadd.f32 %v340, %v1286
        %v1288 = vpop.f32.mrb[0].mxu0
        %1289 = vmatprep.mubr.bf16.mxu0 0
        %1290 = vmatmul.mubr.bf16.gmra.mrb[0].mxu0 %v819
        %v1291 = vpop.f32.mrb[0].mxu0
        %v1292 = vadd.f32 %v340, %v1291
        %v1293 = vpop.f32.mrb[0].mxu0
        %v1294 = vpop.f32.mrb[0].mxu0
        %v1295 = vadd.f32 %v340, %v1294
        %v1296 = vpop.f32.mrb[0].mxu0
        %1297 = vmatprep.mubr.bf16.mxu0 0
        %1298 = vmatmul.mubr.bf16.gmra.mrb[0].mxu0 %v822
        %v1299 = vpop.f32.mrb[0].mxu0
        %v1300 = vadd.f32 %v340, %v1299
        %v1301 = vpop.f32.mrb[0].mxu0
        %v1302 = vpop.f32.mrb[0].mxu0
        %v1303 = vadd.f32 %v340, %v1302
        %v1304 = vpop.f32.mrb[0].mxu0
        %1305 = vmatprep.mubr.bf16.mxu0 0
        %1306 = vmatmul.mubr.bf16.gmra.mrb[0].mxu0 %v825
        %v1307 = vpop.f32.mrb[0].mxu0
        %v1308 = vadd.f32 %v340, %v1307
        %v1309 = vpop.f32.mrb[0].mxu0
        %v1310 = vpop.f32.mrb[0].mxu0
        %v1311 = vadd.f32 %v340, %v1310
        %v1312 = vpop.f32.mrb[0].mxu0
        %1313 = vmatprep.mubr.bf16.mxu0 0
        %1314 = vmatmul.mubr.bf16.gmra.mrb[0].mxu0 %v828
        %v1315 = vpop.f32.mrb[0].mxu0
        %v1316 = vadd.f32 %v340, %v1315
        %v1317 = vpop.f32.mrb[0].mxu0
        %v1318 = vpop.f32.mrb[0].mxu0
        %v1319 = vadd.f32 %v340, %v1318
        %v1320 = vpop.f32.mrb[0].mxu0
        %1321 = vmatprep.mubr.bf16.mxu0 0
        %1322 = vmatmul.mubr.bf16.gmra.mrb[0].mxu0 %v831
        %v1323 = vpop.f32.mrb[0].mxu0
        %v1324 = vadd.f32 %v340, %v1323
        %v1325 = vpop.f32.mrb[0].mxu0
        %v1326 = vpop.f32.mrb[0].mxu0
        %v1327 = vadd.f32 %v340, %v1326
        %v1328 = vpop.f32.mrb[0].mxu0
        %1329 = vmatprep.mubr.bf16.mxu0 0
        %1330 = vmatmul.mubr.bf16.gmra.mrb[0].mxu0 %v834
        %v1331 = vpop.f32.mrb[0].mxu0
        %v1332 = vadd.f32 %v340, %v1331
        %v1333 = vpop.f32.mrb[0].mxu0
        %v1334 = vpop.f32.mrb[0].mxu0
        %v1335 = vadd.f32 %v340, %v1334
        %v1336 = vpop.f32.mrb[0].mxu0
        %1337 = vmatprep.mubr.bf16.mxu0 0
        %1338 = vmatmul.mubr.bf16.gmra.mrb[0].mxu0 %v837
        %v1339 = vpop.f32.mrb[0].mxu0
        %v1340 = vadd.f32 %v340, %v1339
        %v1341 = vpop.f32.mrb[0].mxu0
        %v1342 = vpop.f32.mrb[0].mxu0
        %v1343 = vadd.f32 %v340, %v1342
        %v1344 = vpop.f32.mrb[0].mxu0
        %1345 = vmatprep.mubr.bf16.mxu0 0
        %1346 = vmatmul.mubr.bf16.gmra.mrb[0].mxu0 %v840
        %v1347 = vpop.f32.mrb[0].mxu0
        %v1348 = vadd.f32 %v340, %v1347
        %v1349 = vpop.f32.mrb[0].mxu0
        %v1350 = vpop.f32.mrb[0].mxu0
        %v1351 = vadd.f32 %v340, %v1350
        %v1352 = vpop.f32.mrb[0].mxu0
        %1353 = vmatprep.mubr.bf16.mxu0 0
        %1354 = vmatmul.mubr.bf16.gmra.mrb[0].mxu0 %v843
        %v1355 = vpop.f32.mrb[0].mxu0
        %v1356 = vadd.f32 %v340, %v1355
        %v1357 = vpop.f32.mrb[0].mxu0
        %v1358 = vpop.f32.mrb[0].mxu0
        %v1359 = vadd.f32 %v340, %v1358
        %v1360 = vpop.f32.mrb[0].mxu0
        %1361 = vmatprep.mubr.bf16.mxu0 0
        %1362 = vmatmul.mubr.bf16.gmra.mrb[0].mxu0 %v846
        %v1363 = vpop.f32.mrb[0].mxu0
        %v1364 = vadd.f32 %v340, %v1363
        %v1365 = vpop.f32.mrb[0].mxu0
        %v1366 = vpop.f32.mrb[0].mxu0
        %v1367 = vadd.f32 %v340, %v1366
        %v1368 = vpop.f32.mrb[0].mxu0
        %1369 = vmatprep.mubr.bf16.mxu0 0
        %1370 = vmatmul.mubr.bf16.gmra.mrb[0].mxu0 %v849
        %v1371 = vpop.f32.mrb[0].mxu0
        %v1372 = vadd.f32 %v340, %v1371
        %v1373 = vpop.f32.mrb[0].mxu0
        %v1374 = vpop.f32.mrb[0].mxu0
        %v1375 = vadd.f32 %v340, %v1374
        %v1376 = vpop.f32.mrb[0].mxu0
        %1377 = vmatprep.mubr.bf16.mxu0 0
        %1378 = vmatmul.mubr.bf16.gmra.mrb[0].mxu0 %v852
        %v1379 = vpop.f32.mrb[0].mxu0
        %v1380 = vadd.f32 %v340, %v1379
        %v1381 = vpop.f32.mrb[0].mxu0
        %v1382 = vpop.f32.mrb[0].mxu0
        %v1383 = vadd.f32 %v340, %v1382
        %v1384 = vpop.f32.mrb[0].mxu0
        %1385 = vmatprep.mubr.bf16.mxu0 0
        %1386 = vmatmul.mubr.bf16.gmra.mrb[0].mxu0 %v855
        %v1387 = vpop.f32.mrb[0].mxu0
        %v1388 = vadd.f32 %v340, %v1387
        %v1389 = vpop.f32.mrb[0].mxu0
        %v1390 = vpop.f32.mrb[0].mxu0
        %v1391 = vadd.f32 %v340, %v1390
        %v1392 = vpop.f32.mrb[0].mxu0
        %1393 = vmatprep.mubr.bf16.mxu0 0
        %1394 = vmatmul.mubr.bf16.gmra.mrb[0].mxu0 %v858
        %v1395 = vpop.f32.mrb[0].mxu0
        %v1396 = vadd.f32 %v340, %v1395
        %v1397 = vpop.f32.mrb[0].mxu0
        %v1398 = vpop.f32.mrb[0].mxu0
        %v1399 = vadd.f32 %v340, %v1398
        %v1400 = vpop.f32.mrb[0].mxu0
        %1401 = vmatprep.mubr.bf16.mxu0 0
        %1402 = vmatmul.mubr.bf16.gmra.mrb[0].mxu0 %v861
        %v1403 = vpop.f32.mrb[0].mxu0
        %v1404 = vadd.f32 %v340, %v1403
        %v1405 = vpop.f32.mrb[0].mxu0
        %v1406 = vpop.f32.mrb[0].mxu0
        %v1407 = vadd.f32 %v340, %v1406
        %v1408 = vpop.f32.mrb[0].mxu0
        %1409 = vmatprep.mubr.bf16.mxu0 0
        %1410 = vmatmul.mubr.bf16.gmra.mrb[0].mxu0 %v864
        %v1411 = vpop.f32.mrb[0].mxu0
        %v1412 = vadd.f32 %v340, %v1411
        %v1413 = vpop.f32.mrb[0].mxu0
        %v1414 = vpop.f32.mrb[0].mxu0
        %v1415 = vadd.f32 %v340, %v1414
        %v1416 = vpop.f32.mrb[0].mxu0
        %1417 = vdwg.mxu0
        %v1418 = vmax.f32 %v908, 0.0
        %v1419 = vmax.f32 %v911, 0.0
        %v1420 = vmax.f32 %v916, 0.0
        %v1421 = vmax.f32 %v919, 0.0
        %v1422 = vmax.f32 %v924, 0.0
        %v1423 = vmax.f32 %v927, 0.0
        %v1424 = vmax.f32 %v932, 0.0
        %v1425 = vmax.f32 %v935, 0.0
        %v1426 = vmax.f32 %v940, 0.0
        %v1427 = vmax.f32 %v943, 0.0
        %v1428 = vmax.f32 %v948, 0.0
        %v1429 = vmax.f32 %v951, 0.0
        %v1430 = vmax.f32 %v956, 0.0
        %v1431 = vmax.f32 %v959, 0.0
        %v1432 = vmax.f32 %v964, 0.0
        %v1433 = vmax.f32 %v967, 0.0
        %v1434 = vmax.f32 %v972, 0.0
        %v1435 = vmax.f32 %v975, 0.0
        %v1436 = vmax.f32 %v980, 0.0
        %v1437 = vmax.f32 %v983, 0.0
        %v1438 = vmax.f32 %v988, 0.0
        %v1439 = vmax.f32 %v991, 0.0
        %v1440 = vmax.f32 %v996, 0.0
        %v1441 = vmax.f32 %v999, 0.0
        %v1442 = vmax.f32 %v1004, 0.0
        %v1443 = vmax.f32 %v1007, 0.0
        %v1444 = vmax.f32 %v1012, 0.0
        %v1445 = vmax.f32 %v1015, 0.0
        %v1446 = vmax.f32 %v1020, 0.0
        %v1447 = vmax.f32 %v1023, 0.0
        %v1448 = vmax.f32 %v1028, 0.0
        %v1449 = vmax.f32 %v1031, 0.0
        %v1450 = vmax.f32 %v1036, 0.0
        %v1451 = vmax.f32 %v1039, 0.0
        %v1452 = vmax.f32 %v1044, 0.0
        %v1453 = vmax.f32 %v1047, 0.0
        %v1454 = vmax.f32 %v1052, 0.0
        %v1455 = vmax.f32 %v1055, 0.0
        %v1456 = vmax.f32 %v1060, 0.0
        %v1457 = vmax.f32 %v1063, 0.0
        %v1458 = vmax.f32 %v1068, 0.0
        %v1459 = vmax.f32 %v1071, 0.0
        %v1460 = vmax.f32 %v1076, 0.0
        %v1461 = vmax.f32 %v1079, 0.0
        %v1462 = vmax.f32 %v1084, 0.0
        %v1463 = vmax.f32 %v1087, 0.0
        %v1464 = vmax.f32 %v1092, 0.0
        %v1465 = vmax.f32 %v1095, 0.0
        %v1466 = vmax.f32 %v1100, 0.0
        %v1467 = vmax.f32 %v1103, 0.0
        %v1468 = vmax.f32 %v1108, 0.0
        %v1469 = vmax.f32 %v1111, 0.0
        %v1470 = vmax.f32 %v1116, 0.0
        %v1471 = vmax.f32 %v1119, 0.0
        %v1472 = vmax.f32 %v1124, 0.0
        %v1473 = vmax.f32 %v1127, 0.0
        %v1474 = vmax.f32 %v1132, 0.0
        %v1475 = vmax.f32 %v1135, 0.0
        %v1476 = vmax.f32 %v1140, 0.0
        %v1477 = vmax.f32 %v1143, 0.0
        %v1478 = vmax.f32 %v1148, 0.0
        %v1479 = vmax.f32 %v1151, 0.0
        %v1480 = vmax.f32 %v1156, 0.0
        %v1481 = vmax.f32 %v1159, 0.0
        %v1482 = vmax.f32 %v1164, 0.0
        %v1483 = vmax.f32 %v1167, 0.0
        %v1484 = vmax.f32 %v1172, 0.0
        %v1485 = vmax.f32 %v1175, 0.0
        %v1486 = vmax.f32 %v1180, 0.0
        %v1487 = vmax.f32 %v1183, 0.0
        %v1488 = vmax.f32 %v1188, 0.0
        %v1489 = vmax.f32 %v1191, 0.0
        %v1490 = vmax.f32 %v1196, 0.0
        %v1491 = vmax.f32 %v1199, 0.0
        %v1492 = vmax.f32 %v1204, 0.0
        %v1493 = vmax.f32 %v1207, 0.0
        %v1494 = vmax.f32 %v1212, 0.0
        %v1495 = vmax.f32 %v1215, 0.0
        %v1496 = vmax.f32 %v1220, 0.0
        %v1497 = vmax.f32 %v1223, 0.0
        %v1498 = vmax.f32 %v1228, 0.0
        %v1499 = vmax.f32 %v1231, 0.0
        %v1500 = vmax.f32 %v1236, 0.0
        %v1501 = vmax.f32 %v1239, 0.0
        %v1502 = vmax.f32 %v1244, 0.0
        %v1503 = vmax.f32 %v1247, 0.0
        %v1504 = vmax.f32 %v1252, 0.0
        %v1505 = vmax.f32 %v1255, 0.0
        %v1506 = vmax.f32 %v1260, 0.0
        %v1507 = vmax.f32 %v1263, 0.0
        %v1508 = vmax.f32 %v1268, 0.0
        %v1509 = vmax.f32 %v1271, 0.0
        %v1510 = vmax.f32 %v1276, 0.0
        %v1511 = vmax.f32 %v1279, 0.0
        %v1512 = vmax.f32 %v1284, 0.0
        %v1513 = vmax.f32 %v1287, 0.0
        %v1514 = vmax.f32 %v1292, 0.0
        %v1515 = vmax.f32 %v1295, 0.0
        %v1516 = vmax.f32 %v1300, 0.0
        %v1517 = vmax.f32 %v1303, 0.0
        %v1518 = vmax.f32 %v1308, 0.0
        %v1519 = vmax.f32 %v1311, 0.0
        %v1520 = vmax.f32 %v1316, 0.0
        %v1521 = vmax.f32 %v1319, 0.0
        %v1522 = vmax.f32 %v1324, 0.0
        %v1523 = vmax.f32 %v1327, 0.0
        %v1524 = vmax.f32 %v1332, 0.0
        %v1525 = vmax.f32 %v1335, 0.0
        %v1526 = vmax.f32 %v1340, 0.0
        %v1527 = vmax.f32 %v1343, 0.0
        %v1528 = vmax.f32 %v1348, 0.0
        %v1529 = vmax.f32 %v1351, 0.0
        %v1530 = vmax.f32 %v1356, 0.0
        %v1531 = vmax.f32 %v1359, 0.0
        %v1532 = vmax.f32 %v1364, 0.0
        %v1533 = vmax.f32 %v1367, 0.0
        %v1534 = vmax.f32 %v1372, 0.0
        %v1535 = vmax.f32 %v1375, 0.0
        %v1536 = vmax.f32 %v1380, 0.0
        %v1537 = vmax.f32 %v1383, 0.0
        %v1538 = vmax.f32 %v1388, 0.0
        %v1539 = vmax.f32 %v1391, 0.0
        %v1540 = vmax.f32 %v1396, 0.0
        %v1541 = vmax.f32 %v1399, 0.0
        %v1542 = vmax.f32 %v1404, 0.0
        %v1543 = vmax.f32 %v1407, 0.0
        %v1544 = vmax.f32 %v1412, 0.0
        %v1545 = vmax.f32 %v1415, 0.0
        %v1546 = vpack.c.bf16 %v1419, %v1418
        %v1547 = vpack.c.bf16 %v1421, %v1420
        %v1548 = vpack.c.bf16 %v1423, %v1422
        %v1549 = vpack.c.bf16 %v1425, %v1424
        %v1550 = vpack.c.bf16 %v1427, %v1426
        %v1551 = vpack.c.bf16 %v1429, %v1428
        %v1552 = vpack.c.bf16 %v1431, %v1430
        %v1553 = vpack.c.bf16 %v1433, %v1432
        %v1554 = vpack.c.bf16 %v1435, %v1434
        %v1555 = vpack.c.bf16 %v1437, %v1436
        %v1556 = vpack.c.bf16 %v1439, %v1438
        %v1557 = vpack.c.bf16 %v1441, %v1440
        %v1558 = vpack.c.bf16 %v1443, %v1442
        %v1559 = vpack.c.bf16 %v1445, %v1444
        %v1560 = vpack.c.bf16 %v1447, %v1446
        %v1561 = vpack.c.bf16 %v1449, %v1448
        %v1562 = vpack.c.bf16 %v1451, %v1450
        %v1563 = vpack.c.bf16 %v1453, %v1452
        %v1564 = vpack.c.bf16 %v1455, %v1454
        %v1565 = vpack.c.bf16 %v1457, %v1456
        %v1566 = vpack.c.bf16 %v1459, %v1458
        %v1567 = vpack.c.bf16 %v1461, %v1460
        %v1568 = vpack.c.bf16 %v1463, %v1462
        %v1569 = vpack.c.bf16 %v1465, %v1464
        %v1570 = vpack.c.bf16 %v1467, %v1466
        %v1571 = vpack.c.bf16 %v1469, %v1468
        %v1572 = vpack.c.bf16 %v1471, %v1470
        %v1573 = vpack.c.bf16 %v1473, %v1472
        %v1574 = vpack.c.bf16 %v1475, %v1474
        %v1575 = vpack.c.bf16 %v1477, %v1476
        %v1576 = vpack.c.bf16 %v1479, %v1478
        %v1577 = vpack.c.bf16 %v1481, %v1480
        %v1578 = vpack.c.bf16 %v1483, %v1482
        %v1579 = vpack.c.bf16 %v1485, %v1484
        %v1580 = vpack.c.bf16 %v1487, %v1486
        %v1581 = vpack.c.bf16 %v1489, %v1488
        %v1582 = vpack.c.bf16 %v1491, %v1490
        %v1583 = vpack.c.bf16 %v1493, %v1492
        %v1584 = vpack.c.bf16 %v1495, %v1494
        %v1585 = vpack.c.bf16 %v1497, %v1496
        %v1586 = vpack.c.bf16 %v1499, %v1498
        %v1587 = vpack.c.bf16 %v1501, %v1500
        %v1588 = vpack.c.bf16 %v1503, %v1502
        %v1589 = vpack.c.bf16 %v1505, %v1504
        %v1590 = vpack.c.bf16 %v1507, %v1506
        %v1591 = vpack.c.bf16 %v1509, %v1508
        %v1592 = vpack.c.bf16 %v1511, %v1510
        %v1593 = vpack.c.bf16 %v1513, %v1512
        %v1594 = vpack.c.bf16 %v1515, %v1514
        %v1595 = vpack.c.bf16 %v1517, %v1516
        %v1596 = vpack.c.bf16 %v1519, %v1518
        %v1597 = vpack.c.bf16 %v1521, %v1520
        %v1598 = vpack.c.bf16 %v1523, %v1522
        %v1599 = vpack.c.bf16 %v1525, %v1524
        %v1600 = vpack.c.bf16 %v1527, %v1526
        %v1601 = vpack.c.bf16 %v1529, %v1528
        %v1602 = vpack.c.bf16 %v1531, %v1530
        %v1603 = vpack.c.bf16 %v1533, %v1532
        %v1604 = vpack.c.bf16 %v1535, %v1534
        %v1605 = vpack.c.bf16 %v1537, %v1536
        %v1606 = vpack.c.bf16 %v1539, %v1538
        %v1607 = vpack.c.bf16 %v1541, %v1540
        %v1608 = vpack.c.bf16 %v1543, %v1542
        %v1609 = vpack.c.bf16 %v1545, %v1544
        %v1674 = vunpack.c.l.b16 %v1546
        %v1675 = vunpack.c.h.b16 %v1546
        %v1676 = vunpack.c.l.b16 %v1547
        %v1677 = vunpack.c.h.b16 %v1547
        %v1678 = vunpack.c.l.b16 %v1548
        %v1679 = vunpack.c.h.b16 %v1548
        %v1680 = vunpack.c.l.b16 %v1549
        %v1681 = vunpack.c.h.b16 %v1549
        %v1682 = vunpack.c.l.b16 %v1550
        %v1683 = vunpack.c.h.b16 %v1550
        %v1684 = vunpack.c.l.b16 %v1551
        %v1685 = vunpack.c.h.b16 %v1551
        %v1686 = vunpack.c.l.b16 %v1552
        %v1687 = vunpack.c.h.b16 %v1552
        %v1688 = vunpack.c.l.b16 %v1553
        %v1689 = vunpack.c.h.b16 %v1553
        %v1690 = vunpack.c.l.b16 %v1554
        %v1691 = vunpack.c.h.b16 %v1554
        %v1692 = vunpack.c.l.b16 %v1555
        %v1693 = vunpack.c.h.b16 %v1555
        %v1694 = vunpack.c.l.b16 %v1556
        %v1695 = vunpack.c.h.b16 %v1556
        %v1696 = vunpack.c.l.b16 %v1557
        %v1697 = vunpack.c.h.b16 %v1557
        %v1698 = vunpack.c.l.b16 %v1558
        %v1699 = vunpack.c.h.b16 %v1558
        %v1700 = vunpack.c.l.b16 %v1559
        %v1701 = vunpack.c.h.b16 %v1559
        %v1702 = vunpack.c.l.b16 %v1560
        %v1703 = vunpack.c.h.b16 %v1560
        %v1704 = vunpack.c.l.b16 %v1561
        %v1705 = vunpack.c.h.b16 %v1561
        %v1706 = vunpack.c.l.b16 %v1562
        %v1707 = vunpack.c.h.b16 %v1562
        %v1708 = vunpack.c.l.b16 %v1563
        %v1709 = vunpack.c.h.b16 %v1563
        %v1710 = vunpack.c.l.b16 %v1564
        %v1711 = vunpack.c.h.b16 %v1564
        %v1712 = vunpack.c.l.b16 %v1565
        %v1713 = vunpack.c.h.b16 %v1565
        %v1714 = vunpack.c.l.b16 %v1566
        %v1715 = vunpack.c.h.b16 %v1566
        %v1716 = vunpack.c.l.b16 %v1567
        %v1717 = vunpack.c.h.b16 %v1567
        %v1718 = vunpack.c.l.b16 %v1568
        %v1719 = vunpack.c.h.b16 %v1568
        %v1720 = vunpack.c.l.b16 %v1569
        %v1721 = vunpack.c.h.b16 %v1569
        %v1722 = vunpack.c.l.b16 %v1570
        %v1723 = vunpack.c.h.b16 %v1570
        %v1724 = vunpack.c.l.b16 %v1571
        %v1725 = vunpack.c.h.b16 %v1571
        %v1726 = vunpack.c.l.b16 %v1572
        %v1727 = vunpack.c.h.b16 %v1572
        %v1728 = vunpack.c.l.b16 %v1573
        %v1729 = vunpack.c.h.b16 %v1573
        %v1730 = vunpack.c.l.b16 %v1574
        %v1731 = vunpack.c.h.b16 %v1574
        %v1732 = vunpack.c.l.b16 %v1575
        %v1733 = vunpack.c.h.b16 %v1575
        %v1734 = vunpack.c.l.b16 %v1576
        %v1735 = vunpack.c.h.b16 %v1576
        %v1736 = vunpack.c.l.b16 %v1577
        %v1737 = vunpack.c.h.b16 %v1577
        %v1738 = vunpack.c.l.b16 %v1578
        %v1739 = vunpack.c.h.b16 %v1578
        %v1740 = vunpack.c.l.b16 %v1579
        %v1741 = vunpack.c.h.b16 %v1579
        %v1742 = vunpack.c.l.b16 %v1580
        %v1743 = vunpack.c.h.b16 %v1580
        %v1744 = vunpack.c.l.b16 %v1581
        %v1745 = vunpack.c.h.b16 %v1581
        %v1746 = vunpack.c.l.b16 %v1582
        %v1747 = vunpack.c.h.b16 %v1582
        %v1748 = vunpack.c.l.b16 %v1583
        %v1749 = vunpack.c.h.b16 %v1583
        %v1750 = vunpack.c.l.b16 %v1584
        %v1751 = vunpack.c.h.b16 %v1584
        %v1752 = vunpack.c.l.b16 %v1585
        %v1753 = vunpack.c.h.b16 %v1585
        %v1754 = vunpack.c.l.b16 %v1586
        %v1755 = vunpack.c.h.b16 %v1586
        %v1756 = vunpack.c.l.b16 %v1587
        %v1757 = vunpack.c.h.b16 %v1587
        %v1758 = vunpack.c.l.b16 %v1588
        %v1759 = vunpack.c.h.b16 %v1588
        %v1760 = vunpack.c.l.b16 %v1589
        %v1761 = vunpack.c.h.b16 %v1589
        %v1762 = vunpack.c.l.b16 %v1590
        %v1763 = vunpack.c.h.b16 %v1590
        %v1764 = vunpack.c.l.b16 %v1591
        %v1765 = vunpack.c.h.b16 %v1591
        %v1766 = vunpack.c.l.b16 %v1592
        %v1767 = vunpack.c.h.b16 %v1592
        %v1768 = vunpack.c.l.b16 %v1593
        %v1769 = vunpack.c.h.b16 %v1593
        %v1770 = vunpack.c.l.b16 %v1594
        %v1771 = vunpack.c.h.b16 %v1594
        %v1772 = vunpack.c.l.b16 %v1595
        %v1773 = vunpack.c.h.b16 %v1595
        %v1774 = vunpack.c.l.b16 %v1596
        %v1775 = vunpack.c.h.b16 %v1596
        %v1776 = vunpack.c.l.b16 %v1597
        %v1777 = vunpack.c.h.b16 %v1597
        %v1778 = vunpack.c.l.b16 %v1598
        %v1779 = vunpack.c.h.b16 %v1598
        %v1780 = vunpack.c.l.b16 %v1599
        %v1781 = vunpack.c.h.b16 %v1599
        %v1782 = vunpack.c.l.b16 %v1600
        %v1783 = vunpack.c.h.b16 %v1600
        %v1784 = vunpack.c.l.b16 %v1601
        %v1785 = vunpack.c.h.b16 %v1601
        %v1786 = vunpack.c.l.b16 %v1602
        %v1787 = vunpack.c.h.b16 %v1602
        %v1788 = vunpack.c.l.b16 %v1603
        %v1789 = vunpack.c.h.b16 %v1603
        %v1790 = vunpack.c.l.b16 %v1604
        %v1791 = vunpack.c.h.b16 %v1604
        %v1792 = vunpack.c.l.b16 %v1605
        %v1793 = vunpack.c.h.b16 %v1605
        %v1794 = vunpack.c.l.b16 %v1606
        %v1795 = vunpack.c.h.b16 %v1606
        %v1796 = vunpack.c.l.b16 %v1607
        %v1797 = vunpack.c.h.b16 %v1607
        %v1798 = vunpack.c.l.b16 %v1608
        %v1799 = vunpack.c.h.b16 %v1608
        %v1800 = vunpack.c.l.b16 %v1609
        %v1801 = vunpack.c.h.b16 %v1609
        %v1802 = vpack.c.b16 %v1674, %v1674
        %v1803 = vpack.c.b16 %v1675, %v1675
        %v1804 = vpack.c.b16 %v1676, %v1676
        %v1805 = vpack.c.b16 %v1677, %v1677
        %v1806 = vpack.c.b16 %v1678, %v1678
        %v1807 = vpack.c.b16 %v1679, %v1679
        %v1808 = vpack.c.b16 %v1680, %v1680
        %v1809 = vpack.c.b16 %v1681, %v1681
        %v1810 = vpack.c.b16 %v1682, %v1682
        %v1811 = vpack.c.b16 %v1683, %v1683
        %v1812 = vpack.c.b16 %v1684, %v1684
        %v1813 = vpack.c.b16 %v1685, %v1685
        %v1814 = vpack.c.b16 %v1686, %v1686
        %v1815 = vpack.c.b16 %v1687, %v1687
        %v1816 = vpack.c.b16 %v1688, %v1688
        %v1817 = vpack.c.b16 %v1689, %v1689
        %v1818 = vpack.c.b16 %v1690, %v1690
        %v1819 = vpack.c.b16 %v1691, %v1691
        %v1820 = vpack.c.b16 %v1692, %v1692
        %v1821 = vpack.c.b16 %v1693, %v1693
        %v1822 = vpack.c.b16 %v1694, %v1694
        %v1823 = vpack.c.b16 %v1695, %v1695
        %v1824 = vpack.c.b16 %v1696, %v1696
        %v1825 = vpack.c.b16 %v1697, %v1697
        %v1826 = vpack.c.b16 %v1698, %v1698
        %v1827 = vpack.c.b16 %v1699, %v1699
        %v1828 = vpack.c.b16 %v1700, %v1700
        %v1829 = vpack.c.b16 %v1701, %v1701
        %v1830 = vpack.c.b16 %v1702, %v1702
        %v1831 = vpack.c.b16 %v1703, %v1703
        %v1832 = vpack.c.b16 %v1704, %v1704
        %v1833 = vpack.c.b16 %v1705, %v1705
        %v1834 = vpack.c.b16 %v1706, %v1706
        %v1835 = vpack.c.b16 %v1707, %v1707
        %v1836 = vpack.c.b16 %v1708, %v1708
        %v1837 = vpack.c.b16 %v1709, %v1709
        %v1838 = vpack.c.b16 %v1710, %v1710
        %v1839 = vpack.c.b16 %v1711, %v1711
        %v1840 = vpack.c.b16 %v1712, %v1712
        %v1841 = vpack.c.b16 %v1713, %v1713
        %v1842 = vpack.c.b16 %v1714, %v1714
        %v1843 = vpack.c.b16 %v1715, %v1715
        %v1844 = vpack.c.b16 %v1716, %v1716
        %v1845 = vpack.c.b16 %v1717, %v1717
        %v1846 = vpack.c.b16 %v1718, %v1718
        %v1847 = vpack.c.b16 %v1719, %v1719
        %v1848 = vpack.c.b16 %v1720, %v1720
        %v1849 = vpack.c.b16 %v1721, %v1721
        %v1850 = vpack.c.b16 %v1722, %v1722
        %v1851 = vpack.c.b16 %v1723, %v1723
        %v1852 = vpack.c.b16 %v1724, %v1724
        %v1853 = vpack.c.b16 %v1725, %v1725
        %v1854 = vpack.c.b16 %v1726, %v1726
        %v1855 = vpack.c.b16 %v1727, %v1727
        %v1856 = vpack.c.b16 %v1728, %v1728
        %v1857 = vpack.c.b16 %v1729, %v1729
        %v1858 = vpack.c.b16 %v1730, %v1730
        %v1859 = vpack.c.b16 %v1731, %v1731
        %v1860 = vpack.c.b16 %v1732, %v1732
        %v1861 = vpack.c.b16 %v1733, %v1733
        %v1862 = vpack.c.b16 %v1734, %v1734
        %v1863 = vpack.c.b16 %v1735, %v1735
        %v1864 = vpack.c.b16 %v1736, %v1736
        %v1865 = vpack.c.b16 %v1737, %v1737
        %v1866 = vpack.c.b16 %v1738, %v1738
        %v1867 = vpack.c.b16 %v1739, %v1739
        %v1868 = vpack.c.b16 %v1740, %v1740
        %v1869 = vpack.c.b16 %v1741, %v1741
        %v1870 = vpack.c.b16 %v1742, %v1742
        %v1871 = vpack.c.b16 %v1743, %v1743
        %v1872 = vpack.c.b16 %v1744, %v1744
        %v1873 = vpack.c.b16 %v1745, %v1745
        %v1874 = vpack.c.b16 %v1746, %v1746
        %v1875 = vpack.c.b16 %v1747, %v1747
        %v1876 = vpack.c.b16 %v1748, %v1748
        %v1877 = vpack.c.b16 %v1749, %v1749
        %v1878 = vpack.c.b16 %v1750, %v1750
        %v1879 = vpack.c.b16 %v1751, %v1751
        %v1880 = vpack.c.b16 %v1752, %v1752
        %v1881 = vpack.c.b16 %v1753, %v1753
        %v1882 = vpack.c.b16 %v1754, %v1754
        %v1883 = vpack.c.b16 %v1755, %v1755
        %v1884 = vpack.c.b16 %v1756, %v1756
        %v1885 = vpack.c.b16 %v1757, %v1757
        %v1886 = vpack.c.b16 %v1758, %v1758
        %v1887 = vpack.c.b16 %v1759, %v1759
        %v1888 = vpack.c.b16 %v1760, %v1760
        %v1889 = vpack.c.b16 %v1761, %v1761
        %v1890 = vpack.c.b16 %v1762, %v1762
        %v1891 = vpack.c.b16 %v1763, %v1763
        %v1892 = vpack.c.b16 %v1764, %v1764
        %v1893 = vpack.c.b16 %v1765, %v1765
        %v1894 = vpack.c.b16 %v1766, %v1766
        %v1895 = vpack.c.b16 %v1767, %v1767
        %v1896 = vpack.c.b16 %v1768, %v1768
        %v1897 = vpack.c.b16 %v1769, %v1769
        %v1898 = vpack.c.b16 %v1770, %v1770
        %v1899 = vpack.c.b16 %v1771, %v1771
        %v1900 = vpack.c.b16 %v1772, %v1772
        %v1901 = vpack.c.b16 %v1773, %v1773
        %v1902 = vpack.c.b16 %v1774, %v1774
        %v1903 = vpack.c.b16 %v1775, %v1775
        %v1904 = vpack.c.b16 %v1776, %v1776
        %v1905 = vpack.c.b16 %v1777, %v1777
        %v1906 = vpack.c.b16 %v1778, %v1778
        %v1907 = vpack.c.b16 %v1779, %v1779
        %v1908 = vpack.c.b16 %v1780, %v1780
        %v1909 = vpack.c.b16 %v1781, %v1781
        %v1910 = vpack.c.b16 %v1782, %v1782
        %v1911 = vpack.c.b16 %v1783, %v1783
        %v1912 = vpack.c.b16 %v1784, %v1784
        %v1913 = vpack.c.b16 %v1785, %v1785
        %v1914 = vpack.c.b16 %v1786, %v1786
        %v1915 = vpack.c.b16 %v1787, %v1787
        %v1916 = vpack.c.b16 %v1788, %v1788
        %v1917 = vpack.c.b16 %v1789, %v1789
        %v1918 = vpack.c.b16 %v1790, %v1790
        %v1919 = vpack.c.b16 %v1791, %v1791
        %v1920 = vpack.c.b16 %v1792, %v1792
        %v1921 = vpack.c.b16 %v1793, %v1793
        %v1922 = vpack.c.b16 %v1794, %v1794
        %v1923 = vpack.c.b16 %v1795, %v1795
        %v1924 = vpack.c.b16 %v1796, %v1796
        %v1925 = vpack.c.b16 %v1797, %v1797
        %v1926 = vpack.c.b16 %v1798, %v1798
        %v1927 = vpack.c.b16 %v1799, %v1799
        %v1928 = vpack.c.b16 %v1800, %v1800
        %v1929 = vpack.c.b16 %v1801, %v1801
        %2058 = vst [vmem:[%s200] sm:$0xf] %v1802
        %2059 = vst [vmem:[%s200 + $0x4] sm:$0xf] %v1803
        %2060 = vst [vmem:[%s200 + $0x8] sm:$0xf] %v1804
        %2061 = vst [vmem:[%s200 + $0xc] sm:$0xf] %v1805
        %2062 = vst [vmem:[%s200 + $0x10] sm:$0xf] %v1806
        %2063 = vst [vmem:[%s200 + $0x14] sm:$0xf] %v1807
        %2064 = vst [vmem:[%s200 + $0x18] sm:$0xf] %v1808
        %2065 = vst [vmem:[%s200 + $0x1c] sm:$0xf] %v1809
        %2066 = vst [vmem:[%s200 + $0x20] sm:$0xf] %v1810
        %2067 = vst [vmem:[%s200 + $0x24] sm:$0xf] %v1811
        %2068 = vst [vmem:[%s200 + $0x28] sm:$0xf] %v1812
        %2069 = vst [vmem:[%s200 + $0x2c] sm:$0xf] %v1813
        %2070 = vst [vmem:[%s200 + $0x30] sm:$0xf] %v1814
        %2071 = vst [vmem:[%s200 + $0x34] sm:$0xf] %v1815
        %2072 = vst [vmem:[%s200 + $0x38] sm:$0xf] %v1816
        %2073 = vst [vmem:[%s200 + $0x3c] sm:$0xf] %v1817
        %2074 = vst [vmem:[%s200 + $0x40] sm:$0xf] %v1818
        %2075 = vst [vmem:[%s200 + $0x44] sm:$0xf] %v1819
        %2076 = vst [vmem:[%s200 + $0x48] sm:$0xf] %v1820
        %2077 = vst [vmem:[%s200 + $0x4c] sm:$0xf] %v1821
        %2078 = vst [vmem:[%s200 + $0x50] sm:$0xf] %v1822
        %2079 = vst [vmem:[%s200 + $0x54] sm:$0xf] %v1823
        %2080 = vst [vmem:[%s200 + $0x58] sm:$0xf] %v1824
        %2081 = vst [vmem:[%s200 + $0x5c] sm:$0xf] %v1825
        %2082 = vst [vmem:[%s200 + $0x60] sm:$0xf] %v1826
        %2083 = vst [vmem:[%s200 + $0x64] sm:$0xf] %v1827
        %2084 = vst [vmem:[%s200 + $0x68] sm:$0xf] %v1828
        %2085 = vst [vmem:[%s200 + $0x6c] sm:$0xf] %v1829
        %2086 = vst [vmem:[%s200 + $0x70] sm:$0xf] %v1830
        %2087 = vst [vmem:[%s200 + $0x74] sm:$0xf] %v1831
        %2088 = vst [vmem:[%s200 + $0x78] sm:$0xf] %v1832
        %2089 = vst [vmem:[%s200 + $0x7c] sm:$0xf] %v1833
        %2090 = vst [vmem:[%s200 + $0x80] sm:$0xf] %v1834
        %2091 = vst [vmem:[%s200 + $0x84] sm:$0xf] %v1835
        %2092 = vst [vmem:[%s200 + $0x88] sm:$0xf] %v1836
        %2093 = vst [vmem:[%s200 + $0x8c] sm:$0xf] %v1837
        %2094 = vst [vmem:[%s200 + $0x90] sm:$0xf] %v1838
        %2095 = vst [vmem:[%s200 + $0x94] sm:$0xf] %v1839
        %2096 = vst [vmem:[%s200 + $0x98] sm:$0xf] %v1840
        %2097 = vst [vmem:[%s200 + $0x9c] sm:$0xf] %v1841
        %2098 = vst [vmem:[%s200 + $0xa0] sm:$0xf] %v1842
        %2099 = vst [vmem:[%s200 + $0xa4] sm:$0xf] %v1843
        %2100 = vst [vmem:[%s200 + $0xa8] sm:$0xf] %v1844
        %2101 = vst [vmem:[%s200 + $0xac] sm:$0xf] %v1845
        %2102 = vst [vmem:[%s200 + $0xb0] sm:$0xf] %v1846
        %2103 = vst [vmem:[%s200 + $0xb4] sm:$0xf] %v1847
        %2104 = vst [vmem:[%s200 + $0xb8] sm:$0xf] %v1848
        %2105 = vst [vmem:[%s200 + $0xbc] sm:$0xf] %v1849
        %2106 = vst [vmem:[%s200 + $0xc0] sm:$0xf] %v1850
        %2107 = vst [vmem:[%s200 + $0xc4] sm:$0xf] %v1851
        %2108 = vst [vmem:[%s200 + $0xc8] sm:$0xf] %v1852
        %2109 = vst [vmem:[%s200 + $0xcc] sm:$0xf] %v1853
        %2110 = vst [vmem:[%s200 + $0xd0] sm:$0xf] %v1854
        %2111 = vst [vmem:[%s200 + $0xd4] sm:$0xf] %v1855
        %2112 = vst [vmem:[%s200 + $0xd8] sm:$0xf] %v1856
        %2113 = vst [vmem:[%s200 + $0xdc] sm:$0xf] %v1857
        %2114 = vst [vmem:[%s200 + $0xe0] sm:$0xf] %v1858
        %2115 = vst [vmem:[%s200 + $0xe4] sm:$0xf] %v1859
        %2116 = vst [vmem:[%s200 + $0xe8] sm:$0xf] %v1860
        %2117 = vst [vmem:[%s200 + $0xec] sm:$0xf] %v1861
        %2118 = vst [vmem:[%s200 + $0xf0] sm:$0xf] %v1862
        %2119 = vst [vmem:[%s200 + $0xf4] sm:$0xf] %v1863
        %2120 = vst [vmem:[%s200 + $0xf8] sm:$0xf] %v1864
        %2121 = vst [vmem:[%s200 + $0xfc] sm:$0xf] %v1865
        %2122 = vst [vmem:[%s200 + $0x100] sm:$0xf] %v1866
        %2123 = vst [vmem:[%s200 + $0x104] sm:$0xf] %v1867
        %2124 = vst [vmem:[%s200 + $0x108] sm:$0xf] %v1868
        %2125 = vst [vmem:[%s200 + $0x10c] sm:$0xf] %v1869
        %2126 = vst [vmem:[%s200 + $0x110] sm:$0xf] %v1870
        %2127 = vst [vmem:[%s200 + $0x114] sm:$0xf] %v1871
        %2128 = vst [vmem:[%s200 + $0x118] sm:$0xf] %v1872
        %2129 = vst [vmem:[%s200 + $0x11c] sm:$0xf] %v1873
        %2130 = vst [vmem:[%s200 + $0x120] sm:$0xf] %v1874
        %2131 = vst [vmem:[%s200 + $0x124] sm:$0xf] %v1875
        %2132 = vst [vmem:[%s200 + $0x128] sm:$0xf] %v1876
        %2133 = vst [vmem:[%s200 + $0x12c] sm:$0xf] %v1877
        %2134 = vst [vmem:[%s200 + $0x130] sm:$0xf] %v1878
        %2135 = vst [vmem:[%s200 + $0x134] sm:$0xf] %v1879
        %2136 = vst [vmem:[%s200 + $0x138] sm:$0xf] %v1880
        %2137 = vst [vmem:[%s200 + $0x13c] sm:$0xf] %v1881
        %2138 = vst [vmem:[%s200 + $0x140] sm:$0xf] %v1882
        %2139 = vst [vmem:[%s200 + $0x144] sm:$0xf] %v1883
        %2140 = vst [vmem:[%s200 + $0x148] sm:$0xf] %v1884
        %2141 = vst [vmem:[%s200 + $0x14c] sm:$0xf] %v1885
        %2142 = vst [vmem:[%s200 + $0x150] sm:$0xf] %v1886
        %2143 = vst [vmem:[%s200 + $0x154] sm:$0xf] %v1887
        %2144 = vst [vmem:[%s200 + $0x158] sm:$0xf] %v1888
        %2145 = vst [vmem:[%s200 + $0x15c] sm:$0xf] %v1889
        %2146 = vst [vmem:[%s200 + $0x160] sm:$0xf] %v1890
        %2147 = vst [vmem:[%s200 + $0x164] sm:$0xf] %v1891
        %2148 = vst [vmem:[%s200 + $0x168] sm:$0xf] %v1892
        %2149 = vst [vmem:[%s200 + $0x16c] sm:$0xf] %v1893
        %2150 = vst [vmem:[%s200 + $0x170] sm:$0xf] %v1894
        %2151 = vst [vmem:[%s200 + $0x174] sm:$0xf] %v1895
        %2152 = vst [vmem:[%s200 + $0x178] sm:$0xf] %v1896
        %2153 = vst [vmem:[%s200 + $0x17c] sm:$0xf] %v1897
        %2154 = vst [vmem:[%s200 + $0x180] sm:$0xf] %v1898
        %2155 = vst [vmem:[%s200 + $0x184] sm:$0xf] %v1899
        %2156 = vst [vmem:[%s200 + $0x188] sm:$0xf] %v1900
        %2157 = vst [vmem:[%s200 + $0x18c] sm:$0xf] %v1901
        %2158 = vst [vmem:[%s200 + $0x190] sm:$0xf] %v1902
        %2159 = vst [vmem:[%s200 + $0x194] sm:$0xf] %v1903
        %2160 = vst [vmem:[%s200 + $0x198] sm:$0xf] %v1904
        %2161 = vst [vmem:[%s200 + $0x19c] sm:$0xf] %v1905
        %2162 = vst [vmem:[%s200 + $0x1a0] sm:$0xf] %v1906
        %2163 = vst [vmem:[%s200 + $0x1a4] sm:$0xf] %v1907
        %2164 = vst [vmem:[%s200 + $0x1a8] sm:$0xf] %v1908
        %2165 = vst [vmem:[%s200 + $0x1ac] sm:$0xf] %v1909
        %2166 = vst [vmem:[%s200 + $0x1b0] sm:$0xf] %v1910
        %2167 = vst [vmem:[%s200 + $0x1b4] sm:$0xf] %v1911
        %2168 = vst [vmem:[%s200 + $0x1b8] sm:$0xf] %v1912
        %2169 = vst [vmem:[%s200 + $0x1bc] sm:$0xf] %v1913
        %2170 = vst [vmem:[%s200 + $0x1c0] sm:$0xf] %v1914
        %2171 = vst [vmem:[%s200 + $0x1c4] sm:$0xf] %v1915
        %2172 = vst [vmem:[%s200 + $0x1c8] sm:$0xf] %v1916
        %2173 = vst [vmem:[%s200 + $0x1cc] sm:$0xf] %v1917
        %2174 = vst [vmem:[%s200 + $0x1d0] sm:$0xf] %v1918
        %2175 = vst [vmem:[%s200 + $0x1d4] sm:$0xf] %v1919
        %2176 = vst [vmem:[%s200 + $0x1d8] sm:$0xf] %v1920
        %2177 = vst [vmem:[%s200 + $0x1dc] sm:$0xf] %v1921
        %2178 = vst [vmem:[%s200 + $0x1e0] sm:$0xf] %v1922
        %2179 = vst [vmem:[%s200 + $0x1e4] sm:$0xf] %v1923
        %2180 = vst [vmem:[%s200 + $0x1e8] sm:$0xf] %v1924
        %2181 = vst [vmem:[%s200 + $0x1ec] sm:$0xf] %v1925
        %2182 = vst [vmem:[%s200 + $0x1f0] sm:$0xf] %v1926
        %2183 = vst [vmem:[%s200 + $0x1f4] sm:$0xf] %v1927
        %2184 = vst [vmem:[%s200 + $0x1f8] sm:$0xf] %v1928
        %2185 = vst [vmem:[%s200 + $0x1fc] sm:$0xf] %v1929
        %s2186 = smul.u32 128, %s16
        %p2187 = scmp.lt.s32.totalorder %s2186, 255
        %s2188 = scalar_select %p2187, %s2186, 255
        %s2189 = smul.addr %s2188, 4
        %s2190 = scalar_lea.vmem %s3, %s2189
        // Predicated region
        $region41: #{temp_embed_forward.5} parent=31 // pred_check
          %p2191 = pneg %p102
        $region42: #{temp_embed_forward.5} parent=31 // pred_check_branch
          %2193 = sbr.rel (%p2191) target = $region44
        $region43: #{temp_embed_forward.5} parent=31 // pred_region
          %s2194 = smul.u32 128, %s16
        $region44: #{temp_embed_forward.5} parent=31 // pred_fallthru
          _
      $region32: #{temp_embed_forward.5} parent=5 // pred_fallthru
        _
      %p2195 = scmp.le.s32.totalorder 2, %s11
      // Predicated region
      $region45: #{temp_embed_forward.5} parent=5 // pred_check
        %p2196 = pneg %p2195
      $region46: #{temp_embed_forward.5} parent=5 // pred_check_branch
        %2198 = sbr.rel (%p2196) target = $region48
      $region47: #{temp_embed_forward.5} parent=5 // pred_region
        %s2199 = ssub.s32 %s11, 2
        // Predicated region
        $region49: #{temp_embed_forward.5} parent=47 // pred_check
          %p2200 = pneg %p108
        $region50: #{temp_embed_forward.5} parent=47 // pred_check_branch
          %2202 = sbr.rel (%p2200) target = $region52
        $region51: #{temp_embed_forward.5} parent=47 // pred_region
          %s2203 = smul.u32 128, %s17
          %p2204 = scmp.lt.s32.totalorder %s2203, 255
          %s2205 = scalar_select %p2204, %s2203, 255
          %s2206 = smul.addr %s2205, 4
          %s2207 = scalar_lea.vmem %s3, %s2206
        $region52: #{temp_embed_forward.5} parent=47 // pred_fallthru
          _
      $region48: #{temp_embed_forward.5} parent=5 // pred_fallthru
        _
    $region6: #{temp_embed_forward.5} parent=1 // loop_footer
      %s15 = sadd.s32 1, %s11
    $region7: #{temp_embed_forward.5} parent=1 // loop_footer_branch
      %10 = sbr.rel target = $region3
    $region8: #{temp_embed_forward.5} parent=1 // loop_exit
      _
    %2208 = vsyncpa [#allocation3], 1
    %s2209 = scalar_lea.sflag [#allocation3], 1
    %2210 = vsyncpa %s2209, 1
    %2211 = vsyncpa [#allocation5], 1

// kernel: temp_embed_forward.6
$region0: #{temp_embed_forward.6}
  #allocation0 [shape = 'u32[]', space=smem, size = 0x4, offset = 0x4, fixed_abs, tag = 'smem constant byte address 0x4 - core index']
  #allocation1 [shape = 'u32[144,128]{1,0:T(1,128)}', space=vmem, size = 0x12000, scoped, tag = 'internal scratch']
  %s0 = inlined_call_operand.vmem [shape: bf16[512,800], index: 0, kind: input, shape index: {}]
  %s1 = inlined_call_operand.vmem [shape: bf16[800,128], index: 1, kind: input, shape index: {}]
  %s2 = inlined_call_operand.vmem [shape: f32[1,128], index: 2, kind: input, shape index: {}]
  %s3 = inlined_call_operand.vmem [shape: bf16[512,128], index: 3, kind: output, shape index: {}]
  %s4 = sld [smem:[#allocation0]]
  $region45: #{temp_embed_forward.6} parent=0
    _
  %s6 = ssub.s32 1, %s4
  %s7 = scalar_select 0, %s6, %s4
  loop: start=0, step=1, limit=4
  $region2: #{temp_embed_forward.6} parent=0 // loop_pre_header
    _
  $region3: #{temp_embed_forward.6} parent=0 // loop_header
    %s9 = sphi 0, %s13
    %p10 = scmp.ge.s32.totalorder %s9, 4
    %s19 = sphi 0, %s21
    %s22 = sphi 0, %s19
    %s23 = sphi 0, %s22
    %s39 = sphi 0, %s23
    %s43 = sphi 0, %s43
    %s45 = sphi 0, %s43
    %s46 = sphi 0, %s45
    %s60 = sphi 0, %s46
    %s64 = sphi 0, %s64
    %s66 = sphi 0, %s64
    %s67 = sphi 0, %s66
    %s81 = sphi 0, %s67
    %s87 = sphi 0, %s89
    %s90 = sphi 0, %s87
    %s91 = sphi 0, %s90
    %s107 = sphi 0, %s91
  $region4: #{temp_embed_forward.6} parent=0 // loop_header_branch
    %12 = sbr.rel (%p10) target = $region8
  $region5: #{temp_embed_forward.6} parent=0 // loop_body
    %s14 = ssub.s32 %s9, 1
    %s15 = ssub.s32 %s9, 2
    %s16 = sadd.s32 %s9, 1
    %s17 = ssub.s32 %s9, %s16
    %p18 = scmp.eq.s32.totalorder %s17, 0
    %s20 = sadd.s32 %s19, 1
    %s21 = scalar_select %p18, %s19, %s20
    %p24 = pneg %p18
    %p25 = scmp.eq.s32.totalorder %s9, 1
    %p26 = por %p24, %p25
    %p27 = scmp.ne.s32.totalorder %s19, %s22
    %p28 = scmp.eq.s32.totalorder %s9, 0
    %p29 = por %p27, %p28
    %p30 = scmp.ne.s32.totalorder %s19, %s22
    %p31 = scmp.eq.s32.totalorder %s14, 1
    %p32 = por %p30, %p31
    %p33 = scmp.ne.s32.totalorder %s22, %s23
    %p34 = scmp.eq.s32.totalorder %s14, 0
    %p35 = por %p33, %p34
    %p36 = scmp.ne.s32.totalorder %s22, %s23
    %p37 = scmp.eq.s32.totalorder %s15, 1
    %p38 = por %p36, %p37
    %p40 = scmp.ne.s32.totalorder %s23, %s39
    %p41 = scmp.eq.s32.totalorder %s15, 0
    %p42 = por %p40, %p41
    %s44 = sadd.s32 %s43, 1
    %p47 = scmp.eq.s32.totalorder %s9, 1
    %p48 = scmp.ne.s32.totalorder %s43, %s45
    %p49 = scmp.eq.s32.totalorder %s9, 0
    %p50 = por %p48, %p49
    %p51 = scmp.ne.s32.totalorder %s43, %s45
    %p52 = scmp.eq.s32.totalorder %s14, 1
    %p53 = por %p51, %p52
    %p54 = scmp.ne.s32.totalorder %s45, %s46
    %p55 = scmp.eq.s32.totalorder %s14, 0
    %p56 = por %p54, %p55
    %p57 = scmp.ne.s32.totalorder %s45, %s46
    %p58 = scmp.eq.s32.totalorder %s15, 1
    %p59 = por %p57, %p58
    %p61 = scmp.ne.s32.totalorder %s46, %s60
    %p62 = scmp.eq.s32.totalorder %s15, 0
    %p63 = por %p61, %p62
    %s65 = sadd.s32 %s64, 1
    %p68 = scmp.eq.s32.totalorder %s9, 1
    %p69 = scmp.ne.s32.totalorder %s64, %s66
    %p70 = scmp.eq.s32.totalorder %s9, 0
    %p71 = por %p69, %p70
    %p72 = scmp.ne.s32.totalorder %s64, %s66
    %p73 = scmp.eq.s32.totalorder %s14, 1
    %p74 = por %p72, %p73
    %p75 = scmp.ne.s32.totalorder %s66, %s67
    %p76 = scmp.eq.s32.totalorder %s14, 0
    %p77 = por %p75, %p76
    %p78 = scmp.ne.s32.totalorder %s66, %s67
    %p79 = scmp.eq.s32.totalorder %s15, 1
    %p80 = por %p78, %p79
    %p82 = scmp.ne.s32.totalorder %s67, %s81
    %p83 = scmp.eq.s32.totalorder %s15, 0
    %p84 = por %p82, %p83
    %s85 = ssub.s32 %s9, %s16
    %p86 = scmp.eq.s32.totalorder %s85, 0
    %s88 = sadd.s32 %s87, 1
    %s89 = scalar_select %p86, %s87, %s88
    %p92 = pneg %p86
    %p93 = scmp.eq.s32.totalorder %s9, 1
    %p94 = por %p92, %p93
    %p95 = scmp.ne.s32.totalorder %s87, %s90
    %p96 = scmp.eq.s32.totalorder %s9, 0
    %p97 = por %p95, %p96
    %p98 = scmp.ne.s32.totalorder %s87, %s90
    %p99 = scmp.eq.s32.totalorder %s14, 1
    %p100 = por %p98, %p99
    %p101 = scmp.ne.s32.totalorder %s90, %s91
    %p102 = scmp.eq.s32.totalorder %s14, 0
    %p103 = por %p101, %p102
    %p104 = scmp.ne.s32.totalorder %s90, %s91
    %p105 = scmp.eq.s32.totalorder %s15, 1
    %p106 = por %p104, %p105
    %p108 = scmp.ne.s32.totalorder %s91, %s107
    %p109 = scmp.eq.s32.totalorder %s15, 0
    %p110 = por %p108, %p109
    %p111 = scmp.le.s32.totalorder 1, %s9
    %p112 = scmp.lt.s32.totalorder %s9, 3
    %p113 = pnand %p111, %p112
    %p114 = pneg %p113
    // Predicated region
    $region9: #{temp_embed_forward.6} parent=5 // pred_check
      _
    $region10: #{temp_embed_forward.6} parent=5 // pred_check_branch
      %116 = sbr.rel (%p113) target = $region12
    $region11: #{temp_embed_forward.6} parent=5 // pred_region
      %s117 = ssub.s32 %s9, 1
      // Predicated region
      $region13: #{temp_embed_forward.6} parent=11 // pred_check
        %p118 = pneg %p56
      $region14: #{temp_embed_forward.6} parent=11 // pred_check_branch
        %120 = sbr.rel (%p118) target = $region16
      $region15: #{temp_embed_forward.6} parent=11 // pred_region
        _
      $region16: #{temp_embed_forward.6} parent=11 // pred_fallthru
        _
      // Predicated region
      $region17: #{temp_embed_forward.6} parent=11 // pred_check
        %p121 = pneg %p77
      $region18: #{temp_embed_forward.6} parent=11 // pred_check_branch
        %123 = sbr.rel (%p121) target = $region20
      $region19: #{temp_embed_forward.6} parent=11 // pred_region
        _
      $region20: #{temp_embed_forward.6} parent=11 // pred_fallthru
        _
    $region12: #{temp_embed_forward.6} parent=5 // pred_fallthru
      _
    %p124 = scmp.lt.s32.totalorder %s9, 2
    // Predicated region
    $region21: #{temp_embed_forward.6} parent=5 // pred_check
      %p125 = pneg %p124
    $region22: #{temp_embed_forward.6} parent=5 // pred_check_branch
      %127 = sbr.rel (%p125) target = $region24
    $region23: #{temp_embed_forward.6} parent=5 // pred_region
      // Predicated region
      $region25: #{temp_embed_forward.6} parent=23 // pred_check
        %p128 = pneg %p29
      $region26: #{temp_embed_forward.6} parent=23 // pred_check_branch
        %130 = sbr.rel (%p128) target = $region28
      $region27: #{temp_embed_forward.6} parent=23 // pred_region
        %s131 = smul.u32 32, %s9
        %p132 = scmp.lt.s32.totalorder %s131, 63
        %s133 = scalar_select %p132, %s131, 63
        %s134 = smul.addr %s133, 7
        %s135 = smul.addr %s134, 4
        %s136 = scalar_lea.vmem %s0, %s135
        %s137 = smul.u32 32, %s9
      $region28: #{temp_embed_forward.6} parent=23 // pred_fallthru
        _
    $region24: #{temp_embed_forward.6} parent=5 // pred_fallthru
      _
    %p138 = scmp.le.s32.totalorder 1, %s9
    %p139 = scmp.lt.s32.totalorder %s9, 3
    %p140 = pnand %p138, %p139
    %p141 = pneg %p140
    // Predicated region
    $region29: #{temp_embed_forward.6} parent=5 // pred_check
      _
    $region30: #{temp_embed_forward.6} parent=5 // pred_check_branch
      %143 = sbr.rel (%p140) target = $region32
    $region31: #{temp_embed_forward.6} parent=5 // pred_region
      %s144 = ssub.s32 %s9, 1
      %s145 = smul.u32 32, %s14
      %p146 = scmp.lt.s32.totalorder %s145, 63
      %s147 = scalar_select %p146, %s145, 63
      %s148 = smul.addr %s147, 7
      %s149 = smul.addr %s148, 4
      %s150 = scalar_lea.vmem %s0, %s149
      %p151 = pneg %p35
      %p152 = pneg %p32
      %p153 = pneg %p56
      %p154 = pneg %p53
      %p155 = pneg %p77
      %p156 = pneg %p74
      %p157 = pneg %p103
      %p158 = pneg %p100
      %s159 = smul.u32 32, %s14
      %p160 = scmp.lt.s32.totalorder %s159, 63
      %s161 = scalar_select %p160, %s159, 63
      %s162 = smul.addr %s161, 4
      %s163 = scalar_lea.vmem %s3, %s162
      %s164 = smul.u32 32, %s14
      %p165 = scmp.lt.s32.totalorder %s164, 63
      %s166 = scalar_select %p165, %s164, 63
      %s167 = smul.addr %s166, 7
      %s168 = smul.addr %s167, 4
      %s169 = scalar_lea.vmem %s0, %s168
      %s170 = smul.u32 32, %s14
      %s171 = smul.u32 32, %s14
      %p172 = scmp.lt.s32.totalorder %s171, 63
      %s173 = scalar_select %p172, %s171, 63
      %s174 = smul.addr %s173, 4
      %s175 = scalar_lea.vmem %s3, %s174
      %s176 = smul.u32 32, %s14
      %v178 = vld [vmem:[%s169] sm:$0xff]
      %v179 = vld [vmem:[%s169 + $0x8] sm:$0xff]
      %v180 = vld [vmem:[%s169 + $0x10] sm:$0xff]
      %v181 = vld [vmem:[%s169 + $0x18] sm:$0xf]
      %v182 = vld [vmem:[%s169 + $0x1c] sm:$0xff]
      %v183 = vld [vmem:[%s169 + $0x24] sm:$0xff]
      %v184 = vld [vmem:[%s169 + $0x2c] sm:$0xff]
      %v185 = vld [vmem:[%s169 + $0x34] sm:$0xf]
      %v186 = vld [vmem:[%s169 + $0x38] sm:$0xff]
      %v187 = vld [vmem:[%s169 + $0x40] sm:$0xff]
      %v188 = vld [vmem:[%s169 + $0x48] sm:$0xff]
      %v189 = vld [vmem:[%s169 + $0x50] sm:$0xf]
      %v190 = vld [vmem:[%s169 + $0x54] sm:$0xff]
      %v191 = vld [vmem:[%s169 + $0x5c] sm:$0xff]
      %v192 = vld [vmem:[%s169 + $0x64] sm:$0xff]
      %v193 = vld [vmem:[%s169 + $0x6c] sm:$0xf]
      %v194 = vld [vmem:[%s169 + $0x70] sm:$0xff]
      %v195 = vld [vmem:[%s169 + $0x78] sm:$0xff]
      %v196 = vld [vmem:[%s169 + $0x80] sm:$0xff]
      %v197 = vld [vmem:[%s169 + $0x88] sm:$0xf]
      %v198 = vld [vmem:[%s169 + $0x8c] sm:$0xff]
      %v199 = vld [vmem:[%s169 + $0x94] sm:$0xff]
      %v200 = vld [vmem:[%s169 + $0x9c] sm:$0xff]
      %v201 = vld [vmem:[%s169 + $0xa4] sm:$0xf]
      %v202 = vld [vmem:[%s169 + $0xa8] sm:$0xff]
      %v203 = vld [vmem:[%s169 + $0xb0] sm:$0xff]
      %v204 = vld [vmem:[%s169 + $0xb8] sm:$0xff]
      %v205 = vld [vmem:[%s169 + $0xc0] sm:$0xf]
      %v206 = vld [vmem:[%s169 + $0xc4] sm:$0xff]
      %v207 = vld [vmem:[%s169 + $0xcc] sm:$0xff]
      %v208 = vld [vmem:[%s169 + $0xd4] sm:$0xff]
      %v209 = vld [vmem:[%s169 + $0xdc] sm:$0xf]
      %v210 = vld [vmem:[%s169 + $0xe0] sm:$0xff]
      %v211 = vld [vmem:[%s169 + $0xe8] sm:$0xff]
      %v212 = vld [vmem:[%s169 + $0xf0] sm:$0xff]
      %v213 = vld [vmem:[%s169 + $0xf8] sm:$0xf]
      %v214 = vld [vmem:[%s169 + $0xfc] sm:$0xff]
      %v215 = vld [vmem:[%s169 + $0x104] sm:$0xff]
      %v216 = vld [vmem:[%s169 + $0x10c] sm:$0xff]
      %v217 = vld [vmem:[%s169 + $0x114] sm:$0xf]
      %v218 = vld [vmem:[%s169 + $0x118] sm:$0xff]
      %v219 = vld [vmem:[%s169 + $0x120] sm:$0xff]
      %v220 = vld [vmem:[%s169 + $0x128] sm:$0xff]
      %v221 = vld [vmem:[%s169 + $0x130] sm:$0xf]
      %v222 = vld [vmem:[%s169 + $0x134] sm:$0xff]
      %v223 = vld [vmem:[%s169 + $0x13c] sm:$0xff]
      %v224 = vld [vmem:[%s169 + $0x144] sm:$0xff]
      %v225 = vld [vmem:[%s169 + $0x14c] sm:$0xf]
      %v226 = vld [vmem:[%s169 + $0x150] sm:$0xff]
      %v227 = vld [vmem:[%s169 + $0x158] sm:$0xff]
      %v228 = vld [vmem:[%s169 + $0x160] sm:$0xff]
      %v229 = vld [vmem:[%s169 + $0x168] sm:$0xf]
      %v230 = vld [vmem:[%s169 + $0x16c] sm:$0xff]
      %v231 = vld [vmem:[%s169 + $0x174] sm:$0xff]
      %v232 = vld [vmem:[%s169 + $0x17c] sm:$0xff]
      %v233 = vld [vmem:[%s169 + $0x184] sm:$0xf]
      %v234 = vld [vmem:[%s169 + $0x188] sm:$0xff]
      %v235 = vld [vmem:[%s169 + $0x190] sm:$0xff]
      %v236 = vld [vmem:[%s169 + $0x198] sm:$0xff]
      %v237 = vld [vmem:[%s169 + $0x1a0] sm:$0xf]
      %v238 = vld [vmem:[%s169 + $0x1a4] sm:$0xff]
      %v239 = vld [vmem:[%s169 + $0x1ac] sm:$0xff]
      %v240 = vld [vmem:[%s169 + $0x1b4] sm:$0xff]
      %v241 = vld [vmem:[%s169 + $0x1bc] sm:$0xf]
      %v242 = vld [vmem:[%s169 + $0x1c0] sm:$0xff]
      %v243 = vld [vmem:[%s169 + $0x1c8] sm:$0xff]
      %v244 = vld [vmem:[%s169 + $0x1d0] sm:$0xff]
      %v245 = vld [vmem:[%s169 + $0x1d8] sm:$0xf]
      %v246 = vld [vmem:[%s169 + $0x1dc] sm:$0xff]
      %v247 = vld [vmem:[%s169 + $0x1e4] sm:$0xff]
      %v248 = vld [vmem:[%s169 + $0x1ec] sm:$0xff]
      %v249 = vld [vmem:[%s169 + $0x1f4] sm:$0xf]
      %v250 = vld [vmem:[%s169 + $0x1f8] sm:$0xff]
      %v251 = vld [vmem:[%s169 + $0x200] sm:$0xff]
      %v252 = vld [vmem:[%s169 + $0x208] sm:$0xff]
      %v253 = vld [vmem:[%s169 + $0x210] sm:$0xf]
      %v254 = vld [vmem:[%s169 + $0x214] sm:$0xff]
      %v255 = vld [vmem:[%s169 + $0x21c] sm:$0xff]
      %v256 = vld [vmem:[%s169 + $0x224] sm:$0xff]
      %v257 = vld [vmem:[%s169 + $0x22c] sm:$0xf]
      %v258 = vld [vmem:[%s169 + $0x230] sm:$0xff]
      %v259 = vld [vmem:[%s169 + $0x238] sm:$0xff]
      %v260 = vld [vmem:[%s169 + $0x240] sm:$0xff]
      %v261 = vld [vmem:[%s169 + $0x248] sm:$0xf]
      %v262 = vld [vmem:[%s169 + $0x24c] sm:$0xff]
      %v263 = vld [vmem:[%s169 + $0x254] sm:$0xff]
      %v264 = vld [vmem:[%s169 + $0x25c] sm:$0xff]
      %v265 = vld [vmem:[%s169 + $0x264] sm:$0xf]
      %v266 = vld [vmem:[%s169 + $0x268] sm:$0xff]
      %v267 = vld [vmem:[%s169 + $0x270] sm:$0xff]
      %v268 = vld [vmem:[%s169 + $0x278] sm:$0xff]
      %v269 = vld [vmem:[%s169 + $0x280] sm:$0xf]
      %v270 = vld [vmem:[%s169 + $0x284] sm:$0xff]
      %v271 = vld [vmem:[%s169 + $0x28c] sm:$0xff]
      %v272 = vld [vmem:[%s169 + $0x294] sm:$0xff]
      %v273 = vld [vmem:[%s169 + $0x29c] sm:$0xf]
      %v274 = vld [vmem:[%s169 + $0x2a0] sm:$0xff]
      %v275 = vld [vmem:[%s169 + $0x2a8] sm:$0xff]
      %v276 = vld [vmem:[%s169 + $0x2b0] sm:$0xff]
      %v277 = vld [vmem:[%s169 + $0x2b8] sm:$0xf]
      %v278 = vld [vmem:[%s169 + $0x2bc] sm:$0xff]
      %v279 = vld [vmem:[%s169 + $0x2c4] sm:$0xff]
      %v280 = vld [vmem:[%s169 + $0x2cc] sm:$0xff]
      %v281 = vld [vmem:[%s169 + $0x2d4] sm:$0xf]
      %v282 = vld [vmem:[%s169 + $0x2d8] sm:$0xff]
      %v283 = vld [vmem:[%s169 + $0x2e0] sm:$0xff]
      %v284 = vld [vmem:[%s169 + $0x2e8] sm:$0xff]
      %v285 = vld [vmem:[%s169 + $0x2f0] sm:$0xf]
      %v286 = vld [vmem:[%s169 + $0x2f4] sm:$0xff]
      %v287 = vld [vmem:[%s169 + $0x2fc] sm:$0xff]
      %v288 = vld [vmem:[%s169 + $0x304] sm:$0xff]
      %v289 = vld [vmem:[%s169 + $0x30c] sm:$0xf]
      %v290 = vld [vmem:[%s169 + $0x310] sm:$0xff]
      %v291 = vld [vmem:[%s169 + $0x318] sm:$0xff]
      %v292 = vld [vmem:[%s169 + $0x320] sm:$0xff]
      %v293 = vld [vmem:[%s169 + $0x328] sm:$0xf]
      %v294 = vld [vmem:[%s169 + $0x32c] sm:$0xff]
      %v295 = vld [vmem:[%s169 + $0x334] sm:$0xff]
      %v296 = vld [vmem:[%s169 + $0x33c] sm:$0xff]
      %v297 = vld [vmem:[%s169 + $0x344] sm:$0xf]
      %v298 = vld [vmem:[%s169 + $0x348] sm:$0xff]
      %v299 = vld [vmem:[%s169 + $0x350] sm:$0xff]
      %v300 = vld [vmem:[%s169 + $0x358] sm:$0xff]
      %v301 = vld [vmem:[%s169 + $0x360] sm:$0xf]
      %v302 = vld [vmem:[%s169 + $0x364] sm:$0xff]
      %v303 = vld [vmem:[%s169 + $0x36c] sm:$0xff]
      %v304 = vld [vmem:[%s169 + $0x374] sm:$0xff]
      %v305 = vld [vmem:[%s169 + $0x37c] sm:$0xf]
      %v306 = vld [vmem:[%s1] sm:$0xf]
      %v307 = vld [vmem:[%s1 + $0x4] sm:$0xf]
      %v308 = vld [vmem:[%s1 + $0x8] sm:$0xf]
      %v309 = vld [vmem:[%s1 + $0xc] sm:$0xf]
      %v310 = vld [vmem:[%s1 + $0x10] sm:$0xf]
      %v311 = vld [vmem:[%s1 + $0x14] sm:$0xf]
      %v312 = vld [vmem:[%s1 + $0x18] sm:$0xf]
      %v313 = vld [vmem:[%s1 + $0x1c] sm:$0xf]
      %v314 = vld [vmem:[%s1 + $0x20] sm:$0xf]
      %v315 = vld [vmem:[%s1 + $0x24] sm:$0xf]
      %v316 = vld [vmem:[%s1 + $0x28] sm:$0xf]
      %v317 = vld [vmem:[%s1 + $0x2c] sm:$0xf]
      %v318 = vld [vmem:[%s1 + $0x30] sm:$0xf]
      %v319 = vld [vmem:[%s1 + $0x34] sm:$0xf]
      %v320 = vld [vmem:[%s1 + $0x38] sm:$0xf]
      %v321 = vld [vmem:[%s1 + $0x3c] sm:$0xf]
      %v322 = vld [vmem:[%s1 + $0x40] sm:$0xf]
      %v323 = vld [vmem:[%s1 + $0x44] sm:$0xf]
      %v324 = vld [vmem:[%s1 + $0x48] sm:$0xf]
      %v325 = vld [vmem:[%s1 + $0x4c] sm:$0xf]
      %v326 = vld [vmem:[%s1 + $0x50] sm:$0xf]
      %v327 = vld [vmem:[%s1 + $0x54] sm:$0xf]
      %v328 = vld [vmem:[%s1 + $0x58] sm:$0xf]
      %v329 = vld [vmem:[%s1 + $0x5c] sm:$0xf]
      %v330 = vld [vmem:[%s1 + $0x60] sm:$0xf]
      %v331 = vld [vmem:[%s1 + $0x64] sm:$0xf]
      %v332 = vld [vmem:[%s1 + $0x68] sm:$0xf]
      %v333 = vld [vmem:[%s1 + $0x6c] sm:$0xf]
      %v334 = vld [vmem:[%s1 + $0x70] sm:$0xf]
      %v335 = vld [vmem:[%s1 + $0x74] sm:$0xf]
      %v336 = vld [vmem:[%s1 + $0x78] sm:$0xf]
      %v337 = vld [vmem:[%s1 + $0x7c] sm:$0xf]
      %v338 = vld [vmem:[%s1 + $0x80] sm:$0xf]
      %v339 = vld [vmem:[%s1 + $0x84] sm:$0xf]
      %v340 = vld [vmem:[%s1 + $0x88] sm:$0xf]
      %v341 = vld [vmem:[%s1 + $0x8c] sm:$0xf]
      %v342 = vld [vmem:[%s1 + $0x90] sm:$0xf]
      %v343 = vld [vmem:[%s1 + $0x94] sm:$0xf]
      %v344 = vld [vmem:[%s1 + $0x98] sm:$0xf]
      %v345 = vld [vmem:[%s1 + $0x9c] sm:$0xf]
      %v346 = vld [vmem:[%s1 + $0xa0] sm:$0xf]
      %v347 = vld [vmem:[%s1 + $0xa4] sm:$0xf]
      %v348 = vld [vmem:[%s1 + $0xa8] sm:$0xf]
      %v349 = vld [vmem:[%s1 + $0xac] sm:$0xf]
      %v350 = vld [vmem:[%s1 + $0xb0] sm:$0xf]
      %v351 = vld [vmem:[%s1 + $0xb4] sm:$0xf]
      %v352 = vld [vmem:[%s1 + $0xb8] sm:$0xf]
      %v353 = vld [vmem:[%s1 + $0xbc] sm:$0xf]
      %v354 = vld [vmem:[%s1 + $0xc0] sm:$0xf]
      %v355 = vld [vmem:[%s1 + $0xc4] sm:$0xf]
      %v356 = vld [vmem:[%s1 + $0xc8] sm:$0xf]
      %v357 = vld [vmem:[%s1 + $0xcc] sm:$0xf]
      %v358 = vld [vmem:[%s1 + $0xd0] sm:$0xf]
      %v359 = vld [vmem:[%s1 + $0xd4] sm:$0xf]
      %v360 = vld [vmem:[%s1 + $0xd8] sm:$0xf]
      %v361 = vld [vmem:[%s1 + $0xdc] sm:$0xf]
      %v362 = vld [vmem:[%s1 + $0xe0] sm:$0xf]
      %v363 = vld [vmem:[%s1 + $0xe4] sm:$0xf]
      %v364 = vld [vmem:[%s1 + $0xe8] sm:$0xf]
      %v365 = vld [vmem:[%s1 + $0xec] sm:$0xf]
      %v366 = vld [vmem:[%s1 + $0xf0] sm:$0xf]
      %v367 = vld [vmem:[%s1 + $0xf4] sm:$0xf]
      %v368 = vld [vmem:[%s1 + $0xf8] sm:$0xf]
      %v369 = vld [vmem:[%s1 + $0xfc] sm:$0xf]
      %v370 = vld [vmem:[%s1 + $0x100] sm:$0xf]
      %v371 = vld [vmem:[%s1 + $0x104] sm:$0xf]
      %v372 = vld [vmem:[%s1 + $0x108] sm:$0xf]
      %v373 = vld [vmem:[%s1 + $0x10c] sm:$0xf]
      %v374 = vld [vmem:[%s1 + $0x110] sm:$0xf]
      %v375 = vld [vmem:[%s1 + $0x114] sm:$0xf]
      %v376 = vld [vmem:[%s1 + $0x118] sm:$0xf]
      %v377 = vld [vmem:[%s1 + $0x11c] sm:$0xf]
      %v378 = vld [vmem:[%s1 + $0x120] sm:$0xf]
      %v379 = vld [vmem:[%s1 + $0x124] sm:$0xf]
      %v380 = vld [vmem:[%s1 + $0x128] sm:$0xf]
      %v381 = vld [vmem:[%s1 + $0x12c] sm:$0xf]
      %v382 = vld [vmem:[%s1 + $0x130] sm:$0xf]
      %v383 = vld [vmem:[%s1 + $0x134] sm:$0xf]
      %v384 = vld [vmem:[%s1 + $0x138] sm:$0xf]
      %v385 = vld [vmem:[%s1 + $0x13c] sm:$0xf]
      %v386 = vld [vmem:[%s1 + $0x140] sm:$0xf]
      %v387 = vld [vmem:[%s1 + $0x144] sm:$0xf]
      %v388 = vld [vmem:[%s1 + $0x148] sm:$0xf]
      %v389 = vld [vmem:[%s1 + $0x14c] sm:$0xf]
      %v390 = vld [vmem:[%s1 + $0x150] sm:$0xf]
      %v391 = vld [vmem:[%s1 + $0x154] sm:$0xf]
      %v392 = vld [vmem:[%s1 + $0x158] sm:$0xf]
      %v393 = vld [vmem:[%s1 + $0x15c] sm:$0xf]
      %v394 = vld [vmem:[%s1 + $0x160] sm:$0xf]
      %v395 = vld [vmem:[%s1 + $0x164] sm:$0xf]
      %v396 = vld [vmem:[%s1 + $0x168] sm:$0xf]
      %v397 = vld [vmem:[%s1 + $0x16c] sm:$0xf]
      %v398 = vld [vmem:[%s1 + $0x170] sm:$0xf]
      %v399 = vld [vmem:[%s1 + $0x174] sm:$0xf]
      %v400 = vld [vmem:[%s1 + $0x178] sm:$0xf]
      %v401 = vld [vmem:[%s1 + $0x17c] sm:$0xf]
      %v402 = vld [vmem:[%s1 + $0x180] sm:$0xf]
      %v403 = vld [vmem:[%s1 + $0x184] sm:$0xf]
      %v404 = vld [vmem:[%s1 + $0x188] sm:$0xf]
      %v405 = vld [vmem:[%s1 + $0x18c] sm:$0xf]
      %v406 = vld [vmem:[%s2] sm:$0x1]
      %v408 = vlaneseq
      %v409 = vshrl.u32 %v408, 7
      %v410 = vsub.s32 0, %v409
      %v411 = vrot.slane %v406, %v410
      %v541 = vunpack.c.l.b16 %v178
      %v542 = vunpack.c.h.b16 %v178
      %v543 = vunpack.c.l.b16 %v179
      %v544 = vunpack.c.h.b16 %v179
      %v545 = vunpack.c.l.b16 %v180
      %v546 = vunpack.c.h.b16 %v180
      %v547 = vunpack.c.l.b16 %v181
      %v548 = vunpack.c.l.b16 %v182
      %v549 = vunpack.c.h.b16 %v182
      %v550 = vunpack.c.l.b16 %v183
      %v551 = vunpack.c.h.b16 %v183
      %v552 = vunpack.c.l.b16 %v184
      %v553 = vunpack.c.h.b16 %v184
      %v554 = vunpack.c.l.b16 %v185
      %v555 = vunpack.c.l.b16 %v186
      %v556 = vunpack.c.h.b16 %v186
      %v557 = vunpack.c.l.b16 %v187
      %v558 = vunpack.c.h.b16 %v187
      %v559 = vunpack.c.l.b16 %v188
      %v560 = vunpack.c.h.b16 %v188
      %v561 = vunpack.c.l.b16 %v189
      %v562 = vunpack.c.l.b16 %v190
      %v563 = vunpack.c.h.b16 %v190
      %v564 = vunpack.c.l.b16 %v191
      %v565 = vunpack.c.h.b16 %v191
      %v566 = vunpack.c.l.b16 %v192
      %v567 = vunpack.c.h.b16 %v192
      %v568 = vunpack.c.l.b16 %v193
      %v569 = vunpack.c.l.b16 %v194
      %v570 = vunpack.c.h.b16 %v194
      %v571 = vunpack.c.l.b16 %v195
      %v572 = vunpack.c.h.b16 %v195
      %v573 = vunpack.c.l.b16 %v196
      %v574 = vunpack.c.h.b16 %v196
      %v575 = vunpack.c.l.b16 %v197
      %v576 = vunpack.c.l.b16 %v198
      %v577 = vunpack.c.h.b16 %v198
      %v578 = vunpack.c.l.b16 %v199
      %v579 = vunpack.c.h.b16 %v199
      %v580 = vunpack.c.l.b16 %v200
      %v581 = vunpack.c.h.b16 %v200
      %v582 = vunpack.c.l.b16 %v201
      %v583 = vunpack.c.l.b16 %v202
      %v584 = vunpack.c.h.b16 %v202
      %v585 = vunpack.c.l.b16 %v203
      %v586 = vunpack.c.h.b16 %v203
      %v587 = vunpack.c.l.b16 %v204
      %v588 = vunpack.c.h.b16 %v204
      %v589 = vunpack.c.l.b16 %v205
      %v590 = vunpack.c.l.b16 %v206
      %v591 = vunpack.c.h.b16 %v206
      %v592 = vunpack.c.l.b16 %v207
      %v593 = vunpack.c.h.b16 %v207
      %v594 = vunpack.c.l.b16 %v208
      %v595 = vunpack.c.h.b16 %v208
      %v596 = vunpack.c.l.b16 %v209
      %v597 = vunpack.c.l.b16 %v210
      %v598 = vunpack.c.h.b16 %v210
      %v599 = vunpack.c.l.b16 %v211
      %v600 = vunpack.c.h.b16 %v211
      %v601 = vunpack.c.l.b16 %v212
      %v602 = vunpack.c.h.b16 %v212
      %v603 = vunpack.c.l.b16 %v213
      %v604 = vunpack.c.l.b16 %v214
      %v605 = vunpack.c.h.b16 %v214
      %v606 = vunpack.c.l.b16 %v215
      %v607 = vunpack.c.h.b16 %v215
      %v608 = vunpack.c.l.b16 %v216
      %v609 = vunpack.c.h.b16 %v216
      %v610 = vunpack.c.l.b16 %v217
      %v611 = vunpack.c.l.b16 %v218
      %v612 = vunpack.c.h.b16 %v218
      %v613 = vunpack.c.l.b16 %v219
      %v614 = vunpack.c.h.b16 %v219
      %v615 = vunpack.c.l.b16 %v220
      %v616 = vunpack.c.h.b16 %v220
      %v617 = vunpack.c.l.b16 %v221
      %v618 = vunpack.c.l.b16 %v222
      %v619 = vunpack.c.h.b16 %v222
      %v620 = vunpack.c.l.b16 %v223
      %v621 = vunpack.c.h.b16 %v223
      %v622 = vunpack.c.l.b16 %v224
      %v623 = vunpack.c.h.b16 %v224
      %v624 = vunpack.c.l.b16 %v225
      %v625 = vunpack.c.l.b16 %v226
      %v626 = vunpack.c.h.b16 %v226
      %v627 = vunpack.c.l.b16 %v227
      %v628 = vunpack.c.h.b16 %v227
      %v629 = vunpack.c.l.b16 %v228
      %v630 = vunpack.c.h.b16 %v228
      %v631 = vunpack.c.l.b16 %v229
      %v632 = vunpack.c.l.b16 %v230
      %v633 = vunpack.c.h.b16 %v230
      %v634 = vunpack.c.l.b16 %v231
      %v635 = vunpack.c.h.b16 %v231
      %v636 = vunpack.c.l.b16 %v232
      %v637 = vunpack.c.h.b16 %v232
      %v638 = vunpack.c.l.b16 %v233
      %v639 = vunpack.c.l.b16 %v234
      %v640 = vunpack.c.h.b16 %v234
      %v641 = vunpack.c.l.b16 %v235
      %v642 = vunpack.c.h.b16 %v235
      %v643 = vunpack.c.l.b16 %v236
      %v644 = vunpack.c.h.b16 %v236
      %v645 = vunpack.c.l.b16 %v237
      %v646 = vunpack.c.l.b16 %v238
      %v647 = vunpack.c.h.b16 %v238
      %v648 = vunpack.c.l.b16 %v239
      %v649 = vunpack.c.h.b16 %v239
      %v650 = vunpack.c.l.b16 %v240
      %v651 = vunpack.c.h.b16 %v240
      %v652 = vunpack.c.l.b16 %v241
      %v653 = vunpack.c.l.b16 %v242
      %v654 = vunpack.c.h.b16 %v242
      %v655 = vunpack.c.l.b16 %v243
      %v656 = vunpack.c.h.b16 %v243
      %v657 = vunpack.c.l.b16 %v244
      %v658 = vunpack.c.h.b16 %v244
      %v659 = vunpack.c.l.b16 %v245
      %v660 = vunpack.c.l.b16 %v246
      %v661 = vunpack.c.h.b16 %v246
      %v662 = vunpack.c.l.b16 %v247
      %v663 = vunpack.c.h.b16 %v247
      %v664 = vunpack.c.l.b16 %v248
      %v665 = vunpack.c.h.b16 %v248
      %v666 = vunpack.c.l.b16 %v249
      %v667 = vunpack.c.l.b16 %v250
      %v668 = vunpack.c.h.b16 %v250
      %v669 = vunpack.c.l.b16 %v251
      %v670 = vunpack.c.h.b16 %v251
      %v671 = vunpack.c.l.b16 %v252
      %v672 = vunpack.c.h.b16 %v252
      %v673 = vunpack.c.l.b16 %v253
      %v674 = vunpack.c.l.b16 %v254
      %v675 = vunpack.c.h.b16 %v254
      %v676 = vunpack.c.l.b16 %v255
      %v677 = vunpack.c.h.b16 %v255
      %v678 = vunpack.c.l.b16 %v256
      %v679 = vunpack.c.h.b16 %v256
      %v680 = vunpack.c.l.b16 %v257
      %v681 = vunpack.c.l.b16 %v258
      %v682 = vunpack.c.h.b16 %v258
      %v683 = vunpack.c.l.b16 %v259
      %v684 = vunpack.c.h.b16 %v259
      %v685 = vunpack.c.l.b16 %v260
      %v686 = vunpack.c.h.b16 %v260
      %v687 = vunpack.c.l.b16 %v261
      %v688 = vunpack.c.l.b16 %v262
      %v689 = vunpack.c.h.b16 %v262
      %v690 = vunpack.c.l.b16 %v263
      %v691 = vunpack.c.h.b16 %v263
      %v692 = vunpack.c.l.b16 %v264
      %v693 = vunpack.c.h.b16 %v264
      %v694 = vunpack.c.l.b16 %v265
      %v695 = vunpack.c.l.b16 %v266
      %v696 = vunpack.c.h.b16 %v266
      %v697 = vunpack.c.l.b16 %v267
      %v698 = vunpack.c.h.b16 %v267
      %v699 = vunpack.c.l.b16 %v268
      %v700 = vunpack.c.h.b16 %v268
      %v701 = vunpack.c.l.b16 %v269
      %v702 = vunpack.c.l.b16 %v270
      %v703 = vunpack.c.h.b16 %v270
      %v704 = vunpack.c.l.b16 %v271
      %v705 = vunpack.c.h.b16 %v271
      %v706 = vunpack.c.l.b16 %v272
      %v707 = vunpack.c.h.b16 %v272
      %v708 = vunpack.c.l.b16 %v273
      %v709 = vunpack.c.l.b16 %v274
      %v710 = vunpack.c.h.b16 %v274
      %v711 = vunpack.c.l.b16 %v275
      %v712 = vunpack.c.h.b16 %v275
      %v713 = vunpack.c.l.b16 %v276
      %v714 = vunpack.c.h.b16 %v276
      %v715 = vunpack.c.l.b16 %v277
      %v716 = vunpack.c.l.b16 %v278
      %v717 = vunpack.c.h.b16 %v278
      %v718 = vunpack.c.l.b16 %v279
      %v719 = vunpack.c.h.b16 %v279
      %v720 = vunpack.c.l.b16 %v280
      %v721 = vunpack.c.h.b16 %v280
      %v722 = vunpack.c.l.b16 %v281
      %v723 = vunpack.c.l.b16 %v282
      %v724 = vunpack.c.h.b16 %v282
      %v725 = vunpack.c.l.b16 %v283
      %v726 = vunpack.c.h.b16 %v283
      %v727 = vunpack.c.l.b16 %v284
      %v728 = vunpack.c.h.b16 %v284
      %v729 = vunpack.c.l.b16 %v285
      %v730 = vunpack.c.l.b16 %v286
      %v731 = vunpack.c.h.b16 %v286
      %v732 = vunpack.c.l.b16 %v287
      %v733 = vunpack.c.h.b16 %v287
      %v734 = vunpack.c.l.b16 %v288
      %v735 = vunpack.c.h.b16 %v288
      %v736 = vunpack.c.l.b16 %v289
      %v737 = vunpack.c.l.b16 %v290
      %v738 = vunpack.c.h.b16 %v290
      %v739 = vunpack.c.l.b16 %v291
      %v740 = vunpack.c.h.b16 %v291
      %v741 = vunpack.c.l.b16 %v292
      %v742 = vunpack.c.h.b16 %v292
      %v743 = vunpack.c.l.b16 %v293
      %v744 = vunpack.c.l.b16 %v294
      %v745 = vunpack.c.h.b16 %v294
      %v746 = vunpack.c.l.b16 %v295
      %v747 = vunpack.c.h.b16 %v295
      %v748 = vunpack.c.l.b16 %v296
      %v749 = vunpack.c.h.b16 %v296
      %v750 = vunpack.c.l.b16 %v297
      %v751 = vunpack.c.l.b16 %v298
      %v752 = vunpack.c.h.b16 %v298
      %v753 = vunpack.c.l.b16 %v299
      %v754 = vunpack.c.h.b16 %v299
      %v755 = vunpack.c.l.b16 %v300
      %v756 = vunpack.c.h.b16 %v300
      %v757 = vunpack.c.l.b16 %v301
      %v758 = vunpack.c.l.b16 %v302
      %v759 = vunpack.c.h.b16 %v302
      %v760 = vunpack.c.l.b16 %v303
      %v761 = vunpack.c.h.b16 %v303
      %v762 = vunpack.c.l.b16 %v304
      %v763 = vunpack.c.h.b16 %v304
      %v764 = vunpack.c.l.b16 %v305
      %v765 = vpack.c.b16 %v548, %v541
      %v766 = vpack.c.b16 %v549, %v542
      %v767 = vpack.c.b16 %v550, %v543
      %v768 = vpack.c.b16 %v551, %v544
      %v769 = vpack.c.b16 %v552, %v545
      %v770 = vpack.c.b16 %v553, %v546
      %v771 = vpack.c.b16 %v554, %v547
      %v772 = vpack.c.b16 %v562, %v555
      %v773 = vpack.c.b16 %v563, %v556
      %v774 = vpack.c.b16 %v564, %v557
      %v775 = vpack.c.b16 %v565, %v558
      %v776 = vpack.c.b16 %v566, %v559
      %v777 = vpack.c.b16 %v567, %v560
      %v778 = vpack.c.b16 %v568, %v561
      %v779 = vpack.c.b16 %v576, %v569
      %v780 = vpack.c.b16 %v577, %v570
      %v781 = vpack.c.b16 %v578, %v571
      %v782 = vpack.c.b16 %v579, %v572
      %v783 = vpack.c.b16 %v580, %v573
      %v784 = vpack.c.b16 %v581, %v574
      %v785 = vpack.c.b16 %v582, %v575
      %v786 = vpack.c.b16 %v590, %v583
      %v787 = vpack.c.b16 %v591, %v584
      %v788 = vpack.c.b16 %v592, %v585
      %v789 = vpack.c.b16 %v593, %v586
      %v790 = vpack.c.b16 %v594, %v587
      %v791 = vpack.c.b16 %v595, %v588
      %v792 = vpack.c.b16 %v596, %v589
      %v793 = vpack.c.b16 %v604, %v597
      %v794 = vpack.c.b16 %v605, %v598
      %v795 = vpack.c.b16 %v606, %v599
      %v796 = vpack.c.b16 %v607, %v600
      %v797 = vpack.c.b16 %v608, %v601
      %v798 = vpack.c.b16 %v609, %v602
      %v799 = vpack.c.b16 %v610, %v603
      %v800 = vpack.c.b16 %v618, %v611
      %v801 = vpack.c.b16 %v619, %v612
      %v802 = vpack.c.b16 %v620, %v613
      %v803 = vpack.c.b16 %v621, %v614
      %v804 = vpack.c.b16 %v622, %v615
      %v805 = vpack.c.b16 %v623, %v616
      %v806 = vpack.c.b16 %v624, %v617
      %v807 = vpack.c.b16 %v632, %v625
      %v808 = vpack.c.b16 %v633, %v626
      %v809 = vpack.c.b16 %v634, %v627
      %v810 = vpack.c.b16 %v635, %v628
      %v811 = vpack.c.b16 %v636, %v629
      %v812 = vpack.c.b16 %v637, %v630
      %v813 = vpack.c.b16 %v638, %v631
      %v814 = vpack.c.b16 %v646, %v639
      %v815 = vpack.c.b16 %v647, %v640
      %v816 = vpack.c.b16 %v648, %v641
      %v817 = vpack.c.b16 %v649, %v642
      %v818 = vpack.c.b16 %v650, %v643
      %v819 = vpack.c.b16 %v651, %v644
      %v820 = vpack.c.b16 %v652, %v645
      %v821 = vpack.c.b16 %v660, %v653
      %v822 = vpack.c.b16 %v661, %v654
      %v823 = vpack.c.b16 %v662, %v655
      %v824 = vpack.c.b16 %v663, %v656
      %v825 = vpack.c.b16 %v664, %v657
      %v826 = vpack.c.b16 %v665, %v658
      %v827 = vpack.c.b16 %v666, %v659
      %v828 = vpack.c.b16 %v674, %v667
      %v829 = vpack.c.b16 %v675, %v668
      %v830 = vpack.c.b16 %v676, %v669
      %v831 = vpack.c.b16 %v677, %v670
      %v832 = vpack.c.b16 %v678, %v671
      %v833 = vpack.c.b16 %v679, %v672
      %v834 = vpack.c.b16 %v680, %v673
      %v835 = vpack.c.b16 %v688, %v681
      %v836 = vpack.c.b16 %v689, %v682
      %v837 = vpack.c.b16 %v690, %v683
      %v838 = vpack.c.b16 %v691, %v684
      %v839 = vpack.c.b16 %v692, %v685
      %v840 = vpack.c.b16 %v693, %v686
      %v841 = vpack.c.b16 %v694, %v687
      %v842 = vpack.c.b16 %v702, %v695
      %v843 = vpack.c.b16 %v703, %v696
      %v844 = vpack.c.b16 %v704, %v697
      %v845 = vpack.c.b16 %v705, %v698
      %v846 = vpack.c.b16 %v706, %v699
      %v847 = vpack.c.b16 %v707, %v700
      %v848 = vpack.c.b16 %v708, %v701
      %v849 = vpack.c.b16 %v716, %v709
      %v850 = vpack.c.b16 %v717, %v710
      %v851 = vpack.c.b16 %v718, %v711
      %v852 = vpack.c.b16 %v719, %v712
      %v853 = vpack.c.b16 %v720, %v713
      %v854 = vpack.c.b16 %v721, %v714
      %v855 = vpack.c.b16 %v722, %v715
      %v856 = vpack.c.b16 %v730, %v723
      %v857 = vpack.c.b16 %v731, %v724
      %v858 = vpack.c.b16 %v732, %v725
      %v859 = vpack.c.b16 %v733, %v726
      %v860 = vpack.c.b16 %v734, %v727
      %v861 = vpack.c.b16 %v735, %v728
      %v862 = vpack.c.b16 %v736, %v729
      %v863 = vpack.c.b16 %v744, %v737
      %v864 = vpack.c.b16 %v745, %v738
      %v865 = vpack.c.b16 %v746, %v739
      %v866 = vpack.c.b16 %v747, %v740
      %v867 = vpack.c.b16 %v748, %v741
      %v868 = vpack.c.b16 %v749, %v742
      %v869 = vpack.c.b16 %v750, %v743
      %v870 = vpack.c.b16 %v758, %v751
      %v871 = vpack.c.b16 %v759, %v752
      %v872 = vpack.c.b16 %v760, %v753
      %v873 = vpack.c.b16 %v761, %v754
      %v874 = vpack.c.b16 %v762, %v755
      %v875 = vpack.c.b16 %v763, %v756
      %v876 = vpack.c.b16 %v764, %v757
      %v1073 = vunpack.c.l.b16 %v306
      %v1074 = vunpack.c.l.b16 %v307
      %v1075 = vunpack.c.l.b16 %v308
      %v1076 = vunpack.c.l.b16 %v309
      %v1077 = vunpack.c.l.b16 %v310
      %v1078 = vunpack.c.l.b16 %v311
      %v1079 = vunpack.c.l.b16 %v312
      %v1080 = vunpack.c.l.b16 %v313
      %v1081 = vunpack.c.l.b16 %v314
      %v1082 = vunpack.c.l.b16 %v315
      %v1083 = vunpack.c.l.b16 %v316
      %v1084 = vunpack.c.l.b16 %v317
      %v1085 = vunpack.c.l.b16 %v318
      %v1086 = vunpack.c.l.b16 %v319
      %v1087 = vunpack.c.l.b16 %v320
      %v1088 = vunpack.c.l.b16 %v321
      %v1089 = vunpack.c.l.b16 %v322
      %v1090 = vunpack.c.l.b16 %v323
      %v1091 = vunpack.c.l.b16 %v324
      %v1092 = vunpack.c.l.b16 %v325
      %v1093 = vunpack.c.l.b16 %v326
      %v1094 = vunpack.c.l.b16 %v327
      %v1095 = vunpack.c.l.b16 %v328
      %v1096 = vunpack.c.l.b16 %v329
      %v1097 = vunpack.c.l.b16 %v330
      %v1098 = vunpack.c.l.b16 %v331
      %v1099 = vunpack.c.l.b16 %v332
      %v1100 = vunpack.c.l.b16 %v333
      %v1101 = vunpack.c.l.b16 %v334
      %v1102 = vunpack.c.l.b16 %v335
      %v1103 = vunpack.c.l.b16 %v336
      %v1104 = vunpack.c.l.b16 %v337
      %v1105 = vunpack.c.l.b16 %v338
      %v1106 = vunpack.c.l.b16 %v339
      %v1107 = vunpack.c.l.b16 %v340
      %v1108 = vunpack.c.l.b16 %v341
      %v1109 = vunpack.c.l.b16 %v342
      %v1110 = vunpack.c.l.b16 %v343
      %v1111 = vunpack.c.l.b16 %v344
      %v1112 = vunpack.c.l.b16 %v345
      %v1113 = vunpack.c.l.b16 %v346
      %v1114 = vunpack.c.l.b16 %v347
      %v1115 = vunpack.c.l.b16 %v348
      %v1116 = vunpack.c.l.b16 %v349
      %v1117 = vunpack.c.l.b16 %v350
      %v1118 = vunpack.c.l.b16 %v351
      %v1119 = vunpack.c.l.b16 %v352
      %v1120 = vunpack.c.l.b16 %v353
      %v1121 = vunpack.c.l.b16 %v354
      %v1122 = vunpack.c.l.b16 %v355
      %v1123 = vunpack.c.l.b16 %v356
      %v1124 = vunpack.c.l.b16 %v357
      %v1125 = vunpack.c.l.b16 %v358
      %v1126 = vunpack.c.l.b16 %v359
      %v1127 = vunpack.c.l.b16 %v360
      %v1128 = vunpack.c.l.b16 %v361
      %v1129 = vunpack.c.l.b16 %v362
      %v1130 = vunpack.c.l.b16 %v363
      %v1131 = vunpack.c.l.b16 %v364
      %v1132 = vunpack.c.l.b16 %v365
      %v1133 = vunpack.c.l.b16 %v366
      %v1134 = vunpack.c.l.b16 %v367
      %v1135 = vunpack.c.l.b16 %v368
      %v1136 = vunpack.c.l.b16 %v369
      %v1137 = vunpack.c.l.b16 %v370
      %v1138 = vunpack.c.l.b16 %v371
      %v1139 = vunpack.c.l.b16 %v372
      %v1140 = vunpack.c.l.b16 %v373
      %v1141 = vunpack.c.l.b16 %v374
      %v1142 = vunpack.c.l.b16 %v375
      %v1143 = vunpack.c.l.b16 %v376
      %v1144 = vunpack.c.l.b16 %v377
      %v1145 = vunpack.c.l.b16 %v378
      %v1146 = vunpack.c.l.b16 %v379
      %v1147 = vunpack.c.l.b16 %v380
      %v1148 = vunpack.c.l.b16 %v381
      %v1149 = vunpack.c.l.b16 %v382
      %v1150 = vunpack.c.l.b16 %v383
      %v1151 = vunpack.c.l.b16 %v384
      %v1152 = vunpack.c.l.b16 %v385
      %v1153 = vunpack.c.l.b16 %v386
      %v1154 = vunpack.c.l.b16 %v387
      %v1155 = vunpack.c.l.b16 %v388
      %v1156 = vunpack.c.l.b16 %v389
      %v1157 = vunpack.c.l.b16 %v390
      %v1158 = vunpack.c.l.b16 %v391
      %v1159 = vunpack.c.l.b16 %v392
      %v1160 = vunpack.c.l.b16 %v393
      %v1161 = vunpack.c.l.b16 %v394
      %v1162 = vunpack.c.l.b16 %v395
      %v1163 = vunpack.c.l.b16 %v396
      %v1164 = vunpack.c.l.b16 %v397
      %v1165 = vunpack.c.l.b16 %v398
      %v1166 = vunpack.c.l.b16 %v399
      %v1167 = vunpack.c.l.b16 %v400
      %v1168 = vunpack.c.l.b16 %v401
      %v1169 = vunpack.c.l.b16 %v402
      %v1170 = vunpack.c.l.b16 %v403
      %v1171 = vunpack.c.l.b16 %v404
      %v1172 = vunpack.c.l.b16 %v405
      %v1173 = vpack.c.b16 %v1074, %v1073
      %v1174 = vpack.c.b16 %v1076, %v1075
      %v1175 = vpack.c.b16 %v1078, %v1077
      %v1176 = vpack.c.b16 %v1080, %v1079
      %v1177 = vpack.c.b16 %v1082, %v1081
      %v1178 = vpack.c.b16 %v1084, %v1083
      %v1179 = vpack.c.b16 %v1086, %v1085
      %v1180 = vpack.c.b16 %v1088, %v1087
      %v1181 = vpack.c.b16 %v1090, %v1089
      %v1182 = vpack.c.b16 %v1092, %v1091
      %v1183 = vpack.c.b16 %v1094, %v1093
      %v1184 = vpack.c.b16 %v1096, %v1095
      %v1185 = vpack.c.b16 %v1098, %v1097
      %v1186 = vpack.c.b16 %v1100, %v1099
      %v1187 = vpack.c.b16 %v1102, %v1101
      %v1188 = vpack.c.b16 %v1104, %v1103
      %v1189 = vpack.c.b16 %v1106, %v1105
      %v1190 = vpack.c.b16 %v1108, %v1107
      %v1191 = vpack.c.b16 %v1110, %v1109
      %v1192 = vpack.c.b16 %v1112, %v1111
      %v1193 = vpack.c.b16 %v1114, %v1113
      %v1194 = vpack.c.b16 %v1116, %v1115
      %v1195 = vpack.c.b16 %v1118, %v1117
      %v1196 = vpack.c.b16 %v1120, %v1119
      %v1197 = vpack.c.b16 %v1122, %v1121
      %v1198 = vpack.c.b16 %v1124, %v1123
      %v1199 = vpack.c.b16 %v1126, %v1125
      %v1200 = vpack.c.b16 %v1128, %v1127
      %v1201 = vpack.c.b16 %v1130, %v1129
      %v1202 = vpack.c.b16 %v1132, %v1131
      %v1203 = vpack.c.b16 %v1134, %v1133
      %v1204 = vpack.c.b16 %v1136, %v1135
      %v1205 = vpack.c.b16 %v1138, %v1137
      %v1206 = vpack.c.b16 %v1140, %v1139
      %v1207 = vpack.c.b16 %v1142, %v1141
      %v1208 = vpack.c.b16 %v1144, %v1143
      %v1209 = vpack.c.b16 %v1146, %v1145
      %v1210 = vpack.c.b16 %v1148, %v1147
      %v1211 = vpack.c.b16 %v1150, %v1149
      %v1212 = vpack.c.b16 %v1152, %v1151
      %v1213 = vpack.c.b16 %v1154, %v1153
      %v1214 = vpack.c.b16 %v1156, %v1155
      %v1215 = vpack.c.b16 %v1158, %v1157
      %v1216 = vpack.c.b16 %v1160, %v1159
      %v1217 = vpack.c.b16 %v1162, %v1161
      %v1218 = vpack.c.b16 %v1164, %v1163
      %v1219 = vpack.c.b16 %v1166, %v1165
      %v1220 = vpack.c.b16 %v1168, %v1167
      %v1221 = vpack.c.b16 %v1170, %v1169
      %v1222 = vpack.c.b16 %v1172, %v1171
      %vm1273 = vcmask 261120
      %v1275 = vsel %vm1273, %v771, 0
      %v1278 = vsel %vm1273, %v778, 0
      %v1281 = vsel %vm1273, %v785, 0
      %v1284 = vsel %vm1273, %v792, 0
      %v1287 = vsel %vm1273, %v799, 0
      %v1290 = vsel %vm1273, %v806, 0
      %v1293 = vsel %vm1273, %v813, 0
      %v1296 = vsel %vm1273, %v820, 0
      %v1299 = vsel %vm1273, %v827, 0
      %v1302 = vsel %vm1273, %v834, 0
      %v1305 = vsel %vm1273, %v841, 0
      %v1308 = vsel %vm1273, %v848, 0
      %v1311 = vsel %vm1273, %v855, 0
      %v1314 = vsel %vm1273, %v862, 0
      %v1317 = vsel %vm1273, %v869, 0
      %v1320 = vsel %vm1273, %v876, 0
      %1322 = vmatprep.subr.bf16.mxu0 0
      %1323 = vmatpush1.bf16.msra.mxu0 %v1173
      %1324 = vmatprep.subr.bf16.mxu0 0
      %1325 = vmatpush1.bf16.msra.mxu0 %v1174
      %1326 = vmatprep.subr.bf16.mxu0 0
      %1327 = vmatpush1.bf16.msra.mxu0 %v1175
      %1328 = vmatprep.subr.bf16.mxu0 0
      %1329 = vmatpush1.bf16.msra.mxu0 %v1176
      %1330 = vmatprep.subr.bf16.mxu0 0
      %1331 = vmatpush1.bf16.msra.mxu0 %v1177
      %1332 = vmatprep.subr.bf16.mxu0 0
      %1333 = vmatpush1.bf16.msra.mxu0 %v1178
      %1334 = vmatprep.subr.bf16.mxu0 0
      %1335 = vmatpush1.bf16.msra.mxu0 %v1179
      %1336 = vmatprep.subr.bf16.mxu0 0
      %1337 = vmatpush1.bf16.msra.mxu0 %v1180
      %1338 = vmatprep.subr.bf16.mxu0 0
      %1339 = vmatpush1.bf16.msra.mxu0 %v1181
      %1340 = vmatprep.subr.bf16.mxu0 0
      %1341 = vmatpush1.bf16.msra.mxu0 %v1182
      %1342 = vmatprep.subr.bf16.mxu0 0
      %1343 = vmatpush1.bf16.msra.mxu0 %v1183
      %1344 = vmatprep.subr.bf16.mxu0 0
      %1345 = vmatpush1.bf16.msra.mxu0 %v1184
      %1346 = vmatprep.subr.bf16.mxu0 0
      %1347 = vmatpush1.bf16.msra.mxu0 %v1185
      %1348 = vmatprep.subr.bf16.mxu0 0
      %1349 = vmatpush1.bf16.msra.mxu0 %v1186
      %1350 = vmatprep.subr.bf16.mxu0 0
      %1351 = vmatpush1.bf16.msra.mxu0 %v1187
      %1352 = vmatprep.subr.bf16.mxu0 0
      %1353 = vmatpush1.bf16.msra.mxu0 %v1188
      %1354 = vmatprep.mubr.bf16.mxu0 %v766
      %1355 = vmatmul.mubr.bf16.gmra.mrb[0].mxu0 %v765
      %v1356 = vpop.f32.mrb[0].mxu0
      %v1357 = vadd.f32 %v411, %v1356
      %v1358 = vpop.f32.mrb[0].mxu0
      %v1359 = vpop.f32.mrb[0].mxu0
      %v1360 = vadd.f32 %v411, %v1359
      %v1361 = vpop.f32.mrb[0].mxu0
      %1362 = vmatprep.mubr.bf16.mxu0 %v773
      %1363 = vmatmul.mubr.bf16.gmra.mrb[0].mxu0 %v772
      %v1364 = vpop.f32.mrb[0].mxu0
      %v1365 = vadd.f32 %v411, %v1364
      %v1366 = vpop.f32.mrb[0].mxu0
      %v1367 = vpop.f32.mrb[0].mxu0
      %v1368 = vadd.f32 %v411, %v1367
      %v1369 = vpop.f32.mrb[0].mxu0
      %1370 = vmatprep.mubr.bf16.mxu0 %v780
      %1371 = vmatmul.mubr.bf16.gmra.mrb[0].mxu0 %v779
      %v1372 = vpop.f32.mrb[0].mxu0
      %v1373 = vadd.f32 %v411, %v1372
      %v1374 = vpop.f32.mrb[0].mxu0
      %v1375 = vpop.f32.mrb[0].mxu0
      %v1376 = vadd.f32 %v411, %v1375
      %v1377 = vpop.f32.mrb[0].mxu0
      %1378 = vmatprep.mubr.bf16.mxu0 %v787
      %1379 = vmatmul.mubr.bf16.gmra.mrb[0].mxu0 %v786
      %v1380 = vpop.f32.mrb[0].mxu0
      %v1381 = vadd.f32 %v411, %v1380
      %v1382 = vpop.f32.mrb[0].mxu0
      %v1383 = vpop.f32.mrb[0].mxu0
      %v1384 = vadd.f32 %v411, %v1383
      %v1385 = vpop.f32.mrb[0].mxu0
      %1386 = vmatprep.mubr.bf16.mxu0 %v794
      %1387 = vmatmul.mubr.bf16.gmra.mrb[0].mxu0 %v793
      %v1388 = vpop.f32.mrb[0].mxu0
      %v1389 = vadd.f32 %v411, %v1388
      %v1390 = vpop.f32.mrb[0].mxu0
      %v1391 = vpop.f32.mrb[0].mxu0
      %v1392 = vadd.f32 %v411, %v1391
      %v1393 = vpop.f32.mrb[0].mxu0
      %1394 = vmatprep.mubr.bf16.mxu0 %v801
      %1395 = vmatmul.mubr.bf16.gmra.mrb[0].mxu0 %v800
      %v1396 = vpop.f32.mrb[0].mxu0
      %v1397 = vadd.f32 %v411, %v1396
      %v1398 = vpop.f32.mrb[0].mxu0
      %v1399 = vpop.f32.mrb[0].mxu0
      %v1400 = vadd.f32 %v411, %v1399
      %v1401 = vpop.f32.mrb[0].mxu0
      %1402 = vmatprep.mubr.bf16.mxu0 %v808
      %1403 = vmatmul.mubr.bf16.gmra.mrb[0].mxu0 %v807
      %v1404 = vpop.f32.mrb[0].mxu0
      %v1405 = vadd.f32 %v411, %v1404
      %v1406 = vpop.f32.mrb[0].mxu0
      %v1407 = vpop.f32.mrb[0].mxu0
      %v1408 = vadd.f32 %v411, %v1407
      %v1409 = vpop.f32.mrb[0].mxu0
      %1410 = vmatprep.mubr.bf16.mxu0 %v815
      %1411 = vmatmul.mubr.bf16.gmra.mrb[0].mxu0 %v814
      %v1412 = vpop.f32.mrb[0].mxu0
      %v1413 = vadd.f32 %v411, %v1412
      %v1414 = vpop.f32.mrb[0].mxu0
      %v1415 = vpop.f32.mrb[0].mxu0
      %v1416 = vadd.f32 %v411, %v1415
      %v1417 = vpop.f32.mrb[0].mxu0
      %1418 = vmatprep.mubr.bf16.mxu0 %v822
      %1419 = vmatmul.mubr.bf16.gmra.mrb[0].mxu0 %v821
      %v1420 = vpop.f32.mrb[0].mxu0
      %v1421 = vadd.f32 %v411, %v1420
      %v1422 = vpop.f32.mrb[0].mxu0
      %v1423 = vpop.f32.mrb[0].mxu0
      %v1424 = vadd.f32 %v411, %v1423
      %v1425 = vpop.f32.mrb[0].mxu0
      %1426 = vmatprep.mubr.bf16.mxu0 %v829
      %1427 = vmatmul.mubr.bf16.gmra.mrb[0].mxu0 %v828
      %v1428 = vpop.f32.mrb[0].mxu0
      %v1429 = vadd.f32 %v411, %v1428
      %v1430 = vpop.f32.mrb[0].mxu0
      %v1431 = vpop.f32.mrb[0].mxu0
      %v1432 = vadd.f32 %v411, %v1431
      %v1433 = vpop.f32.mrb[0].mxu0
      %1434 = vmatprep.mubr.bf16.mxu0 %v836
      %1435 = vmatmul.mubr.bf16.gmra.mrb[0].mxu0 %v835
      %v1436 = vpop.f32.mrb[0].mxu0
      %v1437 = vadd.f32 %v411, %v1436
      %v1438 = vpop.f32.mrb[0].mxu0
      %v1439 = vpop.f32.mrb[0].mxu0
      %v1440 = vadd.f32 %v411, %v1439
      %v1441 = vpop.f32.mrb[0].mxu0
      %1442 = vmatprep.mubr.bf16.mxu0 %v843
      %1443 = vmatmul.mubr.bf16.gmra.mrb[0].mxu0 %v842
      %v1444 = vpop.f32.mrb[0].mxu0
      %v1445 = vadd.f32 %v411, %v1444
      %v1446 = vpop.f32.mrb[0].mxu0
      %v1447 = vpop.f32.mrb[0].mxu0
      %v1448 = vadd.f32 %v411, %v1447
      %v1449 = vpop.f32.mrb[0].mxu0
      %1450 = vmatprep.mubr.bf16.mxu0 %v850
      %1451 = vmatmul.mubr.bf16.gmra.mrb[0].mxu0 %v849
      %v1452 = vpop.f32.mrb[0].mxu0
      %v1453 = vadd.f32 %v411, %v1452
      %v1454 = vpop.f32.mrb[0].mxu0
      %v1455 = vpop.f32.mrb[0].mxu0
      %v1456 = vadd.f32 %v411, %v1455
      %v1457 = vpop.f32.mrb[0].mxu0
      %1458 = vmatprep.mubr.bf16.mxu0 %v857
      %1459 = vmatmul.mubr.bf16.gmra.mrb[0].mxu0 %v856
      %v1460 = vpop.f32.mrb[0].mxu0
      %v1461 = vadd.f32 %v411, %v1460
      %v1462 = vpop.f32.mrb[0].mxu0
      %v1463 = vpop.f32.mrb[0].mxu0
      %v1464 = vadd.f32 %v411, %v1463
      %v1465 = vpop.f32.mrb[0].mxu0
      %1466 = vmatprep.mubr.bf16.mxu0 %v864
      %1467 = vmatmul.mubr.bf16.gmra.mrb[0].mxu0 %v863
      %v1468 = vpop.f32.mrb[0].mxu0
      %v1469 = vadd.f32 %v411, %v1468
      %v1470 = vpop.f32.mrb[0].mxu0
      %v1471 = vpop.f32.mrb[0].mxu0
      %v1472 = vadd.f32 %v411, %v1471
      %v1473 = vpop.f32.mrb[0].mxu0
      %1474 = vmatprep.mubr.bf16.mxu0 %v871
      %1475 = vmatmul.mubr.bf16.gmra.mrb[0].mxu0 %v870
      %v1476 = vpop.f32.mrb[0].mxu0
      %v1477 = vadd.f32 %v411, %v1476
      %v1478 = vpop.f32.mrb[0].mxu0
      %v1479 = vpop.f32.mrb[0].mxu0
      %v1480 = vadd.f32 %v411, %v1479
      %v1481 = vpop.f32.mrb[0].mxu0
      %1482 = vdwg.mxu0
      %1483 = vmatprep.subr.bf16.mxu0 0
      %1484 = vmatpush1.bf16.msra.mxu0 %v1189
      %1485 = vmatprep.subr.bf16.mxu0 0
      %1486 = vmatpush1.bf16.msra.mxu0 %v1190
      %1487 = vmatprep.subr.bf16.mxu0 0
      %1488 = vmatpush1.bf16.msra.mxu0 %v1191
      %1489 = vmatprep.subr.bf16.mxu0 0
      %1490 = vmatpush1.bf16.msra.mxu0 %v1192
      %1491 = vmatprep.subr.bf16.mxu0 0
      %1492 = vmatpush1.bf16.msra.mxu0 %v1193
      %1493 = vmatprep.subr.bf16.mxu0 0
      %1494 = vmatpush1.bf16.msra.mxu0 %v1194
      %1495 = vmatprep.subr.bf16.mxu0 0
      %1496 = vmatpush1.bf16.msra.mxu0 %v1195
      %1497 = vmatprep.subr.bf16.mxu0 0
      %1498 = vmatpush1.bf16.msra.mxu0 %v1196
      %1499 = vmatprep.subr.bf16.mxu0 0
      %1500 = vmatpush1.bf16.msra.mxu0 %v1197
      %1501 = vmatprep.subr.bf16.mxu0 0
      %1502 = vmatpush1.bf16.msra.mxu0 %v1198
      %1503 = vmatprep.subr.bf16.mxu0 0
      %1504 = vmatpush1.bf16.msra.mxu0 %v1199
      %1505 = vmatprep.subr.bf16.mxu0 0
      %1506 = vmatpush1.bf16.msra.mxu0 %v1200
      %1507 = vmatprep.subr.bf16.mxu0 0
      %1508 = vmatpush1.bf16.msra.mxu0 %v1201
      %1509 = vmatprep.subr.bf16.mxu0 0
      %1510 = vmatpush1.bf16.msra.mxu0 %v1202
      %1511 = vmatprep.subr.bf16.mxu0 0
      %1512 = vmatpush1.bf16.msra.mxu0 %v1203
      %1513 = vmatprep.subr.bf16.mxu0 0
      %1514 = vmatpush1.bf16.msra.mxu0 %v1204
      %1515 = vmatprep.mubr.bf16.mxu0 %v768
      %1516 = vmatmul.mubr.bf16.gmra.mrb[0].mxu0 %v767
      %v1517 = vpop.f32.mrb[0].mxu0
      %v1518 = vadd.f32 %v1357, %v1517
      %v1519 = vpop.f32.mrb[0].mxu0
      %v1520 = vpop.f32.mrb[0].mxu0
      %v1521 = vadd.f32 %v1360, %v1520
      %v1522 = vpop.f32.mrb[0].mxu0
      %1523 = vmatprep.mubr.bf16.mxu0 %v775
      %1524 = vmatmul.mubr.bf16.gmra.mrb[0].mxu0 %v774
      %v1525 = vpop.f32.mrb[0].mxu0
      %v1526 = vadd.f32 %v1365, %v1525
      %v1527 = vpop.f32.mrb[0].mxu0
      %v1528 = vpop.f32.mrb[0].mxu0
      %v1529 = vadd.f32 %v1368, %v1528
      %v1530 = vpop.f32.mrb[0].mxu0
      %1531 = vmatprep.mubr.bf16.mxu0 %v782
      %1532 = vmatmul.mubr.bf16.gmra.mrb[0].mxu0 %v781
      %v1533 = vpop.f32.mrb[0].mxu0
      %v1534 = vadd.f32 %v1373, %v1533
      %v1535 = vpop.f32.mrb[0].mxu0
      %v1536 = vpop.f32.mrb[0].mxu0
      %v1537 = vadd.f32 %v1376, %v1536
      %v1538 = vpop.f32.mrb[0].mxu0
      %1539 = vmatprep.mubr.bf16.mxu0 %v789
      %1540 = vmatmul.mubr.bf16.gmra.mrb[0].mxu0 %v788
      %v1541 = vpop.f32.mrb[0].mxu0
      %v1542 = vadd.f32 %v1381, %v1541
      %v1543 = vpop.f32.mrb[0].mxu0
      %v1544 = vpop.f32.mrb[0].mxu0
      %v1545 = vadd.f32 %v1384, %v1544
      %v1546 = vpop.f32.mrb[0].mxu0
      %1547 = vmatprep.mubr.bf16.mxu0 %v796
      %1548 = vmatmul.mubr.bf16.gmra.mrb[0].mxu0 %v795
      %v1549 = vpop.f32.mrb[0].mxu0
      %v1550 = vadd.f32 %v1389, %v1549
      %v1551 = vpop.f32.mrb[0].mxu0
      %v1552 = vpop.f32.mrb[0].mxu0
      %v1553 = vadd.f32 %v1392, %v1552
      %v1554 = vpop.f32.mrb[0].mxu0
      %1555 = vmatprep.mubr.bf16.mxu0 %v803
      %1556 = vmatmul.mubr.bf16.gmra.mrb[0].mxu0 %v802
      %v1557 = vpop.f32.mrb[0].mxu0
      %v1558 = vadd.f32 %v1397, %v1557
      %v1559 = vpop.f32.mrb[0].mxu0
      %v1560 = vpop.f32.mrb[0].mxu0
      %v1561 = vadd.f32 %v1400, %v1560
      %v1562 = vpop.f32.mrb[0].mxu0
      %1563 = vmatprep.mubr.bf16.mxu0 %v810
      %1564 = vmatmul.mubr.bf16.gmra.mrb[0].mxu0 %v809
      %v1565 = vpop.f32.mrb[0].mxu0
      %v1566 = vadd.f32 %v1405, %v1565
      %v1567 = vpop.f32.mrb[0].mxu0
      %v1568 = vpop.f32.mrb[0].mxu0
      %v1569 = vadd.f32 %v1408, %v1568
      %v1570 = vpop.f32.mrb[0].mxu0
      %1571 = vmatprep.mubr.bf16.mxu0 %v817
      %1572 = vmatmul.mubr.bf16.gmra.mrb[0].mxu0 %v816
      %v1573 = vpop.f32.mrb[0].mxu0
      %v1574 = vadd.f32 %v1413, %v1573
      %v1575 = vpop.f32.mrb[0].mxu0
      %v1576 = vpop.f32.mrb[0].mxu0
      %v1577 = vadd.f32 %v1416, %v1576
      %v1578 = vpop.f32.mrb[0].mxu0
      %1579 = vmatprep.mubr.bf16.mxu0 %v824
      %1580 = vmatmul.mubr.bf16.gmra.mrb[0].mxu0 %v823
      %v1581 = vpop.f32.mrb[0].mxu0
      %v1582 = vadd.f32 %v1421, %v1581
      %v1583 = vpop.f32.mrb[0].mxu0
      %v1584 = vpop.f32.mrb[0].mxu0
      %v1585 = vadd.f32 %v1424, %v1584
      %v1586 = vpop.f32.mrb[0].mxu0
      %1587 = vmatprep.mubr.bf16.mxu0 %v831
      %1588 = vmatmul.mubr.bf16.gmra.mrb[0].mxu0 %v830
      %v1589 = vpop.f32.mrb[0].mxu0
      %v1590 = vadd.f32 %v1429, %v1589
      %v1591 = vpop.f32.mrb[0].mxu0
      %v1592 = vpop.f32.mrb[0].mxu0
      %v1593 = vadd.f32 %v1432, %v1592
      %v1594 = vpop.f32.mrb[0].mxu0
      %1595 = vmatprep.mubr.bf16.mxu0 %v838
      %1596 = vmatmul.mubr.bf16.gmra.mrb[0].mxu0 %v837
      %v1597 = vpop.f32.mrb[0].mxu0
      %v1598 = vadd.f32 %v1437, %v1597
      %v1599 = vpop.f32.mrb[0].mxu0
      %v1600 = vpop.f32.mrb[0].mxu0
      %v1601 = vadd.f32 %v1440, %v1600
      %v1602 = vpop.f32.mrb[0].mxu0
      %1603 = vmatprep.mubr.bf16.mxu0 %v845
      %1604 = vmatmul.mubr.bf16.gmra.mrb[0].mxu0 %v844
      %v1605 = vpop.f32.mrb[0].mxu0
      %v1606 = vadd.f32 %v1445, %v1605
      %v1607 = vpop.f32.mrb[0].mxu0
      %v1608 = vpop.f32.mrb[0].mxu0
      %v1609 = vadd.f32 %v1448, %v1608
      %v1610 = vpop.f32.mrb[0].mxu0
      %1611 = vmatprep.mubr.bf16.mxu0 %v852
      %1612 = vmatmul.mubr.bf16.gmra.mrb[0].mxu0 %v851
      %v1613 = vpop.f32.mrb[0].mxu0
      %v1614 = vadd.f32 %v1453, %v1613
      %v1615 = vpop.f32.mrb[0].mxu0
      %v1616 = vpop.f32.mrb[0].mxu0
      %v1617 = vadd.f32 %v1456, %v1616
      %v1618 = vpop.f32.mrb[0].mxu0
      %1619 = vmatprep.mubr.bf16.mxu0 %v859
      %1620 = vmatmul.mubr.bf16.gmra.mrb[0].mxu0 %v858
      %v1621 = vpop.f32.mrb[0].mxu0
      %v1622 = vadd.f32 %v1461, %v1621
      %v1623 = vpop.f32.mrb[0].mxu0
      %v1624 = vpop.f32.mrb[0].mxu0
      %v1625 = vadd.f32 %v1464, %v1624
      %v1626 = vpop.f32.mrb[0].mxu0
      %1627 = vmatprep.mubr.bf16.mxu0 %v866
      %1628 = vmatmul.mubr.bf16.gmra.mrb[0].mxu0 %v865
      %v1629 = vpop.f32.mrb[0].mxu0
      %v1630 = vadd.f32 %v1469, %v1629
      %v1631 = vpop.f32.mrb[0].mxu0
      %v1632 = vpop.f32.mrb[0].mxu0
      %v1633 = vadd.f32 %v1472, %v1632
      %v1634 = vpop.f32.mrb[0].mxu0
      %1635 = vmatprep.mubr.bf16.mxu0 %v873
      %1636 = vmatmul.mubr.bf16.gmra.mrb[0].mxu0 %v872
      %v1637 = vpop.f32.mrb[0].mxu0
      %v1638 = vadd.f32 %v1477, %v1637
      %v1639 = vpop.f32.mrb[0].mxu0
      %v1640 = vpop.f32.mrb[0].mxu0
      %v1641 = vadd.f32 %v1480, %v1640
      %v1642 = vpop.f32.mrb[0].mxu0
      %1643 = vdwg.mxu0
      %1644 = vmatprep.subr.bf16.mxu0 0
      %1645 = vmatpush1.bf16.msra.mxu0 %v1205
      %1646 = vmatprep.subr.bf16.mxu0 0
      %1647 = vmatpush1.bf16.msra.mxu0 %v1206
      %1648 = vmatprep.subr.bf16.mxu0 0
      %1649 = vmatpush1.bf16.msra.mxu0 %v1207
      %1650 = vmatprep.subr.bf16.mxu0 0
      %1651 = vmatpush1.bf16.msra.mxu0 %v1208
      %1652 = vmatprep.subr.bf16.mxu0 0
      %1653 = vmatpush1.bf16.msra.mxu0 %v1209
      %1654 = vmatprep.subr.bf16.mxu0 0
      %1655 = vmatpush1.bf16.msra.mxu0 %v1210
      %1656 = vmatprep.subr.bf16.mxu0 0
      %1657 = vmatpush1.bf16.msra.mxu0 %v1211
      %1658 = vmatprep.subr.bf16.mxu0 0
      %1659 = vmatpush1.bf16.msra.mxu0 %v1212
      %1660 = vmatprep.subr.bf16.mxu0 0
      %1661 = vmatpush1.bf16.msra.mxu0 %v1213
      %1662 = vmatprep.subr.bf16.mxu0 0
      %1663 = vmatpush1.bf16.msra.mxu0 %v1214
      %1664 = vmatprep.subr.bf16.mxu0 0
      %1665 = vmatpush1.bf16.msra.mxu0 %v1215
      %1666 = vmatprep.subr.bf16.mxu0 0
      %1667 = vmatpush1.bf16.msra.mxu0 %v1216
      %1668 = vmatprep.subr.bf16.mxu0 0
      %1669 = vmatpush1.bf16.msra.mxu0 %v1217
      %1670 = vmatprep.subr.bf16.mxu0 0
      %1671 = vmatpush1.bf16.msra.mxu0 %v1218
      %1672 = vmatprep.subr.bf16.mxu0 0
      %1673 = vmatpush1.bf16.msra.mxu0 %v1219
      %1674 = vmatprep.subr.bf16.mxu0 0
      %1675 = vmatpush1.bf16.msra.mxu0 %v1220
      %1676 = vmatprep.mubr.bf16.mxu0 %v770
      %1677 = vmatmul.mubr.bf16.gmra.mrb[0].mxu0 %v769
      %v1678 = vpop.f32.mrb[0].mxu0
      %v1679 = vadd.f32 %v1518, %v1678
      %v1680 = vpop.f32.mrb[0].mxu0
      %v1681 = vpop.f32.mrb[0].mxu0
      %v1682 = vadd.f32 %v1521, %v1681
      %v1683 = vpop.f32.mrb[0].mxu0
      %1684 = vmatprep.mubr.bf16.mxu0 %v777
      %1685 = vmatmul.mubr.bf16.gmra.mrb[0].mxu0 %v776
      %v1686 = vpop.f32.mrb[0].mxu0
      %v1687 = vadd.f32 %v1526, %v1686
      %v1688 = vpop.f32.mrb[0].mxu0
      %v1689 = vpop.f32.mrb[0].mxu0
      %v1690 = vadd.f32 %v1529, %v1689
      %v1691 = vpop.f32.mrb[0].mxu0
      %1692 = vmatprep.mubr.bf16.mxu0 %v784
      %1693 = vmatmul.mubr.bf16.gmra.mrb[0].mxu0 %v783
      %v1694 = vpop.f32.mrb[0].mxu0
      %v1695 = vadd.f32 %v1534, %v1694
      %v1696 = vpop.f32.mrb[0].mxu0
      %v1697 = vpop.f32.mrb[0].mxu0
      %v1698 = vadd.f32 %v1537, %v1697
      %v1699 = vpop.f32.mrb[0].mxu0
      %1700 = vmatprep.mubr.bf16.mxu0 %v791
      %1701 = vmatmul.mubr.bf16.gmra.mrb[0].mxu0 %v790
      %v1702 = vpop.f32.mrb[0].mxu0
      %v1703 = vadd.f32 %v1542, %v1702
      %v1704 = vpop.f32.mrb[0].mxu0
      %v1705 = vpop.f32.mrb[0].mxu0
      %v1706 = vadd.f32 %v1545, %v1705
      %v1707 = vpop.f32.mrb[0].mxu0
      %1708 = vmatprep.mubr.bf16.mxu0 %v798
      %1709 = vmatmul.mubr.bf16.gmra.mrb[0].mxu0 %v797
      %v1710 = vpop.f32.mrb[0].mxu0
      %v1711 = vadd.f32 %v1550, %v1710
      %v1712 = vpop.f32.mrb[0].mxu0
      %v1713 = vpop.f32.mrb[0].mxu0
      %v1714 = vadd.f32 %v1553, %v1713
      %v1715 = vpop.f32.mrb[0].mxu0
      %1716 = vmatprep.mubr.bf16.mxu0 %v805
      %1717 = vmatmul.mubr.bf16.gmra.mrb[0].mxu0 %v804
      %v1718 = vpop.f32.mrb[0].mxu0
      %v1719 = vadd.f32 %v1558, %v1718
      %v1720 = vpop.f32.mrb[0].mxu0
      %v1721 = vpop.f32.mrb[0].mxu0
      %v1722 = vadd.f32 %v1561, %v1721
      %v1723 = vpop.f32.mrb[0].mxu0
      %1724 = vmatprep.mubr.bf16.mxu0 %v812
      %1725 = vmatmul.mubr.bf16.gmra.mrb[0].mxu0 %v811
      %v1726 = vpop.f32.mrb[0].mxu0
      %v1727 = vadd.f32 %v1566, %v1726
      %v1728 = vpop.f32.mrb[0].mxu0
      %v1729 = vpop.f32.mrb[0].mxu0
      %v1730 = vadd.f32 %v1569, %v1729
      %v1731 = vpop.f32.mrb[0].mxu0
      %1732 = vmatprep.mubr.bf16.mxu0 %v819
      %1733 = vmatmul.mubr.bf16.gmra.mrb[0].mxu0 %v818
      %v1734 = vpop.f32.mrb[0].mxu0
      %v1735 = vadd.f32 %v1574, %v1734
      %v1736 = vpop.f32.mrb[0].mxu0
      %v1737 = vpop.f32.mrb[0].mxu0
      %v1738 = vadd.f32 %v1577, %v1737
      %v1739 = vpop.f32.mrb[0].mxu0
      %1740 = vmatprep.mubr.bf16.mxu0 %v826
      %1741 = vmatmul.mubr.bf16.gmra.mrb[0].mxu0 %v825
      %v1742 = vpop.f32.mrb[0].mxu0
      %v1743 = vadd.f32 %v1582, %v1742
      %v1744 = vpop.f32.mrb[0].mxu0
      %v1745 = vpop.f32.mrb[0].mxu0
      %v1746 = vadd.f32 %v1585, %v1745
      %v1747 = vpop.f32.mrb[0].mxu0
      %1748 = vmatprep.mubr.bf16.mxu0 %v833
      %1749 = vmatmul.mubr.bf16.gmra.mrb[0].mxu0 %v832
      %v1750 = vpop.f32.mrb[0].mxu0
      %v1751 = vadd.f32 %v1590, %v1750
      %v1752 = vpop.f32.mrb[0].mxu0
      %v1753 = vpop.f32.mrb[0].mxu0
      %v1754 = vadd.f32 %v1593, %v1753
      %v1755 = vpop.f32.mrb[0].mxu0
      %1756 = vmatprep.mubr.bf16.mxu0 %v840
      %1757 = vmatmul.mubr.bf16.gmra.mrb[0].mxu0 %v839
      %v1758 = vpop.f32.mrb[0].mxu0
      %v1759 = vadd.f32 %v1598, %v1758
      %v1760 = vpop.f32.mrb[0].mxu0
      %v1761 = vpop.f32.mrb[0].mxu0
      %v1762 = vadd.f32 %v1601, %v1761
      %v1763 = vpop.f32.mrb[0].mxu0
      %1764 = vmatprep.mubr.bf16.mxu0 %v847
      %1765 = vmatmul.mubr.bf16.gmra.mrb[0].mxu0 %v846
      %v1766 = vpop.f32.mrb[0].mxu0
      %v1767 = vadd.f32 %v1606, %v1766
      %v1768 = vpop.f32.mrb[0].mxu0
      %v1769 = vpop.f32.mrb[0].mxu0
      %v1770 = vadd.f32 %v1609, %v1769
      %v1771 = vpop.f32.mrb[0].mxu0
      %1772 = vmatprep.mubr.bf16.mxu0 %v854
      %1773 = vmatmul.mubr.bf16.gmra.mrb[0].mxu0 %v853
      %v1774 = vpop.f32.mrb[0].mxu0
      %v1775 = vadd.f32 %v1614, %v1774
      %v1776 = vpop.f32.mrb[0].mxu0
      %v1777 = vpop.f32.mrb[0].mxu0
      %v1778 = vadd.f32 %v1617, %v1777
      %v1779 = vpop.f32.mrb[0].mxu0
      %1780 = vmatprep.mubr.bf16.mxu0 %v861
      %1781 = vmatmul.mubr.bf16.gmra.mrb[0].mxu0 %v860
      %v1782 = vpop.f32.mrb[0].mxu0
      %v1783 = vadd.f32 %v1622, %v1782
      %v1784 = vpop.f32.mrb[0].mxu0
      %v1785 = vpop.f32.mrb[0].mxu0
      %v1786 = vadd.f32 %v1625, %v1785
      %v1787 = vpop.f32.mrb[0].mxu0
      %1788 = vmatprep.mubr.bf16.mxu0 %v868
      %1789 = vmatmul.mubr.bf16.gmra.mrb[0].mxu0 %v867
      %v1790 = vpop.f32.mrb[0].mxu0
      %v1791 = vadd.f32 %v1630, %v1790
      %v1792 = vpop.f32.mrb[0].mxu0
      %v1793 = vpop.f32.mrb[0].mxu0
      %v1794 = vadd.f32 %v1633, %v1793
      %v1795 = vpop.f32.mrb[0].mxu0
      %1796 = vmatprep.mubr.bf16.mxu0 %v875
      %1797 = vmatmul.mubr.bf16.gmra.mrb[0].mxu0 %v874
      %v1798 = vpop.f32.mrb[0].mxu0
      %v1799 = vadd.f32 %v1638, %v1798
      %v1800 = vpop.f32.mrb[0].mxu0
      %v1801 = vpop.f32.mrb[0].mxu0
      %v1802 = vadd.f32 %v1641, %v1801
      %v1803 = vpop.f32.mrb[0].mxu0
      %1804 = vdwg.mxu0
      %1805 = vmatprep.subr.bf16.mxu0 0
      %1806 = vmatpush1.bf16.msra.mxu0 %v1221
      %1807 = vmatprep.subr.bf16.mxu0 0
      %1808 = vmatpush1.bf16.msra.mxu0 %v1222
      %1809 = vmatprep.subr.bf16.mxu0 0
      %1810 = vmatpush1.bf16.msra.mxu0 0
      %1811 = vmatprep.subr.bf16.mxu0 0
      %1812 = vmatpush1.bf16.msra.mxu0 0
      %1813 = vmatprep.subr.bf16.mxu0 0
      %1814 = vmatpush1.bf16.msra.mxu0 0
      %1815 = vmatprep.subr.bf16.mxu0 0
      %1816 = vmatpush1.bf16.msra.mxu0 0
      %1817 = vmatprep.subr.bf16.mxu0 0
      %1818 = vmatpush1.bf16.msra.mxu0 0
      %1819 = vmatprep.subr.bf16.mxu0 0
      %1820 = vmatpush1.bf16.msra.mxu0 0
      %1821 = vmatprep.subr.bf16.mxu0 0
      %1822 = vmatpush1.bf16.msra.mxu0 0
      %1823 = vmatprep.subr.bf16.mxu0 0
      %1824 = vmatpush1.bf16.msra.mxu0 0
      %1825 = vmatprep.subr.bf16.mxu0 0
      %1826 = vmatpush1.bf16.msra.mxu0 0
      %1827 = vmatprep.subr.bf16.mxu0 0
      %1828 = vmatpush1.bf16.msra.mxu0 0
      %1829 = vmatprep.subr.bf16.mxu0 0
      %1830 = vmatpush1.bf16.msra.mxu0 0
      %1831 = vmatprep.subr.bf16.mxu0 0
      %1832 = vmatpush1.bf16.msra.mxu0 0
      %1833 = vmatprep.subr.bf16.mxu0 0
      %1834 = vmatpush1.bf16.msra.mxu0 0
      %1835 = vmatprep.subr.bf16.mxu0 0
      %1836 = vmatpush1.bf16.msra.mxu0 0
      %1837 = vmatprep.mubr.bf16.mxu0 0
      %1838 = vmatmul.mubr.bf16.gmra.mrb[0].mxu0 %v1275
      %v1839 = vpop.f32.mrb[0].mxu0
      %v1840 = vadd.f32 %v1679, %v1839
      %v1841 = vpop.f32.mrb[0].mxu0
      %v1842 = vpop.f32.mrb[0].mxu0
      %v1843 = vadd.f32 %v1682, %v1842
      %v1844 = vpop.f32.mrb[0].mxu0
      %1845 = vmatprep.mubr.bf16.mxu0 0
      %1846 = vmatmul.mubr.bf16.gmra.mrb[0].mxu0 %v1278
      %v1847 = vpop.f32.mrb[0].mxu0
      %v1848 = vadd.f32 %v1687, %v1847
      %v1849 = vpop.f32.mrb[0].mxu0
      %v1850 = vpop.f32.mrb[0].mxu0
      %v1851 = vadd.f32 %v1690, %v1850
      %v1852 = vpop.f32.mrb[0].mxu0
      %1853 = vmatprep.mubr.bf16.mxu0 0
      %1854 = vmatmul.mubr.bf16.gmra.mrb[0].mxu0 %v1281
      %v1855 = vpop.f32.mrb[0].mxu0
      %v1856 = vadd.f32 %v1695, %v1855
      %v1857 = vpop.f32.mrb[0].mxu0
      %v1858 = vpop.f32.mrb[0].mxu0
      %v1859 = vadd.f32 %v1698, %v1858
      %v1860 = vpop.f32.mrb[0].mxu0
      %1861 = vmatprep.mubr.bf16.mxu0 0
      %1862 = vmatmul.mubr.bf16.gmra.mrb[0].mxu0 %v1284
      %v1863 = vpop.f32.mrb[0].mxu0
      %v1864 = vadd.f32 %v1703, %v1863
      %v1865 = vpop.f32.mrb[0].mxu0
      %v1866 = vpop.f32.mrb[0].mxu0
      %v1867 = vadd.f32 %v1706, %v1866
      %v1868 = vpop.f32.mrb[0].mxu0
      %1869 = vmatprep.mubr.bf16.mxu0 0
      %1870 = vmatmul.mubr.bf16.gmra.mrb[0].mxu0 %v1287
      %v1871 = vpop.f32.mrb[0].mxu0
      %v1872 = vadd.f32 %v1711, %v1871
      %v1873 = vpop.f32.mrb[0].mxu0
      %v1874 = vpop.f32.mrb[0].mxu0
      %v1875 = vadd.f32 %v1714, %v1874
      %v1876 = vpop.f32.mrb[0].mxu0
      %1877 = vmatprep.mubr.bf16.mxu0 0
      %1878 = vmatmul.mubr.bf16.gmra.mrb[0].mxu0 %v1290
      %v1879 = vpop.f32.mrb[0].mxu0
      %v1880 = vadd.f32 %v1719, %v1879
      %v1881 = vpop.f32.mrb[0].mxu0
      %v1882 = vpop.f32.mrb[0].mxu0
      %v1883 = vadd.f32 %v1722, %v1882
      %v1884 = vpop.f32.mrb[0].mxu0
      %1885 = vmatprep.mubr.bf16.mxu0 0
      %1886 = vmatmul.mubr.bf16.gmra.mrb[0].mxu0 %v1293
      %v1887 = vpop.f32.mrb[0].mxu0
      %v1888 = vadd.f32 %v1727, %v1887
      %v1889 = vpop.f32.mrb[0].mxu0
      %v1890 = vpop.f32.mrb[0].mxu0
      %v1891 = vadd.f32 %v1730, %v1890
      %v1892 = vpop.f32.mrb[0].mxu0
      %1893 = vmatprep.mubr.bf16.mxu0 0
      %1894 = vmatmul.mubr.bf16.gmra.mrb[0].mxu0 %v1296
      %v1895 = vpop.f32.mrb[0].mxu0
      %v1896 = vadd.f32 %v1735, %v1895
      %v1897 = vpop.f32.mrb[0].mxu0
      %v1898 = vpop.f32.mrb[0].mxu0
      %v1899 = vadd.f32 %v1738, %v1898
      %v1900 = vpop.f32.mrb[0].mxu0
      %1901 = vmatprep.mubr.bf16.mxu0 0
      %1902 = vmatmul.mubr.bf16.gmra.mrb[0].mxu0 %v1299
      %v1903 = vpop.f32.mrb[0].mxu0
      %v1904 = vadd.f32 %v1743, %v1903
      %v1905 = vpop.f32.mrb[0].mxu0
      %v1906 = vpop.f32.mrb[0].mxu0
      %v1907 = vadd.f32 %v1746, %v1906
      %v1908 = vpop.f32.mrb[0].mxu0
      %1909 = vmatprep.mubr.bf16.mxu0 0
      %1910 = vmatmul.mubr.bf16.gmra.mrb[0].mxu0 %v1302
      %v1911 = vpop.f32.mrb[0].mxu0
      %v1912 = vadd.f32 %v1751, %v1911
      %v1913 = vpop.f32.mrb[0].mxu0
      %v1914 = vpop.f32.mrb[0].mxu0
      %v1915 = vadd.f32 %v1754, %v1914
      %v1916 = vpop.f32.mrb[0].mxu0
      %1917 = vmatprep.mubr.bf16.mxu0 0
      %1918 = vmatmul.mubr.bf16.gmra.mrb[0].mxu0 %v1305
      %v1919 = vpop.f32.mrb[0].mxu0
      %v1920 = vadd.f32 %v1759, %v1919
      %v1921 = vpop.f32.mrb[0].mxu0
      %v1922 = vpop.f32.mrb[0].mxu0
      %v1923 = vadd.f32 %v1762, %v1922
      %v1924 = vpop.f32.mrb[0].mxu0
      %1925 = vmatprep.mubr.bf16.mxu0 0
      %1926 = vmatmul.mubr.bf16.gmra.mrb[0].mxu0 %v1308
      %v1927 = vpop.f32.mrb[0].mxu0
      %v1928 = vadd.f32 %v1767, %v1927
      %v1929 = vpop.f32.mrb[0].mxu0
      %v1930 = vpop.f32.mrb[0].mxu0
      %v1931 = vadd.f32 %v1770, %v1930
      %v1932 = vpop.f32.mrb[0].mxu0
      %1933 = vmatprep.mubr.bf16.mxu0 0
      %1934 = vmatmul.mubr.bf16.gmra.mrb[0].mxu0 %v1311
      %v1935 = vpop.f32.mrb[0].mxu0
      %v1936 = vadd.f32 %v1775, %v1935
      %v1937 = vpop.f32.mrb[0].mxu0
      %v1938 = vpop.f32.mrb[0].mxu0
      %v1939 = vadd.f32 %v1778, %v1938
      %v1940 = vpop.f32.mrb[0].mxu0
      %1941 = vmatprep.mubr.bf16.mxu0 0
      %1942 = vmatmul.mubr.bf16.gmra.mrb[0].mxu0 %v1314
      %v1943 = vpop.f32.mrb[0].mxu0
      %v1944 = vadd.f32 %v1783, %v1943
      %v1945 = vpop.f32.mrb[0].mxu0
      %v1946 = vpop.f32.mrb[0].mxu0
      %v1947 = vadd.f32 %v1786, %v1946
      %v1948 = vpop.f32.mrb[0].mxu0
      %1949 = vmatprep.mubr.bf16.mxu0 0
      %1950 = vmatmul.mubr.bf16.gmra.mrb[0].mxu0 %v1317
      %v1951 = vpop.f32.mrb[0].mxu0
      %v1952 = vadd.f32 %v1791, %v1951
      %v1953 = vpop.f32.mrb[0].mxu0
      %v1954 = vpop.f32.mrb[0].mxu0
      %v1955 = vadd.f32 %v1794, %v1954
      %v1956 = vpop.f32.mrb[0].mxu0
      %1957 = vmatprep.mubr.bf16.mxu0 0
      %1958 = vmatmul.mubr.bf16.gmra.mrb[0].mxu0 %v1320
      %v1959 = vpop.f32.mrb[0].mxu0
      %v1960 = vadd.f32 %v1799, %v1959
      %v1961 = vpop.f32.mrb[0].mxu0
      %v1962 = vpop.f32.mrb[0].mxu0
      %v1963 = vadd.f32 %v1802, %v1962
      %v1964 = vpop.f32.mrb[0].mxu0
      %1965 = vdwg.mxu0
      %v1966 = vmax.f32 %v1840, 0.0
      %v1967 = vmax.f32 %v1843, 0.0
      %v1968 = vmax.f32 %v1848, 0.0
      %v1969 = vmax.f32 %v1851, 0.0
      %v1970 = vmax.f32 %v1856, 0.0
      %v1971 = vmax.f32 %v1859, 0.0
      %v1972 = vmax.f32 %v1864, 0.0
      %v1973 = vmax.f32 %v1867, 0.0
      %v1974 = vmax.f32 %v1872, 0.0
      %v1975 = vmax.f32 %v1875, 0.0
      %v1976 = vmax.f32 %v1880, 0.0
      %v1977 = vmax.f32 %v1883, 0.0
      %v1978 = vmax.f32 %v1888, 0.0
      %v1979 = vmax.f32 %v1891, 0.0
      %v1980 = vmax.f32 %v1896, 0.0
      %v1981 = vmax.f32 %v1899, 0.0
      %v1982 = vmax.f32 %v1904, 0.0
      %v1983 = vmax.f32 %v1907, 0.0
      %v1984 = vmax.f32 %v1912, 0.0
      %v1985 = vmax.f32 %v1915, 0.0
      %v1986 = vmax.f32 %v1920, 0.0
      %v1987 = vmax.f32 %v1923, 0.0
      %v1988 = vmax.f32 %v1928, 0.0
      %v1989 = vmax.f32 %v1931, 0.0
      %v1990 = vmax.f32 %v1936, 0.0
      %v1991 = vmax.f32 %v1939, 0.0
      %v1992 = vmax.f32 %v1944, 0.0
      %v1993 = vmax.f32 %v1947, 0.0
      %v1994 = vmax.f32 %v1952, 0.0
      %v1995 = vmax.f32 %v1955, 0.0
      %v1996 = vmax.f32 %v1960, 0.0
      %v1997 = vmax.f32 %v1963, 0.0
      %v1998 = vpack.c.bf16 %v1967, %v1966
      %v1999 = vpack.c.bf16 %v1969, %v1968
      %v2000 = vpack.c.bf16 %v1971, %v1970
      %v2001 = vpack.c.bf16 %v1973, %v1972
      %v2002 = vpack.c.bf16 %v1975, %v1974
      %v2003 = vpack.c.bf16 %v1977, %v1976
      %v2004 = vpack.c.bf16 %v1979, %v1978
      %v2005 = vpack.c.bf16 %v1981, %v1980
      %v2006 = vpack.c.bf16 %v1983, %v1982
      %v2007 = vpack.c.bf16 %v1985, %v1984
      %v2008 = vpack.c.bf16 %v1987, %v1986
      %v2009 = vpack.c.bf16 %v1989, %v1988
      %v2010 = vpack.c.bf16 %v1991, %v1990
      %v2011 = vpack.c.bf16 %v1993, %v1992
      %v2012 = vpack.c.bf16 %v1995, %v1994
      %v2013 = vpack.c.bf16 %v1997, %v1996
      %v2030 = vunpack.c.l.b16 %v1998
      %v2031 = vunpack.c.h.b16 %v1998
      %v2032 = vunpack.c.l.b16 %v1999
      %v2033 = vunpack.c.h.b16 %v1999
      %v2034 = vunpack.c.l.b16 %v2000
      %v2035 = vunpack.c.h.b16 %v2000
      %v2036 = vunpack.c.l.b16 %v2001
      %v2037 = vunpack.c.h.b16 %v2001
      %v2038 = vunpack.c.l.b16 %v2002
      %v2039 = vunpack.c.h.b16 %v2002
      %v2040 = vunpack.c.l.b16 %v2003
      %v2041 = vunpack.c.h.b16 %v2003
      %v2042 = vunpack.c.l.b16 %v2004
      %v2043 = vunpack.c.h.b16 %v2004
      %v2044 = vunpack.c.l.b16 %v2005
      %v2045 = vunpack.c.h.b16 %v2005
      %v2046 = vunpack.c.l.b16 %v2006
      %v2047 = vunpack.c.h.b16 %v2006
      %v2048 = vunpack.c.l.b16 %v2007
      %v2049 = vunpack.c.h.b16 %v2007
      %v2050 = vunpack.c.l.b16 %v2008
      %v2051 = vunpack.c.h.b16 %v2008
      %v2052 = vunpack.c.l.b16 %v2009
      %v2053 = vunpack.c.h.b16 %v2009
      %v2054 = vunpack.c.l.b16 %v2010
      %v2055 = vunpack.c.h.b16 %v2010
      %v2056 = vunpack.c.l.b16 %v2011
      %v2057 = vunpack.c.h.b16 %v2011
      %v2058 = vunpack.c.l.b16 %v2012
      %v2059 = vunpack.c.h.b16 %v2012
      %v2060 = vunpack.c.l.b16 %v2013
      %v2061 = vunpack.c.h.b16 %v2013
      %v2062 = vpack.c.b16 %v2030, %v2030
      %v2063 = vpack.c.b16 %v2031, %v2031
      %v2064 = vpack.c.b16 %v2032, %v2032
      %v2065 = vpack.c.b16 %v2033, %v2033
      %v2066 = vpack.c.b16 %v2034, %v2034
      %v2067 = vpack.c.b16 %v2035, %v2035
      %v2068 = vpack.c.b16 %v2036, %v2036
      %v2069 = vpack.c.b16 %v2037, %v2037
      %v2070 = vpack.c.b16 %v2038, %v2038
      %v2071 = vpack.c.b16 %v2039, %v2039
      %v2072 = vpack.c.b16 %v2040, %v2040
      %v2073 = vpack.c.b16 %v2041, %v2041
      %v2074 = vpack.c.b16 %v2042, %v2042
      %v2075 = vpack.c.b16 %v2043, %v2043
      %v2076 = vpack.c.b16 %v2044, %v2044
      %v2077 = vpack.c.b16 %v2045, %v2045
      %v2078 = vpack.c.b16 %v2046, %v2046
      %v2079 = vpack.c.b16 %v2047, %v2047
      %v2080 = vpack.c.b16 %v2048, %v2048
      %v2081 = vpack.c.b16 %v2049, %v2049
      %v2082 = vpack.c.b16 %v2050, %v2050
      %v2083 = vpack.c.b16 %v2051, %v2051
      %v2084 = vpack.c.b16 %v2052, %v2052
      %v2085 = vpack.c.b16 %v2053, %v2053
      %v2086 = vpack.c.b16 %v2054, %v2054
      %v2087 = vpack.c.b16 %v2055, %v2055
      %v2088 = vpack.c.b16 %v2056, %v2056
      %v2089 = vpack.c.b16 %v2057, %v2057
      %v2090 = vpack.c.b16 %v2058, %v2058
      %v2091 = vpack.c.b16 %v2059, %v2059
      %v2092 = vpack.c.b16 %v2060, %v2060
      %v2093 = vpack.c.b16 %v2061, %v2061
      %2126 = vst [vmem:[%s175] sm:$0xf] %v2062
      %2127 = vst [vmem:[%s175 + $0x4] sm:$0xf] %v2063
      %2128 = vst [vmem:[%s175 + $0x8] sm:$0xf] %v2064
      %2129 = vst [vmem:[%s175 + $0xc] sm:$0xf] %v2065
      %2130 = vst [vmem:[%s175 + $0x10] sm:$0xf] %v2066
      %2131 = vst [vmem:[%s175 + $0x14] sm:$0xf] %v2067
      %2132 = vst [vmem:[%s175 + $0x18] sm:$0xf] %v2068
      %2133 = vst [vmem:[%s175 + $0x1c] sm:$0xf] %v2069
      %2134 = vst [vmem:[%s175 + $0x20] sm:$0xf] %v2070
      %2135 = vst [vmem:[%s175 + $0x24] sm:$0xf] %v2071
      %2136 = vst [vmem:[%s175 + $0x28] sm:$0xf] %v2072
      %2137 = vst [vmem:[%s175 + $0x2c] sm:$0xf] %v2073
      %2138 = vst [vmem:[%s175 + $0x30] sm:$0xf] %v2074
      %2139 = vst [vmem:[%s175 + $0x34] sm:$0xf] %v2075
      %2140 = vst [vmem:[%s175 + $0x38] sm:$0xf] %v2076
      %2141 = vst [vmem:[%s175 + $0x3c] sm:$0xf] %v2077
      %2142 = vst [vmem:[%s175 + $0x40] sm:$0xf] %v2078
      %2143 = vst [vmem:[%s175 + $0x44] sm:$0xf] %v2079
      %2144 = vst [vmem:[%s175 + $0x48] sm:$0xf] %v2080
      %2145 = vst [vmem:[%s175 + $0x4c] sm:$0xf] %v2081
      %2146 = vst [vmem:[%s175 + $0x50] sm:$0xf] %v2082
      %2147 = vst [vmem:[%s175 + $0x54] sm:$0xf] %v2083
      %2148 = vst [vmem:[%s175 + $0x58] sm:$0xf] %v2084
      %2149 = vst [vmem:[%s175 + $0x5c] sm:$0xf] %v2085
      %2150 = vst [vmem:[%s175 + $0x60] sm:$0xf] %v2086
      %2151 = vst [vmem:[%s175 + $0x64] sm:$0xf] %v2087
      %2152 = vst [vmem:[%s175 + $0x68] sm:$0xf] %v2088
      %2153 = vst [vmem:[%s175 + $0x6c] sm:$0xf] %v2089
      %2154 = vst [vmem:[%s175 + $0x70] sm:$0xf] %v2090
      %2155 = vst [vmem:[%s175 + $0x74] sm:$0xf] %v2091
      %2156 = vst [vmem:[%s175 + $0x78] sm:$0xf] %v2092
      %2157 = vst [vmem:[%s175 + $0x7c] sm:$0xf] %v2093
      %s2158 = smul.u32 32, %s14
      %p2159 = scmp.lt.s32.totalorder %s2158, 63
      %s2160 = scalar_select %p2159, %s2158, 63
      %s2161 = smul.addr %s2160, 4
      %s2162 = scalar_lea.vmem %s3, %s2161
      // Predicated region
      $region33: #{temp_embed_forward.6} parent=31 // pred_check
        %p2163 = pneg %p100
      $region34: #{temp_embed_forward.6} parent=31 // pred_check_branch
        %2165 = sbr.rel (%p2163) target = $region36
      $region35: #{temp_embed_forward.6} parent=31 // pred_region
        %s2166 = smul.u32 32, %s14
      $region36: #{temp_embed_forward.6} parent=31 // pred_fallthru
        _
    $region32: #{temp_embed_forward.6} parent=5 // pred_fallthru
      _
    %p2167 = scmp.le.s32.totalorder 2, %s9
    // Predicated region
    $region37: #{temp_embed_forward.6} parent=5 // pred_check
      %p2168 = pneg %p2167
    $region38: #{temp_embed_forward.6} parent=5 // pred_check_branch
      %2170 = sbr.rel (%p2168) target = $region40
    $region39: #{temp_embed_forward.6} parent=5 // pred_region
      %s2171 = ssub.s32 %s9, 2
      // Predicated region
      $region41: #{temp_embed_forward.6} parent=39 // pred_check
        %p2172 = pneg %p106
      $region42: #{temp_embed_forward.6} parent=39 // pred_check_branch
        %2174 = sbr.rel (%p2172) target = $region44
      $region43: #{temp_embed_forward.6} parent=39 // pred_region
        %s2175 = smul.u32 32, %s15
        %p2176 = scmp.lt.s32.totalorder %s2175, 63
        %s2177 = scalar_select %p2176, %s2175, 63
        %s2178 = smul.addr %s2177, 4
        %s2179 = scalar_lea.vmem %s3, %s2178
      $region44: #{temp_embed_forward.6} parent=39 // pred_fallthru
        _
    $region40: #{temp_embed_forward.6} parent=5 // pred_fallthru
      _
  $region6: #{temp_embed_forward.6} parent=0 // loop_footer
    %s13 = sadd.s32 1, %s9
  $region7: #{temp_embed_forward.6} parent=0 // loop_footer_branch
    %8 = sbr.rel target = $region3
  $region8: #{temp_embed_forward.6} parent=0 // loop_exit
    _

// kernel: temp_embed_forward.7
$region0: #{temp_embed_forward.7}
  #allocation0 [shape = 'u32[]', space=smem, size = 0x4, offset = 0x4, fixed_abs, tag = 'smem constant byte address 0x4 - core index']
  #allocation1 [shape = 'u32[144,128]{1,0:T(1,128)}', space=vmem, size = 0x12000, scoped, tag = 'internal scratch']
  %s0 = inlined_call_operand.vmem [shape: bf16[128,1600], index: 0, kind: input, shape index: {}]
  %s1 = inlined_call_operand.vmem [shape: bf16[1600,128], index: 1, kind: input, shape index: {}]
  %s2 = inlined_call_operand.vmem [shape: f32[1,128], index: 2, kind: input, shape index: {}]
  %s3 = inlined_call_operand.vmem [shape: bf16[128,128], index: 3, kind: output, shape index: {}]
  %s4 = sld [smem:[#allocation0]]
  $region45: #{temp_embed_forward.7} parent=0
    _
  %s6 = ssub.s32 1, %s4
  %s7 = scalar_select 0, %s6, %s4
  loop: start=0, step=1, limit=4
  $region2: #{temp_embed_forward.7} parent=0 // loop_pre_header
    _
  $region3: #{temp_embed_forward.7} parent=0 // loop_header
    %s9 = sphi 0, %s13
    %p10 = scmp.ge.s32.totalorder %s9, 4
    %s19 = sphi 0, %s21
    %s22 = sphi 0, %s19
    %s23 = sphi 0, %s22
    %s39 = sphi 0, %s23
    %s43 = sphi 0, %s43
    %s45 = sphi 0, %s43
    %s46 = sphi 0, %s45
    %s60 = sphi 0, %s46
    %s64 = sphi 0, %s64
    %s66 = sphi 0, %s64
    %s67 = sphi 0, %s66
    %s81 = sphi 0, %s67
    %s87 = sphi 0, %s89
    %s90 = sphi 0, %s87
    %s91 = sphi 0, %s90
    %s107 = sphi 0, %s91
  $region4: #{temp_embed_forward.7} parent=0 // loop_header_branch
    %12 = sbr.rel (%p10) target = $region8
  $region5: #{temp_embed_forward.7} parent=0 // loop_body
    %s14 = ssub.s32 %s9, 1
    %s15 = ssub.s32 %s9, 2
    %s16 = sadd.s32 %s9, 1
    %s17 = ssub.s32 %s9, %s16
    %p18 = scmp.eq.s32.totalorder %s17, 0
    %s20 = sadd.s32 %s19, 1
    %s21 = scalar_select %p18, %s19, %s20
    %p24 = pneg %p18
    %p25 = scmp.eq.s32.totalorder %s9, 1
    %p26 = por %p24, %p25
    %p27 = scmp.ne.s32.totalorder %s19, %s22
    %p28 = scmp.eq.s32.totalorder %s9, 0
    %p29 = por %p27, %p28
    %p30 = scmp.ne.s32.totalorder %s19, %s22
    %p31 = scmp.eq.s32.totalorder %s14, 1
    %p32 = por %p30, %p31
    %p33 = scmp.ne.s32.totalorder %s22, %s23
    %p34 = scmp.eq.s32.totalorder %s14, 0
    %p35 = por %p33, %p34
    %p36 = scmp.ne.s32.totalorder %s22, %s23
    %p37 = scmp.eq.s32.totalorder %s15, 1
    %p38 = por %p36, %p37
    %p40 = scmp.ne.s32.totalorder %s23, %s39
    %p41 = scmp.eq.s32.totalorder %s15, 0
    %p42 = por %p40, %p41
    %s44 = sadd.s32 %s43, 1
    %p47 = scmp.eq.s32.totalorder %s9, 1
    %p48 = scmp.ne.s32.totalorder %s43, %s45
    %p49 = scmp.eq.s32.totalorder %s9, 0
    %p50 = por %p48, %p49
    %p51 = scmp.ne.s32.totalorder %s43, %s45
    %p52 = scmp.eq.s32.totalorder %s14, 1
    %p53 = por %p51, %p52
    %p54 = scmp.ne.s32.totalorder %s45, %s46
    %p55 = scmp.eq.s32.totalorder %s14, 0
    %p56 = por %p54, %p55
    %p57 = scmp.ne.s32.totalorder %s45, %s46
    %p58 = scmp.eq.s32.totalorder %s15, 1
    %p59 = por %p57, %p58
    %p61 = scmp.ne.s32.totalorder %s46, %s60
    %p62 = scmp.eq.s32.totalorder %s15, 0
    %p63 = por %p61, %p62
    %s65 = sadd.s32 %s64, 1
    %p68 = scmp.eq.s32.totalorder %s9, 1
    %p69 = scmp.ne.s32.totalorder %s64, %s66
    %p70 = scmp.eq.s32.totalorder %s9, 0
    %p71 = por %p69, %p70
    %p72 = scmp.ne.s32.totalorder %s64, %s66
    %p73 = scmp.eq.s32.totalorder %s14, 1
    %p74 = por %p72, %p73
    %p75 = scmp.ne.s32.totalorder %s66, %s67
    %p76 = scmp.eq.s32.totalorder %s14, 0
    %p77 = por %p75, %p76
    %p78 = scmp.ne.s32.totalorder %s66, %s67
    %p79 = scmp.eq.s32.totalorder %s15, 1
    %p80 = por %p78, %p79
    %p82 = scmp.ne.s32.totalorder %s67, %s81
    %p83 = scmp.eq.s32.totalorder %s15, 0
    %p84 = por %p82, %p83
    %s85 = ssub.s32 %s9, %s16
    %p86 = scmp.eq.s32.totalorder %s85, 0
    %s88 = sadd.s32 %s87, 1
    %s89 = scalar_select %p86, %s87, %s88
    %p92 = pneg %p86
    %p93 = scmp.eq.s32.totalorder %s9, 1
    %p94 = por %p92, %p93
    %p95 = scmp.ne.s32.totalorder %s87, %s90
    %p96 = scmp.eq.s32.totalorder %s9, 0
    %p97 = por %p95, %p96
    %p98 = scmp.ne.s32.totalorder %s87, %s90
    %p99 = scmp.eq.s32.totalorder %s14, 1
    %p100 = por %p98, %p99
    %p101 = scmp.ne.s32.totalorder %s90, %s91
    %p102 = scmp.eq.s32.totalorder %s14, 0
    %p103 = por %p101, %p102
    %p104 = scmp.ne.s32.totalorder %s90, %s91
    %p105 = scmp.eq.s32.totalorder %s15, 1
    %p106 = por %p104, %p105
    %p108 = scmp.ne.s32.totalorder %s91, %s107
    %p109 = scmp.eq.s32.totalorder %s15, 0
    %p110 = por %p108, %p109
    %p111 = scmp.le.s32.totalorder 1, %s9
    %p112 = scmp.lt.s32.totalorder %s9, 3
    %p113 = pnand %p111, %p112
    %p114 = pneg %p113
    // Predicated region
    $region9: #{temp_embed_forward.7} parent=5 // pred_check
      _
    $region10: #{temp_embed_forward.7} parent=5 // pred_check_branch
      %116 = sbr.rel (%p113) target = $region12
    $region11: #{temp_embed_forward.7} parent=5 // pred_region
      %s117 = ssub.s32 %s9, 1
      // Predicated region
      $region13: #{temp_embed_forward.7} parent=11 // pred_check
        %p118 = pneg %p56
      $region14: #{temp_embed_forward.7} parent=11 // pred_check_branch
        %120 = sbr.rel (%p118) target = $region16
      $region15: #{temp_embed_forward.7} parent=11 // pred_region
        _
      $region16: #{temp_embed_forward.7} parent=11 // pred_fallthru
        _
      // Predicated region
      $region17: #{temp_embed_forward.7} parent=11 // pred_check
        %p121 = pneg %p77
      $region18: #{temp_embed_forward.7} parent=11 // pred_check_branch
        %123 = sbr.rel (%p121) target = $region20
      $region19: #{temp_embed_forward.7} parent=11 // pred_region
        _
      $region20: #{temp_embed_forward.7} parent=11 // pred_fallthru
        _
    $region12: #{temp_embed_forward.7} parent=5 // pred_fallthru
      _
    %p124 = scmp.lt.s32.totalorder %s9, 2
    // Predicated region
    $region21: #{temp_embed_forward.7} parent=5 // pred_check
      %p125 = pneg %p124
    $region22: #{temp_embed_forward.7} parent=5 // pred_check_branch
      %127 = sbr.rel (%p125) target = $region24
    $region23: #{temp_embed_forward.7} parent=5 // pred_region
      // Predicated region
      $region25: #{temp_embed_forward.7} parent=23 // pred_check
        %p128 = pneg %p29
      $region26: #{temp_embed_forward.7} parent=23 // pred_check_branch
        %130 = sbr.rel (%p128) target = $region28
      $region27: #{temp_embed_forward.7} parent=23 // pred_region
        %s131 = smul.u32 8, %s9
        %p132 = scmp.lt.s32.totalorder %s131, 15
        %s133 = scalar_select %p132, %s131, 15
        %s134 = smul.addr %s133, 13
        %s135 = smul.addr %s134, 4
        %s136 = scalar_lea.vmem %s0, %s135
        %s137 = smul.u32 8, %s9
      $region28: #{temp_embed_forward.7} parent=23 // pred_fallthru
        _
    $region24: #{temp_embed_forward.7} parent=5 // pred_fallthru
      _
    %p138 = scmp.le.s32.totalorder 1, %s9
    %p139 = scmp.lt.s32.totalorder %s9, 3
    %p140 = pnand %p138, %p139
    %p141 = pneg %p140
    // Predicated region
    $region29: #{temp_embed_forward.7} parent=5 // pred_check
      _
    $region30: #{temp_embed_forward.7} parent=5 // pred_check_branch
      %143 = sbr.rel (%p140) target = $region32
    $region31: #{temp_embed_forward.7} parent=5 // pred_region
      %s144 = ssub.s32 %s9, 1
      %s145 = smul.u32 8, %s14
      %p146 = scmp.lt.s32.totalorder %s145, 15
      %s147 = scalar_select %p146, %s145, 15
      %s148 = smul.addr %s147, 13
      %s149 = smul.addr %s148, 4
      %s150 = scalar_lea.vmem %s0, %s149
      %p151 = pneg %p35
      %p152 = pneg %p32
      %p153 = pneg %p56
      %p154 = pneg %p53
      %p155 = pneg %p77
      %p156 = pneg %p74
      %p157 = pneg %p103
      %p158 = pneg %p100
      %s159 = smul.u32 8, %s14
      %p160 = scmp.lt.s32.totalorder %s159, 15
      %s161 = scalar_select %p160, %s159, 15
      %s162 = smul.addr %s161, 4
      %s163 = scalar_lea.vmem %s3, %s162
      %s164 = smul.u32 8, %s14
      %p165 = scmp.lt.s32.totalorder %s164, 15
      %s166 = scalar_select %p165, %s164, 15
      %s167 = smul.addr %s166, 13
      %s168 = smul.addr %s167, 4
      %s169 = scalar_lea.vmem %s0, %s168
      %s170 = smul.u32 8, %s14
      %s171 = smul.u32 8, %s14
      %p172 = scmp.lt.s32.totalorder %s171, 15
      %s173 = scalar_select %p172, %s171, 15
      %s174 = smul.addr %s173, 4
      %s175 = scalar_lea.vmem %s3, %s174
      %s176 = smul.u32 8, %s14
      %v178 = vld [vmem:[%s169] sm:$0xff]
      %v179 = vld [vmem:[%s169 + $0x8] sm:$0xff]
      %v180 = vld [vmem:[%s169 + $0x10] sm:$0xff]
      %v181 = vld [vmem:[%s169 + $0x18] sm:$0xff]
      %v182 = vld [vmem:[%s169 + $0x20] sm:$0xff]
      %v183 = vld [vmem:[%s169 + $0x28] sm:$0xff]
      %v184 = vld [vmem:[%s169 + $0x30] sm:$0xf]
      %v185 = vld [vmem:[%s169 + $0x34] sm:$0xff]
      %v186 = vld [vmem:[%s169 + $0x3c] sm:$0xff]
      %v187 = vld [vmem:[%s169 + $0x44] sm:$0xff]
      %v188 = vld [vmem:[%s169 + $0x4c] sm:$0xff]
      %v189 = vld [vmem:[%s169 + $0x54] sm:$0xff]
      %v190 = vld [vmem:[%s169 + $0x5c] sm:$0xff]
      %v191 = vld [vmem:[%s169 + $0x64] sm:$0xf]
      %v192 = vld [vmem:[%s169 + $0x68] sm:$0xff]
      %v193 = vld [vmem:[%s169 + $0x70] sm:$0xff]
      %v194 = vld [vmem:[%s169 + $0x78] sm:$0xff]
      %v195 = vld [vmem:[%s169 + $0x80] sm:$0xff]
      %v196 = vld [vmem:[%s169 + $0x88] sm:$0xff]
      %v197 = vld [vmem:[%s169 + $0x90] sm:$0xff]
      %v198 = vld [vmem:[%s169 + $0x98] sm:$0xf]
      %v199 = vld [vmem:[%s169 + $0x9c] sm:$0xff]
      %v200 = vld [vmem:[%s169 + $0xa4] sm:$0xff]
      %v201 = vld [vmem:[%s169 + $0xac] sm:$0xff]
      %v202 = vld [vmem:[%s169 + $0xb4] sm:$0xff]
      %v203 = vld [vmem:[%s169 + $0xbc] sm:$0xff]
      %v204 = vld [vmem:[%s169 + $0xc4] sm:$0xff]
      %v205 = vld [vmem:[%s169 + $0xcc] sm:$0xf]
      %v206 = vld [vmem:[%s169 + $0xd0] sm:$0xff]
      %v207 = vld [vmem:[%s169 + $0xd8] sm:$0xff]
      %v208 = vld [vmem:[%s169 + $0xe0] sm:$0xff]
      %v209 = vld [vmem:[%s169 + $0xe8] sm:$0xff]
      %v210 = vld [vmem:[%s169 + $0xf0] sm:$0xff]
      %v211 = vld [vmem:[%s169 + $0xf8] sm:$0xff]
      %v212 = vld [vmem:[%s169 + $0x100] sm:$0xf]
      %v213 = vld [vmem:[%s169 + $0x104] sm:$0xff]
      %v214 = vld [vmem:[%s169 + $0x10c] sm:$0xff]
      %v215 = vld [vmem:[%s169 + $0x114] sm:$0xff]
      %v216 = vld [vmem:[%s169 + $0x11c] sm:$0xff]
      %v217 = vld [vmem:[%s169 + $0x124] sm:$0xff]
      %v218 = vld [vmem:[%s169 + $0x12c] sm:$0xff]
      %v219 = vld [vmem:[%s169 + $0x134] sm:$0xf]
      %v220 = vld [vmem:[%s169 + $0x138] sm:$0xff]
      %v221 = vld [vmem:[%s169 + $0x140] sm:$0xff]
      %v222 = vld [vmem:[%s169 + $0x148] sm:$0xff]
      %v223 = vld [vmem:[%s169 + $0x150] sm:$0xff]
      %v224 = vld [vmem:[%s169 + $0x158] sm:$0xff]
      %v225 = vld [vmem:[%s169 + $0x160] sm:$0xff]
      %v226 = vld [vmem:[%s169 + $0x168] sm:$0xf]
      %v227 = vld [vmem:[%s169 + $0x16c] sm:$0xff]
      %v228 = vld [vmem:[%s169 + $0x174] sm:$0xff]
      %v229 = vld [vmem:[%s169 + $0x17c] sm:$0xff]
      %v230 = vld [vmem:[%s169 + $0x184] sm:$0xff]
      %v231 = vld [vmem:[%s169 + $0x18c] sm:$0xff]
      %v232 = vld [vmem:[%s169 + $0x194] sm:$0xff]
      %v233 = vld [vmem:[%s169 + $0x19c] sm:$0xf]
      %v234 = vld [vmem:[%s1] sm:$0xf]
      %v235 = vld [vmem:[%s1 + $0x4] sm:$0xf]
      %v236 = vld [vmem:[%s1 + $0x8] sm:$0xf]
      %v237 = vld [vmem:[%s1 + $0xc] sm:$0xf]
      %v238 = vld [vmem:[%s1 + $0x10] sm:$0xf]
      %v239 = vld [vmem:[%s1 + $0x14] sm:$0xf]
      %v240 = vld [vmem:[%s1 + $0x18] sm:$0xf]
      %v241 = vld [vmem:[%s1 + $0x1c] sm:$0xf]
      %v242 = vld [vmem:[%s1 + $0x20] sm:$0xf]
      %v243 = vld [vmem:[%s1 + $0x24] sm:$0xf]
      %v244 = vld [vmem:[%s1 + $0x28] sm:$0xf]
      %v245 = vld [vmem:[%s1 + $0x2c] sm:$0xf]
      %v246 = vld [vmem:[%s1 + $0x30] sm:$0xf]
      %v247 = vld [vmem:[%s1 + $0x34] sm:$0xf]
      %v248 = vld [vmem:[%s1 + $0x38] sm:$0xf]
      %v249 = vld [vmem:[%s1 + $0x3c] sm:$0xf]
      %v250 = vld [vmem:[%s1 + $0x40] sm:$0xf]
      %v251 = vld [vmem:[%s1 + $0x44] sm:$0xf]
      %v252 = vld [vmem:[%s1 + $0x48] sm:$0xf]
      %v253 = vld [vmem:[%s1 + $0x4c] sm:$0xf]
      %v254 = vld [vmem:[%s1 + $0x50] sm:$0xf]
      %v255 = vld [vmem:[%s1 + $0x54] sm:$0xf]
      %v256 = vld [vmem:[%s1 + $0x58] sm:$0xf]
      %v257 = vld [vmem:[%s1 + $0x5c] sm:$0xf]
      %v258 = vld [vmem:[%s1 + $0x60] sm:$0xf]
      %v259 = vld [vmem:[%s1 + $0x64] sm:$0xf]
      %v260 = vld [vmem:[%s1 + $0x68] sm:$0xf]
      %v261 = vld [vmem:[%s1 + $0x6c] sm:$0xf]
      %v262 = vld [vmem:[%s1 + $0x70] sm:$0xf]
      %v263 = vld [vmem:[%s1 + $0x74] sm:$0xf]
      %v264 = vld [vmem:[%s1 + $0x78] sm:$0xf]
      %v265 = vld [vmem:[%s1 + $0x7c] sm:$0xf]
      %v266 = vld [vmem:[%s1 + $0x80] sm:$0xf]
      %v267 = vld [vmem:[%s1 + $0x84] sm:$0xf]
      %v268 = vld [vmem:[%s1 + $0x88] sm:$0xf]
      %v269 = vld [vmem:[%s1 + $0x8c] sm:$0xf]
      %v270 = vld [vmem:[%s1 + $0x90] sm:$0xf]
      %v271 = vld [vmem:[%s1 + $0x94] sm:$0xf]
      %v272 = vld [vmem:[%s1 + $0x98] sm:$0xf]
      %v273 = vld [vmem:[%s1 + $0x9c] sm:$0xf]
      %v274 = vld [vmem:[%s1 + $0xa0] sm:$0xf]
      %v275 = vld [vmem:[%s1 + $0xa4] sm:$0xf]
      %v276 = vld [vmem:[%s1 + $0xa8] sm:$0xf]
      %v277 = vld [vmem:[%s1 + $0xac] sm:$0xf]
      %v278 = vld [vmem:[%s1 + $0xb0] sm:$0xf]
      %v279 = vld [vmem:[%s1 + $0xb4] sm:$0xf]
      %v280 = vld [vmem:[%s1 + $0xb8] sm:$0xf]
      %v281 = vld [vmem:[%s1 + $0xbc] sm:$0xf]
      %v282 = vld [vmem:[%s1 + $0xc0] sm:$0xf]
      %v283 = vld [vmem:[%s1 + $0xc4] sm:$0xf]
      %v284 = vld [vmem:[%s1 + $0xc8] sm:$0xf]
      %v285 = vld [vmem:[%s1 + $0xcc] sm:$0xf]
      %v286 = vld [vmem:[%s1 + $0xd0] sm:$0xf]
      %v287 = vld [vmem:[%s1 + $0xd4] sm:$0xf]
      %v288 = vld [vmem:[%s1 + $0xd8] sm:$0xf]
      %v289 = vld [vmem:[%s1 + $0xdc] sm:$0xf]
      %v290 = vld [vmem:[%s1 + $0xe0] sm:$0xf]
      %v291 = vld [vmem:[%s1 + $0xe4] sm:$0xf]
      %v292 = vld [vmem:[%s1 + $0xe8] sm:$0xf]
      %v293 = vld [vmem:[%s1 + $0xec] sm:$0xf]
      %v294 = vld [vmem:[%s1 + $0xf0] sm:$0xf]
      %v295 = vld [vmem:[%s1 + $0xf4] sm:$0xf]
      %v296 = vld [vmem:[%s1 + $0xf8] sm:$0xf]
      %v297 = vld [vmem:[%s1 + $0xfc] sm:$0xf]
      %v298 = vld [vmem:[%s1 + $0x100] sm:$0xf]
      %v299 = vld [vmem:[%s1 + $0x104] sm:$0xf]
      %v300 = vld [vmem:[%s1 + $0x108] sm:$0xf]
      %v301 = vld [vmem:[%s1 + $0x10c] sm:$0xf]
      %v302 = vld [vmem:[%s1 + $0x110] sm:$0xf]
      %v303 = vld [vmem:[%s1 + $0x114] sm:$0xf]
      %v304 = vld [vmem:[%s1 + $0x118] sm:$0xf]
      %v305 = vld [vmem:[%s1 + $0x11c] sm:$0xf]
      %v306 = vld [vmem:[%s1 + $0x120] sm:$0xf]
      %v307 = vld [vmem:[%s1 + $0x124] sm:$0xf]
      %v308 = vld [vmem:[%s1 + $0x128] sm:$0xf]
      %v309 = vld [vmem:[%s1 + $0x12c] sm:$0xf]
      %v310 = vld [vmem:[%s1 + $0x130] sm:$0xf]
      %v311 = vld [vmem:[%s1 + $0x134] sm:$0xf]
      %v312 = vld [vmem:[%s1 + $0x138] sm:$0xf]
      %v313 = vld [vmem:[%s1 + $0x13c] sm:$0xf]
      %v314 = vld [vmem:[%s1 + $0x140] sm:$0xf]
      %v315 = vld [vmem:[%s1 + $0x144] sm:$0xf]
      %v316 = vld [vmem:[%s1 + $0x148] sm:$0xf]
      %v317 = vld [vmem:[%s1 + $0x14c] sm:$0xf]
      %v318 = vld [vmem:[%s1 + $0x150] sm:$0xf]
      %v319 = vld [vmem:[%s1 + $0x154] sm:$0xf]
      %v320 = vld [vmem:[%s1 + $0x158] sm:$0xf]
      %v321 = vld [vmem:[%s1 + $0x15c] sm:$0xf]
      %v322 = vld [vmem:[%s1 + $0x160] sm:$0xf]
      %v323 = vld [vmem:[%s1 + $0x164] sm:$0xf]
      %v324 = vld [vmem:[%s1 + $0x168] sm:$0xf]
      %v325 = vld [vmem:[%s1 + $0x16c] sm:$0xf]
      %v326 = vld [vmem:[%s1 + $0x170] sm:$0xf]
      %v327 = vld [vmem:[%s1 + $0x174] sm:$0xf]
      %v328 = vld [vmem:[%s1 + $0x178] sm:$0xf]
      %v329 = vld [vmem:[%s1 + $0x17c] sm:$0xf]
      %v330 = vld [vmem:[%s1 + $0x180] sm:$0xf]
      %v331 = vld [vmem:[%s1 + $0x184] sm:$0xf]
      %v332 = vld [vmem:[%s1 + $0x188] sm:$0xf]
      %v333 = vld [vmem:[%s1 + $0x18c] sm:$0xf]
      %v334 = vld [vmem:[%s1 + $0x190] sm:$0xf]
      %v335 = vld [vmem:[%s1 + $0x194] sm:$0xf]
      %v336 = vld [vmem:[%s1 + $0x198] sm:$0xf]
      %v337 = vld [vmem:[%s1 + $0x19c] sm:$0xf]
      %v338 = vld [vmem:[%s1 + $0x1a0] sm:$0xf]
      %v339 = vld [vmem:[%s1 + $0x1a4] sm:$0xf]
      %v340 = vld [vmem:[%s1 + $0x1a8] sm:$0xf]
      %v341 = vld [vmem:[%s1 + $0x1ac] sm:$0xf]
      %v342 = vld [vmem:[%s1 + $0x1b0] sm:$0xf]
      %v343 = vld [vmem:[%s1 + $0x1b4] sm:$0xf]
      %v344 = vld [vmem:[%s1 + $0x1b8] sm:$0xf]
      %v345 = vld [vmem:[%s1 + $0x1bc] sm:$0xf]
      %v346 = vld [vmem:[%s1 + $0x1c0] sm:$0xf]
      %v347 = vld [vmem:[%s1 + $0x1c4] sm:$0xf]
      %v348 = vld [vmem:[%s1 + $0x1c8] sm:$0xf]
      %v349 = vld [vmem:[%s1 + $0x1cc] sm:$0xf]
      %v350 = vld [vmem:[%s1 + $0x1d0] sm:$0xf]
      %v351 = vld [vmem:[%s1 + $0x1d4] sm:$0xf]
      %v352 = vld [vmem:[%s1 + $0x1d8] sm:$0xf]
      %v353 = vld [vmem:[%s1 + $0x1dc] sm:$0xf]
      %v354 = vld [vmem:[%s1 + $0x1e0] sm:$0xf]
      %v355 = vld [vmem:[%s1 + $0x1e4] sm:$0xf]
      %v356 = vld [vmem:[%s1 + $0x1e8] sm:$0xf]
      %v357 = vld [vmem:[%s1 + $0x1ec] sm:$0xf]
      %v358 = vld [vmem:[%s1 + $0x1f0] sm:$0xf]
      %v359 = vld [vmem:[%s1 + $0x1f4] sm:$0xf]
      %v360 = vld [vmem:[%s1 + $0x1f8] sm:$0xf]
      %v361 = vld [vmem:[%s1 + $0x1fc] sm:$0xf]
      %v362 = vld [vmem:[%s1 + $0x200] sm:$0xf]
      %v363 = vld [vmem:[%s1 + $0x204] sm:$0xf]
      %v364 = vld [vmem:[%s1 + $0x208] sm:$0xf]
      %v365 = vld [vmem:[%s1 + $0x20c] sm:$0xf]
      %v366 = vld [vmem:[%s1 + $0x210] sm:$0xf]
      %v367 = vld [vmem:[%s1 + $0x214] sm:$0xf]
      %v368 = vld [vmem:[%s1 + $0x218] sm:$0xf]
      %v369 = vld [vmem:[%s1 + $0x21c] sm:$0xf]
      %v370 = vld [vmem:[%s1 + $0x220] sm:$0xf]
      %v371 = vld [vmem:[%s1 + $0x224] sm:$0xf]
      %v372 = vld [vmem:[%s1 + $0x228] sm:$0xf]
      %v373 = vld [vmem:[%s1 + $0x22c] sm:$0xf]
      %v374 = vld [vmem:[%s1 + $0x230] sm:$0xf]
      %v375 = vld [vmem:[%s1 + $0x234] sm:$0xf]
      %v376 = vld [vmem:[%s1 + $0x238] sm:$0xf]
      %v377 = vld [vmem:[%s1 + $0x23c] sm:$0xf]
      %v378 = vld [vmem:[%s1 + $0x240] sm:$0xf]
      %v379 = vld [vmem:[%s1 + $0x244] sm:$0xf]
      %v380 = vld [vmem:[%s1 + $0x248] sm:$0xf]
      %v381 = vld [vmem:[%s1 + $0x24c] sm:$0xf]
      %v382 = vld [vmem:[%s1 + $0x250] sm:$0xf]
      %v383 = vld [vmem:[%s1 + $0x254] sm:$0xf]
      %v384 = vld [vmem:[%s1 + $0x258] sm:$0xf]
      %v385 = vld [vmem:[%s1 + $0x25c] sm:$0xf]
      %v386 = vld [vmem:[%s1 + $0x260] sm:$0xf]
      %v387 = vld [vmem:[%s1 + $0x264] sm:$0xf]
      %v388 = vld [vmem:[%s1 + $0x268] sm:$0xf]
      %v389 = vld [vmem:[%s1 + $0x26c] sm:$0xf]
      %v390 = vld [vmem:[%s1 + $0x270] sm:$0xf]
      %v391 = vld [vmem:[%s1 + $0x274] sm:$0xf]
      %v392 = vld [vmem:[%s1 + $0x278] sm:$0xf]
      %v393 = vld [vmem:[%s1 + $0x27c] sm:$0xf]
      %v394 = vld [vmem:[%s1 + $0x280] sm:$0xf]
      %v395 = vld [vmem:[%s1 + $0x284] sm:$0xf]
      %v396 = vld [vmem:[%s1 + $0x288] sm:$0xf]
      %v397 = vld [vmem:[%s1 + $0x28c] sm:$0xf]
      %v398 = vld [vmem:[%s1 + $0x290] sm:$0xf]
      %v399 = vld [vmem:[%s1 + $0x294] sm:$0xf]
      %v400 = vld [vmem:[%s1 + $0x298] sm:$0xf]
      %v401 = vld [vmem:[%s1 + $0x29c] sm:$0xf]
      %v402 = vld [vmem:[%s1 + $0x2a0] sm:$0xf]
      %v403 = vld [vmem:[%s1 + $0x2a4] sm:$0xf]
      %v404 = vld [vmem:[%s1 + $0x2a8] sm:$0xf]
      %v405 = vld [vmem:[%s1 + $0x2ac] sm:$0xf]
      %v406 = vld [vmem:[%s1 + $0x2b0] sm:$0xf]
      %v407 = vld [vmem:[%s1 + $0x2b4] sm:$0xf]
      %v408 = vld [vmem:[%s1 + $0x2b8] sm:$0xf]
      %v409 = vld [vmem:[%s1 + $0x2bc] sm:$0xf]
      %v410 = vld [vmem:[%s1 + $0x2c0] sm:$0xf]
      %v411 = vld [vmem:[%s1 + $0x2c4] sm:$0xf]
      %v412 = vld [vmem:[%s1 + $0x2c8] sm:$0xf]
      %v413 = vld [vmem:[%s1 + $0x2cc] sm:$0xf]
      %v414 = vld [vmem:[%s1 + $0x2d0] sm:$0xf]
      %v415 = vld [vmem:[%s1 + $0x2d4] sm:$0xf]
      %v416 = vld [vmem:[%s1 + $0x2d8] sm:$0xf]
      %v417 = vld [vmem:[%s1 + $0x2dc] sm:$0xf]
      %v418 = vld [vmem:[%s1 + $0x2e0] sm:$0xf]
      %v419 = vld [vmem:[%s1 + $0x2e4] sm:$0xf]
      %v420 = vld [vmem:[%s1 + $0x2e8] sm:$0xf]
      %v421 = vld [vmem:[%s1 + $0x2ec] sm:$0xf]
      %v422 = vld [vmem:[%s1 + $0x2f0] sm:$0xf]
      %v423 = vld [vmem:[%s1 + $0x2f4] sm:$0xf]
      %v424 = vld [vmem:[%s1 + $0x2f8] sm:$0xf]
      %v425 = vld [vmem:[%s1 + $0x2fc] sm:$0xf]
      %v426 = vld [vmem:[%s1 + $0x300] sm:$0xf]
      %v427 = vld [vmem:[%s1 + $0x304] sm:$0xf]
      %v428 = vld [vmem:[%s1 + $0x308] sm:$0xf]
      %v429 = vld [vmem:[%s1 + $0x30c] sm:$0xf]
      %v430 = vld [vmem:[%s1 + $0x310] sm:$0xf]
      %v431 = vld [vmem:[%s1 + $0x314] sm:$0xf]
      %v432 = vld [vmem:[%s1 + $0x318] sm:$0xf]
      %v433 = vld [vmem:[%s1 + $0x31c] sm:$0xf]
      %v434 = vld [vmem:[%s2] sm:$0x1]
      %v436 = vlaneseq
      %v437 = vshrl.u32 %v436, 7
      %v438 = vsub.s32 0, %v437
      %v439 = vrot.slane %v434, %v438
      %v497 = vunpack.c.l.b16 %v178
      %v498 = vunpack.c.h.b16 %v178
      %v499 = vunpack.c.l.b16 %v179
      %v500 = vunpack.c.h.b16 %v179
      %v501 = vunpack.c.l.b16 %v180
      %v502 = vunpack.c.h.b16 %v180
      %v503 = vunpack.c.l.b16 %v181
      %v504 = vunpack.c.h.b16 %v181
      %v505 = vunpack.c.l.b16 %v182
      %v506 = vunpack.c.h.b16 %v182
      %v507 = vunpack.c.l.b16 %v183
      %v508 = vunpack.c.h.b16 %v183
      %v509 = vunpack.c.l.b16 %v184
      %v510 = vunpack.c.l.b16 %v185
      %v511 = vunpack.c.h.b16 %v185
      %v512 = vunpack.c.l.b16 %v186
      %v513 = vunpack.c.h.b16 %v186
      %v514 = vunpack.c.l.b16 %v187
      %v515 = vunpack.c.h.b16 %v187
      %v516 = vunpack.c.l.b16 %v188
      %v517 = vunpack.c.h.b16 %v188
      %v518 = vunpack.c.l.b16 %v189
      %v519 = vunpack.c.h.b16 %v189
      %v520 = vunpack.c.l.b16 %v190
      %v521 = vunpack.c.h.b16 %v190
      %v522 = vunpack.c.l.b16 %v191
      %v523 = vunpack.c.l.b16 %v192
      %v524 = vunpack.c.h.b16 %v192
      %v525 = vunpack.c.l.b16 %v193
      %v526 = vunpack.c.h.b16 %v193
      %v527 = vunpack.c.l.b16 %v194
      %v528 = vunpack.c.h.b16 %v194
      %v529 = vunpack.c.l.b16 %v195
      %v530 = vunpack.c.h.b16 %v195
      %v531 = vunpack.c.l.b16 %v196
      %v532 = vunpack.c.h.b16 %v196
      %v533 = vunpack.c.l.b16 %v197
      %v534 = vunpack.c.h.b16 %v197
      %v535 = vunpack.c.l.b16 %v198
      %v536 = vunpack.c.l.b16 %v199
      %v537 = vunpack.c.h.b16 %v199
      %v538 = vunpack.c.l.b16 %v200
      %v539 = vunpack.c.h.b16 %v200
      %v540 = vunpack.c.l.b16 %v201
      %v541 = vunpack.c.h.b16 %v201
      %v542 = vunpack.c.l.b16 %v202
      %v543 = vunpack.c.h.b16 %v202
      %v544 = vunpack.c.l.b16 %v203
      %v545 = vunpack.c.h.b16 %v203
      %v546 = vunpack.c.l.b16 %v204
      %v547 = vunpack.c.h.b16 %v204
      %v548 = vunpack.c.l.b16 %v205
      %v549 = vunpack.c.l.b16 %v206
      %v550 = vunpack.c.h.b16 %v206
      %v551 = vunpack.c.l.b16 %v207
      %v552 = vunpack.c.h.b16 %v207
      %v553 = vunpack.c.l.b16 %v208
      %v554 = vunpack.c.h.b16 %v208
      %v555 = vunpack.c.l.b16 %v209
      %v556 = vunpack.c.h.b16 %v209
      %v557 = vunpack.c.l.b16 %v210
      %v558 = vunpack.c.h.b16 %v210
      %v559 = vunpack.c.l.b16 %v211
      %v560 = vunpack.c.h.b16 %v211
      %v561 = vunpack.c.l.b16 %v212
      %v562 = vunpack.c.l.b16 %v213
      %v563 = vunpack.c.h.b16 %v213
      %v564 = vunpack.c.l.b16 %v214
      %v565 = vunpack.c.h.b16 %v214
      %v566 = vunpack.c.l.b16 %v215
      %v567 = vunpack.c.h.b16 %v215
      %v568 = vunpack.c.l.b16 %v216
      %v569 = vunpack.c.h.b16 %v216
      %v570 = vunpack.c.l.b16 %v217
      %v571 = vunpack.c.h.b16 %v217
      %v572 = vunpack.c.l.b16 %v218
      %v573 = vunpack.c.h.b16 %v218
      %v574 = vunpack.c.l.b16 %v219
      %v575 = vunpack.c.l.b16 %v220
      %v576 = vunpack.c.h.b16 %v220
      %v577 = vunpack.c.l.b16 %v221
      %v578 = vunpack.c.h.b16 %v221
      %v579 = vunpack.c.l.b16 %v222
      %v580 = vunpack.c.h.b16 %v222
      %v581 = vunpack.c.l.b16 %v223
      %v582 = vunpack.c.h.b16 %v223
      %v583 = vunpack.c.l.b16 %v224
      %v584 = vunpack.c.h.b16 %v224
      %v585 = vunpack.c.l.b16 %v225
      %v586 = vunpack.c.h.b16 %v225
      %v587 = vunpack.c.l.b16 %v226
      %v588 = vunpack.c.l.b16 %v227
      %v589 = vunpack.c.h.b16 %v227
      %v590 = vunpack.c.l.b16 %v228
      %v591 = vunpack.c.h.b16 %v228
      %v592 = vunpack.c.l.b16 %v229
      %v593 = vunpack.c.h.b16 %v229
      %v594 = vunpack.c.l.b16 %v230
      %v595 = vunpack.c.h.b16 %v230
      %v596 = vunpack.c.l.b16 %v231
      %v597 = vunpack.c.h.b16 %v231
      %v598 = vunpack.c.l.b16 %v232
      %v599 = vunpack.c.h.b16 %v232
      %v600 = vunpack.c.l.b16 %v233
      %v601 = vpack.c.b16 %v510, %v497
      %v602 = vpack.c.b16 %v511, %v498
      %v603 = vpack.c.b16 %v512, %v499
      %v604 = vpack.c.b16 %v513, %v500
      %v605 = vpack.c.b16 %v514, %v501
      %v606 = vpack.c.b16 %v515, %v502
      %v607 = vpack.c.b16 %v516, %v503
      %v608 = vpack.c.b16 %v517, %v504
      %v609 = vpack.c.b16 %v518, %v505
      %v610 = vpack.c.b16 %v519, %v506
      %v611 = vpack.c.b16 %v520, %v507
      %v612 = vpack.c.b16 %v521, %v508
      %v613 = vpack.c.b16 %v522, %v509
      %v614 = vpack.c.b16 %v536, %v523
      %v615 = vpack.c.b16 %v537, %v524
      %v616 = vpack.c.b16 %v538, %v525
      %v617 = vpack.c.b16 %v539, %v526
      %v618 = vpack.c.b16 %v540, %v527
      %v619 = vpack.c.b16 %v541, %v528
      %v620 = vpack.c.b16 %v542, %v529
      %v621 = vpack.c.b16 %v543, %v530
      %v622 = vpack.c.b16 %v544, %v531
      %v623 = vpack.c.b16 %v545, %v532
      %v624 = vpack.c.b16 %v546, %v533
      %v625 = vpack.c.b16 %v547, %v534
      %v626 = vpack.c.b16 %v548, %v535
      %v627 = vpack.c.b16 %v562, %v549
      %v628 = vpack.c.b16 %v563, %v550
      %v629 = vpack.c.b16 %v564, %v551
      %v630 = vpack.c.b16 %v565, %v552
      %v631 = vpack.c.b16 %v566, %v553
      %v632 = vpack.c.b16 %v567, %v554
      %v633 = vpack.c.b16 %v568, %v555
      %v634 = vpack.c.b16 %v569, %v556
      %v635 = vpack.c.b16 %v570, %v557
      %v636 = vpack.c.b16 %v571, %v558
      %v637 = vpack.c.b16 %v572, %v559
      %v638 = vpack.c.b16 %v573, %v560
      %v639 = vpack.c.b16 %v574, %v561
      %v640 = vpack.c.b16 %v588, %v575
      %v641 = vpack.c.b16 %v589, %v576
      %v642 = vpack.c.b16 %v590, %v577
      %v643 = vpack.c.b16 %v591, %v578
      %v644 = vpack.c.b16 %v592, %v579
      %v645 = vpack.c.b16 %v593, %v580
      %v646 = vpack.c.b16 %v594, %v581
      %v647 = vpack.c.b16 %v595, %v582
      %v648 = vpack.c.b16 %v596, %v583
      %v649 = vpack.c.b16 %v597, %v584
      %v650 = vpack.c.b16 %v598, %v585
      %v651 = vpack.c.b16 %v599, %v586
      %v652 = vpack.c.b16 %v600, %v587
      %v901 = vunpack.c.l.b16 %v234
      %v902 = vunpack.c.l.b16 %v235
      %v903 = vunpack.c.l.b16 %v236
      %v904 = vunpack.c.l.b16 %v237
      %v905 = vunpack.c.l.b16 %v238
      %v906 = vunpack.c.l.b16 %v239
      %v907 = vunpack.c.l.b16 %v240
      %v908 = vunpack.c.l.b16 %v241
      %v909 = vunpack.c.l.b16 %v242
      %v910 = vunpack.c.l.b16 %v243
      %v911 = vunpack.c.l.b16 %v244
      %v912 = vunpack.c.l.b16 %v245
      %v913 = vunpack.c.l.b16 %v246
      %v914 = vunpack.c.l.b16 %v247
      %v915 = vunpack.c.l.b16 %v248
      %v916 = vunpack.c.l.b16 %v249
      %v917 = vunpack.c.l.b16 %v250
      %v918 = vunpack.c.l.b16 %v251
      %v919 = vunpack.c.l.b16 %v252
      %v920 = vunpack.c.l.b16 %v253
      %v921 = vunpack.c.l.b16 %v254
      %v922 = vunpack.c.l.b16 %v255
      %v923 = vunpack.c.l.b16 %v256
      %v924 = vunpack.c.l.b16 %v257
      %v925 = vunpack.c.l.b16 %v258
      %v926 = vunpack.c.l.b16 %v259
      %v927 = vunpack.c.l.b16 %v260
      %v928 = vunpack.c.l.b16 %v261
      %v929 = vunpack.c.l.b16 %v262
      %v930 = vunpack.c.l.b16 %v263
      %v931 = vunpack.c.l.b16 %v264
      %v932 = vunpack.c.l.b16 %v265
      %v933 = vunpack.c.l.b16 %v266
      %v934 = vunpack.c.l.b16 %v267
      %v935 = vunpack.c.l.b16 %v268
      %v936 = vunpack.c.l.b16 %v269
      %v937 = vunpack.c.l.b16 %v270
      %v938 = vunpack.c.l.b16 %v271
      %v939 = vunpack.c.l.b16 %v272
      %v940 = vunpack.c.l.b16 %v273
      %v941 = vunpack.c.l.b16 %v274
      %v942 = vunpack.c.l.b16 %v275
      %v943 = vunpack.c.l.b16 %v276
      %v944 = vunpack.c.l.b16 %v277
      %v945 = vunpack.c.l.b16 %v278
      %v946 = vunpack.c.l.b16 %v279
      %v947 = vunpack.c.l.b16 %v280
      %v948 = vunpack.c.l.b16 %v281
      %v949 = vunpack.c.l.b16 %v282
      %v950 = vunpack.c.l.b16 %v283
      %v951 = vunpack.c.l.b16 %v284
      %v952 = vunpack.c.l.b16 %v285
      %v953 = vunpack.c.l.b16 %v286
      %v954 = vunpack.c.l.b16 %v287
      %v955 = vunpack.c.l.b16 %v288
      %v956 = vunpack.c.l.b16 %v289
      %v957 = vunpack.c.l.b16 %v290
      %v958 = vunpack.c.l.b16 %v291
      %v959 = vunpack.c.l.b16 %v292
      %v960 = vunpack.c.l.b16 %v293
      %v961 = vunpack.c.l.b16 %v294
      %v962 = vunpack.c.l.b16 %v295
      %v963 = vunpack.c.l.b16 %v296
      %v964 = vunpack.c.l.b16 %v297
      %v965 = vunpack.c.l.b16 %v298
      %v966 = vunpack.c.l.b16 %v299
      %v967 = vunpack.c.l.b16 %v300
      %v968 = vunpack.c.l.b16 %v301
      %v969 = vunpack.c.l.b16 %v302
      %v970 = vunpack.c.l.b16 %v303
      %v971 = vunpack.c.l.b16 %v304
      %v972 = vunpack.c.l.b16 %v305
      %v973 = vunpack.c.l.b16 %v306
      %v974 = vunpack.c.l.b16 %v307
      %v975 = vunpack.c.l.b16 %v308
      %v976 = vunpack.c.l.b16 %v309
      %v977 = vunpack.c.l.b16 %v310
      %v978 = vunpack.c.l.b16 %v311
      %v979 = vunpack.c.l.b16 %v312
      %v980 = vunpack.c.l.b16 %v313
      %v981 = vunpack.c.l.b16 %v314
      %v982 = vunpack.c.l.b16 %v315
      %v983 = vunpack.c.l.b16 %v316
      %v984 = vunpack.c.l.b16 %v317
      %v985 = vunpack.c.l.b16 %v318
      %v986 = vunpack.c.l.b16 %v319
      %v987 = vunpack.c.l.b16 %v320
      %v988 = vunpack.c.l.b16 %v321
      %v989 = vunpack.c.l.b16 %v322
      %v990 = vunpack.c.l.b16 %v323
      %v991 = vunpack.c.l.b16 %v324
      %v992 = vunpack.c.l.b16 %v325
      %v993 = vunpack.c.l.b16 %v326
      %v994 = vunpack.c.l.b16 %v327
      %v995 = vunpack.c.l.b16 %v328
      %v996 = vunpack.c.l.b16 %v329
      %v997 = vunpack.c.l.b16 %v330
      %v998 = vunpack.c.l.b16 %v331
      %v999 = vunpack.c.l.b16 %v332
      %v1000 = vunpack.c.l.b16 %v333
      %v1001 = vunpack.c.l.b16 %v334
      %v1002 = vunpack.c.l.b16 %v335
      %v1003 = vunpack.c.l.b16 %v336
      %v1004 = vunpack.c.l.b16 %v337
      %v1005 = vunpack.c.l.b16 %v338
      %v1006 = vunpack.c.l.b16 %v339
      %v1007 = vunpack.c.l.b16 %v340
      %v1008 = vunpack.c.l.b16 %v341
      %v1009 = vunpack.c.l.b16 %v342
      %v1010 = vunpack.c.l.b16 %v343
      %v1011 = vunpack.c.l.b16 %v344
      %v1012 = vunpack.c.l.b16 %v345
      %v1013 = vunpack.c.l.b16 %v346
      %v1014 = vunpack.c.l.b16 %v347
      %v1015 = vunpack.c.l.b16 %v348
      %v1016 = vunpack.c.l.b16 %v349
      %v1017 = vunpack.c.l.b16 %v350
      %v1018 = vunpack.c.l.b16 %v351
      %v1019 = vunpack.c.l.b16 %v352
      %v1020 = vunpack.c.l.b16 %v353
      %v1021 = vunpack.c.l.b16 %v354
      %v1022 = vunpack.c.l.b16 %v355
      %v1023 = vunpack.c.l.b16 %v356
      %v1024 = vunpack.c.l.b16 %v357
      %v1025 = vunpack.c.l.b16 %v358
      %v1026 = vunpack.c.l.b16 %v359
      %v1027 = vunpack.c.l.b16 %v360
      %v1028 = vunpack.c.l.b16 %v361
      %v1029 = vunpack.c.l.b16 %v362
      %v1030 = vunpack.c.l.b16 %v363
      %v1031 = vunpack.c.l.b16 %v364
      %v1032 = vunpack.c.l.b16 %v365
      %v1033 = vunpack.c.l.b16 %v366
      %v1034 = vunpack.c.l.b16 %v367
      %v1035 = vunpack.c.l.b16 %v368
      %v1036 = vunpack.c.l.b16 %v369
      %v1037 = vunpack.c.l.b16 %v370
      %v1038 = vunpack.c.l.b16 %v371
      %v1039 = vunpack.c.l.b16 %v372
      %v1040 = vunpack.c.l.b16 %v373
      %v1041 = vunpack.c.l.b16 %v374
      %v1042 = vunpack.c.l.b16 %v375
      %v1043 = vunpack.c.l.b16 %v376
      %v1044 = vunpack.c.l.b16 %v377
      %v1045 = vunpack.c.l.b16 %v378
      %v1046 = vunpack.c.l.b16 %v379
      %v1047 = vunpack.c.l.b16 %v380
      %v1048 = vunpack.c.l.b16 %v381
      %v1049 = vunpack.c.l.b16 %v382
      %v1050 = vunpack.c.l.b16 %v383
      %v1051 = vunpack.c.l.b16 %v384
      %v1052 = vunpack.c.l.b16 %v385
      %v1053 = vunpack.c.l.b16 %v386
      %v1054 = vunpack.c.l.b16 %v387
      %v1055 = vunpack.c.l.b16 %v388
      %v1056 = vunpack.c.l.b16 %v389
      %v1057 = vunpack.c.l.b16 %v390
      %v1058 = vunpack.c.l.b16 %v391
      %v1059 = vunpack.c.l.b16 %v392
      %v1060 = vunpack.c.l.b16 %v393
      %v1061 = vunpack.c.l.b16 %v394
      %v1062 = vunpack.c.l.b16 %v395
      %v1063 = vunpack.c.l.b16 %v396
      %v1064 = vunpack.c.l.b16 %v397
      %v1065 = vunpack.c.l.b16 %v398
      %v1066 = vunpack.c.l.b16 %v399
      %v1067 = vunpack.c.l.b16 %v400
      %v1068 = vunpack.c.l.b16 %v401
      %v1069 = vunpack.c.l.b16 %v402
      %v1070 = vunpack.c.l.b16 %v403
      %v1071 = vunpack.c.l.b16 %v404
      %v1072 = vunpack.c.l.b16 %v405
      %v1073 = vunpack.c.l.b16 %v406
      %v1074 = vunpack.c.l.b16 %v407
      %v1075 = vunpack.c.l.b16 %v408
      %v1076 = vunpack.c.l.b16 %v409
      %v1077 = vunpack.c.l.b16 %v410
      %v1078 = vunpack.c.l.b16 %v411
      %v1079 = vunpack.c.l.b16 %v412
      %v1080 = vunpack.c.l.b16 %v413
      %v1081 = vunpack.c.l.b16 %v414
      %v1082 = vunpack.c.l.b16 %v415
      %v1083 = vunpack.c.l.b16 %v416
      %v1084 = vunpack.c.l.b16 %v417
      %v1085 = vunpack.c.l.b16 %v418
      %v1086 = vunpack.c.l.b16 %v419
      %v1087 = vunpack.c.l.b16 %v420
      %v1088 = vunpack.c.l.b16 %v421
      %v1089 = vunpack.c.l.b16 %v422
      %v1090 = vunpack.c.l.b16 %v423
      %v1091 = vunpack.c.l.b16 %v424
      %v1092 = vunpack.c.l.b16 %v425
      %v1093 = vunpack.c.l.b16 %v426
      %v1094 = vunpack.c.l.b16 %v427
      %v1095 = vunpack.c.l.b16 %v428
      %v1096 = vunpack.c.l.b16 %v429
      %v1097 = vunpack.c.l.b16 %v430
      %v1098 = vunpack.c.l.b16 %v431
      %v1099 = vunpack.c.l.b16 %v432
      %v1100 = vunpack.c.l.b16 %v433
      %v1101 = vpack.c.b16 %v902, %v901
      %v1102 = vpack.c.b16 %v904, %v903
      %v1103 = vpack.c.b16 %v906, %v905
      %v1104 = vpack.c.b16 %v908, %v907
      %v1105 = vpack.c.b16 %v910, %v909
      %v1106 = vpack.c.b16 %v912, %v911
      %v1107 = vpack.c.b16 %v914, %v913
      %v1108 = vpack.c.b16 %v916, %v915
      %v1109 = vpack.c.b16 %v918, %v917
      %v1110 = vpack.c.b16 %v920, %v919
      %v1111 = vpack.c.b16 %v922, %v921
      %v1112 = vpack.c.b16 %v924, %v923
      %v1113 = vpack.c.b16 %v926, %v925
      %v1114 = vpack.c.b16 %v928, %v927
      %v1115 = vpack.c.b16 %v930, %v929
      %v1116 = vpack.c.b16 %v932, %v931
      %v1117 = vpack.c.b16 %v934, %v933
      %v1118 = vpack.c.b16 %v936, %v935
      %v1119 = vpack.c.b16 %v938, %v937
      %v1120 = vpack.c.b16 %v940, %v939
      %v1121 = vpack.c.b16 %v942, %v941
      %v1122 = vpack.c.b16 %v944, %v943
      %v1123 = vpack.c.b16 %v946, %v945
      %v1124 = vpack.c.b16 %v948, %v947
      %v1125 = vpack.c.b16 %v950, %v949
      %v1126 = vpack.c.b16 %v952, %v951
      %v1127 = vpack.c.b16 %v954, %v953
      %v1128 = vpack.c.b16 %v956, %v955
      %v1129 = vpack.c.b16 %v958, %v957
      %v1130 = vpack.c.b16 %v960, %v959
      %v1131 = vpack.c.b16 %v962, %v961
      %v1132 = vpack.c.b16 %v964, %v963
      %v1133 = vpack.c.b16 %v966, %v965
      %v1134 = vpack.c.b16 %v968, %v967
      %v1135 = vpack.c.b16 %v970, %v969
      %v1136 = vpack.c.b16 %v972, %v971
      %v1137 = vpack.c.b16 %v974, %v973
      %v1138 = vpack.c.b16 %v976, %v975
      %v1139 = vpack.c.b16 %v978, %v977
      %v1140 = vpack.c.b16 %v980, %v979
      %v1141 = vpack.c.b16 %v982, %v981
      %v1142 = vpack.c.b16 %v984, %v983
      %v1143 = vpack.c.b16 %v986, %v985
      %v1144 = vpack.c.b16 %v988, %v987
      %v1145 = vpack.c.b16 %v990, %v989
      %v1146 = vpack.c.b16 %v992, %v991
      %v1147 = vpack.c.b16 %v994, %v993
      %v1148 = vpack.c.b16 %v996, %v995
      %v1149 = vpack.c.b16 %v998, %v997
      %v1150 = vpack.c.b16 %v1000, %v999
      %v1151 = vpack.c.b16 %v1002, %v1001
      %v1152 = vpack.c.b16 %v1004, %v1003
      %v1153 = vpack.c.b16 %v1006, %v1005
      %v1154 = vpack.c.b16 %v1008, %v1007
      %v1155 = vpack.c.b16 %v1010, %v1009
      %v1156 = vpack.c.b16 %v1012, %v1011
      %v1157 = vpack.c.b16 %v1014, %v1013
      %v1158 = vpack.c.b16 %v1016, %v1015
      %v1159 = vpack.c.b16 %v1018, %v1017
      %v1160 = vpack.c.b16 %v1020, %v1019
      %v1161 = vpack.c.b16 %v1022, %v1021
      %v1162 = vpack.c.b16 %v1024, %v1023
      %v1163 = vpack.c.b16 %v1026, %v1025
      %v1164 = vpack.c.b16 %v1028, %v1027
      %v1165 = vpack.c.b16 %v1030, %v1029
      %v1166 = vpack.c.b16 %v1032, %v1031
      %v1167 = vpack.c.b16 %v1034, %v1033
      %v1168 = vpack.c.b16 %v1036, %v1035
      %v1169 = vpack.c.b16 %v1038, %v1037
      %v1170 = vpack.c.b16 %v1040, %v1039
      %v1171 = vpack.c.b16 %v1042, %v1041
      %v1172 = vpack.c.b16 %v1044, %v1043
      %v1173 = vpack.c.b16 %v1046, %v1045
      %v1174 = vpack.c.b16 %v1048, %v1047
      %v1175 = vpack.c.b16 %v1050, %v1049
      %v1176 = vpack.c.b16 %v1052, %v1051
      %v1177 = vpack.c.b16 %v1054, %v1053
      %v1178 = vpack.c.b16 %v1056, %v1055
      %v1179 = vpack.c.b16 %v1058, %v1057
      %v1180 = vpack.c.b16 %v1060, %v1059
      %v1181 = vpack.c.b16 %v1062, %v1061
      %v1182 = vpack.c.b16 %v1064, %v1063
      %v1183 = vpack.c.b16 %v1066, %v1065
      %v1184 = vpack.c.b16 %v1068, %v1067
      %v1185 = vpack.c.b16 %v1070, %v1069
      %v1186 = vpack.c.b16 %v1072, %v1071
      %v1187 = vpack.c.b16 %v1074, %v1073
      %v1188 = vpack.c.b16 %v1076, %v1075
      %v1189 = vpack.c.b16 %v1078, %v1077
      %v1190 = vpack.c.b16 %v1080, %v1079
      %v1191 = vpack.c.b16 %v1082, %v1081
      %v1192 = vpack.c.b16 %v1084, %v1083
      %v1193 = vpack.c.b16 %v1086, %v1085
      %v1194 = vpack.c.b16 %v1088, %v1087
      %v1195 = vpack.c.b16 %v1090, %v1089
      %v1196 = vpack.c.b16 %v1092, %v1091
      %v1197 = vpack.c.b16 %v1094, %v1093
      %v1198 = vpack.c.b16 %v1096, %v1095
      %v1199 = vpack.c.b16 %v1098, %v1097
      %v1200 = vpack.c.b16 %v1100, %v1099
      %vm1301 = vcmask 523264
      %v1303 = vsel %vm1301, %v613, 0
      %v1306 = vsel %vm1301, %v626, 0
      %v1309 = vsel %vm1301, %v639, 0
      %v1312 = vsel %vm1301, %v652, 0
      %1314 = vmatprep.subr.bf16.mxu0 0
      %1315 = vmatpush1.bf16.msra.mxu0 %v1101
      %1316 = vmatprep.subr.bf16.mxu0 0
      %1317 = vmatpush1.bf16.msra.mxu0 %v1102
      %1318 = vmatprep.subr.bf16.mxu0 0
      %1319 = vmatpush1.bf16.msra.mxu0 %v1103
      %1320 = vmatprep.subr.bf16.mxu0 0
      %1321 = vmatpush1.bf16.msra.mxu0 %v1104
      %1322 = vmatprep.subr.bf16.mxu0 0
      %1323 = vmatpush1.bf16.msra.mxu0 %v1105
      %1324 = vmatprep.subr.bf16.mxu0 0
      %1325 = vmatpush1.bf16.msra.mxu0 %v1106
      %1326 = vmatprep.subr.bf16.mxu0 0
      %1327 = vmatpush1.bf16.msra.mxu0 %v1107
      %1328 = vmatprep.subr.bf16.mxu0 0
      %1329 = vmatpush1.bf16.msra.mxu0 %v1108
      %1330 = vmatprep.subr.bf16.mxu0 0
      %1331 = vmatpush1.bf16.msra.mxu0 %v1109
      %1332 = vmatprep.subr.bf16.mxu0 0
      %1333 = vmatpush1.bf16.msra.mxu0 %v1110
      %1334 = vmatprep.subr.bf16.mxu0 0
      %1335 = vmatpush1.bf16.msra.mxu0 %v1111
      %1336 = vmatprep.subr.bf16.mxu0 0
      %1337 = vmatpush1.bf16.msra.mxu0 %v1112
      %1338 = vmatprep.subr.bf16.mxu0 0
      %1339 = vmatpush1.bf16.msra.mxu0 %v1113
      %1340 = vmatprep.subr.bf16.mxu0 0
      %1341 = vmatpush1.bf16.msra.mxu0 %v1114
      %1342 = vmatprep.subr.bf16.mxu0 0
      %1343 = vmatpush1.bf16.msra.mxu0 %v1115
      %1344 = vmatprep.subr.bf16.mxu0 0
      %1345 = vmatpush1.bf16.msra.mxu0 %v1116
      %1346 = vmatprep.mubr.bf16.mxu0 %v602
      %1347 = vmatmul.mubr.bf16.gmra.mrb[0].mxu0 %v601
      %v1348 = vpop.f32.mrb[0].mxu0
      %v1349 = vadd.f32 %v439, %v1348
      %v1350 = vpop.f32.mrb[0].mxu0
      %v1351 = vpop.f32.mrb[0].mxu0
      %v1352 = vadd.f32 %v439, %v1351
      %v1353 = vpop.f32.mrb[0].mxu0
      %1354 = vmatprep.mubr.bf16.mxu0 %v615
      %1355 = vmatmul.mubr.bf16.gmra.mrb[0].mxu0 %v614
      %v1356 = vpop.f32.mrb[0].mxu0
      %v1357 = vadd.f32 %v439, %v1356
      %v1358 = vpop.f32.mrb[0].mxu0
      %v1359 = vpop.f32.mrb[0].mxu0
      %v1360 = vadd.f32 %v439, %v1359
      %v1361 = vpop.f32.mrb[0].mxu0
      %1362 = vmatprep.mubr.bf16.mxu0 %v628
      %1363 = vmatmul.mubr.bf16.gmra.mrb[0].mxu0 %v627
      %v1364 = vpop.f32.mrb[0].mxu0
      %v1365 = vadd.f32 %v439, %v1364
      %v1366 = vpop.f32.mrb[0].mxu0
      %v1367 = vpop.f32.mrb[0].mxu0
      %v1368 = vadd.f32 %v439, %v1367
      %v1369 = vpop.f32.mrb[0].mxu0
      %1370 = vmatprep.mubr.bf16.mxu0 %v641
      %1371 = vmatmul.mubr.bf16.gmra.mrb[0].mxu0 %v640
      %v1372 = vpop.f32.mrb[0].mxu0
      %v1373 = vadd.f32 %v439, %v1372
      %v1374 = vpop.f32.mrb[0].mxu0
      %v1375 = vpop.f32.mrb[0].mxu0
      %v1376 = vadd.f32 %v439, %v1375
      %v1377 = vpop.f32.mrb[0].mxu0
      %1378 = vdwg.mxu0
      %1379 = vmatprep.subr.bf16.mxu0 0
      %1380 = vmatpush1.bf16.msra.mxu0 %v1117
      %1381 = vmatprep.subr.bf16.mxu0 0
      %1382 = vmatpush1.bf16.msra.mxu0 %v1118
      %1383 = vmatprep.subr.bf16.mxu0 0
      %1384 = vmatpush1.bf16.msra.mxu0 %v1119
      %1385 = vmatprep.subr.bf16.mxu0 0
      %1386 = vmatpush1.bf16.msra.mxu0 %v1120
      %1387 = vmatprep.subr.bf16.mxu0 0
      %1388 = vmatpush1.bf16.msra.mxu0 %v1121
      %1389 = vmatprep.subr.bf16.mxu0 0
      %1390 = vmatpush1.bf16.msra.mxu0 %v1122
      %1391 = vmatprep.subr.bf16.mxu0 0
      %1392 = vmatpush1.bf16.msra.mxu0 %v1123
      %1393 = vmatprep.subr.bf16.mxu0 0
      %1394 = vmatpush1.bf16.msra.mxu0 %v1124
      %1395 = vmatprep.subr.bf16.mxu0 0
      %1396 = vmatpush1.bf16.msra.mxu0 %v1125
      %1397 = vmatprep.subr.bf16.mxu0 0
      %1398 = vmatpush1.bf16.msra.mxu0 %v1126
      %1399 = vmatprep.subr.bf16.mxu0 0
      %1400 = vmatpush1.bf16.msra.mxu0 %v1127
      %1401 = vmatprep.subr.bf16.mxu0 0
      %1402 = vmatpush1.bf16.msra.mxu0 %v1128
      %1403 = vmatprep.subr.bf16.mxu0 0
      %1404 = vmatpush1.bf16.msra.mxu0 %v1129
      %1405 = vmatprep.subr.bf16.mxu0 0
      %1406 = vmatpush1.bf16.msra.mxu0 %v1130
      %1407 = vmatprep.subr.bf16.mxu0 0
      %1408 = vmatpush1.bf16.msra.mxu0 %v1131
      %1409 = vmatprep.subr.bf16.mxu0 0
      %1410 = vmatpush1.bf16.msra.mxu0 %v1132
      %1411 = vmatprep.mubr.bf16.mxu0 %v604
      %1412 = vmatmul.mubr.bf16.gmra.mrb[0].mxu0 %v603
      %v1413 = vpop.f32.mrb[0].mxu0
      %v1414 = vadd.f32 %v1349, %v1413
      %v1415 = vpop.f32.mrb[0].mxu0
      %v1416 = vpop.f32.mrb[0].mxu0
      %v1417 = vadd.f32 %v1352, %v1416
      %v1418 = vpop.f32.mrb[0].mxu0
      %1419 = vmatprep.mubr.bf16.mxu0 %v617
      %1420 = vmatmul.mubr.bf16.gmra.mrb[0].mxu0 %v616
      %v1421 = vpop.f32.mrb[0].mxu0
      %v1422 = vadd.f32 %v1357, %v1421
      %v1423 = vpop.f32.mrb[0].mxu0
      %v1424 = vpop.f32.mrb[0].mxu0
      %v1425 = vadd.f32 %v1360, %v1424
      %v1426 = vpop.f32.mrb[0].mxu0
      %1427 = vmatprep.mubr.bf16.mxu0 %v630
      %1428 = vmatmul.mubr.bf16.gmra.mrb[0].mxu0 %v629
      %v1429 = vpop.f32.mrb[0].mxu0
      %v1430 = vadd.f32 %v1365, %v1429
      %v1431 = vpop.f32.mrb[0].mxu0
      %v1432 = vpop.f32.mrb[0].mxu0
      %v1433 = vadd.f32 %v1368, %v1432
      %v1434 = vpop.f32.mrb[0].mxu0
      %1435 = vmatprep.mubr.bf16.mxu0 %v643
      %1436 = vmatmul.mubr.bf16.gmra.mrb[0].mxu0 %v642
      %v1437 = vpop.f32.mrb[0].mxu0
      %v1438 = vadd.f32 %v1373, %v1437
      %v1439 = vpop.f32.mrb[0].mxu0
      %v1440 = vpop.f32.mrb[0].mxu0
      %v1441 = vadd.f32 %v1376, %v1440
      %v1442 = vpop.f32.mrb[0].mxu0
      %1443 = vdwg.mxu0
      %1444 = vmatprep.subr.bf16.mxu0 0
      %1445 = vmatpush1.bf16.msra.mxu0 %v1133
      %1446 = vmatprep.subr.bf16.mxu0 0
      %1447 = vmatpush1.bf16.msra.mxu0 %v1134
      %1448 = vmatprep.subr.bf16.mxu0 0
      %1449 = vmatpush1.bf16.msra.mxu0 %v1135
      %1450 = vmatprep.subr.bf16.mxu0 0
      %1451 = vmatpush1.bf16.msra.mxu0 %v1136
      %1452 = vmatprep.subr.bf16.mxu0 0
      %1453 = vmatpush1.bf16.msra.mxu0 %v1137
      %1454 = vmatprep.subr.bf16.mxu0 0
      %1455 = vmatpush1.bf16.msra.mxu0 %v1138
      %1456 = vmatprep.subr.bf16.mxu0 0
      %1457 = vmatpush1.bf16.msra.mxu0 %v1139
      %1458 = vmatprep.subr.bf16.mxu0 0
      %1459 = vmatpush1.bf16.msra.mxu0 %v1140
      %1460 = vmatprep.subr.bf16.mxu0 0
      %1461 = vmatpush1.bf16.msra.mxu0 %v1141
      %1462 = vmatprep.subr.bf16.mxu0 0
      %1463 = vmatpush1.bf16.msra.mxu0 %v1142
      %1464 = vmatprep.subr.bf16.mxu0 0
      %1465 = vmatpush1.bf16.msra.mxu0 %v1143
      %1466 = vmatprep.subr.bf16.mxu0 0
      %1467 = vmatpush1.bf16.msra.mxu0 %v1144
      %1468 = vmatprep.subr.bf16.mxu0 0
      %1469 = vmatpush1.bf16.msra.mxu0 %v1145
      %1470 = vmatprep.subr.bf16.mxu0 0
      %1471 = vmatpush1.bf16.msra.mxu0 %v1146
      %1472 = vmatprep.subr.bf16.mxu0 0
      %1473 = vmatpush1.bf16.msra.mxu0 %v1147
      %1474 = vmatprep.subr.bf16.mxu0 0
      %1475 = vmatpush1.bf16.msra.mxu0 %v1148
      %1476 = vmatprep.mubr.bf16.mxu0 %v606
      %1477 = vmatmul.mubr.bf16.gmra.mrb[0].mxu0 %v605
      %v1478 = vpop.f32.mrb[0].mxu0
      %v1479 = vadd.f32 %v1414, %v1478
      %v1480 = vpop.f32.mrb[0].mxu0
      %v1481 = vpop.f32.mrb[0].mxu0
      %v1482 = vadd.f32 %v1417, %v1481
      %v1483 = vpop.f32.mrb[0].mxu0
      %1484 = vmatprep.mubr.bf16.mxu0 %v619
      %1485 = vmatmul.mubr.bf16.gmra.mrb[0].mxu0 %v618
      %v1486 = vpop.f32.mrb[0].mxu0
      %v1487 = vadd.f32 %v1422, %v1486
      %v1488 = vpop.f32.mrb[0].mxu0
      %v1489 = vpop.f32.mrb[0].mxu0
      %v1490 = vadd.f32 %v1425, %v1489
      %v1491 = vpop.f32.mrb[0].mxu0
      %1492 = vmatprep.mubr.bf16.mxu0 %v632
      %1493 = vmatmul.mubr.bf16.gmra.mrb[0].mxu0 %v631
      %v1494 = vpop.f32.mrb[0].mxu0
      %v1495 = vadd.f32 %v1430, %v1494
      %v1496 = vpop.f32.mrb[0].mxu0
      %v1497 = vpop.f32.mrb[0].mxu0
      %v1498 = vadd.f32 %v1433, %v1497
      %v1499 = vpop.f32.mrb[0].mxu0
      %1500 = vmatprep.mubr.bf16.mxu0 %v645
      %1501 = vmatmul.mubr.bf16.gmra.mrb[0].mxu0 %v644
      %v1502 = vpop.f32.mrb[0].mxu0
      %v1503 = vadd.f32 %v1438, %v1502
      %v1504 = vpop.f32.mrb[0].mxu0
      %v1505 = vpop.f32.mrb[0].mxu0
      %v1506 = vadd.f32 %v1441, %v1505
      %v1507 = vpop.f32.mrb[0].mxu0
      %1508 = vdwg.mxu0
      %1509 = vmatprep.subr.bf16.mxu0 0
      %1510 = vmatpush1.bf16.msra.mxu0 %v1149
      %1511 = vmatprep.subr.bf16.mxu0 0
      %1512 = vmatpush1.bf16.msra.mxu0 %v1150
      %1513 = vmatprep.subr.bf16.mxu0 0
      %1514 = vmatpush1.bf16.msra.mxu0 %v1151
      %1515 = vmatprep.subr.bf16.mxu0 0
      %1516 = vmatpush1.bf16.msra.mxu0 %v1152
      %1517 = vmatprep.subr.bf16.mxu0 0
      %1518 = vmatpush1.bf16.msra.mxu0 %v1153
      %1519 = vmatprep.subr.bf16.mxu0 0
      %1520 = vmatpush1.bf16.msra.mxu0 %v1154
      %1521 = vmatprep.subr.bf16.mxu0 0
      %1522 = vmatpush1.bf16.msra.mxu0 %v1155
      %1523 = vmatprep.subr.bf16.mxu0 0
      %1524 = vmatpush1.bf16.msra.mxu0 %v1156
      %1525 = vmatprep.subr.bf16.mxu0 0
      %1526 = vmatpush1.bf16.msra.mxu0 %v1157
      %1527 = vmatprep.subr.bf16.mxu0 0
      %1528 = vmatpush1.bf16.msra.mxu0 %v1158
      %1529 = vmatprep.subr.bf16.mxu0 0
      %1530 = vmatpush1.bf16.msra.mxu0 %v1159
      %1531 = vmatprep.subr.bf16.mxu0 0
      %1532 = vmatpush1.bf16.msra.mxu0 %v1160
      %1533 = vmatprep.subr.bf16.mxu0 0
      %1534 = vmatpush1.bf16.msra.mxu0 %v1161
      %1535 = vmatprep.subr.bf16.mxu0 0
      %1536 = vmatpush1.bf16.msra.mxu0 %v1162
      %1537 = vmatprep.subr.bf16.mxu0 0
      %1538 = vmatpush1.bf16.msra.mxu0 %v1163
      %1539 = vmatprep.subr.bf16.mxu0 0
      %1540 = vmatpush1.bf16.msra.mxu0 %v1164
      %1541 = vmatprep.mubr.bf16.mxu0 %v608
      %1542 = vmatmul.mubr.bf16.gmra.mrb[0].mxu0 %v607
      %v1543 = vpop.f32.mrb[0].mxu0
      %v1544 = vadd.f32 %v1479, %v1543
      %v1545 = vpop.f32.mrb[0].mxu0
      %v1546 = vpop.f32.mrb[0].mxu0
      %v1547 = vadd.f32 %v1482, %v1546
      %v1548 = vpop.f32.mrb[0].mxu0
      %1549 = vmatprep.mubr.bf16.mxu0 %v621
      %1550 = vmatmul.mubr.bf16.gmra.mrb[0].mxu0 %v620
      %v1551 = vpop.f32.mrb[0].mxu0
      %v1552 = vadd.f32 %v1487, %v1551
      %v1553 = vpop.f32.mrb[0].mxu0
      %v1554 = vpop.f32.mrb[0].mxu0
      %v1555 = vadd.f32 %v1490, %v1554
      %v1556 = vpop.f32.mrb[0].mxu0
      %1557 = vmatprep.mubr.bf16.mxu0 %v634
      %1558 = vmatmul.mubr.bf16.gmra.mrb[0].mxu0 %v633
      %v1559 = vpop.f32.mrb[0].mxu0
      %v1560 = vadd.f32 %v1495, %v1559
      %v1561 = vpop.f32.mrb[0].mxu0
      %v1562 = vpop.f32.mrb[0].mxu0
      %v1563 = vadd.f32 %v1498, %v1562
      %v1564 = vpop.f32.mrb[0].mxu0
      %1565 = vmatprep.mubr.bf16.mxu0 %v647
      %1566 = vmatmul.mubr.bf16.gmra.mrb[0].mxu0 %v646
      %v1567 = vpop.f32.mrb[0].mxu0
      %v1568 = vadd.f32 %v1503, %v1567
      %v1569 = vpop.f32.mrb[0].mxu0
      %v1570 = vpop.f32.mrb[0].mxu0
      %v1571 = vadd.f32 %v1506, %v1570
      %v1572 = vpop.f32.mrb[0].mxu0
      %1573 = vdwg.mxu0
      %1574 = vmatprep.subr.bf16.mxu0 0
      %1575 = vmatpush1.bf16.msra.mxu0 %v1165
      %1576 = vmatprep.subr.bf16.mxu0 0
      %1577 = vmatpush1.bf16.msra.mxu0 %v1166
      %1578 = vmatprep.subr.bf16.mxu0 0
      %1579 = vmatpush1.bf16.msra.mxu0 %v1167
      %1580 = vmatprep.subr.bf16.mxu0 0
      %1581 = vmatpush1.bf16.msra.mxu0 %v1168
      %1582 = vmatprep.subr.bf16.mxu0 0
      %1583 = vmatpush1.bf16.msra.mxu0 %v1169
      %1584 = vmatprep.subr.bf16.mxu0 0
      %1585 = vmatpush1.bf16.msra.mxu0 %v1170
      %1586 = vmatprep.subr.bf16.mxu0 0
      %1587 = vmatpush1.bf16.msra.mxu0 %v1171
      %1588 = vmatprep.subr.bf16.mxu0 0
      %1589 = vmatpush1.bf16.msra.mxu0 %v1172
      %1590 = vmatprep.subr.bf16.mxu0 0
      %1591 = vmatpush1.bf16.msra.mxu0 %v1173
      %1592 = vmatprep.subr.bf16.mxu0 0
      %1593 = vmatpush1.bf16.msra.mxu0 %v1174
      %1594 = vmatprep.subr.bf16.mxu0 0
      %1595 = vmatpush1.bf16.msra.mxu0 %v1175
      %1596 = vmatprep.subr.bf16.mxu0 0
      %1597 = vmatpush1.bf16.msra.mxu0 %v1176
      %1598 = vmatprep.subr.bf16.mxu0 0
      %1599 = vmatpush1.bf16.msra.mxu0 %v1177
      %1600 = vmatprep.subr.bf16.mxu0 0
      %1601 = vmatpush1.bf16.msra.mxu0 %v1178
      %1602 = vmatprep.subr.bf16.mxu0 0
      %1603 = vmatpush1.bf16.msra.mxu0 %v1179
      %1604 = vmatprep.subr.bf16.mxu0 0
      %1605 = vmatpush1.bf16.msra.mxu0 %v1180
      %1606 = vmatprep.mubr.bf16.mxu0 %v610
      %1607 = vmatmul.mubr.bf16.gmra.mrb[0].mxu0 %v609
      %v1608 = vpop.f32.mrb[0].mxu0
      %v1609 = vadd.f32 %v1544, %v1608
      %v1610 = vpop.f32.mrb[0].mxu0
      %v1611 = vpop.f32.mrb[0].mxu0
      %v1612 = vadd.f32 %v1547, %v1611
      %v1613 = vpop.f32.mrb[0].mxu0
      %1614 = vmatprep.mubr.bf16.mxu0 %v623
      %1615 = vmatmul.mubr.bf16.gmra.mrb[0].mxu0 %v622
      %v1616 = vpop.f32.mrb[0].mxu0
      %v1617 = vadd.f32 %v1552, %v1616
      %v1618 = vpop.f32.mrb[0].mxu0
      %v1619 = vpop.f32.mrb[0].mxu0
      %v1620 = vadd.f32 %v1555, %v1619
      %v1621 = vpop.f32.mrb[0].mxu0
      %1622 = vmatprep.mubr.bf16.mxu0 %v636
      %1623 = vmatmul.mubr.bf16.gmra.mrb[0].mxu0 %v635
      %v1624 = vpop.f32.mrb[0].mxu0
      %v1625 = vadd.f32 %v1560, %v1624
      %v1626 = vpop.f32.mrb[0].mxu0
      %v1627 = vpop.f32.mrb[0].mxu0
      %v1628 = vadd.f32 %v1563, %v1627
      %v1629 = vpop.f32.mrb[0].mxu0
      %1630 = vmatprep.mubr.bf16.mxu0 %v649
      %1631 = vmatmul.mubr.bf16.gmra.mrb[0].mxu0 %v648
      %v1632 = vpop.f32.mrb[0].mxu0
      %v1633 = vadd.f32 %v1568, %v1632
      %v1634 = vpop.f32.mrb[0].mxu0
      %v1635 = vpop.f32.mrb[0].mxu0
      %v1636 = vadd.f32 %v1571, %v1635
      %v1637 = vpop.f32.mrb[0].mxu0
      %1638 = vdwg.mxu0
      %1639 = vmatprep.subr.bf16.mxu0 0
      %1640 = vmatpush1.bf16.msra.mxu0 %v1181
      %1641 = vmatprep.subr.bf16.mxu0 0
      %1642 = vmatpush1.bf16.msra.mxu0 %v1182
      %1643 = vmatprep.subr.bf16.mxu0 0
      %1644 = vmatpush1.bf16.msra.mxu0 %v1183
      %1645 = vmatprep.subr.bf16.mxu0 0
      %1646 = vmatpush1.bf16.msra.mxu0 %v1184
      %1647 = vmatprep.subr.bf16.mxu0 0
      %1648 = vmatpush1.bf16.msra.mxu0 %v1185
      %1649 = vmatprep.subr.bf16.mxu0 0
      %1650 = vmatpush1.bf16.msra.mxu0 %v1186
      %1651 = vmatprep.subr.bf16.mxu0 0
      %1652 = vmatpush1.bf16.msra.mxu0 %v1187
      %1653 = vmatprep.subr.bf16.mxu0 0
      %1654 = vmatpush1.bf16.msra.mxu0 %v1188
      %1655 = vmatprep.subr.bf16.mxu0 0
      %1656 = vmatpush1.bf16.msra.mxu0 %v1189
      %1657 = vmatprep.subr.bf16.mxu0 0
      %1658 = vmatpush1.bf16.msra.mxu0 %v1190
      %1659 = vmatprep.subr.bf16.mxu0 0
      %1660 = vmatpush1.bf16.msra.mxu0 %v1191
      %1661 = vmatprep.subr.bf16.mxu0 0
      %1662 = vmatpush1.bf16.msra.mxu0 %v1192
      %1663 = vmatprep.subr.bf16.mxu0 0
      %1664 = vmatpush1.bf16.msra.mxu0 %v1193
      %1665 = vmatprep.subr.bf16.mxu0 0
      %1666 = vmatpush1.bf16.msra.mxu0 %v1194
      %1667 = vmatprep.subr.bf16.mxu0 0
      %1668 = vmatpush1.bf16.msra.mxu0 %v1195
      %1669 = vmatprep.subr.bf16.mxu0 0
      %1670 = vmatpush1.bf16.msra.mxu0 %v1196
      %1671 = vmatprep.mubr.bf16.mxu0 %v612
      %1672 = vmatmul.mubr.bf16.gmra.mrb[0].mxu0 %v611
      %v1673 = vpop.f32.mrb[0].mxu0
      %v1674 = vadd.f32 %v1609, %v1673
      %v1675 = vpop.f32.mrb[0].mxu0
      %v1676 = vpop.f32.mrb[0].mxu0
      %v1677 = vadd.f32 %v1612, %v1676
      %v1678 = vpop.f32.mrb[0].mxu0
      %1679 = vmatprep.mubr.bf16.mxu0 %v625
      %1680 = vmatmul.mubr.bf16.gmra.mrb[0].mxu0 %v624
      %v1681 = vpop.f32.mrb[0].mxu0
      %v1682 = vadd.f32 %v1617, %v1681
      %v1683 = vpop.f32.mrb[0].mxu0
      %v1684 = vpop.f32.mrb[0].mxu0
      %v1685 = vadd.f32 %v1620, %v1684
      %v1686 = vpop.f32.mrb[0].mxu0
      %1687 = vmatprep.mubr.bf16.mxu0 %v638
      %1688 = vmatmul.mubr.bf16.gmra.mrb[0].mxu0 %v637
      %v1689 = vpop.f32.mrb[0].mxu0
      %v1690 = vadd.f32 %v1625, %v1689
      %v1691 = vpop.f32.mrb[0].mxu0
      %v1692 = vpop.f32.mrb[0].mxu0
      %v1693 = vadd.f32 %v1628, %v1692
      %v1694 = vpop.f32.mrb[0].mxu0
      %1695 = vmatprep.mubr.bf16.mxu0 %v651
      %1696 = vmatmul.mubr.bf16.gmra.mrb[0].mxu0 %v650
      %v1697 = vpop.f32.mrb[0].mxu0
      %v1698 = vadd.f32 %v1633, %v1697
      %v1699 = vpop.f32.mrb[0].mxu0
      %v1700 = vpop.f32.mrb[0].mxu0
      %v1701 = vadd.f32 %v1636, %v1700
      %v1702 = vpop.f32.mrb[0].mxu0
      %1703 = vdwg.mxu0
      %1704 = vmatprep.subr.bf16.mxu0 0
      %1705 = vmatpush1.bf16.msra.mxu0 %v1197
      %1706 = vmatprep.subr.bf16.mxu0 0
      %1707 = vmatpush1.bf16.msra.mxu0 %v1198
      %1708 = vmatprep.subr.bf16.mxu0 0
      %1709 = vmatpush1.bf16.msra.mxu0 %v1199
      %1710 = vmatprep.subr.bf16.mxu0 0
      %1711 = vmatpush1.bf16.msra.mxu0 %v1200
      %1712 = vmatprep.subr.bf16.mxu0 0
      %1713 = vmatpush1.bf16.msra.mxu0 0
      %1714 = vmatprep.subr.bf16.mxu0 0
      %1715 = vmatpush1.bf16.msra.mxu0 0
      %1716 = vmatprep.subr.bf16.mxu0 0
      %1717 = vmatpush1.bf16.msra.mxu0 0
      %1718 = vmatprep.subr.bf16.mxu0 0
      %1719 = vmatpush1.bf16.msra.mxu0 0
      %1720 = vmatprep.subr.bf16.mxu0 0
      %1721 = vmatpush1.bf16.msra.mxu0 0
      %1722 = vmatprep.subr.bf16.mxu0 0
      %1723 = vmatpush1.bf16.msra.mxu0 0
      %1724 = vmatprep.subr.bf16.mxu0 0
      %1725 = vmatpush1.bf16.msra.mxu0 0
      %1726 = vmatprep.subr.bf16.mxu0 0
      %1727 = vmatpush1.bf16.msra.mxu0 0
      %1728 = vmatprep.subr.bf16.mxu0 0
      %1729 = vmatpush1.bf16.msra.mxu0 0
      %1730 = vmatprep.subr.bf16.mxu0 0
      %1731 = vmatpush1.bf16.msra.mxu0 0
      %1732 = vmatprep.subr.bf16.mxu0 0
      %1733 = vmatpush1.bf16.msra.mxu0 0
      %1734 = vmatprep.subr.bf16.mxu0 0
      %1735 = vmatpush1.bf16.msra.mxu0 0
      %1736 = vmatprep.mubr.bf16.mxu0 0
      %1737 = vmatmul.mubr.bf16.gmra.mrb[0].mxu0 %v1303
      %v1738 = vpop.f32.mrb[0].mxu0
      %v1739 = vadd.f32 %v1674, %v1738
      %v1740 = vpop.f32.mrb[0].mxu0
      %v1741 = vpop.f32.mrb[0].mxu0
      %v1742 = vadd.f32 %v1677, %v1741
      %v1743 = vpop.f32.mrb[0].mxu0
      %1744 = vmatprep.mubr.bf16.mxu0 0
      %1745 = vmatmul.mubr.bf16.gmra.mrb[0].mxu0 %v1306
      %v1746 = vpop.f32.mrb[0].mxu0
      %v1747 = vadd.f32 %v1682, %v1746
      %v1748 = vpop.f32.mrb[0].mxu0
      %v1749 = vpop.f32.mrb[0].mxu0
      %v1750 = vadd.f32 %v1685, %v1749
      %v1751 = vpop.f32.mrb[0].mxu0
      %1752 = vmatprep.mubr.bf16.mxu0 0
      %1753 = vmatmul.mubr.bf16.gmra.mrb[0].mxu0 %v1309
      %v1754 = vpop.f32.mrb[0].mxu0
      %v1755 = vadd.f32 %v1690, %v1754
      %v1756 = vpop.f32.mrb[0].mxu0
      %v1757 = vpop.f32.mrb[0].mxu0
      %v1758 = vadd.f32 %v1693, %v1757
      %v1759 = vpop.f32.mrb[0].mxu0
      %1760 = vmatprep.mubr.bf16.mxu0 0
      %1761 = vmatmul.mubr.bf16.gmra.mrb[0].mxu0 %v1312
      %v1762 = vpop.f32.mrb[0].mxu0
      %v1763 = vadd.f32 %v1698, %v1762
      %v1764 = vpop.f32.mrb[0].mxu0
      %v1765 = vpop.f32.mrb[0].mxu0
      %v1766 = vadd.f32 %v1701, %v1765
      %v1767 = vpop.f32.mrb[0].mxu0
      %1768 = vdwg.mxu0
      %v1769 = vmax.f32 %v1739, 0.0
      %v1770 = vmax.f32 %v1742, 0.0
      %v1771 = vmax.f32 %v1747, 0.0
      %v1772 = vmax.f32 %v1750, 0.0
      %v1773 = vmax.f32 %v1755, 0.0
      %v1774 = vmax.f32 %v1758, 0.0
      %v1775 = vmax.f32 %v1763, 0.0
      %v1776 = vmax.f32 %v1766, 0.0
      %v1777 = vpack.c.bf16 %v1770, %v1769
      %v1778 = vpack.c.bf16 %v1772, %v1771
      %v1779 = vpack.c.bf16 %v1774, %v1773
      %v1780 = vpack.c.bf16 %v1776, %v1775
      %v1785 = vunpack.c.l.b16 %v1777
      %v1786 = vunpack.c.h.b16 %v1777
      %v1787 = vunpack.c.l.b16 %v1778
      %v1788 = vunpack.c.h.b16 %v1778
      %v1789 = vunpack.c.l.b16 %v1779
      %v1790 = vunpack.c.h.b16 %v1779
      %v1791 = vunpack.c.l.b16 %v1780
      %v1792 = vunpack.c.h.b16 %v1780
      %v1793 = vpack.c.b16 %v1785, %v1785
      %v1794 = vpack.c.b16 %v1786, %v1786
      %v1795 = vpack.c.b16 %v1787, %v1787
      %v1796 = vpack.c.b16 %v1788, %v1788
      %v1797 = vpack.c.b16 %v1789, %v1789
      %v1798 = vpack.c.b16 %v1790, %v1790
      %v1799 = vpack.c.b16 %v1791, %v1791
      %v1800 = vpack.c.b16 %v1792, %v1792
      %1809 = vst [vmem:[%s175] sm:$0xf] %v1793
      %1810 = vst [vmem:[%s175 + $0x4] sm:$0xf] %v1794
      %1811 = vst [vmem:[%s175 + $0x8] sm:$0xf] %v1795
      %1812 = vst [vmem:[%s175 + $0xc] sm:$0xf] %v1796
      %1813 = vst [vmem:[%s175 + $0x10] sm:$0xf] %v1797
      %1814 = vst [vmem:[%s175 + $0x14] sm:$0xf] %v1798
      %1815 = vst [vmem:[%s175 + $0x18] sm:$0xf] %v1799
      %1816 = vst [vmem:[%s175 + $0x1c] sm:$0xf] %v1800
      %s1817 = smul.u32 8, %s14
      %p1818 = scmp.lt.s32.totalorder %s1817, 15
      %s1819 = scalar_select %p1818, %s1817, 15
      %s1820 = smul.addr %s1819, 4
      %s1821 = scalar_lea.vmem %s3, %s1820
      // Predicated region
      $region33: #{temp_embed_forward.7} parent=31 // pred_check
        %p1822 = pneg %p100
      $region34: #{temp_embed_forward.7} parent=31 // pred_check_branch
        %1824 = sbr.rel (%p1822) target = $region36
      $region35: #{temp_embed_forward.7} parent=31 // pred_region
        %s1825 = smul.u32 8, %s14
      $region36: #{temp_embed_forward.7} parent=31 // pred_fallthru
        _
    $region32: #{temp_embed_forward.7} parent=5 // pred_fallthru
      _
    %p1826 = scmp.le.s32.totalorder 2, %s9
    // Predicated region
    $region37: #{temp_embed_forward.7} parent=5 // pred_check
      %p1827 = pneg %p1826
    $region38: #{temp_embed_forward.7} parent=5 // pred_check_branch
      %1829 = sbr.rel (%p1827) target = $region40
    $region39: #{temp_embed_forward.7} parent=5 // pred_region
      %s1830 = ssub.s32 %s9, 2
      // Predicated region
      $region41: #{temp_embed_forward.7} parent=39 // pred_check
        %p1831 = pneg %p106
      $region42: #{temp_embed_forward.7} parent=39 // pred_check_branch
        %1833 = sbr.rel (%p1831) target = $region44
      $region43: #{temp_embed_forward.7} parent=39 // pred_region
        %s1834 = smul.u32 8, %s15
        %p1835 = scmp.lt.s32.totalorder %s1834, 15
        %s1836 = scalar_select %p1835, %s1834, 15
        %s1837 = smul.addr %s1836, 4
        %s1838 = scalar_lea.vmem %s3, %s1837
      $region44: #{temp_embed_forward.7} parent=39 // pred_fallthru
        _
    $region40: #{temp_embed_forward.7} parent=5 // pred_fallthru
      _
  $region6: #{temp_embed_forward.7} parent=0 // loop_footer
    %s13 = sadd.s32 1, %s9
  $region7: #{temp_embed_forward.7} parent=0 // loop_footer_branch
    %8 = sbr.rel target = $region3
  $region8: #{temp_embed_forward.7} parent=0 // loop_exit
    _

// kernel: temp_embed_forward.8
$region0: #{temp_embed_forward.8}
  #allocation0 [shape = 'u32[]', space=smem, size = 0x4, offset = 0x4, fixed_abs, tag = 'smem constant byte address 0x4 - core index']
  #allocation1 [shape = 'u32[144,128]{1,0:T(1,128)}', space=vmem, size = 0x12000, scoped, tag = 'internal scratch']
  %s0 = inlined_call_operand.vmem [shape: bf16[72,576], index: 0, kind: input, shape index: {}]
  %s1 = inlined_call_operand.vmem [shape: bf16[576,128], index: 1, kind: input, shape index: {}]
  %s2 = inlined_call_operand.vmem [shape: f32[1,128], index: 2, kind: input, shape index: {}]
  %s3 = inlined_call_operand.vmem [shape: bf16[72,128], index: 3, kind: output, shape index: {}]
  %s4 = sld [smem:[#allocation0]]
  $region22: #{temp_embed_forward.8} parent=0
    _
  %s6 = ssub.s32 1, %s4
  %s7 = scalar_select 0, %s6, %s4
  // Predicated region
  $region2: #{temp_embed_forward.8} parent=0 // pred_check
    _
  $region3: #{temp_embed_forward.8} parent=0 // pred_check_branch
    %9 = sbr.rel (0) target = $region5
  $region4: #{temp_embed_forward.8} parent=0 // pred_region
    _
  $region5: #{temp_embed_forward.8} parent=0 // pred_fallthru
    _
  // Predicated region
  $region6: #{temp_embed_forward.8} parent=0 // pred_check
    _
  $region7: #{temp_embed_forward.8} parent=0 // pred_check_branch
    %11 = sbr.rel (0) target = $region9
  $region8: #{temp_embed_forward.8} parent=0 // pred_region
    _
  $region9: #{temp_embed_forward.8} parent=0 // pred_fallthru
    _
  // Predicated region
  $region10: #{temp_embed_forward.8} parent=0 // pred_check
    _
  $region11: #{temp_embed_forward.8} parent=0 // pred_check_branch
    %13 = sbr.rel (0) target = $region13
  $region12: #{temp_embed_forward.8} parent=0 // pred_region
    _
  $region13: #{temp_embed_forward.8} parent=0 // pred_fallthru
    _
  %v15 = vld [vmem:[%s0] sm:$0xff]
  %v16 = vld [vmem:[%s0 + $0x8] sm:$0xff]
  %v17 = vld [vmem:[%s0 + $0x10] sm:$0xf]
  %v18 = vld [vmem:[%s0 + $0x14] sm:$0xff]
  %v19 = vld [vmem:[%s0 + $0x1c] sm:$0xff]
  %v20 = vld [vmem:[%s0 + $0x24] sm:$0xf]
  %v21 = vld [vmem:[%s0 + $0x28] sm:$0xff]
  %v22 = vld [vmem:[%s0 + $0x30] sm:$0xff]
  %v23 = vld [vmem:[%s0 + $0x38] sm:$0xf]
  %v24 = vld [vmem:[%s0 + $0x3c] sm:$0xff]
  %v25 = vld [vmem:[%s0 + $0x44] sm:$0xff]
  %v26 = vld [vmem:[%s0 + $0x4c] sm:$0xf]
  %v27 = vld [vmem:[%s0 + $0x50] sm:$0xff]
  %v28 = vld [vmem:[%s0 + $0x58] sm:$0xff]
  %v29 = vld [vmem:[%s0 + $0x60] sm:$0xf]
  %v30 = vld [vmem:[%s0 + $0x64] sm:$0xff]
  %v31 = vld [vmem:[%s0 + $0x6c] sm:$0xff]
  %v32 = vld [vmem:[%s0 + $0x74] sm:$0xf]
  %v33 = vld [vmem:[%s0 + $0x78] sm:$0xff]
  %v34 = vld [vmem:[%s0 + $0x80] sm:$0xff]
  %v35 = vld [vmem:[%s0 + $0x88] sm:$0xf]
  %v36 = vld [vmem:[%s0 + $0x8c] sm:$0xff]
  %v37 = vld [vmem:[%s0 + $0x94] sm:$0xff]
  %v38 = vld [vmem:[%s0 + $0x9c] sm:$0xf]
  %v39 = vld [vmem:[%s0 + $0xa0] sm:$0xff]
  %v40 = vld [vmem:[%s0 + $0xa8] sm:$0xff]
  %v41 = vld [vmem:[%s0 + $0xb0] sm:$0xf]
  %v42 = vld [vmem:[%s1] sm:$0xf]
  %v43 = vld [vmem:[%s1 + $0x4] sm:$0xf]
  %v44 = vld [vmem:[%s1 + $0x8] sm:$0xf]
  %v45 = vld [vmem:[%s1 + $0xc] sm:$0xf]
  %v46 = vld [vmem:[%s1 + $0x10] sm:$0xf]
  %v47 = vld [vmem:[%s1 + $0x14] sm:$0xf]
  %v48 = vld [vmem:[%s1 + $0x18] sm:$0xf]
  %v49 = vld [vmem:[%s1 + $0x1c] sm:$0xf]
  %v50 = vld [vmem:[%s1 + $0x20] sm:$0xf]
  %v51 = vld [vmem:[%s1 + $0x24] sm:$0xf]
  %v52 = vld [vmem:[%s1 + $0x28] sm:$0xf]
  %v53 = vld [vmem:[%s1 + $0x2c] sm:$0xf]
  %v54 = vld [vmem:[%s1 + $0x30] sm:$0xf]
  %v55 = vld [vmem:[%s1 + $0x34] sm:$0xf]
  %v56 = vld [vmem:[%s1 + $0x38] sm:$0xf]
  %v57 = vld [vmem:[%s1 + $0x3c] sm:$0xf]
  %v58 = vld [vmem:[%s1 + $0x40] sm:$0xf]
  %v59 = vld [vmem:[%s1 + $0x44] sm:$0xf]
  %v60 = vld [vmem:[%s1 + $0x48] sm:$0xf]
  %v61 = vld [vmem:[%s1 + $0x4c] sm:$0xf]
  %v62 = vld [vmem:[%s1 + $0x50] sm:$0xf]
  %v63 = vld [vmem:[%s1 + $0x54] sm:$0xf]
  %v64 = vld [vmem:[%s1 + $0x58] sm:$0xf]
  %v65 = vld [vmem:[%s1 + $0x5c] sm:$0xf]
  %v66 = vld [vmem:[%s1 + $0x60] sm:$0xf]
  %v67 = vld [vmem:[%s1 + $0x64] sm:$0xf]
  %v68 = vld [vmem:[%s1 + $0x68] sm:$0xf]
  %v69 = vld [vmem:[%s1 + $0x6c] sm:$0xf]
  %v70 = vld [vmem:[%s1 + $0x70] sm:$0xf]
  %v71 = vld [vmem:[%s1 + $0x74] sm:$0xf]
  %v72 = vld [vmem:[%s1 + $0x78] sm:$0xf]
  %v73 = vld [vmem:[%s1 + $0x7c] sm:$0xf]
  %v74 = vld [vmem:[%s1 + $0x80] sm:$0xf]
  %v75 = vld [vmem:[%s1 + $0x84] sm:$0xf]
  %v76 = vld [vmem:[%s1 + $0x88] sm:$0xf]
  %v77 = vld [vmem:[%s1 + $0x8c] sm:$0xf]
  %v78 = vld [vmem:[%s1 + $0x90] sm:$0xf]
  %v79 = vld [vmem:[%s1 + $0x94] sm:$0xf]
  %v80 = vld [vmem:[%s1 + $0x98] sm:$0xf]
  %v81 = vld [vmem:[%s1 + $0x9c] sm:$0xf]
  %v82 = vld [vmem:[%s1 + $0xa0] sm:$0xf]
  %v83 = vld [vmem:[%s1 + $0xa4] sm:$0xf]
  %v84 = vld [vmem:[%s1 + $0xa8] sm:$0xf]
  %v85 = vld [vmem:[%s1 + $0xac] sm:$0xf]
  %v86 = vld [vmem:[%s1 + $0xb0] sm:$0xf]
  %v87 = vld [vmem:[%s1 + $0xb4] sm:$0xf]
  %v88 = vld [vmem:[%s1 + $0xb8] sm:$0xf]
  %v89 = vld [vmem:[%s1 + $0xbc] sm:$0xf]
  %v90 = vld [vmem:[%s1 + $0xc0] sm:$0xf]
  %v91 = vld [vmem:[%s1 + $0xc4] sm:$0xf]
  %v92 = vld [vmem:[%s1 + $0xc8] sm:$0xf]
  %v93 = vld [vmem:[%s1 + $0xcc] sm:$0xf]
  %v94 = vld [vmem:[%s1 + $0xd0] sm:$0xf]
  %v95 = vld [vmem:[%s1 + $0xd4] sm:$0xf]
  %v96 = vld [vmem:[%s1 + $0xd8] sm:$0xf]
  %v97 = vld [vmem:[%s1 + $0xdc] sm:$0xf]
  %v98 = vld [vmem:[%s1 + $0xe0] sm:$0xf]
  %v99 = vld [vmem:[%s1 + $0xe4] sm:$0xf]
  %v100 = vld [vmem:[%s1 + $0xe8] sm:$0xf]
  %v101 = vld [vmem:[%s1 + $0xec] sm:$0xf]
  %v102 = vld [vmem:[%s1 + $0xf0] sm:$0xf]
  %v103 = vld [vmem:[%s1 + $0xf4] sm:$0xf]
  %v104 = vld [vmem:[%s1 + $0xf8] sm:$0xf]
  %v105 = vld [vmem:[%s1 + $0xfc] sm:$0xf]
  %v106 = vld [vmem:[%s1 + $0x100] sm:$0xf]
  %v107 = vld [vmem:[%s1 + $0x104] sm:$0xf]
  %v108 = vld [vmem:[%s1 + $0x108] sm:$0xf]
  %v109 = vld [vmem:[%s1 + $0x10c] sm:$0xf]
  %v110 = vld [vmem:[%s1 + $0x110] sm:$0xf]
  %v111 = vld [vmem:[%s1 + $0x114] sm:$0xf]
  %v112 = vld [vmem:[%s1 + $0x118] sm:$0xf]
  %v113 = vld [vmem:[%s1 + $0x11c] sm:$0xf]
  %v114 = vld [vmem:[%s2] sm:$0x1]
  %v116 = vlaneseq
  %v117 = vshrl.u32 %v116, 7
  %v118 = vsub.s32 0, %v117
  %v119 = vrot.slane %v114, %v118
  %v148 = vunpack.c.l.b16 %v15
  %v149 = vunpack.c.h.b16 %v15
  %v150 = vunpack.c.l.b16 %v16
  %v151 = vunpack.c.h.b16 %v16
  %v152 = vunpack.c.l.b16 %v17
  %v153 = vunpack.c.l.b16 %v18
  %v154 = vunpack.c.h.b16 %v18
  %v155 = vunpack.c.l.b16 %v19
  %v156 = vunpack.c.h.b16 %v19
  %v157 = vunpack.c.l.b16 %v20
  %v158 = vunpack.c.l.b16 %v21
  %v159 = vunpack.c.h.b16 %v21
  %v160 = vunpack.c.l.b16 %v22
  %v161 = vunpack.c.h.b16 %v22
  %v162 = vunpack.c.l.b16 %v23
  %v163 = vunpack.c.l.b16 %v24
  %v164 = vunpack.c.h.b16 %v24
  %v165 = vunpack.c.l.b16 %v25
  %v166 = vunpack.c.h.b16 %v25
  %v167 = vunpack.c.l.b16 %v26
  %v168 = vunpack.c.l.b16 %v27
  %v169 = vunpack.c.h.b16 %v27
  %v170 = vunpack.c.l.b16 %v28
  %v171 = vunpack.c.h.b16 %v28
  %v172 = vunpack.c.l.b16 %v29
  %v173 = vunpack.c.l.b16 %v30
  %v174 = vunpack.c.h.b16 %v30
  %v175 = vunpack.c.l.b16 %v31
  %v176 = vunpack.c.h.b16 %v31
  %v177 = vunpack.c.l.b16 %v32
  %v178 = vunpack.c.l.b16 %v33
  %v179 = vunpack.c.h.b16 %v33
  %v180 = vunpack.c.l.b16 %v34
  %v181 = vunpack.c.h.b16 %v34
  %v182 = vunpack.c.l.b16 %v35
  %v183 = vunpack.c.l.b16 %v36
  %v184 = vunpack.c.h.b16 %v36
  %v185 = vunpack.c.l.b16 %v37
  %v186 = vunpack.c.h.b16 %v37
  %v187 = vunpack.c.l.b16 %v38
  %v188 = vunpack.c.l.b16 %v39
  %v189 = vunpack.c.h.b16 %v39
  %v190 = vunpack.c.l.b16 %v40
  %v191 = vunpack.c.h.b16 %v40
  %v192 = vunpack.c.l.b16 %v41
  %v193 = vpack.c.b16 %v153, %v148
  %v194 = vpack.c.b16 %v154, %v149
  %v195 = vpack.c.b16 %v155, %v150
  %v196 = vpack.c.b16 %v156, %v151
  %v197 = vpack.c.b16 %v157, %v152
  %v198 = vpack.c.b16 %v163, %v158
  %v199 = vpack.c.b16 %v164, %v159
  %v200 = vpack.c.b16 %v165, %v160
  %v201 = vpack.c.b16 %v166, %v161
  %v202 = vpack.c.b16 %v167, %v162
  %v203 = vpack.c.b16 %v173, %v168
  %v204 = vpack.c.b16 %v174, %v169
  %v205 = vpack.c.b16 %v175, %v170
  %v206 = vpack.c.b16 %v176, %v171
  %v207 = vpack.c.b16 %v177, %v172
  %v208 = vpack.c.b16 %v183, %v178
  %v209 = vpack.c.b16 %v184, %v179
  %v210 = vpack.c.b16 %v185, %v180
  %v211 = vpack.c.b16 %v186, %v181
  %v212 = vpack.c.b16 %v187, %v182
  %v213 = vpack.c.b16 %v188, %v188
  %v214 = vpack.c.b16 %v189, %v189
  %v215 = vpack.c.b16 %v190, %v190
  %v216 = vpack.c.b16 %v191, %v191
  %v217 = vpack.c.b16 %v192, %v192
  %v310 = vunpack.c.l.b16 %v42
  %v311 = vunpack.c.l.b16 %v43
  %v312 = vunpack.c.l.b16 %v44
  %v313 = vunpack.c.l.b16 %v45
  %v314 = vunpack.c.l.b16 %v46
  %v315 = vunpack.c.l.b16 %v47
  %v316 = vunpack.c.l.b16 %v48
  %v317 = vunpack.c.l.b16 %v49
  %v318 = vunpack.c.l.b16 %v50
  %v319 = vunpack.c.l.b16 %v51
  %v320 = vunpack.c.l.b16 %v52
  %v321 = vunpack.c.l.b16 %v53
  %v322 = vunpack.c.l.b16 %v54
  %v323 = vunpack.c.l.b16 %v55
  %v324 = vunpack.c.l.b16 %v56
  %v325 = vunpack.c.l.b16 %v57
  %v326 = vunpack.c.l.b16 %v58
  %v327 = vunpack.c.l.b16 %v59
  %v328 = vunpack.c.l.b16 %v60
  %v329 = vunpack.c.l.b16 %v61
  %v330 = vunpack.c.l.b16 %v62
  %v331 = vunpack.c.l.b16 %v63
  %v332 = vunpack.c.l.b16 %v64
  %v333 = vunpack.c.l.b16 %v65
  %v334 = vunpack.c.l.b16 %v66
  %v335 = vunpack.c.l.b16 %v67
  %v336 = vunpack.c.l.b16 %v68
  %v337 = vunpack.c.l.b16 %v69
  %v338 = vunpack.c.l.b16 %v70
  %v339 = vunpack.c.l.b16 %v71
  %v340 = vunpack.c.l.b16 %v72
  %v341 = vunpack.c.l.b16 %v73
  %v342 = vunpack.c.l.b16 %v74
  %v343 = vunpack.c.l.b16 %v75
  %v344 = vunpack.c.l.b16 %v76
  %v345 = vunpack.c.l.b16 %v77
  %v346 = vunpack.c.l.b16 %v78
  %v347 = vunpack.c.l.b16 %v79
  %v348 = vunpack.c.l.b16 %v80
  %v349 = vunpack.c.l.b16 %v81
  %v350 = vunpack.c.l.b16 %v82
  %v351 = vunpack.c.l.b16 %v83
  %v352 = vunpack.c.l.b16 %v84
  %v353 = vunpack.c.l.b16 %v85
  %v354 = vunpack.c.l.b16 %v86
  %v355 = vunpack.c.l.b16 %v87
  %v356 = vunpack.c.l.b16 %v88
  %v357 = vunpack.c.l.b16 %v89
  %v358 = vunpack.c.l.b16 %v90
  %v359 = vunpack.c.l.b16 %v91
  %v360 = vunpack.c.l.b16 %v92
  %v361 = vunpack.c.l.b16 %v93
  %v362 = vunpack.c.l.b16 %v94
  %v363 = vunpack.c.l.b16 %v95
  %v364 = vunpack.c.l.b16 %v96
  %v365 = vunpack.c.l.b16 %v97
  %v366 = vunpack.c.l.b16 %v98
  %v367 = vunpack.c.l.b16 %v99
  %v368 = vunpack.c.l.b16 %v100
  %v369 = vunpack.c.l.b16 %v101
  %v370 = vunpack.c.l.b16 %v102
  %v371 = vunpack.c.l.b16 %v103
  %v372 = vunpack.c.l.b16 %v104
  %v373 = vunpack.c.l.b16 %v105
  %v374 = vunpack.c.l.b16 %v106
  %v375 = vunpack.c.l.b16 %v107
  %v376 = vunpack.c.l.b16 %v108
  %v377 = vunpack.c.l.b16 %v109
  %v378 = vunpack.c.l.b16 %v110
  %v379 = vunpack.c.l.b16 %v111
  %v380 = vunpack.c.l.b16 %v112
  %v381 = vunpack.c.l.b16 %v113
  %v382 = vpack.c.b16 %v311, %v310
  %v383 = vpack.c.b16 %v313, %v312
  %v384 = vpack.c.b16 %v315, %v314
  %v385 = vpack.c.b16 %v317, %v316
  %v386 = vpack.c.b16 %v319, %v318
  %v387 = vpack.c.b16 %v321, %v320
  %v388 = vpack.c.b16 %v323, %v322
  %v389 = vpack.c.b16 %v325, %v324
  %v390 = vpack.c.b16 %v327, %v326
  %v391 = vpack.c.b16 %v329, %v328
  %v392 = vpack.c.b16 %v331, %v330
  %v393 = vpack.c.b16 %v333, %v332
  %v394 = vpack.c.b16 %v335, %v334
  %v395 = vpack.c.b16 %v337, %v336
  %v396 = vpack.c.b16 %v339, %v338
  %v397 = vpack.c.b16 %v341, %v340
  %v398 = vpack.c.b16 %v343, %v342
  %v399 = vpack.c.b16 %v345, %v344
  %v400 = vpack.c.b16 %v347, %v346
  %v401 = vpack.c.b16 %v349, %v348
  %v402 = vpack.c.b16 %v351, %v350
  %v403 = vpack.c.b16 %v353, %v352
  %v404 = vpack.c.b16 %v355, %v354
  %v405 = vpack.c.b16 %v357, %v356
  %v406 = vpack.c.b16 %v359, %v358
  %v407 = vpack.c.b16 %v361, %v360
  %v408 = vpack.c.b16 %v363, %v362
  %v409 = vpack.c.b16 %v365, %v364
  %v410 = vpack.c.b16 %v367, %v366
  %v411 = vpack.c.b16 %v369, %v368
  %v412 = vpack.c.b16 %v371, %v370
  %v413 = vpack.c.b16 %v373, %v372
  %v414 = vpack.c.b16 %v375, %v374
  %v415 = vpack.c.b16 %v377, %v376
  %v416 = vpack.c.b16 %v379, %v378
  %v417 = vpack.c.b16 %v381, %v380
  %vm454 = vcmask 523264
  %v456 = vsel %vm454, %v197, 0
  %v459 = vsel %vm454, %v202, 0
  %v462 = vsel %vm454, %v207, 0
  %v465 = vsel %vm454, %v212, 0
  %v468 = vsel %vm454, %v217, 0
  %470 = vmatprep.subr.bf16.mxu0 0
  %471 = vmatpush1.bf16.msra.mxu0 %v382
  %472 = vmatprep.subr.bf16.mxu0 0
  %473 = vmatpush1.bf16.msra.mxu0 %v383
  %474 = vmatprep.subr.bf16.mxu0 0
  %475 = vmatpush1.bf16.msra.mxu0 %v384
  %476 = vmatprep.subr.bf16.mxu0 0
  %477 = vmatpush1.bf16.msra.mxu0 %v385
  %478 = vmatprep.subr.bf16.mxu0 0
  %479 = vmatpush1.bf16.msra.mxu0 %v386
  %480 = vmatprep.subr.bf16.mxu0 0
  %481 = vmatpush1.bf16.msra.mxu0 %v387
  %482 = vmatprep.subr.bf16.mxu0 0
  %483 = vmatpush1.bf16.msra.mxu0 %v388
  %484 = vmatprep.subr.bf16.mxu0 0
  %485 = vmatpush1.bf16.msra.mxu0 %v389
  %486 = vmatprep.subr.bf16.mxu0 0
  %487 = vmatpush1.bf16.msra.mxu0 %v390
  %488 = vmatprep.subr.bf16.mxu0 0
  %489 = vmatpush1.bf16.msra.mxu0 %v391
  %490 = vmatprep.subr.bf16.mxu0 0
  %491 = vmatpush1.bf16.msra.mxu0 %v392
  %492 = vmatprep.subr.bf16.mxu0 0
  %493 = vmatpush1.bf16.msra.mxu0 %v393
  %494 = vmatprep.subr.bf16.mxu0 0
  %495 = vmatpush1.bf16.msra.mxu0 %v394
  %496 = vmatprep.subr.bf16.mxu0 0
  %497 = vmatpush1.bf16.msra.mxu0 %v395
  %498 = vmatprep.subr.bf16.mxu0 0
  %499 = vmatpush1.bf16.msra.mxu0 %v396
  %500 = vmatprep.subr.bf16.mxu0 0
  %501 = vmatpush1.bf16.msra.mxu0 %v397
  %502 = vmatprep.mubr.bf16.mxu0 %v194
  %503 = vmatmul.mubr.bf16.gmra.mrb[0].mxu0 %v193
  %v504 = vpop.f32.mrb[0].mxu0
  %v505 = vadd.f32 %v119, %v504
  %v506 = vpop.f32.mrb[0].mxu0
  %v507 = vpop.f32.mrb[0].mxu0
  %v508 = vadd.f32 %v119, %v507
  %v509 = vpop.f32.mrb[0].mxu0
  %510 = vmatprep.mubr.bf16.mxu0 %v199
  %511 = vmatmul.mubr.bf16.gmra.mrb[0].mxu0 %v198
  %v512 = vpop.f32.mrb[0].mxu0
  %v513 = vadd.f32 %v119, %v512
  %v514 = vpop.f32.mrb[0].mxu0
  %v515 = vpop.f32.mrb[0].mxu0
  %v516 = vadd.f32 %v119, %v515
  %v517 = vpop.f32.mrb[0].mxu0
  %518 = vmatprep.mubr.bf16.mxu0 %v204
  %519 = vmatmul.mubr.bf16.gmra.mrb[0].mxu0 %v203
  %v520 = vpop.f32.mrb[0].mxu0
  %v521 = vadd.f32 %v119, %v520
  %v522 = vpop.f32.mrb[0].mxu0
  %v523 = vpop.f32.mrb[0].mxu0
  %v524 = vadd.f32 %v119, %v523
  %v525 = vpop.f32.mrb[0].mxu0
  %526 = vmatprep.mubr.bf16.mxu0 %v209
  %527 = vmatmul.mubr.bf16.gmra.mrb[0].mxu0 %v208
  %v528 = vpop.f32.mrb[0].mxu0
  %v529 = vadd.f32 %v119, %v528
  %v530 = vpop.f32.mrb[0].mxu0
  %v531 = vpop.f32.mrb[0].mxu0
  %v532 = vadd.f32 %v119, %v531
  %v533 = vpop.f32.mrb[0].mxu0
  %534 = vmatprep.mubr.bf16.mxu0 %v214
  %535 = vmatmul.mubr.bf16.gmra.mrb[0].mxu0 %v213
  %v536 = vpop.f32.mrb[0].mxu0
  %v537 = vadd.f32 %v119, %v536
  %v538 = vpop.f32.mrb[0].mxu0
  %v539 = vpop.f32.mrb[0].mxu0
  %v540 = vpop.f32.mrb[0].mxu0
  %541 = vdwg.mxu0
  %542 = vmatprep.subr.bf16.mxu0 0
  %543 = vmatpush1.bf16.msra.mxu0 %v398
  %544 = vmatprep.subr.bf16.mxu0 0
  %545 = vmatpush1.bf16.msra.mxu0 %v399
  %546 = vmatprep.subr.bf16.mxu0 0
  %547 = vmatpush1.bf16.msra.mxu0 %v400
  %548 = vmatprep.subr.bf16.mxu0 0
  %549 = vmatpush1.bf16.msra.mxu0 %v401
  %550 = vmatprep.subr.bf16.mxu0 0
  %551 = vmatpush1.bf16.msra.mxu0 %v402
  %552 = vmatprep.subr.bf16.mxu0 0
  %553 = vmatpush1.bf16.msra.mxu0 %v403
  %554 = vmatprep.subr.bf16.mxu0 0
  %555 = vmatpush1.bf16.msra.mxu0 %v404
  %556 = vmatprep.subr.bf16.mxu0 0
  %557 = vmatpush1.bf16.msra.mxu0 %v405
  %558 = vmatprep.subr.bf16.mxu0 0
  %559 = vmatpush1.bf16.msra.mxu0 %v406
  %560 = vmatprep.subr.bf16.mxu0 0
  %561 = vmatpush1.bf16.msra.mxu0 %v407
  %562 = vmatprep.subr.bf16.mxu0 0
  %563 = vmatpush1.bf16.msra.mxu0 %v408
  %564 = vmatprep.subr.bf16.mxu0 0
  %565 = vmatpush1.bf16.msra.mxu0 %v409
  %566 = vmatprep.subr.bf16.mxu0 0
  %567 = vmatpush1.bf16.msra.mxu0 %v410
  %568 = vmatprep.subr.bf16.mxu0 0
  %569 = vmatpush1.bf16.msra.mxu0 %v411
  %570 = vmatprep.subr.bf16.mxu0 0
  %571 = vmatpush1.bf16.msra.mxu0 %v412
  %572 = vmatprep.subr.bf16.mxu0 0
  %573 = vmatpush1.bf16.msra.mxu0 %v413
  %574 = vmatprep.mubr.bf16.mxu0 %v196
  %575 = vmatmul.mubr.bf16.gmra.mrb[0].mxu0 %v195
  %v576 = vpop.f32.mrb[0].mxu0
  %v577 = vadd.f32 %v505, %v576
  %v578 = vpop.f32.mrb[0].mxu0
  %v579 = vpop.f32.mrb[0].mxu0
  %v580 = vadd.f32 %v508, %v579
  %v581 = vpop.f32.mrb[0].mxu0
  %582 = vmatprep.mubr.bf16.mxu0 %v201
  %583 = vmatmul.mubr.bf16.gmra.mrb[0].mxu0 %v200
  %v584 = vpop.f32.mrb[0].mxu0
  %v585 = vadd.f32 %v513, %v584
  %v586 = vpop.f32.mrb[0].mxu0
  %v587 = vpop.f32.mrb[0].mxu0
  %v588 = vadd.f32 %v516, %v587
  %v589 = vpop.f32.mrb[0].mxu0
  %590 = vmatprep.mubr.bf16.mxu0 %v206
  %591 = vmatmul.mubr.bf16.gmra.mrb[0].mxu0 %v205
  %v592 = vpop.f32.mrb[0].mxu0
  %v593 = vadd.f32 %v521, %v592
  %v594 = vpop.f32.mrb[0].mxu0
  %v595 = vpop.f32.mrb[0].mxu0
  %v596 = vadd.f32 %v524, %v595
  %v597 = vpop.f32.mrb[0].mxu0
  %598 = vmatprep.mubr.bf16.mxu0 %v211
  %599 = vmatmul.mubr.bf16.gmra.mrb[0].mxu0 %v210
  %v600 = vpop.f32.mrb[0].mxu0
  %v601 = vadd.f32 %v529, %v600
  %v602 = vpop.f32.mrb[0].mxu0
  %v603 = vpop.f32.mrb[0].mxu0
  %v604 = vadd.f32 %v532, %v603
  %v605 = vpop.f32.mrb[0].mxu0
  %606 = vmatprep.mubr.bf16.mxu0 %v216
  %607 = vmatmul.mubr.bf16.gmra.mrb[0].mxu0 %v215
  %v608 = vpop.f32.mrb[0].mxu0
  %v609 = vadd.f32 %v537, %v608
  %v610 = vpop.f32.mrb[0].mxu0
  %v611 = vpop.f32.mrb[0].mxu0
  %v612 = vpop.f32.mrb[0].mxu0
  %613 = vdwg.mxu0
  %614 = vmatprep.subr.bf16.mxu0 0
  %615 = vmatpush1.bf16.msra.mxu0 %v414
  %616 = vmatprep.subr.bf16.mxu0 0
  %617 = vmatpush1.bf16.msra.mxu0 %v415
  %618 = vmatprep.subr.bf16.mxu0 0
  %619 = vmatpush1.bf16.msra.mxu0 %v416
  %620 = vmatprep.subr.bf16.mxu0 0
  %621 = vmatpush1.bf16.msra.mxu0 %v417
  %622 = vmatprep.subr.bf16.mxu0 0
  %623 = vmatpush1.bf16.msra.mxu0 0
  %624 = vmatprep.subr.bf16.mxu0 0
  %625 = vmatpush1.bf16.msra.mxu0 0
  %626 = vmatprep.subr.bf16.mxu0 0
  %627 = vmatpush1.bf16.msra.mxu0 0
  %628 = vmatprep.subr.bf16.mxu0 0
  %629 = vmatpush1.bf16.msra.mxu0 0
  %630 = vmatprep.subr.bf16.mxu0 0
  %631 = vmatpush1.bf16.msra.mxu0 0
  %632 = vmatprep.subr.bf16.mxu0 0
  %633 = vmatpush1.bf16.msra.mxu0 0
  %634 = vmatprep.subr.bf16.mxu0 0
  %635 = vmatpush1.bf16.msra.mxu0 0
  %636 = vmatprep.subr.bf16.mxu0 0
  %637 = vmatpush1.bf16.msra.mxu0 0
  %638 = vmatprep.subr.bf16.mxu0 0
  %639 = vmatpush1.bf16.msra.mxu0 0
  %640 = vmatprep.subr.bf16.mxu0 0
  %641 = vmatpush1.bf16.msra.mxu0 0
  %642 = vmatprep.subr.bf16.mxu0 0
  %643 = vmatpush1.bf16.msra.mxu0 0
  %644 = vmatprep.subr.bf16.mxu0 0
  %645 = vmatpush1.bf16.msra.mxu0 0
  %646 = vmatprep.mubr.bf16.mxu0 0
  %647 = vmatmul.mubr.bf16.gmra.mrb[0].mxu0 %v456
  %v648 = vpop.f32.mrb[0].mxu0
  %v649 = vadd.f32 %v577, %v648
  %v650 = vpop.f32.mrb[0].mxu0
  %v651 = vpop.f32.mrb[0].mxu0
  %v652 = vadd.f32 %v580, %v651
  %v653 = vpop.f32.mrb[0].mxu0
  %654 = vmatprep.mubr.bf16.mxu0 0
  %655 = vmatmul.mubr.bf16.gmra.mrb[0].mxu0 %v459
  %v656 = vpop.f32.mrb[0].mxu0
  %v657 = vadd.f32 %v585, %v656
  %v658 = vpop.f32.mrb[0].mxu0
  %v659 = vpop.f32.mrb[0].mxu0
  %v660 = vadd.f32 %v588, %v659
  %v661 = vpop.f32.mrb[0].mxu0
  %662 = vmatprep.mubr.bf16.mxu0 0
  %663 = vmatmul.mubr.bf16.gmra.mrb[0].mxu0 %v462
  %v664 = vpop.f32.mrb[0].mxu0
  %v665 = vadd.f32 %v593, %v664
  %v666 = vpop.f32.mrb[0].mxu0
  %v667 = vpop.f32.mrb[0].mxu0
  %v668 = vadd.f32 %v596, %v667
  %v669 = vpop.f32.mrb[0].mxu0
  %670 = vmatprep.mubr.bf16.mxu0 0
  %671 = vmatmul.mubr.bf16.gmra.mrb[0].mxu0 %v465
  %v672 = vpop.f32.mrb[0].mxu0
  %v673 = vadd.f32 %v601, %v672
  %v674 = vpop.f32.mrb[0].mxu0
  %v675 = vpop.f32.mrb[0].mxu0
  %v676 = vadd.f32 %v604, %v675
  %v677 = vpop.f32.mrb[0].mxu0
  %678 = vmatprep.mubr.bf16.mxu0 0
  %679 = vmatmul.mubr.bf16.gmra.mrb[0].mxu0 %v468
  %v680 = vpop.f32.mrb[0].mxu0
  %v681 = vadd.f32 %v609, %v680
  %v682 = vpop.f32.mrb[0].mxu0
  %v683 = vpop.f32.mrb[0].mxu0
  %v684 = vpop.f32.mrb[0].mxu0
  %685 = vdwg.mxu0
  %v686 = vmax.f32 %v649, 0.0
  %v687 = vmax.f32 %v652, 0.0
  %v688 = vmax.f32 %v657, 0.0
  %v689 = vmax.f32 %v660, 0.0
  %v690 = vmax.f32 %v665, 0.0
  %v691 = vmax.f32 %v668, 0.0
  %v692 = vmax.f32 %v673, 0.0
  %v693 = vmax.f32 %v676, 0.0
  %v694 = vmax.f32 %v681, 0.0
  %v695 = vpack.c.bf16 %v687, %v686
  %v696 = vpack.c.bf16 %v689, %v688
  %v697 = vpack.c.bf16 %v691, %v690
  %v698 = vpack.c.bf16 %v693, %v692
  %v699 = vpack.c.bf16 %v694, %v694
  %v705 = vunpack.c.l.b16 %v695
  %v706 = vunpack.c.h.b16 %v695
  %v707 = vunpack.c.l.b16 %v696
  %v708 = vunpack.c.h.b16 %v696
  %v709 = vunpack.c.l.b16 %v697
  %v710 = vunpack.c.h.b16 %v697
  %v711 = vunpack.c.l.b16 %v698
  %v712 = vunpack.c.h.b16 %v698
  %v713 = vunpack.c.l.b16 %v699
  %v714 = vpack.c.b16 %v705, %v705
  %v715 = vpack.c.b16 %v706, %v706
  %v716 = vpack.c.b16 %v707, %v707
  %v717 = vpack.c.b16 %v708, %v708
  %v718 = vpack.c.b16 %v709, %v709
  %v719 = vpack.c.b16 %v710, %v710
  %v720 = vpack.c.b16 %v711, %v711
  %v721 = vpack.c.b16 %v712, %v712
  %v722 = vpack.c.b16 %v713, %v713
  %732 = vst [vmem:[%s3] sm:$0xf] %v714
  %733 = vst [vmem:[%s3 + $0x4] sm:$0xf] %v715
  %734 = vst [vmem:[%s3 + $0x8] sm:$0xf] %v716
  %735 = vst [vmem:[%s3 + $0xc] sm:$0xf] %v717
  %736 = vst [vmem:[%s3 + $0x10] sm:$0xf] %v718
  %737 = vst [vmem:[%s3 + $0x14] sm:$0xf] %v719
  %738 = vst [vmem:[%s3 + $0x18] sm:$0xf] %v720
  %739 = vst [vmem:[%s3 + $0x1c] sm:$0xf] %v721
  %740 = vst [vmem:[%s3 + $0x20] sm:$0xf] %v722
  // Predicated region
  $region14: #{temp_embed_forward.8} parent=0 // pred_check
    _
  $region15: #{temp_embed_forward.8} parent=0 // pred_check_branch
    %742 = sbr.rel (0) target = $region17
  $region16: #{temp_embed_forward.8} parent=0 // pred_region
    _
  $region17: #{temp_embed_forward.8} parent=0 // pred_fallthru
    _
  // Predicated region
  $region18: #{temp_embed_forward.8} parent=0 // pred_check
    _
  $region19: #{temp_embed_forward.8} parent=0 // pred_check_branch
    %744 = sbr.rel (0) target = $region21
  $region20: #{temp_embed_forward.8} parent=0 // pred_region
    _
  $region21: #{temp_embed_forward.8} parent=0 // pred_fallthru
    _

// kernel: temp_embed_forward.9
$region0: #{temp_embed_forward.9}
  #allocation0 [shape = 'u32[]', space=smem, size = 0x4, offset = 0x4, fixed_abs, tag = 'smem constant byte address 0x4 - core index']
  #allocation1 [shape = 'u32[144,128]{1,0:T(1,128)}', space=vmem, size = 0x12000, scoped, tag = 'internal scratch']
  #allocation2 [shape = 'f32[8,128]{1,0:T(8,128)}', space=vmem, size = 0x1000, scoped, tag = 'scratch operand']
  %s0 = inlined_call_operand.vmem [shape: bf16[8,2304], index: 0, kind: input, shape index: {}]
  %s1 = inlined_call_operand.vmem [shape: bf16[2304,512], index: 1, kind: input, shape index: {}]
  %s2 = inlined_call_operand.vmem [shape: f32[1,512], index: 2, kind: input, shape index: {}]
  %s3 = inlined_call_operand.vmem [shape: bf16[512,128], index: 3, kind: input, shape index: {}]
  %s4 = inlined_call_operand.vmem [shape: f32[1,128], index: 4, kind: input, shape index: {}]
  %s5 = inlined_call_operand.vmem [shape: f32[8,128], index: 5, kind: output, shape index: {}]
  %s6 = sld [smem:[#allocation0]]
  $region99: #{temp_embed_forward.9} parent=0
    _
  %s8 = ssub.s32 1, %s6
  %s9 = scalar_select 0, %s8, %s6
  $region1: #{temp_embed_forward.9} parent=0
    #allocation3 [shape = 'u8[2359296]{0}', space=vmem, size = 0x240000, scoped, tag = 'input window, operand 1']
    loop: start=0, step=1, limit=4
    $region2: #{temp_embed_forward.9} parent=1 // loop_pre_header
      _
    $region3: #{temp_embed_forward.9} parent=1 // loop_header
      %s11 = sphi 0, %s15
      %p12 = scmp.ge.s32.totalorder %s11, 4
      %s19 = sphi 0, %s19
      %s21 = sphi 0, %s19
      %s22 = sphi 0, %s21
      %s36 = sphi 0, %s22
      %s42 = sphi 0, %s44
      %s45 = sphi 0, %s42
      %s46 = sphi 0, %s45
      %s62 = sphi 0, %s46
      %s68 = sphi 0, %s70
      %s71 = sphi 0, %s68
      %s72 = sphi 0, %s71
      %s88 = sphi 0, %s72
      %s94 = sphi 0, %s96
      %s97 = sphi 0, %s94
      %s98 = sphi 0, %s97
      %s114 = sphi 0, %s98
      %s118 = sphi 0, %s118
      %s120 = sphi 0, %s118
      %s121 = sphi 0, %s120
      %s135 = sphi 0, %s121
      %s139 = sphi 0, %s139
      %s141 = sphi 0, %s139
      %s142 = sphi 0, %s141
      %s156 = sphi 0, %s142
    $region4: #{temp_embed_forward.9} parent=1 // loop_header_branch
      %14 = sbr.rel (%p12) target = $region8
    $region5: #{temp_embed_forward.9} parent=1 // loop_body
      %s16 = ssub.s32 %s11, 1
      %s17 = ssub.s32 %s11, 2
      %s18 = sadd.s32 %s11, 1
      %s20 = sadd.s32 %s19, 1
      %p23 = scmp.eq.s32.totalorder %s11, 1
      %p24 = scmp.ne.s32.totalorder %s19, %s21
      %p25 = scmp.eq.s32.totalorder %s11, 0
      %p26 = por %p24, %p25
      %p27 = scmp.ne.s32.totalorder %s19, %s21
      %p28 = scmp.eq.s32.totalorder %s16, 1
      %p29 = por %p27, %p28
      %p30 = scmp.ne.s32.totalorder %s21, %s22
      %p31 = scmp.eq.s32.totalorder %s16, 0
      %p32 = por %p30, %p31
      %p33 = scmp.ne.s32.totalorder %s21, %s22
      %p34 = scmp.eq.s32.totalorder %s17, 1
      %p35 = por %p33, %p34
      %p37 = scmp.ne.s32.totalorder %s22, %s36
      %p38 = scmp.eq.s32.totalorder %s17, 0
      %p39 = por %p37, %p38
      %s40 = ssub.s32 %s11, %s18
      %p41 = scmp.eq.s32.totalorder %s40, 0
      %s43 = sadd.s32 %s42, 1
      %s44 = scalar_select %p41, %s42, %s43
      %p47 = pneg %p41
      %p48 = scmp.eq.s32.totalorder %s11, 1
      %p49 = por %p47, %p48
      %p50 = scmp.ne.s32.totalorder %s42, %s45
      %p51 = scmp.eq.s32.totalorder %s11, 0
      %p52 = por %p50, %p51
      %p53 = scmp.ne.s32.totalorder %s42, %s45
      %p54 = scmp.eq.s32.totalorder %s16, 1
      %p55 = por %p53, %p54
      %p56 = scmp.ne.s32.totalorder %s45, %s46
      %p57 = scmp.eq.s32.totalorder %s16, 0
      %p58 = por %p56, %p57
      %p59 = scmp.ne.s32.totalorder %s45, %s46
      %p60 = scmp.eq.s32.totalorder %s17, 1
      %p61 = por %p59, %p60
      %p63 = scmp.ne.s32.totalorder %s46, %s62
      %p64 = scmp.eq.s32.totalorder %s17, 0
      %p65 = por %p63, %p64
      %s66 = ssub.s32 %s11, %s18
      %p67 = scmp.eq.s32.totalorder %s66, 0
      %s69 = sadd.s32 %s68, 1
      %s70 = scalar_select %p67, %s68, %s69
      %p73 = pneg %p67
      %p74 = scmp.eq.s32.totalorder %s11, 1
      %p75 = por %p73, %p74
      %p76 = scmp.ne.s32.totalorder %s68, %s71
      %p77 = scmp.eq.s32.totalorder %s11, 0
      %p78 = por %p76, %p77
      %p79 = scmp.ne.s32.totalorder %s68, %s71
      %p80 = scmp.eq.s32.totalorder %s16, 1
      %p81 = por %p79, %p80
      %p82 = scmp.ne.s32.totalorder %s71, %s72
      %p83 = scmp.eq.s32.totalorder %s16, 0
      %p84 = por %p82, %p83
      %p85 = scmp.ne.s32.totalorder %s71, %s72
      %p86 = scmp.eq.s32.totalorder %s17, 1
      %p87 = por %p85, %p86
      %p89 = scmp.ne.s32.totalorder %s72, %s88
      %p90 = scmp.eq.s32.totalorder %s17, 0
      %p91 = por %p89, %p90
      %s92 = ssub.s32 %s11, %s18
      %p93 = scmp.eq.s32.totalorder %s92, 0
      %s95 = sadd.s32 %s94, 1
      %s96 = scalar_select %p93, %s94, %s95
      %p99 = pneg %p93
      %p100 = scmp.eq.s32.totalorder %s11, 1
      %p101 = por %p99, %p100
      %p102 = scmp.ne.s32.totalorder %s94, %s97
      %p103 = scmp.eq.s32.totalorder %s11, 0
      %p104 = por %p102, %p103
      %p105 = scmp.ne.s32.totalorder %s94, %s97
      %p106 = scmp.eq.s32.totalorder %s16, 1
      %p107 = por %p105, %p106
      %p108 = scmp.ne.s32.totalorder %s97, %s98
      %p109 = scmp.eq.s32.totalorder %s16, 0
      %p110 = por %p108, %p109
      %p111 = scmp.ne.s32.totalorder %s97, %s98
      %p112 = scmp.eq.s32.totalorder %s17, 1
      %p113 = por %p111, %p112
      %p115 = scmp.ne.s32.totalorder %s98, %s114
      %p116 = scmp.eq.s32.totalorder %s17, 0
      %p117 = por %p115, %p116
      %s119 = sadd.s32 %s118, 1
      %p122 = scmp.eq.s32.totalorder %s11, 1
      %p123 = scmp.ne.s32.totalorder %s118, %s120
      %p124 = scmp.eq.s32.totalorder %s11, 0
      %p125 = por %p123, %p124
      %p126 = scmp.ne.s32.totalorder %s118, %s120
      %p127 = scmp.eq.s32.totalorder %s16, 1
      %p128 = por %p126, %p127
      %p129 = scmp.ne.s32.totalorder %s120, %s121
      %p130 = scmp.eq.s32.totalorder %s16, 0
      %p131 = por %p129, %p130
      %p132 = scmp.ne.s32.totalorder %s120, %s121
      %p133 = scmp.eq.s32.totalorder %s17, 1
      %p134 = por %p132, %p133
      %p136 = scmp.ne.s32.totalorder %s121, %s135
      %p137 = scmp.eq.s32.totalorder %s17, 0
      %p138 = por %p136, %p137
      %s140 = sadd.s32 %s139, 1
      %p143 = scmp.eq.s32.totalorder %s11, 1
      %p144 = scmp.ne.s32.totalorder %s139, %s141
      %p145 = scmp.eq.s32.totalorder %s11, 0
      %p146 = por %p144, %p145
      %p147 = scmp.ne.s32.totalorder %s139, %s141
      %p148 = scmp.eq.s32.totalorder %s16, 1
      %p149 = por %p147, %p148
      %p150 = scmp.ne.s32.totalorder %s141, %s142
      %p151 = scmp.eq.s32.totalorder %s16, 0
      %p152 = por %p150, %p151
      %p153 = scmp.ne.s32.totalorder %s141, %s142
      %p154 = scmp.eq.s32.totalorder %s17, 1
      %p155 = por %p153, %p154
      %p157 = scmp.ne.s32.totalorder %s142, %s156
      %p158 = scmp.eq.s32.totalorder %s17, 0
      %p159 = por %p157, %p158
      %p160 = scmp.le.s32.totalorder 1, %s11
      %p161 = scmp.lt.s32.totalorder %s11, 3
      %p162 = pnand %p160, %p161
      %p163 = pneg %p162
      // Predicated region
      $region9: #{temp_embed_forward.9} parent=5 // pred_check
        _
      $region10: #{temp_embed_forward.9} parent=5 // pred_check_branch
        %165 = sbr.rel (%p162) target = $region12
      $region11: #{temp_embed_forward.9} parent=5 // pred_region
        %s166 = ssub.s32 %s11, 1
        // Predicated region
        $region13: #{temp_embed_forward.9} parent=11 // pred_check
          %p167 = pneg %p32
        $region14: #{temp_embed_forward.9} parent=11 // pred_check_branch
          %169 = sbr.rel (%p167) target = $region16
        $region15: #{temp_embed_forward.9} parent=11 // pred_region
          _
        $region16: #{temp_embed_forward.9} parent=11 // pred_fallthru
          _
        // Predicated region
        $region17: #{temp_embed_forward.9} parent=11 // pred_check
          %p170 = pneg %p131
        $region18: #{temp_embed_forward.9} parent=11 // pred_check_branch
          %172 = sbr.rel (%p170) target = $region20
        $region19: #{temp_embed_forward.9} parent=11 // pred_region
          _
        $region20: #{temp_embed_forward.9} parent=11 // pred_fallthru
          _
      $region12: #{temp_embed_forward.9} parent=5 // pred_fallthru
        _
      %p173 = scmp.lt.s32.totalorder %s11, 2
      // Predicated region
      $region21: #{temp_embed_forward.9} parent=5 // pred_check
        %p174 = pneg %p173
      $region22: #{temp_embed_forward.9} parent=5 // pred_check_branch
        %176 = sbr.rel (%p174) target = $region24
      $region23: #{temp_embed_forward.9} parent=5 // pred_region
        // Predicated region
        $region25: #{temp_embed_forward.9} parent=23 // pred_check
          %p177 = pneg %p52
        $region26: #{temp_embed_forward.9} parent=23 // pred_check_branch
          %179 = sbr.rel (%p177) target = $region28
        $region27: #{temp_embed_forward.9} parent=23 // pred_region
          %s180 = sand.u32 %s42, 1
          %s181 = sand.u32 %s42, 1
          %s182 = smul.addr %s181, 2304
          %s183 = scalar_lea.vmem [#allocation3], %s182
          %s184 = smul.u32 2, %s11
          %s185 = smul.addr %s184, 4
          %s186 = scalar_lea.vmem %s1, %s185
          // Predicated region
          $region29: #{temp_embed_forward.9} parent=27 // pred_check
            _
          $region30: #{temp_embed_forward.9} parent=27 // pred_check_branch
            %188 = sbr.rel (0) target = $region32
          $region31: #{temp_embed_forward.9} parent=27 // pred_region
            // Predicated region
            $region33: #{temp_embed_forward.9} parent=31 // pred_check
              _
            $region34: #{temp_embed_forward.9} parent=31 // pred_check_branch
              %190 = sbr.rel (0) target = $region36
            $region35: #{temp_embed_forward.9} parent=31 // pred_region
              // Predicated region
              $region48: #{temp_embed_forward.9} parent=35 // pred_check
                _
              $region49: #{temp_embed_forward.9} parent=35 // pred_check_branch
                %779 = sbr.rel (0) target = $region51
              $region50: #{temp_embed_forward.9} parent=35 // pred_region
                loop: start=0, step=1, limit=1
                $region52: #{temp_embed_forward.9} parent=50 // loop_pre_header
                  _
                $region53: #{temp_embed_forward.9} parent=50 // loop_header
                  %s781 = sphi 0, %s785
                  %p782 = scmp.ge.s32.totalorder %s781, 1
                  %s786 = sphi %s186, %s186
                  %s787 = sphi %s183, %s183
                $region54: #{temp_embed_forward.9} parent=50 // loop_header_branch
                  %784 = sbr.rel (%p782) target = $region58
                $region55: #{temp_embed_forward.9} parent=50 // loop_body
                  %v788 = vld [vmem:[%s786] sm:$0xff]
                  %789 = vst [vmem:[%s787] sm:$0xff] %v788
                  %v790 = vld [vmem:[%s786 + $0x10] sm:$0xff]
                  %791 = vst [vmem:[%s787 + $0x8] sm:$0xff] %v790
                  %v792 = vld [vmem:[%s786 + $0x20] sm:$0xff]
                  %793 = vst [vmem:[%s787 + $0x10] sm:$0xff] %v792
                  %v794 = vld [vmem:[%s786 + $0x30] sm:$0xff]
                  %795 = vst [vmem:[%s787 + $0x18] sm:$0xff] %v794
                  %v796 = vld [vmem:[%s786 + $0x40] sm:$0xff]
                  %797 = vst [vmem:[%s787 + $0x20] sm:$0xff] %v796
                  %v798 = vld [vmem:[%s786 + $0x50] sm:$0xff]
                  %799 = vst [vmem:[%s787 + $0x28] sm:$0xff] %v798
                  %v800 = vld [vmem:[%s786 + $0x60] sm:$0xff]
                  %801 = vst [vmem:[%s787 + $0x30] sm:$0xff] %v800
                  %v802 = vld [vmem:[%s786 + $0x70] sm:$0xff]
                  %803 = vst [vmem:[%s787 + $0x38] sm:$0xff] %v802
                  %v804 = vld [vmem:[%s786 + $0x80] sm:$0xff]
                  %805 = vst [vmem:[%s787 + $0x40] sm:$0xff] %v804
                  %v806 = vld [vmem:[%s786 + $0x90] sm:$0xff]
                  %807 = vst [vmem:[%s787 + $0x48] sm:$0xff] %v806
                  %v808 = vld [vmem:[%s786 + $0xa0] sm:$0xff]
                  %809 = vst [vmem:[%s787 + $0x50] sm:$0xff] %v808
                  %v810 = vld [vmem:[%s786 + $0xb0] sm:$0xff]
                  %811 = vst [vmem:[%s787 + $0x58] sm:$0xff] %v810
                  %v812 = vld [vmem:[%s786 + $0xc0] sm:$0xff]
                  %813 = vst [vmem:[%s787 + $0x60] sm:$0xff] %v812
                  %v814 = vld [vmem:[%s786 + $0xd0] sm:$0xff]
                  %815 = vst [vmem:[%s787 + $0x68] sm:$0xff] %v814
                  %v816 = vld [vmem:[%s786 + $0xe0] sm:$0xff]
                  %817 = vst [vmem:[%s787 + $0x70] sm:$0xff] %v816
                  %v818 = vld [vmem:[%s786 + $0xf0] sm:$0xff]
                  %819 = vst [vmem:[%s787 + $0x78] sm:$0xff] %v818
                  %v820 = vld [vmem:[%s786 + $0x100] sm:$0xff]
                  %821 = vst [vmem:[%s787 + $0x80] sm:$0xff] %v820
                  %v822 = vld [vmem:[%s786 + $0x110] sm:$0xff]
                  %823 = vst [vmem:[%s787 + $0x88] sm:$0xff] %v822
                  %v824 = vld [vmem:[%s786 + $0x120] sm:$0xff]
                  %825 = vst [vmem:[%s787 + $0x90] sm:$0xff] %v824
                  %v826 = vld [vmem:[%s786 + $0x130] sm:$0xff]
                  %827 = vst [vmem:[%s787 + $0x98] sm:$0xff] %v826
                  %v828 = vld [vmem:[%s786 + $0x140] sm:$0xff]
                  %829 = vst [vmem:[%s787 + $0xa0] sm:$0xff] %v828
                  %v830 = vld [vmem:[%s786 + $0x150] sm:$0xff]
                  %831 = vst [vmem:[%s787 + $0xa8] sm:$0xff] %v830
                  %v832 = vld [vmem:[%s786 + $0x160] sm:$0xff]
                  %833 = vst [vmem:[%s787 + $0xb0] sm:$0xff] %v832
                  %v834 = vld [vmem:[%s786 + $0x170] sm:$0xff]
                  %835 = vst [vmem:[%s787 + $0xb8] sm:$0xff] %v834
                  %v836 = vld [vmem:[%s786 + $0x180] sm:$0xff]
                  %837 = vst [vmem:[%s787 + $0xc0] sm:$0xff] %v836
                  %v838 = vld [vmem:[%s786 + $0x190] sm:$0xff]
                  %839 = vst [vmem:[%s787 + $0xc8] sm:$0xff] %v838
                  %v840 = vld [vmem:[%s786 + $0x1a0] sm:$0xff]
                  %841 = vst [vmem:[%s787 + $0xd0] sm:$0xff] %v840
                  %v842 = vld [vmem:[%s786 + $0x1b0] sm:$0xff]
                  %843 = vst [vmem:[%s787 + $0xd8] sm:$0xff] %v842
                  %v844 = vld [vmem:[%s786 + $0x1c0] sm:$0xff]
                  %845 = vst [vmem:[%s787 + $0xe0] sm:$0xff] %v844
                  %v846 = vld [vmem:[%s786 + $0x1d0] sm:$0xff]
                  %847 = vst [vmem:[%s787 + $0xe8] sm:$0xff] %v846
                  %v848 = vld [vmem:[%s786 + $0x1e0] sm:$0xff]
                  %849 = vst [vmem:[%s787 + $0xf0] sm:$0xff] %v848
                  %v850 = vld [vmem:[%s786 + $0x1f0] sm:$0xff]
                  %851 = vst [vmem:[%s787 + $0xf8] sm:$0xff] %v850
                  %v852 = vld [vmem:[%s786 + $0x200] sm:$0xff]
                  %853 = vst [vmem:[%s787 + $0x100] sm:$0xff] %v852
                  %v854 = vld [vmem:[%s786 + $0x210] sm:$0xff]
                  %855 = vst [vmem:[%s787 + $0x108] sm:$0xff] %v854
                  %v856 = vld [vmem:[%s786 + $0x220] sm:$0xff]
                  %857 = vst [vmem:[%s787 + $0x110] sm:$0xff] %v856
                  %v858 = vld [vmem:[%s786 + $0x230] sm:$0xff]
                  %859 = vst [vmem:[%s787 + $0x118] sm:$0xff] %v858
                  %v860 = vld [vmem:[%s786 + $0x240] sm:$0xff]
                  %861 = vst [vmem:[%s787 + $0x120] sm:$0xff] %v860
                  %v862 = vld [vmem:[%s786 + $0x250] sm:$0xff]
                  %863 = vst [vmem:[%s787 + $0x128] sm:$0xff] %v862
                  %v864 = vld [vmem:[%s786 + $0x260] sm:$0xff]
                  %865 = vst [vmem:[%s787 + $0x130] sm:$0xff] %v864
                  %v866 = vld [vmem:[%s786 + $0x270] sm:$0xff]
                  %867 = vst [vmem:[%s787 + $0x138] sm:$0xff] %v866
                  %v868 = vld [vmem:[%s786 + $0x280] sm:$0xff]
                  %869 = vst [vmem:[%s787 + $0x140] sm:$0xff] %v868
                  %v870 = vld [vmem:[%s786 + $0x290] sm:$0xff]
                  %871 = vst [vmem:[%s787 + $0x148] sm:$0xff] %v870
                  %v872 = vld [vmem:[%s786 + $0x2a0] sm:$0xff]
                  %873 = vst [vmem:[%s787 + $0x150] sm:$0xff] %v872
                  %v874 = vld [vmem:[%s786 + $0x2b0] sm:$0xff]
                  %875 = vst [vmem:[%s787 + $0x158] sm:$0xff] %v874
                  %v876 = vld [vmem:[%s786 + $0x2c0] sm:$0xff]
                  %877 = vst [vmem:[%s787 + $0x160] sm:$0xff] %v876
                  %v878 = vld [vmem:[%s786 + $0x2d0] sm:$0xff]
                  %879 = vst [vmem:[%s787 + $0x168] sm:$0xff] %v878
                  %v880 = vld [vmem:[%s786 + $0x2e0] sm:$0xff]
                  %881 = vst [vmem:[%s787 + $0x170] sm:$0xff] %v880
                  %v882 = vld [vmem:[%s786 + $0x2f0] sm:$0xff]
                  %883 = vst [vmem:[%s787 + $0x178] sm:$0xff] %v882
                  %v884 = vld [vmem:[%s786 + $0x300] sm:$0xff]
                  %885 = vst [vmem:[%s787 + $0x180] sm:$0xff] %v884
                  %v886 = vld [vmem:[%s786 + $0x310] sm:$0xff]
                  %887 = vst [vmem:[%s787 + $0x188] sm:$0xff] %v886
                  %v888 = vld [vmem:[%s786 + $0x320] sm:$0xff]
                  %889 = vst [vmem:[%s787 + $0x190] sm:$0xff] %v888
                  %v890 = vld [vmem:[%s786 + $0x330] sm:$0xff]
                  %891 = vst [vmem:[%s787 + $0x198] sm:$0xff] %v890
                  %v892 = vld [vmem:[%s786 + $0x340] sm:$0xff]
                  %893 = vst [vmem:[%s787 + $0x1a0] sm:$0xff] %v892
                  %v894 = vld [vmem:[%s786 + $0x350] sm:$0xff]
                  %895 = vst [vmem:[%s787 + $0x1a8] sm:$0xff] %v894
                  %v896 = vld [vmem:[%s786 + $0x360] sm:$0xff]
                  %897 = vst [vmem:[%s787 + $0x1b0] sm:$0xff] %v896
                  %v898 = vld [vmem:[%s786 + $0x370] sm:$0xff]
                  %899 = vst [vmem:[%s787 + $0x1b8] sm:$0xff] %v898
                  %v900 = vld [vmem:[%s786 + $0x380] sm:$0xff]
                  %901 = vst [vmem:[%s787 + $0x1c0] sm:$0xff] %v900
                  %v902 = vld [vmem:[%s786 + $0x390] sm:$0xff]
                  %903 = vst [vmem:[%s787 + $0x1c8] sm:$0xff] %v902
                  %v904 = vld [vmem:[%s786 + $0x3a0] sm:$0xff]
                  %905 = vst [vmem:[%s787 + $0x1d0] sm:$0xff] %v904
                  %v906 = vld [vmem:[%s786 + $0x3b0] sm:$0xff]
                  %907 = vst [vmem:[%s787 + $0x1d8] sm:$0xff] %v906
                  %v908 = vld [vmem:[%s786 + $0x3c0] sm:$0xff]
                  %909 = vst [vmem:[%s787 + $0x1e0] sm:$0xff] %v908
                  %v910 = vld [vmem:[%s786 + $0x3d0] sm:$0xff]
                  %911 = vst [vmem:[%s787 + $0x1e8] sm:$0xff] %v910
                  %v912 = vld [vmem:[%s786 + $0x3e0] sm:$0xff]
                  %913 = vst [vmem:[%s787 + $0x1f0] sm:$0xff] %v912
                  %v914 = vld [vmem:[%s786 + $0x3f0] sm:$0xff]
                  %915 = vst [vmem:[%s787 + $0x1f8] sm:$0xff] %v914
                  %v916 = vld [vmem:[%s786 + $0x400] sm:$0xff]
                  %917 = vst [vmem:[%s787 + $0x200] sm:$0xff] %v916
                  %v918 = vld [vmem:[%s786 + $0x410] sm:$0xff]
                  %919 = vst [vmem:[%s787 + $0x208] sm:$0xff] %v918
                  %v920 = vld [vmem:[%s786 + $0x420] sm:$0xff]
                  %921 = vst [vmem:[%s787 + $0x210] sm:$0xff] %v920
                  %v922 = vld [vmem:[%s786 + $0x430] sm:$0xff]
                  %923 = vst [vmem:[%s787 + $0x218] sm:$0xff] %v922
                  %v924 = vld [vmem:[%s786 + $0x440] sm:$0xff]
                  %925 = vst [vmem:[%s787 + $0x220] sm:$0xff] %v924
                  %v926 = vld [vmem:[%s786 + $0x450] sm:$0xff]
                  %927 = vst [vmem:[%s787 + $0x228] sm:$0xff] %v926
                  %v928 = vld [vmem:[%s786 + $0x460] sm:$0xff]
                  %929 = vst [vmem:[%s787 + $0x230] sm:$0xff] %v928
                  %v930 = vld [vmem:[%s786 + $0x470] sm:$0xff]
                  %931 = vst [vmem:[%s787 + $0x238] sm:$0xff] %v930
                  %v932 = vld [vmem:[%s786 + $0x480] sm:$0xff]
                  %933 = vst [vmem:[%s787 + $0x240] sm:$0xff] %v932
                  %v934 = vld [vmem:[%s786 + $0x490] sm:$0xff]
                  %935 = vst [vmem:[%s787 + $0x248] sm:$0xff] %v934
                  %v936 = vld [vmem:[%s786 + $0x4a0] sm:$0xff]
                  %937 = vst [vmem:[%s787 + $0x250] sm:$0xff] %v936
                  %v938 = vld [vmem:[%s786 + $0x4b0] sm:$0xff]
                  %939 = vst [vmem:[%s787 + $0x258] sm:$0xff] %v938
                  %v940 = vld [vmem:[%s786 + $0x4c0] sm:$0xff]
                  %941 = vst [vmem:[%s787 + $0x260] sm:$0xff] %v940
                  %v942 = vld [vmem:[%s786 + $0x4d0] sm:$0xff]
                  %943 = vst [vmem:[%s787 + $0x268] sm:$0xff] %v942
                  %v944 = vld [vmem:[%s786 + $0x4e0] sm:$0xff]
                  %945 = vst [vmem:[%s787 + $0x270] sm:$0xff] %v944
                  %v946 = vld [vmem:[%s786 + $0x4f0] sm:$0xff]
                  %947 = vst [vmem:[%s787 + $0x278] sm:$0xff] %v946
                  %v948 = vld [vmem:[%s786 + $0x500] sm:$0xff]
                  %949 = vst [vmem:[%s787 + $0x280] sm:$0xff] %v948
                  %v950 = vld [vmem:[%s786 + $0x510] sm:$0xff]
                  %951 = vst [vmem:[%s787 + $0x288] sm:$0xff] %v950
                  %v952 = vld [vmem:[%s786 + $0x520] sm:$0xff]
                  %953 = vst [vmem:[%s787 + $0x290] sm:$0xff] %v952
                  %v954 = vld [vmem:[%s786 + $0x530] sm:$0xff]
                  %955 = vst [vmem:[%s787 + $0x298] sm:$0xff] %v954
                  %v956 = vld [vmem:[%s786 + $0x540] sm:$0xff]
                  %957 = vst [vmem:[%s787 + $0x2a0] sm:$0xff] %v956
                  %v958 = vld [vmem:[%s786 + $0x550] sm:$0xff]
                  %959 = vst [vmem:[%s787 + $0x2a8] sm:$0xff] %v958
                  %v960 = vld [vmem:[%s786 + $0x560] sm:$0xff]
                  %961 = vst [vmem:[%s787 + $0x2b0] sm:$0xff] %v960
                  %v962 = vld [vmem:[%s786 + $0x570] sm:$0xff]
                  %963 = vst [vmem:[%s787 + $0x2b8] sm:$0xff] %v962
                  %v964 = vld [vmem:[%s786 + $0x580] sm:$0xff]
                  %965 = vst [vmem:[%s787 + $0x2c0] sm:$0xff] %v964
                  %v966 = vld [vmem:[%s786 + $0x590] sm:$0xff]
                  %967 = vst [vmem:[%s787 + $0x2c8] sm:$0xff] %v966
                  %v968 = vld [vmem:[%s786 + $0x5a0] sm:$0xff]
                  %969 = vst [vmem:[%s787 + $0x2d0] sm:$0xff] %v968
                  %v970 = vld [vmem:[%s786 + $0x5b0] sm:$0xff]
                  %971 = vst [vmem:[%s787 + $0x2d8] sm:$0xff] %v970
                  %v972 = vld [vmem:[%s786 + $0x5c0] sm:$0xff]
                  %973 = vst [vmem:[%s787 + $0x2e0] sm:$0xff] %v972
                  %v974 = vld [vmem:[%s786 + $0x5d0] sm:$0xff]
                  %975 = vst [vmem:[%s787 + $0x2e8] sm:$0xff] %v974
                  %v976 = vld [vmem:[%s786 + $0x5e0] sm:$0xff]
                  %977 = vst [vmem:[%s787 + $0x2f0] sm:$0xff] %v976
                  %v978 = vld [vmem:[%s786 + $0x5f0] sm:$0xff]
                  %979 = vst [vmem:[%s787 + $0x2f8] sm:$0xff] %v978
                  %v980 = vld [vmem:[%s786 + $0x600] sm:$0xff]
                  %981 = vst [vmem:[%s787 + $0x300] sm:$0xff] %v980
                  %v982 = vld [vmem:[%s786 + $0x610] sm:$0xff]
                  %983 = vst [vmem:[%s787 + $0x308] sm:$0xff] %v982
                  %v984 = vld [vmem:[%s786 + $0x620] sm:$0xff]
                  %985 = vst [vmem:[%s787 + $0x310] sm:$0xff] %v984
                  %v986 = vld [vmem:[%s786 + $0x630] sm:$0xff]
                  %987 = vst [vmem:[%s787 + $0x318] sm:$0xff] %v986
                  %v988 = vld [vmem:[%s786 + $0x640] sm:$0xff]
                  %989 = vst [vmem:[%s787 + $0x320] sm:$0xff] %v988
                  %v990 = vld [vmem:[%s786 + $0x650] sm:$0xff]
                  %991 = vst [vmem:[%s787 + $0x328] sm:$0xff] %v990
                  %v992 = vld [vmem:[%s786 + $0x660] sm:$0xff]
                  %993 = vst [vmem:[%s787 + $0x330] sm:$0xff] %v992
                  %v994 = vld [vmem:[%s786 + $0x670] sm:$0xff]
                  %995 = vst [vmem:[%s787 + $0x338] sm:$0xff] %v994
                  %v996 = vld [vmem:[%s786 + $0x680] sm:$0xff]
                  %997 = vst [vmem:[%s787 + $0x340] sm:$0xff] %v996
                  %v998 = vld [vmem:[%s786 + $0x690] sm:$0xff]
                  %999 = vst [vmem:[%s787 + $0x348] sm:$0xff] %v998
                  %v1000 = vld [vmem:[%s786 + $0x6a0] sm:$0xff]
                  %1001 = vst [vmem:[%s787 + $0x350] sm:$0xff] %v1000
                  %v1002 = vld [vmem:[%s786 + $0x6b0] sm:$0xff]
                  %1003 = vst [vmem:[%s787 + $0x358] sm:$0xff] %v1002
                  %v1004 = vld [vmem:[%s786 + $0x6c0] sm:$0xff]
                  %1005 = vst [vmem:[%s787 + $0x360] sm:$0xff] %v1004
                  %v1006 = vld [vmem:[%s786 + $0x6d0] sm:$0xff]
                  %1007 = vst [vmem:[%s787 + $0x368] sm:$0xff] %v1006
                  %v1008 = vld [vmem:[%s786 + $0x6e0] sm:$0xff]
                  %1009 = vst [vmem:[%s787 + $0x370] sm:$0xff] %v1008
                  %v1010 = vld [vmem:[%s786 + $0x6f0] sm:$0xff]
                  %1011 = vst [vmem:[%s787 + $0x378] sm:$0xff] %v1010
                  %v1012 = vld [vmem:[%s786 + $0x700] sm:$0xff]
                  %1013 = vst [vmem:[%s787 + $0x380] sm:$0xff] %v1012
                  %v1014 = vld [vmem:[%s786 + $0x710] sm:$0xff]
                  %1015 = vst [vmem:[%s787 + $0x388] sm:$0xff] %v1014
                  %v1016 = vld [vmem:[%s786 + $0x720] sm:$0xff]
                  %1017 = vst [vmem:[%s787 + $0x390] sm:$0xff] %v1016
                  %v1018 = vld [vmem:[%s786 + $0x730] sm:$0xff]
                  %1019 = vst [vmem:[%s787 + $0x398] sm:$0xff] %v1018
                  %v1020 = vld [vmem:[%s786 + $0x740] sm:$0xff]
                  %1021 = vst [vmem:[%s787 + $0x3a0] sm:$0xff] %v1020
                  %v1022 = vld [vmem:[%s786 + $0x750] sm:$0xff]
                  %1023 = vst [vmem:[%s787 + $0x3a8] sm:$0xff] %v1022
                  %v1024 = vld [vmem:[%s786 + $0x760] sm:$0xff]
                  %1025 = vst [vmem:[%s787 + $0x3b0] sm:$0xff] %v1024
                  %v1026 = vld [vmem:[%s786 + $0x770] sm:$0xff]
                  %1027 = vst [vmem:[%s787 + $0x3b8] sm:$0xff] %v1026
                  %v1028 = vld [vmem:[%s786 + $0x780] sm:$0xff]
                  %1029 = vst [vmem:[%s787 + $0x3c0] sm:$0xff] %v1028
                  %v1030 = vld [vmem:[%s786 + $0x790] sm:$0xff]
                  %1031 = vst [vmem:[%s787 + $0x3c8] sm:$0xff] %v1030
                  %v1032 = vld [vmem:[%s786 + $0x7a0] sm:$0xff]
                  %1033 = vst [vmem:[%s787 + $0x3d0] sm:$0xff] %v1032
                  %v1034 = vld [vmem:[%s786 + $0x7b0] sm:$0xff]
                  %1035 = vst [vmem:[%s787 + $0x3d8] sm:$0xff] %v1034
                  %v1036 = vld [vmem:[%s786 + $0x7c0] sm:$0xff]
                  %1037 = vst [vmem:[%s787 + $0x3e0] sm:$0xff] %v1036
                  %v1038 = vld [vmem:[%s786 + $0x7d0] sm:$0xff]
                  %1039 = vst [vmem:[%s787 + $0x3e8] sm:$0xff] %v1038
                  %v1040 = vld [vmem:[%s786 + $0x7e0] sm:$0xff]
                  %1041 = vst [vmem:[%s787 + $0x3f0] sm:$0xff] %v1040
                  %v1042 = vld [vmem:[%s786 + $0x7f0] sm:$0xff]
                  %1043 = vst [vmem:[%s787 + $0x3f8] sm:$0xff] %v1042
                  %v1044 = vld [vmem:[%s786 + $0x800] sm:$0xff]
                  %1045 = vst [vmem:[%s787 + $0x400] sm:$0xff] %v1044
                  %v1046 = vld [vmem:[%s786 + $0x810] sm:$0xff]
                  %1047 = vst [vmem:[%s787 + $0x408] sm:$0xff] %v1046
                  %v1048 = vld [vmem:[%s786 + $0x820] sm:$0xff]
                  %1049 = vst [vmem:[%s787 + $0x410] sm:$0xff] %v1048
                  %v1050 = vld [vmem:[%s786 + $0x830] sm:$0xff]
                  %1051 = vst [vmem:[%s787 + $0x418] sm:$0xff] %v1050
                  %v1052 = vld [vmem:[%s786 + $0x840] sm:$0xff]
                  %1053 = vst [vmem:[%s787 + $0x420] sm:$0xff] %v1052
                  %v1054 = vld [vmem:[%s786 + $0x850] sm:$0xff]
                  %1055 = vst [vmem:[%s787 + $0x428] sm:$0xff] %v1054
                  %v1056 = vld [vmem:[%s786 + $0x860] sm:$0xff]
                  %1057 = vst [vmem:[%s787 + $0x430] sm:$0xff] %v1056
                  %v1058 = vld [vmem:[%s786 + $0x870] sm:$0xff]
                  %1059 = vst [vmem:[%s787 + $0x438] sm:$0xff] %v1058
                  %v1060 = vld [vmem:[%s786 + $0x880] sm:$0xff]
                  %1061 = vst [vmem:[%s787 + $0x440] sm:$0xff] %v1060
                  %v1062 = vld [vmem:[%s786 + $0x890] sm:$0xff]
                  %1063 = vst [vmem:[%s787 + $0x448] sm:$0xff] %v1062
                  %v1064 = vld [vmem:[%s786 + $0x8a0] sm:$0xff]
                  %1065 = vst [vmem:[%s787 + $0x450] sm:$0xff] %v1064
                  %v1066 = vld [vmem:[%s786 + $0x8b0] sm:$0xff]
                  %1067 = vst [vmem:[%s787 + $0x458] sm:$0xff] %v1066
                  %v1068 = vld [vmem:[%s786 + $0x8c0] sm:$0xff]
                  %1069 = vst [vmem:[%s787 + $0x460] sm:$0xff] %v1068
                  %v1070 = vld [vmem:[%s786 + $0x8d0] sm:$0xff]
                  %1071 = vst [vmem:[%s787 + $0x468] sm:$0xff] %v1070
                  %v1072 = vld [vmem:[%s786 + $0x8e0] sm:$0xff]
                  %1073 = vst [vmem:[%s787 + $0x470] sm:$0xff] %v1072
                  %v1074 = vld [vmem:[%s786 + $0x8f0] sm:$0xff]
                  %1075 = vst [vmem:[%s787 + $0x478] sm:$0xff] %v1074
                  %v1076 = vld [vmem:[%s786 + $0x900] sm:$0xff]
                  %1077 = vst [vmem:[%s787 + $0x480] sm:$0xff] %v1076
                  %v1078 = vld [vmem:[%s786 + $0x910] sm:$0xff]
                  %1079 = vst [vmem:[%s787 + $0x488] sm:$0xff] %v1078
                  %v1080 = vld [vmem:[%s786 + $0x920] sm:$0xff]
                  %1081 = vst [vmem:[%s787 + $0x490] sm:$0xff] %v1080
                  %v1082 = vld [vmem:[%s786 + $0x930] sm:$0xff]
                  %1083 = vst [vmem:[%s787 + $0x498] sm:$0xff] %v1082
                  %v1084 = vld [vmem:[%s786 + $0x940] sm:$0xff]
                  %1085 = vst [vmem:[%s787 + $0x4a0] sm:$0xff] %v1084
                  %v1086 = vld [vmem:[%s786 + $0x950] sm:$0xff]
                  %1087 = vst [vmem:[%s787 + $0x4a8] sm:$0xff] %v1086
                  %v1088 = vld [vmem:[%s786 + $0x960] sm:$0xff]
                  %1089 = vst [vmem:[%s787 + $0x4b0] sm:$0xff] %v1088
                  %v1090 = vld [vmem:[%s786 + $0x970] sm:$0xff]
                  %1091 = vst [vmem:[%s787 + $0x4b8] sm:$0xff] %v1090
                  %v1092 = vld [vmem:[%s786 + $0x980] sm:$0xff]
                  %1093 = vst [vmem:[%s787 + $0x4c0] sm:$0xff] %v1092
                  %v1094 = vld [vmem:[%s786 + $0x990] sm:$0xff]
                  %1095 = vst [vmem:[%s787 + $0x4c8] sm:$0xff] %v1094
                  %v1096 = vld [vmem:[%s786 + $0x9a0] sm:$0xff]
                  %1097 = vst [vmem:[%s787 + $0x4d0] sm:$0xff] %v1096
                  %v1098 = vld [vmem:[%s786 + $0x9b0] sm:$0xff]
                  %1099 = vst [vmem:[%s787 + $0x4d8] sm:$0xff] %v1098
                  %v1100 = vld [vmem:[%s786 + $0x9c0] sm:$0xff]
                  %1101 = vst [vmem:[%s787 + $0x4e0] sm:$0xff] %v1100
                  %v1102 = vld [vmem:[%s786 + $0x9d0] sm:$0xff]
                  %1103 = vst [vmem:[%s787 + $0x4e8] sm:$0xff] %v1102
                  %v1104 = vld [vmem:[%s786 + $0x9e0] sm:$0xff]
                  %1105 = vst [vmem:[%s787 + $0x4f0] sm:$0xff] %v1104
                  %v1106 = vld [vmem:[%s786 + $0x9f0] sm:$0xff]
                  %1107 = vst [vmem:[%s787 + $0x4f8] sm:$0xff] %v1106
                  %v1108 = vld [vmem:[%s786 + $0xa00] sm:$0xff]
                  %1109 = vst [vmem:[%s787 + $0x500] sm:$0xff] %v1108
                  %v1110 = vld [vmem:[%s786 + $0xa10] sm:$0xff]
                  %1111 = vst [vmem:[%s787 + $0x508] sm:$0xff] %v1110
                  %v1112 = vld [vmem:[%s786 + $0xa20] sm:$0xff]
                  %1113 = vst [vmem:[%s787 + $0x510] sm:$0xff] %v1112
                  %v1114 = vld [vmem:[%s786 + $0xa30] sm:$0xff]
                  %1115 = vst [vmem:[%s787 + $0x518] sm:$0xff] %v1114
                  %v1116 = vld [vmem:[%s786 + $0xa40] sm:$0xff]
                  %1117 = vst [vmem:[%s787 + $0x520] sm:$0xff] %v1116
                  %v1118 = vld [vmem:[%s786 + $0xa50] sm:$0xff]
                  %1119 = vst [vmem:[%s787 + $0x528] sm:$0xff] %v1118
                  %v1120 = vld [vmem:[%s786 + $0xa60] sm:$0xff]
                  %1121 = vst [vmem:[%s787 + $0x530] sm:$0xff] %v1120
                  %v1122 = vld [vmem:[%s786 + $0xa70] sm:$0xff]
                  %1123 = vst [vmem:[%s787 + $0x538] sm:$0xff] %v1122
                  %v1124 = vld [vmem:[%s786 + $0xa80] sm:$0xff]
                  %1125 = vst [vmem:[%s787 + $0x540] sm:$0xff] %v1124
                  %v1126 = vld [vmem:[%s786 + $0xa90] sm:$0xff]
                  %1127 = vst [vmem:[%s787 + $0x548] sm:$0xff] %v1126
                  %v1128 = vld [vmem:[%s786 + $0xaa0] sm:$0xff]
                  %1129 = vst [vmem:[%s787 + $0x550] sm:$0xff] %v1128
                  %v1130 = vld [vmem:[%s786 + $0xab0] sm:$0xff]
                  %1131 = vst [vmem:[%s787 + $0x558] sm:$0xff] %v1130
                  %v1132 = vld [vmem:[%s786 + $0xac0] sm:$0xff]
                  %1133 = vst [vmem:[%s787 + $0x560] sm:$0xff] %v1132
                  %v1134 = vld [vmem:[%s786 + $0xad0] sm:$0xff]
                  %1135 = vst [vmem:[%s787 + $0x568] sm:$0xff] %v1134
                  %v1136 = vld [vmem:[%s786 + $0xae0] sm:$0xff]
                  %1137 = vst [vmem:[%s787 + $0x570] sm:$0xff] %v1136
                  %v1138 = vld [vmem:[%s786 + $0xaf0] sm:$0xff]
                  %1139 = vst [vmem:[%s787 + $0x578] sm:$0xff] %v1138
                  %v1140 = vld [vmem:[%s786 + $0xb00] sm:$0xff]
                  %1141 = vst [vmem:[%s787 + $0x580] sm:$0xff] %v1140
                  %v1142 = vld [vmem:[%s786 + $0xb10] sm:$0xff]
                  %1143 = vst [vmem:[%s787 + $0x588] sm:$0xff] %v1142
                  %v1144 = vld [vmem:[%s786 + $0xb20] sm:$0xff]
                  %1145 = vst [vmem:[%s787 + $0x590] sm:$0xff] %v1144
                  %v1146 = vld [vmem:[%s786 + $0xb30] sm:$0xff]
                  %1147 = vst [vmem:[%s787 + $0x598] sm:$0xff] %v1146
                  %v1148 = vld [vmem:[%s786 + $0xb40] sm:$0xff]
                  %1149 = vst [vmem:[%s787 + $0x5a0] sm:$0xff] %v1148
                  %v1150 = vld [vmem:[%s786 + $0xb50] sm:$0xff]
                  %1151 = vst [vmem:[%s787 + $0x5a8] sm:$0xff] %v1150
                  %v1152 = vld [vmem:[%s786 + $0xb60] sm:$0xff]
                  %1153 = vst [vmem:[%s787 + $0x5b0] sm:$0xff] %v1152
                  %v1154 = vld [vmem:[%s786 + $0xb70] sm:$0xff]
                  %1155 = vst [vmem:[%s787 + $0x5b8] sm:$0xff] %v1154
                  %v1156 = vld [vmem:[%s786 + $0xb80] sm:$0xff]
                  %1157 = vst [vmem:[%s787 + $0x5c0] sm:$0xff] %v1156
                  %v1158 = vld [vmem:[%s786 + $0xb90] sm:$0xff]
                  %1159 = vst [vmem:[%s787 + $0x5c8] sm:$0xff] %v1158
                  %v1160 = vld [vmem:[%s786 + $0xba0] sm:$0xff]
                  %1161 = vst [vmem:[%s787 + $0x5d0] sm:$0xff] %v1160
                  %v1162 = vld [vmem:[%s786 + $0xbb0] sm:$0xff]
                  %1163 = vst [vmem:[%s787 + $0x5d8] sm:$0xff] %v1162
                  %v1164 = vld [vmem:[%s786 + $0xbc0] sm:$0xff]
                  %1165 = vst [vmem:[%s787 + $0x5e0] sm:$0xff] %v1164
                  %v1166 = vld [vmem:[%s786 + $0xbd0] sm:$0xff]
                  %1167 = vst [vmem:[%s787 + $0x5e8] sm:$0xff] %v1166
                  %v1168 = vld [vmem:[%s786 + $0xbe0] sm:$0xff]
                  %1169 = vst [vmem:[%s787 + $0x5f0] sm:$0xff] %v1168
                  %v1170 = vld [vmem:[%s786 + $0xbf0] sm:$0xff]
                  %1171 = vst [vmem:[%s787 + $0x5f8] sm:$0xff] %v1170
                  %v1172 = vld [vmem:[%s786 + $0xc00] sm:$0xff]
                  %1173 = vst [vmem:[%s787 + $0x600] sm:$0xff] %v1172
                  %v1174 = vld [vmem:[%s786 + $0xc10] sm:$0xff]
                  %1175 = vst [vmem:[%s787 + $0x608] sm:$0xff] %v1174
                  %v1176 = vld [vmem:[%s786 + $0xc20] sm:$0xff]
                  %1177 = vst [vmem:[%s787 + $0x610] sm:$0xff] %v1176
                  %v1178 = vld [vmem:[%s786 + $0xc30] sm:$0xff]
                  %1179 = vst [vmem:[%s787 + $0x618] sm:$0xff] %v1178
                  %v1180 = vld [vmem:[%s786 + $0xc40] sm:$0xff]
                  %1181 = vst [vmem:[%s787 + $0x620] sm:$0xff] %v1180
                  %v1182 = vld [vmem:[%s786 + $0xc50] sm:$0xff]
                  %1183 = vst [vmem:[%s787 + $0x628] sm:$0xff] %v1182
                  %v1184 = vld [vmem:[%s786 + $0xc60] sm:$0xff]
                  %1185 = vst [vmem:[%s787 + $0x630] sm:$0xff] %v1184
                  %v1186 = vld [vmem:[%s786 + $0xc70] sm:$0xff]
                  %1187 = vst [vmem:[%s787 + $0x638] sm:$0xff] %v1186
                  %v1188 = vld [vmem:[%s786 + $0xc80] sm:$0xff]
                  %1189 = vst [vmem:[%s787 + $0x640] sm:$0xff] %v1188
                  %v1190 = vld [vmem:[%s786 + $0xc90] sm:$0xff]
                  %1191 = vst [vmem:[%s787 + $0x648] sm:$0xff] %v1190
                  %v1192 = vld [vmem:[%s786 + $0xca0] sm:$0xff]
                  %1193 = vst [vmem:[%s787 + $0x650] sm:$0xff] %v1192
                  %v1194 = vld [vmem:[%s786 + $0xcb0] sm:$0xff]
                  %1195 = vst [vmem:[%s787 + $0x658] sm:$0xff] %v1194
                  %v1196 = vld [vmem:[%s786 + $0xcc0] sm:$0xff]
                  %1197 = vst [vmem:[%s787 + $0x660] sm:$0xff] %v1196
                  %v1198 = vld [vmem:[%s786 + $0xcd0] sm:$0xff]
                  %1199 = vst [vmem:[%s787 + $0x668] sm:$0xff] %v1198
                  %v1200 = vld [vmem:[%s786 + $0xce0] sm:$0xff]
                  %1201 = vst [vmem:[%s787 + $0x670] sm:$0xff] %v1200
                  %v1202 = vld [vmem:[%s786 + $0xcf0] sm:$0xff]
                  %1203 = vst [vmem:[%s787 + $0x678] sm:$0xff] %v1202
                  %v1204 = vld [vmem:[%s786 + $0xd00] sm:$0xff]
                  %1205 = vst [vmem:[%s787 + $0x680] sm:$0xff] %v1204
                  %v1206 = vld [vmem:[%s786 + $0xd10] sm:$0xff]
                  %1207 = vst [vmem:[%s787 + $0x688] sm:$0xff] %v1206
                  %v1208 = vld [vmem:[%s786 + $0xd20] sm:$0xff]
                  %1209 = vst [vmem:[%s787 + $0x690] sm:$0xff] %v1208
                  %v1210 = vld [vmem:[%s786 + $0xd30] sm:$0xff]
                  %1211 = vst [vmem:[%s787 + $0x698] sm:$0xff] %v1210
                  %v1212 = vld [vmem:[%s786 + $0xd40] sm:$0xff]
                  %1213 = vst [vmem:[%s787 + $0x6a0] sm:$0xff] %v1212
                  %v1214 = vld [vmem:[%s786 + $0xd50] sm:$0xff]
                  %1215 = vst [vmem:[%s787 + $0x6a8] sm:$0xff] %v1214
                  %v1216 = vld [vmem:[%s786 + $0xd60] sm:$0xff]
                  %1217 = vst [vmem:[%s787 + $0x6b0] sm:$0xff] %v1216
                  %v1218 = vld [vmem:[%s786 + $0xd70] sm:$0xff]
                  %1219 = vst [vmem:[%s787 + $0x6b8] sm:$0xff] %v1218
                  %v1220 = vld [vmem:[%s786 + $0xd80] sm:$0xff]
                  %1221 = vst [vmem:[%s787 + $0x6c0] sm:$0xff] %v1220
                  %v1222 = vld [vmem:[%s786 + $0xd90] sm:$0xff]
                  %1223 = vst [vmem:[%s787 + $0x6c8] sm:$0xff] %v1222
                  %v1224 = vld [vmem:[%s786 + $0xda0] sm:$0xff]
                  %1225 = vst [vmem:[%s787 + $0x6d0] sm:$0xff] %v1224
                  %v1226 = vld [vmem:[%s786 + $0xdb0] sm:$0xff]
                  %1227 = vst [vmem:[%s787 + $0x6d8] sm:$0xff] %v1226
                  %v1228 = vld [vmem:[%s786 + $0xdc0] sm:$0xff]
                  %1229 = vst [vmem:[%s787 + $0x6e0] sm:$0xff] %v1228
                  %v1230 = vld [vmem:[%s786 + $0xdd0] sm:$0xff]
                  %1231 = vst [vmem:[%s787 + $0x6e8] sm:$0xff] %v1230
                  %v1232 = vld [vmem:[%s786 + $0xde0] sm:$0xff]
                  %1233 = vst [vmem:[%s787 + $0x6f0] sm:$0xff] %v1232
                  %v1234 = vld [vmem:[%s786 + $0xdf0] sm:$0xff]
                  %1235 = vst [vmem:[%s787 + $0x6f8] sm:$0xff] %v1234
                  %v1236 = vld [vmem:[%s786 + $0xe00] sm:$0xff]
                  %1237 = vst [vmem:[%s787 + $0x700] sm:$0xff] %v1236
                  %v1238 = vld [vmem:[%s786 + $0xe10] sm:$0xff]
                  %1239 = vst [vmem:[%s787 + $0x708] sm:$0xff] %v1238
                  %v1240 = vld [vmem:[%s786 + $0xe20] sm:$0xff]
                  %1241 = vst [vmem:[%s787 + $0x710] sm:$0xff] %v1240
                  %v1242 = vld [vmem:[%s786 + $0xe30] sm:$0xff]
                  %1243 = vst [vmem:[%s787 + $0x718] sm:$0xff] %v1242
                  %v1244 = vld [vmem:[%s786 + $0xe40] sm:$0xff]
                  %1245 = vst [vmem:[%s787 + $0x720] sm:$0xff] %v1244
                  %v1246 = vld [vmem:[%s786 + $0xe50] sm:$0xff]
                  %1247 = vst [vmem:[%s787 + $0x728] sm:$0xff] %v1246
                  %v1248 = vld [vmem:[%s786 + $0xe60] sm:$0xff]
                  %1249 = vst [vmem:[%s787 + $0x730] sm:$0xff] %v1248
                  %v1250 = vld [vmem:[%s786 + $0xe70] sm:$0xff]
                  %1251 = vst [vmem:[%s787 + $0x738] sm:$0xff] %v1250
                  %v1252 = vld [vmem:[%s786 + $0xe80] sm:$0xff]
                  %1253 = vst [vmem:[%s787 + $0x740] sm:$0xff] %v1252
                  %v1254 = vld [vmem:[%s786 + $0xe90] sm:$0xff]
                  %1255 = vst [vmem:[%s787 + $0x748] sm:$0xff] %v1254
                  %v1256 = vld [vmem:[%s786 + $0xea0] sm:$0xff]
                  %1257 = vst [vmem:[%s787 + $0x750] sm:$0xff] %v1256
                  %v1258 = vld [vmem:[%s786 + $0xeb0] sm:$0xff]
                  %1259 = vst [vmem:[%s787 + $0x758] sm:$0xff] %v1258
                  %v1260 = vld [vmem:[%s786 + $0xec0] sm:$0xff]
                  %1261 = vst [vmem:[%s787 + $0x760] sm:$0xff] %v1260
                  %v1262 = vld [vmem:[%s786 + $0xed0] sm:$0xff]
                  %1263 = vst [vmem:[%s787 + $0x768] sm:$0xff] %v1262
                  %v1264 = vld [vmem:[%s786 + $0xee0] sm:$0xff]
                  %1265 = vst [vmem:[%s787 + $0x770] sm:$0xff] %v1264
                  %v1266 = vld [vmem:[%s786 + $0xef0] sm:$0xff]
                  %1267 = vst [vmem:[%s787 + $0x778] sm:$0xff] %v1266
                  %v1268 = vld [vmem:[%s786 + $0xf00] sm:$0xff]
                  %1269 = vst [vmem:[%s787 + $0x780] sm:$0xff] %v1268
                  %v1270 = vld [vmem:[%s786 + $0xf10] sm:$0xff]
                  %1271 = vst [vmem:[%s787 + $0x788] sm:$0xff] %v1270
                  %v1272 = vld [vmem:[%s786 + $0xf20] sm:$0xff]
                  %1273 = vst [vmem:[%s787 + $0x790] sm:$0xff] %v1272
                  %v1274 = vld [vmem:[%s786 + $0xf30] sm:$0xff]
                  %1275 = vst [vmem:[%s787 + $0x798] sm:$0xff] %v1274
                  %v1276 = vld [vmem:[%s786 + $0xf40] sm:$0xff]
                  %1277 = vst [vmem:[%s787 + $0x7a0] sm:$0xff] %v1276
                  %v1278 = vld [vmem:[%s786 + $0xf50] sm:$0xff]
                  %1279 = vst [vmem:[%s787 + $0x7a8] sm:$0xff] %v1278
                  %v1280 = vld [vmem:[%s786 + $0xf60] sm:$0xff]
                  %1281 = vst [vmem:[%s787 + $0x7b0] sm:$0xff] %v1280
                  %v1282 = vld [vmem:[%s786 + $0xf70] sm:$0xff]
                  %1283 = vst [vmem:[%s787 + $0x7b8] sm:$0xff] %v1282
                  %v1284 = vld [vmem:[%s786 + $0xf80] sm:$0xff]
                  %1285 = vst [vmem:[%s787 + $0x7c0] sm:$0xff] %v1284
                  %v1286 = vld [vmem:[%s786 + $0xf90] sm:$0xff]
                  %1287 = vst [vmem:[%s787 + $0x7c8] sm:$0xff] %v1286
                  %v1288 = vld [vmem:[%s786 + $0xfa0] sm:$0xff]
                  %1289 = vst [vmem:[%s787 + $0x7d0] sm:$0xff] %v1288
                  %v1290 = vld [vmem:[%s786 + $0xfb0] sm:$0xff]
                  %1291 = vst [vmem:[%s787 + $0x7d8] sm:$0xff] %v1290
                  %v1292 = vld [vmem:[%s786 + $0xfc0] sm:$0xff]
                  %1293 = vst [vmem:[%s787 + $0x7e0] sm:$0xff] %v1292
                  %v1294 = vld [vmem:[%s786 + $0xfd0] sm:$0xff]
                  %1295 = vst [vmem:[%s787 + $0x7e8] sm:$0xff] %v1294
                  %v1296 = vld [vmem:[%s786 + $0xfe0] sm:$0xff]
                  %1297 = vst [vmem:[%s787 + $0x7f0] sm:$0xff] %v1296
                  %v1298 = vld [vmem:[%s786 + $0xff0] sm:$0xff]
                  %1299 = vst [vmem:[%s787 + $0x7f8] sm:$0xff] %v1298
                  %v1300 = vld [vmem:[%s786 + $0x1000] sm:$0xff]
                  %1301 = vst [vmem:[%s787 + $0x800] sm:$0xff] %v1300
                  %v1302 = vld [vmem:[%s786 + $0x1010] sm:$0xff]
                  %1303 = vst [vmem:[%s787 + $0x808] sm:$0xff] %v1302
                  %v1304 = vld [vmem:[%s786 + $0x1020] sm:$0xff]
                  %1305 = vst [vmem:[%s787 + $0x810] sm:$0xff] %v1304
                  %v1306 = vld [vmem:[%s786 + $0x1030] sm:$0xff]
                  %1307 = vst [vmem:[%s787 + $0x818] sm:$0xff] %v1306
                  %v1308 = vld [vmem:[%s786 + $0x1040] sm:$0xff]
                  %1309 = vst [vmem:[%s787 + $0x820] sm:$0xff] %v1308
                  %v1310 = vld [vmem:[%s786 + $0x1050] sm:$0xff]
                  %1311 = vst [vmem:[%s787 + $0x828] sm:$0xff] %v1310
                  %v1312 = vld [vmem:[%s786 + $0x1060] sm:$0xff]
                  %1313 = vst [vmem:[%s787 + $0x830] sm:$0xff] %v1312
                  %v1314 = vld [vmem:[%s786 + $0x1070] sm:$0xff]
                  %1315 = vst [vmem:[%s787 + $0x838] sm:$0xff] %v1314
                  %v1316 = vld [vmem:[%s786 + $0x1080] sm:$0xff]
                  %1317 = vst [vmem:[%s787 + $0x840] sm:$0xff] %v1316
                  %v1318 = vld [vmem:[%s786 + $0x1090] sm:$0xff]
                  %1319 = vst [vmem:[%s787 + $0x848] sm:$0xff] %v1318
                  %v1320 = vld [vmem:[%s786 + $0x10a0] sm:$0xff]
                  %1321 = vst [vmem:[%s787 + $0x850] sm:$0xff] %v1320
                  %v1322 = vld [vmem:[%s786 + $0x10b0] sm:$0xff]
                  %1323 = vst [vmem:[%s787 + $0x858] sm:$0xff] %v1322
                  %v1324 = vld [vmem:[%s786 + $0x10c0] sm:$0xff]
                  %1325 = vst [vmem:[%s787 + $0x860] sm:$0xff] %v1324
                  %v1326 = vld [vmem:[%s786 + $0x10d0] sm:$0xff]
                  %1327 = vst [vmem:[%s787 + $0x868] sm:$0xff] %v1326
                  %v1328 = vld [vmem:[%s786 + $0x10e0] sm:$0xff]
                  %1329 = vst [vmem:[%s787 + $0x870] sm:$0xff] %v1328
                  %v1330 = vld [vmem:[%s786 + $0x10f0] sm:$0xff]
                  %1331 = vst [vmem:[%s787 + $0x878] sm:$0xff] %v1330
                  %v1332 = vld [vmem:[%s786 + $0x1100] sm:$0xff]
                  %1333 = vst [vmem:[%s787 + $0x880] sm:$0xff] %v1332
                  %v1334 = vld [vmem:[%s786 + $0x1110] sm:$0xff]
                  %1335 = vst [vmem:[%s787 + $0x888] sm:$0xff] %v1334
                  %v1336 = vld [vmem:[%s786 + $0x1120] sm:$0xff]
                  %1337 = vst [vmem:[%s787 + $0x890] sm:$0xff] %v1336
                  %v1338 = vld [vmem:[%s786 + $0x1130] sm:$0xff]
                  %1339 = vst [vmem:[%s787 + $0x898] sm:$0xff] %v1338
                  %v1340 = vld [vmem:[%s786 + $0x1140] sm:$0xff]
                  %1341 = vst [vmem:[%s787 + $0x8a0] sm:$0xff] %v1340
                  %v1342 = vld [vmem:[%s786 + $0x1150] sm:$0xff]
                  %1343 = vst [vmem:[%s787 + $0x8a8] sm:$0xff] %v1342
                  %v1344 = vld [vmem:[%s786 + $0x1160] sm:$0xff]
                  %1345 = vst [vmem:[%s787 + $0x8b0] sm:$0xff] %v1344
                  %v1346 = vld [vmem:[%s786 + $0x1170] sm:$0xff]
                  %1347 = vst [vmem:[%s787 + $0x8b8] sm:$0xff] %v1346
                  %v1348 = vld [vmem:[%s786 + $0x1180] sm:$0xff]
                  %1349 = vst [vmem:[%s787 + $0x8c0] sm:$0xff] %v1348
                  %v1350 = vld [vmem:[%s786 + $0x1190] sm:$0xff]
                  %1351 = vst [vmem:[%s787 + $0x8c8] sm:$0xff] %v1350
                  %v1352 = vld [vmem:[%s786 + $0x11a0] sm:$0xff]
                  %1353 = vst [vmem:[%s787 + $0x8d0] sm:$0xff] %v1352
                  %v1354 = vld [vmem:[%s786 + $0x11b0] sm:$0xff]
                  %1355 = vst [vmem:[%s787 + $0x8d8] sm:$0xff] %v1354
                  %v1356 = vld [vmem:[%s786 + $0x11c0] sm:$0xff]
                  %1357 = vst [vmem:[%s787 + $0x8e0] sm:$0xff] %v1356
                  %v1358 = vld [vmem:[%s786 + $0x11d0] sm:$0xff]
                  %1359 = vst [vmem:[%s787 + $0x8e8] sm:$0xff] %v1358
                  %v1360 = vld [vmem:[%s786 + $0x11e0] sm:$0xff]
                  %1361 = vst [vmem:[%s787 + $0x8f0] sm:$0xff] %v1360
                  %v1362 = vld [vmem:[%s786 + $0x11f0] sm:$0xff]
                  %1363 = vst [vmem:[%s787 + $0x8f8] sm:$0xff] %v1362
                $region56: #{temp_embed_forward.9} parent=50 // loop_footer
                  %s785 = sadd.s32 1, %s781
                $region57: #{temp_embed_forward.9} parent=50 // loop_footer_branch
                  %780 = sbr.rel target = $region53
                $region58: #{temp_embed_forward.9} parent=50 // loop_exit
                  _
              $region51: #{temp_embed_forward.9} parent=35 // pred_fallthru
                _
              // Predicated region
              $region59: #{temp_embed_forward.9} parent=35 // pred_check
                _
              $region60: #{temp_embed_forward.9} parent=35 // pred_check_branch
                %1365 = sbr.rel target = $region62
              $region61: #{temp_embed_forward.9} parent=35 // pred_region
                _
              $region62: #{temp_embed_forward.9} parent=35 // pred_fallthru
                _
            $region36: #{temp_embed_forward.9} parent=31 // pred_fallthru
              _
            // Predicated region
            $region37: #{temp_embed_forward.9} parent=31 // pred_check
              _
            $region38: #{temp_embed_forward.9} parent=31 // pred_check_branch
              %192 = sbr.rel target = $region40
            $region39: #{temp_embed_forward.9} parent=31 // pred_region
              loop: start=0, step=1, limit=1
              $region41: #{temp_embed_forward.9} parent=39 // loop_pre_header
                _
              $region42: #{temp_embed_forward.9} parent=39 // loop_header
                %s195 = sphi 0, %s199
                %p196 = scmp.ge.s32.totalorder %s195, 1
                %s200 = sphi %s186, %s186
                %s201 = sphi %s183, %s183
              $region43: #{temp_embed_forward.9} parent=39 // loop_header_branch
                %198 = sbr.rel (%p196) target = $region47
              $region44: #{temp_embed_forward.9} parent=39 // loop_body
                %v202 = vld [vmem:[%s200] sm:$0xff]
                %203 = vst [vmem:[%s201] sm:$0xff] %v202
                %v204 = vld [vmem:[%s200 + $0x10] sm:$0xff]
                %205 = vst [vmem:[%s201 + $0x8] sm:$0xff] %v204
                %v206 = vld [vmem:[%s200 + $0x20] sm:$0xff]
                %207 = vst [vmem:[%s201 + $0x10] sm:$0xff] %v206
                %v208 = vld [vmem:[%s200 + $0x30] sm:$0xff]
                %209 = vst [vmem:[%s201 + $0x18] sm:$0xff] %v208
                %v210 = vld [vmem:[%s200 + $0x40] sm:$0xff]
                %211 = vst [vmem:[%s201 + $0x20] sm:$0xff] %v210
                %v212 = vld [vmem:[%s200 + $0x50] sm:$0xff]
                %213 = vst [vmem:[%s201 + $0x28] sm:$0xff] %v212
                %v214 = vld [vmem:[%s200 + $0x60] sm:$0xff]
                %215 = vst [vmem:[%s201 + $0x30] sm:$0xff] %v214
                %v216 = vld [vmem:[%s200 + $0x70] sm:$0xff]
                %217 = vst [vmem:[%s201 + $0x38] sm:$0xff] %v216
                %v218 = vld [vmem:[%s200 + $0x80] sm:$0xff]
                %219 = vst [vmem:[%s201 + $0x40] sm:$0xff] %v218
                %v220 = vld [vmem:[%s200 + $0x90] sm:$0xff]
                %221 = vst [vmem:[%s201 + $0x48] sm:$0xff] %v220
                %v222 = vld [vmem:[%s200 + $0xa0] sm:$0xff]
                %223 = vst [vmem:[%s201 + $0x50] sm:$0xff] %v222
                %v224 = vld [vmem:[%s200 + $0xb0] sm:$0xff]
                %225 = vst [vmem:[%s201 + $0x58] sm:$0xff] %v224
                %v226 = vld [vmem:[%s200 + $0xc0] sm:$0xff]
                %227 = vst [vmem:[%s201 + $0x60] sm:$0xff] %v226
                %v228 = vld [vmem:[%s200 + $0xd0] sm:$0xff]
                %229 = vst [vmem:[%s201 + $0x68] sm:$0xff] %v228
                %v230 = vld [vmem:[%s200 + $0xe0] sm:$0xff]
                %231 = vst [vmem:[%s201 + $0x70] sm:$0xff] %v230
                %v232 = vld [vmem:[%s200 + $0xf0] sm:$0xff]
                %233 = vst [vmem:[%s201 + $0x78] sm:$0xff] %v232
                %v234 = vld [vmem:[%s200 + $0x100] sm:$0xff]
                %235 = vst [vmem:[%s201 + $0x80] sm:$0xff] %v234
                %v236 = vld [vmem:[%s200 + $0x110] sm:$0xff]
                %237 = vst [vmem:[%s201 + $0x88] sm:$0xff] %v236
                %v238 = vld [vmem:[%s200 + $0x120] sm:$0xff]
                %239 = vst [vmem:[%s201 + $0x90] sm:$0xff] %v238
                %v240 = vld [vmem:[%s200 + $0x130] sm:$0xff]
                %241 = vst [vmem:[%s201 + $0x98] sm:$0xff] %v240
                %v242 = vld [vmem:[%s200 + $0x140] sm:$0xff]
                %243 = vst [vmem:[%s201 + $0xa0] sm:$0xff] %v242
                %v244 = vld [vmem:[%s200 + $0x150] sm:$0xff]
                %245 = vst [vmem:[%s201 + $0xa8] sm:$0xff] %v244
                %v246 = vld [vmem:[%s200 + $0x160] sm:$0xff]
                %247 = vst [vmem:[%s201 + $0xb0] sm:$0xff] %v246
                %v248 = vld [vmem:[%s200 + $0x170] sm:$0xff]
                %249 = vst [vmem:[%s201 + $0xb8] sm:$0xff] %v248
                %v250 = vld [vmem:[%s200 + $0x180] sm:$0xff]
                %251 = vst [vmem:[%s201 + $0xc0] sm:$0xff] %v250
                %v252 = vld [vmem:[%s200 + $0x190] sm:$0xff]
                %253 = vst [vmem:[%s201 + $0xc8] sm:$0xff] %v252
                %v254 = vld [vmem:[%s200 + $0x1a0] sm:$0xff]
                %255 = vst [vmem:[%s201 + $0xd0] sm:$0xff] %v254
                %v256 = vld [vmem:[%s200 + $0x1b0] sm:$0xff]
                %257 = vst [vmem:[%s201 + $0xd8] sm:$0xff] %v256
                %v258 = vld [vmem:[%s200 + $0x1c0] sm:$0xff]
                %259 = vst [vmem:[%s201 + $0xe0] sm:$0xff] %v258
                %v260 = vld [vmem:[%s200 + $0x1d0] sm:$0xff]
                %261 = vst [vmem:[%s201 + $0xe8] sm:$0xff] %v260
                %v262 = vld [vmem:[%s200 + $0x1e0] sm:$0xff]
                %263 = vst [vmem:[%s201 + $0xf0] sm:$0xff] %v262
                %v264 = vld [vmem:[%s200 + $0x1f0] sm:$0xff]
                %265 = vst [vmem:[%s201 + $0xf8] sm:$0xff] %v264
                %v266 = vld [vmem:[%s200 + $0x200] sm:$0xff]
                %267 = vst [vmem:[%s201 + $0x100] sm:$0xff] %v266
                %v268 = vld [vmem:[%s200 + $0x210] sm:$0xff]
                %269 = vst [vmem:[%s201 + $0x108] sm:$0xff] %v268
                %v270 = vld [vmem:[%s200 + $0x220] sm:$0xff]
                %271 = vst [vmem:[%s201 + $0x110] sm:$0xff] %v270
                %v272 = vld [vmem:[%s200 + $0x230] sm:$0xff]
                %273 = vst [vmem:[%s201 + $0x118] sm:$0xff] %v272
                %v274 = vld [vmem:[%s200 + $0x240] sm:$0xff]
                %275 = vst [vmem:[%s201 + $0x120] sm:$0xff] %v274
                %v276 = vld [vmem:[%s200 + $0x250] sm:$0xff]
                %277 = vst [vmem:[%s201 + $0x128] sm:$0xff] %v276
                %v278 = vld [vmem:[%s200 + $0x260] sm:$0xff]
                %279 = vst [vmem:[%s201 + $0x130] sm:$0xff] %v278
                %v280 = vld [vmem:[%s200 + $0x270] sm:$0xff]
                %281 = vst [vmem:[%s201 + $0x138] sm:$0xff] %v280
                %v282 = vld [vmem:[%s200 + $0x280] sm:$0xff]
                %283 = vst [vmem:[%s201 + $0x140] sm:$0xff] %v282
                %v284 = vld [vmem:[%s200 + $0x290] sm:$0xff]
                %285 = vst [vmem:[%s201 + $0x148] sm:$0xff] %v284
                %v286 = vld [vmem:[%s200 + $0x2a0] sm:$0xff]
                %287 = vst [vmem:[%s201 + $0x150] sm:$0xff] %v286
                %v288 = vld [vmem:[%s200 + $0x2b0] sm:$0xff]
                %289 = vst [vmem:[%s201 + $0x158] sm:$0xff] %v288
                %v290 = vld [vmem:[%s200 + $0x2c0] sm:$0xff]
                %291 = vst [vmem:[%s201 + $0x160] sm:$0xff] %v290
                %v292 = vld [vmem:[%s200 + $0x2d0] sm:$0xff]
                %293 = vst [vmem:[%s201 + $0x168] sm:$0xff] %v292
                %v294 = vld [vmem:[%s200 + $0x2e0] sm:$0xff]
                %295 = vst [vmem:[%s201 + $0x170] sm:$0xff] %v294
                %v296 = vld [vmem:[%s200 + $0x2f0] sm:$0xff]
                %297 = vst [vmem:[%s201 + $0x178] sm:$0xff] %v296
                %v298 = vld [vmem:[%s200 + $0x300] sm:$0xff]
                %299 = vst [vmem:[%s201 + $0x180] sm:$0xff] %v298
                %v300 = vld [vmem:[%s200 + $0x310] sm:$0xff]
                %301 = vst [vmem:[%s201 + $0x188] sm:$0xff] %v300
                %v302 = vld [vmem:[%s200 + $0x320] sm:$0xff]
                %303 = vst [vmem:[%s201 + $0x190] sm:$0xff] %v302
                %v304 = vld [vmem:[%s200 + $0x330] sm:$0xff]
                %305 = vst [vmem:[%s201 + $0x198] sm:$0xff] %v304
                %v306 = vld [vmem:[%s200 + $0x340] sm:$0xff]
                %307 = vst [vmem:[%s201 + $0x1a0] sm:$0xff] %v306
                %v308 = vld [vmem:[%s200 + $0x350] sm:$0xff]
                %309 = vst [vmem:[%s201 + $0x1a8] sm:$0xff] %v308
                %v310 = vld [vmem:[%s200 + $0x360] sm:$0xff]
                %311 = vst [vmem:[%s201 + $0x1b0] sm:$0xff] %v310
                %v312 = vld [vmem:[%s200 + $0x370] sm:$0xff]
                %313 = vst [vmem:[%s201 + $0x1b8] sm:$0xff] %v312
                %v314 = vld [vmem:[%s200 + $0x380] sm:$0xff]
                %315 = vst [vmem:[%s201 + $0x1c0] sm:$0xff] %v314
                %v316 = vld [vmem:[%s200 + $0x390] sm:$0xff]
                %317 = vst [vmem:[%s201 + $0x1c8] sm:$0xff] %v316
                %v318 = vld [vmem:[%s200 + $0x3a0] sm:$0xff]
                %319 = vst [vmem:[%s201 + $0x1d0] sm:$0xff] %v318
                %v320 = vld [vmem:[%s200 + $0x3b0] sm:$0xff]
                %321 = vst [vmem:[%s201 + $0x1d8] sm:$0xff] %v320
                %v322 = vld [vmem:[%s200 + $0x3c0] sm:$0xff]
                %323 = vst [vmem:[%s201 + $0x1e0] sm:$0xff] %v322
                %v324 = vld [vmem:[%s200 + $0x3d0] sm:$0xff]
                %325 = vst [vmem:[%s201 + $0x1e8] sm:$0xff] %v324
                %v326 = vld [vmem:[%s200 + $0x3e0] sm:$0xff]
                %327 = vst [vmem:[%s201 + $0x1f0] sm:$0xff] %v326
                %v328 = vld [vmem:[%s200 + $0x3f0] sm:$0xff]
                %329 = vst [vmem:[%s201 + $0x1f8] sm:$0xff] %v328
                %v330 = vld [vmem:[%s200 + $0x400] sm:$0xff]
                %331 = vst [vmem:[%s201 + $0x200] sm:$0xff] %v330
                %v332 = vld [vmem:[%s200 + $0x410] sm:$0xff]
                %333 = vst [vmem:[%s201 + $0x208] sm:$0xff] %v332
                %v334 = vld [vmem:[%s200 + $0x420] sm:$0xff]
                %335 = vst [vmem:[%s201 + $0x210] sm:$0xff] %v334
                %v336 = vld [vmem:[%s200 + $0x430] sm:$0xff]
                %337 = vst [vmem:[%s201 + $0x218] sm:$0xff] %v336
                %v338 = vld [vmem:[%s200 + $0x440] sm:$0xff]
                %339 = vst [vmem:[%s201 + $0x220] sm:$0xff] %v338
                %v340 = vld [vmem:[%s200 + $0x450] sm:$0xff]
                %341 = vst [vmem:[%s201 + $0x228] sm:$0xff] %v340
                %v342 = vld [vmem:[%s200 + $0x460] sm:$0xff]
                %343 = vst [vmem:[%s201 + $0x230] sm:$0xff] %v342
                %v344 = vld [vmem:[%s200 + $0x470] sm:$0xff]
                %345 = vst [vmem:[%s201 + $0x238] sm:$0xff] %v344
                %v346 = vld [vmem:[%s200 + $0x480] sm:$0xff]
                %347 = vst [vmem:[%s201 + $0x240] sm:$0xff] %v346
                %v348 = vld [vmem:[%s200 + $0x490] sm:$0xff]
                %349 = vst [vmem:[%s201 + $0x248] sm:$0xff] %v348
                %v350 = vld [vmem:[%s200 + $0x4a0] sm:$0xff]
                %351 = vst [vmem:[%s201 + $0x250] sm:$0xff] %v350
                %v352 = vld [vmem:[%s200 + $0x4b0] sm:$0xff]
                %353 = vst [vmem:[%s201 + $0x258] sm:$0xff] %v352
                %v354 = vld [vmem:[%s200 + $0x4c0] sm:$0xff]
                %355 = vst [vmem:[%s201 + $0x260] sm:$0xff] %v354
                %v356 = vld [vmem:[%s200 + $0x4d0] sm:$0xff]
                %357 = vst [vmem:[%s201 + $0x268] sm:$0xff] %v356
                %v358 = vld [vmem:[%s200 + $0x4e0] sm:$0xff]
                %359 = vst [vmem:[%s201 + $0x270] sm:$0xff] %v358
                %v360 = vld [vmem:[%s200 + $0x4f0] sm:$0xff]
                %361 = vst [vmem:[%s201 + $0x278] sm:$0xff] %v360
                %v362 = vld [vmem:[%s200 + $0x500] sm:$0xff]
                %363 = vst [vmem:[%s201 + $0x280] sm:$0xff] %v362
                %v364 = vld [vmem:[%s200 + $0x510] sm:$0xff]
                %365 = vst [vmem:[%s201 + $0x288] sm:$0xff] %v364
                %v366 = vld [vmem:[%s200 + $0x520] sm:$0xff]
                %367 = vst [vmem:[%s201 + $0x290] sm:$0xff] %v366
                %v368 = vld [vmem:[%s200 + $0x530] sm:$0xff]
                %369 = vst [vmem:[%s201 + $0x298] sm:$0xff] %v368
                %v370 = vld [vmem:[%s200 + $0x540] sm:$0xff]
                %371 = vst [vmem:[%s201 + $0x2a0] sm:$0xff] %v370
                %v372 = vld [vmem:[%s200 + $0x550] sm:$0xff]
                %373 = vst [vmem:[%s201 + $0x2a8] sm:$0xff] %v372
                %v374 = vld [vmem:[%s200 + $0x560] sm:$0xff]
                %375 = vst [vmem:[%s201 + $0x2b0] sm:$0xff] %v374
                %v376 = vld [vmem:[%s200 + $0x570] sm:$0xff]
                %377 = vst [vmem:[%s201 + $0x2b8] sm:$0xff] %v376
                %v378 = vld [vmem:[%s200 + $0x580] sm:$0xff]
                %379 = vst [vmem:[%s201 + $0x2c0] sm:$0xff] %v378
                %v380 = vld [vmem:[%s200 + $0x590] sm:$0xff]
                %381 = vst [vmem:[%s201 + $0x2c8] sm:$0xff] %v380
                %v382 = vld [vmem:[%s200 + $0x5a0] sm:$0xff]
                %383 = vst [vmem:[%s201 + $0x2d0] sm:$0xff] %v382
                %v384 = vld [vmem:[%s200 + $0x5b0] sm:$0xff]
                %385 = vst [vmem:[%s201 + $0x2d8] sm:$0xff] %v384
                %v386 = vld [vmem:[%s200 + $0x5c0] sm:$0xff]
                %387 = vst [vmem:[%s201 + $0x2e0] sm:$0xff] %v386
                %v388 = vld [vmem:[%s200 + $0x5d0] sm:$0xff]
                %389 = vst [vmem:[%s201 + $0x2e8] sm:$0xff] %v388
                %v390 = vld [vmem:[%s200 + $0x5e0] sm:$0xff]
                %391 = vst [vmem:[%s201 + $0x2f0] sm:$0xff] %v390
                %v392 = vld [vmem:[%s200 + $0x5f0] sm:$0xff]
                %393 = vst [vmem:[%s201 + $0x2f8] sm:$0xff] %v392
                %v394 = vld [vmem:[%s200 + $0x600] sm:$0xff]
                %395 = vst [vmem:[%s201 + $0x300] sm:$0xff] %v394
                %v396 = vld [vmem:[%s200 + $0x610] sm:$0xff]
                %397 = vst [vmem:[%s201 + $0x308] sm:$0xff] %v396
                %v398 = vld [vmem:[%s200 + $0x620] sm:$0xff]
                %399 = vst [vmem:[%s201 + $0x310] sm:$0xff] %v398
                %v400 = vld [vmem:[%s200 + $0x630] sm:$0xff]
                %401 = vst [vmem:[%s201 + $0x318] sm:$0xff] %v400
                %v402 = vld [vmem:[%s200 + $0x640] sm:$0xff]
                %403 = vst [vmem:[%s201 + $0x320] sm:$0xff] %v402
                %v404 = vld [vmem:[%s200 + $0x650] sm:$0xff]
                %405 = vst [vmem:[%s201 + $0x328] sm:$0xff] %v404
                %v406 = vld [vmem:[%s200 + $0x660] sm:$0xff]
                %407 = vst [vmem:[%s201 + $0x330] sm:$0xff] %v406
                %v408 = vld [vmem:[%s200 + $0x670] sm:$0xff]
                %409 = vst [vmem:[%s201 + $0x338] sm:$0xff] %v408
                %v410 = vld [vmem:[%s200 + $0x680] sm:$0xff]
                %411 = vst [vmem:[%s201 + $0x340] sm:$0xff] %v410
                %v412 = vld [vmem:[%s200 + $0x690] sm:$0xff]
                %413 = vst [vmem:[%s201 + $0x348] sm:$0xff] %v412
                %v414 = vld [vmem:[%s200 + $0x6a0] sm:$0xff]
                %415 = vst [vmem:[%s201 + $0x350] sm:$0xff] %v414
                %v416 = vld [vmem:[%s200 + $0x6b0] sm:$0xff]
                %417 = vst [vmem:[%s201 + $0x358] sm:$0xff] %v416
                %v418 = vld [vmem:[%s200 + $0x6c0] sm:$0xff]
                %419 = vst [vmem:[%s201 + $0x360] sm:$0xff] %v418
                %v420 = vld [vmem:[%s200 + $0x6d0] sm:$0xff]
                %421 = vst [vmem:[%s201 + $0x368] sm:$0xff] %v420
                %v422 = vld [vmem:[%s200 + $0x6e0] sm:$0xff]
                %423 = vst [vmem:[%s201 + $0x370] sm:$0xff] %v422
                %v424 = vld [vmem:[%s200 + $0x6f0] sm:$0xff]
                %425 = vst [vmem:[%s201 + $0x378] sm:$0xff] %v424
                %v426 = vld [vmem:[%s200 + $0x700] sm:$0xff]
                %427 = vst [vmem:[%s201 + $0x380] sm:$0xff] %v426
                %v428 = vld [vmem:[%s200 + $0x710] sm:$0xff]
                %429 = vst [vmem:[%s201 + $0x388] sm:$0xff] %v428
                %v430 = vld [vmem:[%s200 + $0x720] sm:$0xff]
                %431 = vst [vmem:[%s201 + $0x390] sm:$0xff] %v430
                %v432 = vld [vmem:[%s200 + $0x730] sm:$0xff]
                %433 = vst [vmem:[%s201 + $0x398] sm:$0xff] %v432
                %v434 = vld [vmem:[%s200 + $0x740] sm:$0xff]
                %435 = vst [vmem:[%s201 + $0x3a0] sm:$0xff] %v434
                %v436 = vld [vmem:[%s200 + $0x750] sm:$0xff]
                %437 = vst [vmem:[%s201 + $0x3a8] sm:$0xff] %v436
                %v438 = vld [vmem:[%s200 + $0x760] sm:$0xff]
                %439 = vst [vmem:[%s201 + $0x3b0] sm:$0xff] %v438
                %v440 = vld [vmem:[%s200 + $0x770] sm:$0xff]
                %441 = vst [vmem:[%s201 + $0x3b8] sm:$0xff] %v440
                %v442 = vld [vmem:[%s200 + $0x780] sm:$0xff]
                %443 = vst [vmem:[%s201 + $0x3c0] sm:$0xff] %v442
                %v444 = vld [vmem:[%s200 + $0x790] sm:$0xff]
                %445 = vst [vmem:[%s201 + $0x3c8] sm:$0xff] %v444
                %v446 = vld [vmem:[%s200 + $0x7a0] sm:$0xff]
                %447 = vst [vmem:[%s201 + $0x3d0] sm:$0xff] %v446
                %v448 = vld [vmem:[%s200 + $0x7b0] sm:$0xff]
                %449 = vst [vmem:[%s201 + $0x3d8] sm:$0xff] %v448
                %v450 = vld [vmem:[%s200 + $0x7c0] sm:$0xff]
                %451 = vst [vmem:[%s201 + $0x3e0] sm:$0xff] %v450
                %v452 = vld [vmem:[%s200 + $0x7d0] sm:$0xff]
                %453 = vst [vmem:[%s201 + $0x3e8] sm:$0xff] %v452
                %v454 = vld [vmem:[%s200 + $0x7e0] sm:$0xff]
                %455 = vst [vmem:[%s201 + $0x3f0] sm:$0xff] %v454
                %v456 = vld [vmem:[%s200 + $0x7f0] sm:$0xff]
                %457 = vst [vmem:[%s201 + $0x3f8] sm:$0xff] %v456
                %v458 = vld [vmem:[%s200 + $0x800] sm:$0xff]
                %459 = vst [vmem:[%s201 + $0x400] sm:$0xff] %v458
                %v460 = vld [vmem:[%s200 + $0x810] sm:$0xff]
                %461 = vst [vmem:[%s201 + $0x408] sm:$0xff] %v460
                %v462 = vld [vmem:[%s200 + $0x820] sm:$0xff]
                %463 = vst [vmem:[%s201 + $0x410] sm:$0xff] %v462
                %v464 = vld [vmem:[%s200 + $0x830] sm:$0xff]
                %465 = vst [vmem:[%s201 + $0x418] sm:$0xff] %v464
                %v466 = vld [vmem:[%s200 + $0x840] sm:$0xff]
                %467 = vst [vmem:[%s201 + $0x420] sm:$0xff] %v466
                %v468 = vld [vmem:[%s200 + $0x850] sm:$0xff]
                %469 = vst [vmem:[%s201 + $0x428] sm:$0xff] %v468
                %v470 = vld [vmem:[%s200 + $0x860] sm:$0xff]
                %471 = vst [vmem:[%s201 + $0x430] sm:$0xff] %v470
                %v472 = vld [vmem:[%s200 + $0x870] sm:$0xff]
                %473 = vst [vmem:[%s201 + $0x438] sm:$0xff] %v472
                %v474 = vld [vmem:[%s200 + $0x880] sm:$0xff]
                %475 = vst [vmem:[%s201 + $0x440] sm:$0xff] %v474
                %v476 = vld [vmem:[%s200 + $0x890] sm:$0xff]
                %477 = vst [vmem:[%s201 + $0x448] sm:$0xff] %v476
                %v478 = vld [vmem:[%s200 + $0x8a0] sm:$0xff]
                %479 = vst [vmem:[%s201 + $0x450] sm:$0xff] %v478
                %v480 = vld [vmem:[%s200 + $0x8b0] sm:$0xff]
                %481 = vst [vmem:[%s201 + $0x458] sm:$0xff] %v480
                %v482 = vld [vmem:[%s200 + $0x8c0] sm:$0xff]
                %483 = vst [vmem:[%s201 + $0x460] sm:$0xff] %v482
                %v484 = vld [vmem:[%s200 + $0x8d0] sm:$0xff]
                %485 = vst [vmem:[%s201 + $0x468] sm:$0xff] %v484
                %v486 = vld [vmem:[%s200 + $0x8e0] sm:$0xff]
                %487 = vst [vmem:[%s201 + $0x470] sm:$0xff] %v486
                %v488 = vld [vmem:[%s200 + $0x8f0] sm:$0xff]
                %489 = vst [vmem:[%s201 + $0x478] sm:$0xff] %v488
                %v490 = vld [vmem:[%s200 + $0x900] sm:$0xff]
                %491 = vst [vmem:[%s201 + $0x480] sm:$0xff] %v490
                %v492 = vld [vmem:[%s200 + $0x910] sm:$0xff]
                %493 = vst [vmem:[%s201 + $0x488] sm:$0xff] %v492
                %v494 = vld [vmem:[%s200 + $0x920] sm:$0xff]
                %495 = vst [vmem:[%s201 + $0x490] sm:$0xff] %v494
                %v496 = vld [vmem:[%s200 + $0x930] sm:$0xff]
                %497 = vst [vmem:[%s201 + $0x498] sm:$0xff] %v496
                %v498 = vld [vmem:[%s200 + $0x940] sm:$0xff]
                %499 = vst [vmem:[%s201 + $0x4a0] sm:$0xff] %v498
                %v500 = vld [vmem:[%s200 + $0x950] sm:$0xff]
                %501 = vst [vmem:[%s201 + $0x4a8] sm:$0xff] %v500
                %v502 = vld [vmem:[%s200 + $0x960] sm:$0xff]
                %503 = vst [vmem:[%s201 + $0x4b0] sm:$0xff] %v502
                %v504 = vld [vmem:[%s200 + $0x970] sm:$0xff]
                %505 = vst [vmem:[%s201 + $0x4b8] sm:$0xff] %v504
                %v506 = vld [vmem:[%s200 + $0x980] sm:$0xff]
                %507 = vst [vmem:[%s201 + $0x4c0] sm:$0xff] %v506
                %v508 = vld [vmem:[%s200 + $0x990] sm:$0xff]
                %509 = vst [vmem:[%s201 + $0x4c8] sm:$0xff] %v508
                %v510 = vld [vmem:[%s200 + $0x9a0] sm:$0xff]
                %511 = vst [vmem:[%s201 + $0x4d0] sm:$0xff] %v510
                %v512 = vld [vmem:[%s200 + $0x9b0] sm:$0xff]
                %513 = vst [vmem:[%s201 + $0x4d8] sm:$0xff] %v512
                %v514 = vld [vmem:[%s200 + $0x9c0] sm:$0xff]
                %515 = vst [vmem:[%s201 + $0x4e0] sm:$0xff] %v514
                %v516 = vld [vmem:[%s200 + $0x9d0] sm:$0xff]
                %517 = vst [vmem:[%s201 + $0x4e8] sm:$0xff] %v516
                %v518 = vld [vmem:[%s200 + $0x9e0] sm:$0xff]
                %519 = vst [vmem:[%s201 + $0x4f0] sm:$0xff] %v518
                %v520 = vld [vmem:[%s200 + $0x9f0] sm:$0xff]
                %521 = vst [vmem:[%s201 + $0x4f8] sm:$0xff] %v520
                %v522 = vld [vmem:[%s200 + $0xa00] sm:$0xff]
                %523 = vst [vmem:[%s201 + $0x500] sm:$0xff] %v522
                %v524 = vld [vmem:[%s200 + $0xa10] sm:$0xff]
                %525 = vst [vmem:[%s201 + $0x508] sm:$0xff] %v524
                %v526 = vld [vmem:[%s200 + $0xa20] sm:$0xff]
                %527 = vst [vmem:[%s201 + $0x510] sm:$0xff] %v526
                %v528 = vld [vmem:[%s200 + $0xa30] sm:$0xff]
                %529 = vst [vmem:[%s201 + $0x518] sm:$0xff] %v528
                %v530 = vld [vmem:[%s200 + $0xa40] sm:$0xff]
                %531 = vst [vmem:[%s201 + $0x520] sm:$0xff] %v530
                %v532 = vld [vmem:[%s200 + $0xa50] sm:$0xff]
                %533 = vst [vmem:[%s201 + $0x528] sm:$0xff] %v532
                %v534 = vld [vmem:[%s200 + $0xa60] sm:$0xff]
                %535 = vst [vmem:[%s201 + $0x530] sm:$0xff] %v534
                %v536 = vld [vmem:[%s200 + $0xa70] sm:$0xff]
                %537 = vst [vmem:[%s201 + $0x538] sm:$0xff] %v536
                %v538 = vld [vmem:[%s200 + $0xa80] sm:$0xff]
                %539 = vst [vmem:[%s201 + $0x540] sm:$0xff] %v538
                %v540 = vld [vmem:[%s200 + $0xa90] sm:$0xff]
                %541 = vst [vmem:[%s201 + $0x548] sm:$0xff] %v540
                %v542 = vld [vmem:[%s200 + $0xaa0] sm:$0xff]
                %543 = vst [vmem:[%s201 + $0x550] sm:$0xff] %v542
                %v544 = vld [vmem:[%s200 + $0xab0] sm:$0xff]
                %545 = vst [vmem:[%s201 + $0x558] sm:$0xff] %v544
                %v546 = vld [vmem:[%s200 + $0xac0] sm:$0xff]
                %547 = vst [vmem:[%s201 + $0x560] sm:$0xff] %v546
                %v548 = vld [vmem:[%s200 + $0xad0] sm:$0xff]
                %549 = vst [vmem:[%s201 + $0x568] sm:$0xff] %v548
                %v550 = vld [vmem:[%s200 + $0xae0] sm:$0xff]
                %551 = vst [vmem:[%s201 + $0x570] sm:$0xff] %v550
                %v552 = vld [vmem:[%s200 + $0xaf0] sm:$0xff]
                %553 = vst [vmem:[%s201 + $0x578] sm:$0xff] %v552
                %v554 = vld [vmem:[%s200 + $0xb00] sm:$0xff]
                %555 = vst [vmem:[%s201 + $0x580] sm:$0xff] %v554
                %v556 = vld [vmem:[%s200 + $0xb10] sm:$0xff]
                %557 = vst [vmem:[%s201 + $0x588] sm:$0xff] %v556
                %v558 = vld [vmem:[%s200 + $0xb20] sm:$0xff]
                %559 = vst [vmem:[%s201 + $0x590] sm:$0xff] %v558
                %v560 = vld [vmem:[%s200 + $0xb30] sm:$0xff]
                %561 = vst [vmem:[%s201 + $0x598] sm:$0xff] %v560
                %v562 = vld [vmem:[%s200 + $0xb40] sm:$0xff]
                %563 = vst [vmem:[%s201 + $0x5a0] sm:$0xff] %v562
                %v564 = vld [vmem:[%s200 + $0xb50] sm:$0xff]
                %565 = vst [vmem:[%s201 + $0x5a8] sm:$0xff] %v564
                %v566 = vld [vmem:[%s200 + $0xb60] sm:$0xff]
                %567 = vst [vmem:[%s201 + $0x5b0] sm:$0xff] %v566
                %v568 = vld [vmem:[%s200 + $0xb70] sm:$0xff]
                %569 = vst [vmem:[%s201 + $0x5b8] sm:$0xff] %v568
                %v570 = vld [vmem:[%s200 + $0xb80] sm:$0xff]
                %571 = vst [vmem:[%s201 + $0x5c0] sm:$0xff] %v570
                %v572 = vld [vmem:[%s200 + $0xb90] sm:$0xff]
                %573 = vst [vmem:[%s201 + $0x5c8] sm:$0xff] %v572
                %v574 = vld [vmem:[%s200 + $0xba0] sm:$0xff]
                %575 = vst [vmem:[%s201 + $0x5d0] sm:$0xff] %v574
                %v576 = vld [vmem:[%s200 + $0xbb0] sm:$0xff]
                %577 = vst [vmem:[%s201 + $0x5d8] sm:$0xff] %v576
                %v578 = vld [vmem:[%s200 + $0xbc0] sm:$0xff]
                %579 = vst [vmem:[%s201 + $0x5e0] sm:$0xff] %v578
                %v580 = vld [vmem:[%s200 + $0xbd0] sm:$0xff]
                %581 = vst [vmem:[%s201 + $0x5e8] sm:$0xff] %v580
                %v582 = vld [vmem:[%s200 + $0xbe0] sm:$0xff]
                %583 = vst [vmem:[%s201 + $0x5f0] sm:$0xff] %v582
                %v584 = vld [vmem:[%s200 + $0xbf0] sm:$0xff]
                %585 = vst [vmem:[%s201 + $0x5f8] sm:$0xff] %v584
                %v586 = vld [vmem:[%s200 + $0xc00] sm:$0xff]
                %587 = vst [vmem:[%s201 + $0x600] sm:$0xff] %v586
                %v588 = vld [vmem:[%s200 + $0xc10] sm:$0xff]
                %589 = vst [vmem:[%s201 + $0x608] sm:$0xff] %v588
                %v590 = vld [vmem:[%s200 + $0xc20] sm:$0xff]
                %591 = vst [vmem:[%s201 + $0x610] sm:$0xff] %v590
                %v592 = vld [vmem:[%s200 + $0xc30] sm:$0xff]
                %593 = vst [vmem:[%s201 + $0x618] sm:$0xff] %v592
                %v594 = vld [vmem:[%s200 + $0xc40] sm:$0xff]
                %595 = vst [vmem:[%s201 + $0x620] sm:$0xff] %v594
                %v596 = vld [vmem:[%s200 + $0xc50] sm:$0xff]
                %597 = vst [vmem:[%s201 + $0x628] sm:$0xff] %v596
                %v598 = vld [vmem:[%s200 + $0xc60] sm:$0xff]
                %599 = vst [vmem:[%s201 + $0x630] sm:$0xff] %v598
                %v600 = vld [vmem:[%s200 + $0xc70] sm:$0xff]
                %601 = vst [vmem:[%s201 + $0x638] sm:$0xff] %v600
                %v602 = vld [vmem:[%s200 + $0xc80] sm:$0xff]
                %603 = vst [vmem:[%s201 + $0x640] sm:$0xff] %v602
                %v604 = vld [vmem:[%s200 + $0xc90] sm:$0xff]
                %605 = vst [vmem:[%s201 + $0x648] sm:$0xff] %v604
                %v606 = vld [vmem:[%s200 + $0xca0] sm:$0xff]
                %607 = vst [vmem:[%s201 + $0x650] sm:$0xff] %v606
                %v608 = vld [vmem:[%s200 + $0xcb0] sm:$0xff]
                %609 = vst [vmem:[%s201 + $0x658] sm:$0xff] %v608
                %v610 = vld [vmem:[%s200 + $0xcc0] sm:$0xff]
                %611 = vst [vmem:[%s201 + $0x660] sm:$0xff] %v610
                %v612 = vld [vmem:[%s200 + $0xcd0] sm:$0xff]
                %613 = vst [vmem:[%s201 + $0x668] sm:$0xff] %v612
                %v614 = vld [vmem:[%s200 + $0xce0] sm:$0xff]
                %615 = vst [vmem:[%s201 + $0x670] sm:$0xff] %v614
                %v616 = vld [vmem:[%s200 + $0xcf0] sm:$0xff]
                %617 = vst [vmem:[%s201 + $0x678] sm:$0xff] %v616
                %v618 = vld [vmem:[%s200 + $0xd00] sm:$0xff]
                %619 = vst [vmem:[%s201 + $0x680] sm:$0xff] %v618
                %v620 = vld [vmem:[%s200 + $0xd10] sm:$0xff]
                %621 = vst [vmem:[%s201 + $0x688] sm:$0xff] %v620
                %v622 = vld [vmem:[%s200 + $0xd20] sm:$0xff]
                %623 = vst [vmem:[%s201 + $0x690] sm:$0xff] %v622
                %v624 = vld [vmem:[%s200 + $0xd30] sm:$0xff]
                %625 = vst [vmem:[%s201 + $0x698] sm:$0xff] %v624
                %v626 = vld [vmem:[%s200 + $0xd40] sm:$0xff]
                %627 = vst [vmem:[%s201 + $0x6a0] sm:$0xff] %v626
                %v628 = vld [vmem:[%s200 + $0xd50] sm:$0xff]
                %629 = vst [vmem:[%s201 + $0x6a8] sm:$0xff] %v628
                %v630 = vld [vmem:[%s200 + $0xd60] sm:$0xff]
                %631 = vst [vmem:[%s201 + $0x6b0] sm:$0xff] %v630
                %v632 = vld [vmem:[%s200 + $0xd70] sm:$0xff]
                %633 = vst [vmem:[%s201 + $0x6b8] sm:$0xff] %v632
                %v634 = vld [vmem:[%s200 + $0xd80] sm:$0xff]
                %635 = vst [vmem:[%s201 + $0x6c0] sm:$0xff] %v634
                %v636 = vld [vmem:[%s200 + $0xd90] sm:$0xff]
                %637 = vst [vmem:[%s201 + $0x6c8] sm:$0xff] %v636
                %v638 = vld [vmem:[%s200 + $0xda0] sm:$0xff]
                %639 = vst [vmem:[%s201 + $0x6d0] sm:$0xff] %v638
                %v640 = vld [vmem:[%s200 + $0xdb0] sm:$0xff]
                %641 = vst [vmem:[%s201 + $0x6d8] sm:$0xff] %v640
                %v642 = vld [vmem:[%s200 + $0xdc0] sm:$0xff]
                %643 = vst [vmem:[%s201 + $0x6e0] sm:$0xff] %v642
                %v644 = vld [vmem:[%s200 + $0xdd0] sm:$0xff]
                %645 = vst [vmem:[%s201 + $0x6e8] sm:$0xff] %v644
                %v646 = vld [vmem:[%s200 + $0xde0] sm:$0xff]
                %647 = vst [vmem:[%s201 + $0x6f0] sm:$0xff] %v646
                %v648 = vld [vmem:[%s200 + $0xdf0] sm:$0xff]
                %649 = vst [vmem:[%s201 + $0x6f8] sm:$0xff] %v648
                %v650 = vld [vmem:[%s200 + $0xe00] sm:$0xff]
                %651 = vst [vmem:[%s201 + $0x700] sm:$0xff] %v650
                %v652 = vld [vmem:[%s200 + $0xe10] sm:$0xff]
                %653 = vst [vmem:[%s201 + $0x708] sm:$0xff] %v652
                %v654 = vld [vmem:[%s200 + $0xe20] sm:$0xff]
                %655 = vst [vmem:[%s201 + $0x710] sm:$0xff] %v654
                %v656 = vld [vmem:[%s200 + $0xe30] sm:$0xff]
                %657 = vst [vmem:[%s201 + $0x718] sm:$0xff] %v656
                %v658 = vld [vmem:[%s200 + $0xe40] sm:$0xff]
                %659 = vst [vmem:[%s201 + $0x720] sm:$0xff] %v658
                %v660 = vld [vmem:[%s200 + $0xe50] sm:$0xff]
                %661 = vst [vmem:[%s201 + $0x728] sm:$0xff] %v660
                %v662 = vld [vmem:[%s200 + $0xe60] sm:$0xff]
                %663 = vst [vmem:[%s201 + $0x730] sm:$0xff] %v662
                %v664 = vld [vmem:[%s200 + $0xe70] sm:$0xff]
                %665 = vst [vmem:[%s201 + $0x738] sm:$0xff] %v664
                %v666 = vld [vmem:[%s200 + $0xe80] sm:$0xff]
                %667 = vst [vmem:[%s201 + $0x740] sm:$0xff] %v666
                %v668 = vld [vmem:[%s200 + $0xe90] sm:$0xff]
                %669 = vst [vmem:[%s201 + $0x748] sm:$0xff] %v668
                %v670 = vld [vmem:[%s200 + $0xea0] sm:$0xff]
                %671 = vst [vmem:[%s201 + $0x750] sm:$0xff] %v670
                %v672 = vld [vmem:[%s200 + $0xeb0] sm:$0xff]
                %673 = vst [vmem:[%s201 + $0x758] sm:$0xff] %v672
                %v674 = vld [vmem:[%s200 + $0xec0] sm:$0xff]
                %675 = vst [vmem:[%s201 + $0x760] sm:$0xff] %v674
                %v676 = vld [vmem:[%s200 + $0xed0] sm:$0xff]
                %677 = vst [vmem:[%s201 + $0x768] sm:$0xff] %v676
                %v678 = vld [vmem:[%s200 + $0xee0] sm:$0xff]
                %679 = vst [vmem:[%s201 + $0x770] sm:$0xff] %v678
                %v680 = vld [vmem:[%s200 + $0xef0] sm:$0xff]
                %681 = vst [vmem:[%s201 + $0x778] sm:$0xff] %v680
                %v682 = vld [vmem:[%s200 + $0xf00] sm:$0xff]
                %683 = vst [vmem:[%s201 + $0x780] sm:$0xff] %v682
                %v684 = vld [vmem:[%s200 + $0xf10] sm:$0xff]
                %685 = vst [vmem:[%s201 + $0x788] sm:$0xff] %v684
                %v686 = vld [vmem:[%s200 + $0xf20] sm:$0xff]
                %687 = vst [vmem:[%s201 + $0x790] sm:$0xff] %v686
                %v688 = vld [vmem:[%s200 + $0xf30] sm:$0xff]
                %689 = vst [vmem:[%s201 + $0x798] sm:$0xff] %v688
                %v690 = vld [vmem:[%s200 + $0xf40] sm:$0xff]
                %691 = vst [vmem:[%s201 + $0x7a0] sm:$0xff] %v690
                %v692 = vld [vmem:[%s200 + $0xf50] sm:$0xff]
                %693 = vst [vmem:[%s201 + $0x7a8] sm:$0xff] %v692
                %v694 = vld [vmem:[%s200 + $0xf60] sm:$0xff]
                %695 = vst [vmem:[%s201 + $0x7b0] sm:$0xff] %v694
                %v696 = vld [vmem:[%s200 + $0xf70] sm:$0xff]
                %697 = vst [vmem:[%s201 + $0x7b8] sm:$0xff] %v696
                %v698 = vld [vmem:[%s200 + $0xf80] sm:$0xff]
                %699 = vst [vmem:[%s201 + $0x7c0] sm:$0xff] %v698
                %v700 = vld [vmem:[%s200 + $0xf90] sm:$0xff]
                %701 = vst [vmem:[%s201 + $0x7c8] sm:$0xff] %v700
                %v702 = vld [vmem:[%s200 + $0xfa0] sm:$0xff]
                %703 = vst [vmem:[%s201 + $0x7d0] sm:$0xff] %v702
                %v704 = vld [vmem:[%s200 + $0xfb0] sm:$0xff]
                %705 = vst [vmem:[%s201 + $0x7d8] sm:$0xff] %v704
                %v706 = vld [vmem:[%s200 + $0xfc0] sm:$0xff]
                %707 = vst [vmem:[%s201 + $0x7e0] sm:$0xff] %v706
                %v708 = vld [vmem:[%s200 + $0xfd0] sm:$0xff]
                %709 = vst [vmem:[%s201 + $0x7e8] sm:$0xff] %v708
                %v710 = vld [vmem:[%s200 + $0xfe0] sm:$0xff]
                %711 = vst [vmem:[%s201 + $0x7f0] sm:$0xff] %v710
                %v712 = vld [vmem:[%s200 + $0xff0] sm:$0xff]
                %713 = vst [vmem:[%s201 + $0x7f8] sm:$0xff] %v712
                %v714 = vld [vmem:[%s200 + $0x1000] sm:$0xff]
                %715 = vst [vmem:[%s201 + $0x800] sm:$0xff] %v714
                %v716 = vld [vmem:[%s200 + $0x1010] sm:$0xff]
                %717 = vst [vmem:[%s201 + $0x808] sm:$0xff] %v716
                %v718 = vld [vmem:[%s200 + $0x1020] sm:$0xff]
                %719 = vst [vmem:[%s201 + $0x810] sm:$0xff] %v718
                %v720 = vld [vmem:[%s200 + $0x1030] sm:$0xff]
                %721 = vst [vmem:[%s201 + $0x818] sm:$0xff] %v720
                %v722 = vld [vmem:[%s200 + $0x1040] sm:$0xff]
                %723 = vst [vmem:[%s201 + $0x820] sm:$0xff] %v722
                %v724 = vld [vmem:[%s200 + $0x1050] sm:$0xff]
                %725 = vst [vmem:[%s201 + $0x828] sm:$0xff] %v724
                %v726 = vld [vmem:[%s200 + $0x1060] sm:$0xff]
                %727 = vst [vmem:[%s201 + $0x830] sm:$0xff] %v726
                %v728 = vld [vmem:[%s200 + $0x1070] sm:$0xff]
                %729 = vst [vmem:[%s201 + $0x838] sm:$0xff] %v728
                %v730 = vld [vmem:[%s200 + $0x1080] sm:$0xff]
                %731 = vst [vmem:[%s201 + $0x840] sm:$0xff] %v730
                %v732 = vld [vmem:[%s200 + $0x1090] sm:$0xff]
                %733 = vst [vmem:[%s201 + $0x848] sm:$0xff] %v732
                %v734 = vld [vmem:[%s200 + $0x10a0] sm:$0xff]
                %735 = vst [vmem:[%s201 + $0x850] sm:$0xff] %v734
                %v736 = vld [vmem:[%s200 + $0x10b0] sm:$0xff]
                %737 = vst [vmem:[%s201 + $0x858] sm:$0xff] %v736
                %v738 = vld [vmem:[%s200 + $0x10c0] sm:$0xff]
                %739 = vst [vmem:[%s201 + $0x860] sm:$0xff] %v738
                %v740 = vld [vmem:[%s200 + $0x10d0] sm:$0xff]
                %741 = vst [vmem:[%s201 + $0x868] sm:$0xff] %v740
                %v742 = vld [vmem:[%s200 + $0x10e0] sm:$0xff]
                %743 = vst [vmem:[%s201 + $0x870] sm:$0xff] %v742
                %v744 = vld [vmem:[%s200 + $0x10f0] sm:$0xff]
                %745 = vst [vmem:[%s201 + $0x878] sm:$0xff] %v744
                %v746 = vld [vmem:[%s200 + $0x1100] sm:$0xff]
                %747 = vst [vmem:[%s201 + $0x880] sm:$0xff] %v746
                %v748 = vld [vmem:[%s200 + $0x1110] sm:$0xff]
                %749 = vst [vmem:[%s201 + $0x888] sm:$0xff] %v748
                %v750 = vld [vmem:[%s200 + $0x1120] sm:$0xff]
                %751 = vst [vmem:[%s201 + $0x890] sm:$0xff] %v750
                %v752 = vld [vmem:[%s200 + $0x1130] sm:$0xff]
                %753 = vst [vmem:[%s201 + $0x898] sm:$0xff] %v752
                %v754 = vld [vmem:[%s200 + $0x1140] sm:$0xff]
                %755 = vst [vmem:[%s201 + $0x8a0] sm:$0xff] %v754
                %v756 = vld [vmem:[%s200 + $0x1150] sm:$0xff]
                %757 = vst [vmem:[%s201 + $0x8a8] sm:$0xff] %v756
                %v758 = vld [vmem:[%s200 + $0x1160] sm:$0xff]
                %759 = vst [vmem:[%s201 + $0x8b0] sm:$0xff] %v758
                %v760 = vld [vmem:[%s200 + $0x1170] sm:$0xff]
                %761 = vst [vmem:[%s201 + $0x8b8] sm:$0xff] %v760
                %v762 = vld [vmem:[%s200 + $0x1180] sm:$0xff]
                %763 = vst [vmem:[%s201 + $0x8c0] sm:$0xff] %v762
                %v764 = vld [vmem:[%s200 + $0x1190] sm:$0xff]
                %765 = vst [vmem:[%s201 + $0x8c8] sm:$0xff] %v764
                %v766 = vld [vmem:[%s200 + $0x11a0] sm:$0xff]
                %767 = vst [vmem:[%s201 + $0x8d0] sm:$0xff] %v766
                %v768 = vld [vmem:[%s200 + $0x11b0] sm:$0xff]
                %769 = vst [vmem:[%s201 + $0x8d8] sm:$0xff] %v768
                %v770 = vld [vmem:[%s200 + $0x11c0] sm:$0xff]
                %771 = vst [vmem:[%s201 + $0x8e0] sm:$0xff] %v770
                %v772 = vld [vmem:[%s200 + $0x11d0] sm:$0xff]
                %773 = vst [vmem:[%s201 + $0x8e8] sm:$0xff] %v772
                %v774 = vld [vmem:[%s200 + $0x11e0] sm:$0xff]
                %775 = vst [vmem:[%s201 + $0x8f0] sm:$0xff] %v774
                %v776 = vld [vmem:[%s200 + $0x11f0] sm:$0xff]
                %777 = vst [vmem:[%s201 + $0x8f8] sm:$0xff] %v776
              $region45: #{temp_embed_forward.9} parent=39 // loop_footer
                %s199 = sadd.s32 1, %s195
              $region46: #{temp_embed_forward.9} parent=39 // loop_footer_branch
                %194 = sbr.rel target = $region42
              $region47: #{temp_embed_forward.9} parent=39 // loop_exit
                _
            $region40: #{temp_embed_forward.9} parent=31 // pred_fallthru
              _
          $region32: #{temp_embed_forward.9} parent=27 // pred_fallthru
            _
          %1366 = vnop
        $region28: #{temp_embed_forward.9} parent=23 // pred_fallthru
          _
        // Predicated region
        $region63: #{temp_embed_forward.9} parent=23 // pred_check
          %p1367 = pneg %p78
        $region64: #{temp_embed_forward.9} parent=23 // pred_check_branch
          %1369 = sbr.rel (%p1367) target = $region66
        $region65: #{temp_embed_forward.9} parent=23 // pred_region
          %s1370 = smul.u32 2, %s11
          %p1371 = scmp.lt.s32.totalorder %s1370, 3
          %s1372 = scalar_select %p1371, %s1370, 3
          %s1373 = scalar_lea.vmem %s2, %s1372
          %s1374 = smul.u32 2, %s11
        $region66: #{temp_embed_forward.9} parent=23 // pred_fallthru
          _
        // Predicated region
        $region67: #{temp_embed_forward.9} parent=23 // pred_check
          %p1375 = pneg %p104
        $region68: #{temp_embed_forward.9} parent=23 // pred_check_branch
          %1377 = sbr.rel (%p1375) target = $region70
        $region69: #{temp_embed_forward.9} parent=23 // pred_region
          %s1378 = smul.u32 32, %s11
          %p1379 = scmp.lt.s32.totalorder %s1378, 63
          %s1380 = scalar_select %p1379, %s1378, 63
          %s1381 = smul.addr %s1380, 4
          %s1382 = scalar_lea.vmem %s3, %s1381
          %s1383 = smul.u32 32, %s11
        $region70: #{temp_embed_forward.9} parent=23 // pred_fallthru
          _
      $region24: #{temp_embed_forward.9} parent=5 // pred_fallthru
        _
      %p1384 = scmp.le.s32.totalorder 1, %s11
      %p1385 = scmp.lt.s32.totalorder %s11, 3
      %p1386 = pnand %p1384, %p1385
      %p1387 = pneg %p1386
      // Predicated region
      $region71: #{temp_embed_forward.9} parent=5 // pred_check
        _
      $region72: #{temp_embed_forward.9} parent=5 // pred_check_branch
        %1389 = sbr.rel (%p1386) target = $region74
      $region73: #{temp_embed_forward.9} parent=5 // pred_region
        %s1390 = ssub.s32 %s11, 1
        %s1391 = sand.u32 %s45, 1
        %s1392 = sand.u32 %s45, 1
        %s1393 = smul.addr %s1392, 2304
        %s1394 = scalar_lea.vmem [#allocation3], %s1393
        // Predicated region
        $region75: #{temp_embed_forward.9} parent=73 // pred_check
          %p1395 = pneg %p58
        $region76: #{temp_embed_forward.9} parent=73 // pred_check_branch
          %1397 = sbr.rel (%p1395) target = $region78
        $region77: #{temp_embed_forward.9} parent=73 // pred_region
          _
        $region78: #{temp_embed_forward.9} parent=73 // pred_fallthru
          _
        %p1398 = pneg %p32
        %p1399 = pneg %p29
        %s1400 = sand.u32 %s45, 1
        %s1401 = sand.u32 %s45, 1
        %s1402 = smul.addr %s1401, 2304
        %s1403 = scalar_lea.vmem [#allocation3], %s1402
        %p1404 = pneg %p58
        %p1405 = pneg %p55
        %s1406 = smul.u32 2, %s16
        %p1407 = scmp.lt.s32.totalorder %s1406, 3
        %s1408 = scalar_select %p1407, %s1406, 3
        %s1409 = scalar_lea.vmem %s2, %s1408
        %p1410 = pneg %p84
        %p1411 = pneg %p81
        %s1412 = smul.u32 32, %s16
        %p1413 = scmp.lt.s32.totalorder %s1412, 63
        %s1414 = scalar_select %p1413, %s1412, 63
        %s1415 = smul.addr %s1414, 4
        %s1416 = scalar_lea.vmem %s3, %s1415
        %p1417 = pneg %p110
        %p1418 = pneg %p107
        %p1419 = pneg %p131
        %p1420 = pneg %p128
        %p1421 = pneg %p152
        %p1422 = pneg %p149
        %s1423 = smul.u32 2, %s16
        %s1424 = smul.u32 2, %s16
        %p1425 = scmp.lt.s32.totalorder %s1424, 3
        %s1426 = scalar_select %p1425, %s1424, 3
        %s1427 = scalar_lea.vmem %s2, %s1426
        %s1428 = smul.u32 2, %s16
        %s1429 = smul.u32 32, %s16
        %p1430 = scmp.lt.s32.totalorder %s1429, 63
        %s1431 = scalar_select %p1430, %s1429, 63
        %s1432 = smul.addr %s1431, 4
        %s1433 = scalar_lea.vmem %s3, %s1432
        %s1434 = smul.u32 32, %s16
        %p1436 = scmp.eq.s32.totalorder %s16, 0
        // Predicated region
        $region79: #{temp_embed_forward.9} parent=73 // pred_check
          %p1437 = pneg %p1436
        $region80: #{temp_embed_forward.9} parent=73 // pred_check_branch
          %1439 = sbr.rel (%p1437) target = $region82
        $region81: #{temp_embed_forward.9} parent=73 // pred_region
          %1440 = vst [vmem:[#allocation2] sm:$0xff] 0.0
        $region82: #{temp_embed_forward.9} parent=73 // pred_fallthru
          _
        %v1441 = vld [vmem:[%s0] sm:$0xff]
        %v1442 = vld [vmem:[%s0 + $0x8] sm:$0xff]
        %v1443 = vld [vmem:[%s0 + $0x10] sm:$0xff]
        %v1444 = vld [vmem:[%s0 + $0x18] sm:$0xff]
        %v1445 = vld [vmem:[%s0 + $0x20] sm:$0xff]
        %v1446 = vld [vmem:[%s0 + $0x28] sm:$0xff]
        %v1447 = vld [vmem:[%s0 + $0x30] sm:$0xff]
        %v1448 = vld [vmem:[%s0 + $0x38] sm:$0xff]
        %v1449 = vld [vmem:[%s0 + $0x40] sm:$0xff]
        %v1450 = vld [vmem:[%s1394] sm:$0xff]
        %v1451 = vld [vmem:[%s1394 + $0x8] sm:$0xff]
        %v1452 = vld [vmem:[%s1394 + $0x10] sm:$0xff]
        %v1453 = vld [vmem:[%s1394 + $0x18] sm:$0xff]
        %v1454 = vld [vmem:[%s1394 + $0x20] sm:$0xff]
        %v1455 = vld [vmem:[%s1394 + $0x28] sm:$0xff]
        %v1456 = vld [vmem:[%s1394 + $0x30] sm:$0xff]
        %v1457 = vld [vmem:[%s1394 + $0x38] sm:$0xff]
        %v1458 = vld [vmem:[%s1394 + $0x40] sm:$0xff]
        %v1459 = vld [vmem:[%s1394 + $0x48] sm:$0xff]
        %v1460 = vld [vmem:[%s1394 + $0x50] sm:$0xff]
        %v1461 = vld [vmem:[%s1394 + $0x58] sm:$0xff]
        %v1462 = vld [vmem:[%s1394 + $0x60] sm:$0xff]
        %v1463 = vld [vmem:[%s1394 + $0x68] sm:$0xff]
        %v1464 = vld [vmem:[%s1394 + $0x70] sm:$0xff]
        %v1465 = vld [vmem:[%s1394 + $0x78] sm:$0xff]
        %v1466 = vld [vmem:[%s1394 + $0x80] sm:$0xff]
        %v1467 = vld [vmem:[%s1394 + $0x88] sm:$0xff]
        %v1468 = vld [vmem:[%s1394 + $0x90] sm:$0xff]
        %v1469 = vld [vmem:[%s1394 + $0x98] sm:$0xff]
        %v1470 = vld [vmem:[%s1394 + $0xa0] sm:$0xff]
        %v1471 = vld [vmem:[%s1394 + $0xa8] sm:$0xff]
        %v1472 = vld [vmem:[%s1394 + $0xb0] sm:$0xff]
        %v1473 = vld [vmem:[%s1394 + $0xb8] sm:$0xff]
        %v1474 = vld [vmem:[%s1394 + $0xc0] sm:$0xff]
        %v1475 = vld [vmem:[%s1394 + $0xc8] sm:$0xff]
        %v1476 = vld [vmem:[%s1394 + $0xd0] sm:$0xff]
        %v1477 = vld [vmem:[%s1394 + $0xd8] sm:$0xff]
        %v1478 = vld [vmem:[%s1394 + $0xe0] sm:$0xff]
        %v1479 = vld [vmem:[%s1394 + $0xe8] sm:$0xff]
        %v1480 = vld [vmem:[%s1394 + $0xf0] sm:$0xff]
        %v1481 = vld [vmem:[%s1394 + $0xf8] sm:$0xff]
        %v1482 = vld [vmem:[%s1394 + $0x100] sm:$0xff]
        %v1483 = vld [vmem:[%s1394 + $0x108] sm:$0xff]
        %v1484 = vld [vmem:[%s1394 + $0x110] sm:$0xff]
        %v1485 = vld [vmem:[%s1394 + $0x118] sm:$0xff]
        %v1486 = vld [vmem:[%s1394 + $0x120] sm:$0xff]
        %v1487 = vld [vmem:[%s1394 + $0x128] sm:$0xff]
        %v1488 = vld [vmem:[%s1394 + $0x130] sm:$0xff]
        %v1489 = vld [vmem:[%s1394 + $0x138] sm:$0xff]
        %v1490 = vld [vmem:[%s1394 + $0x140] sm:$0xff]
        %v1491 = vld [vmem:[%s1394 + $0x148] sm:$0xff]
        %v1492 = vld [vmem:[%s1394 + $0x150] sm:$0xff]
        %v1493 = vld [vmem:[%s1394 + $0x158] sm:$0xff]
        %v1494 = vld [vmem:[%s1394 + $0x160] sm:$0xff]
        %v1495 = vld [vmem:[%s1394 + $0x168] sm:$0xff]
        %v1496 = vld [vmem:[%s1394 + $0x170] sm:$0xff]
        %v1497 = vld [vmem:[%s1394 + $0x178] sm:$0xff]
        %v1498 = vld [vmem:[%s1394 + $0x180] sm:$0xff]
        %v1499 = vld [vmem:[%s1394 + $0x188] sm:$0xff]
        %v1500 = vld [vmem:[%s1394 + $0x190] sm:$0xff]
        %v1501 = vld [vmem:[%s1394 + $0x198] sm:$0xff]
        %v1502 = vld [vmem:[%s1394 + $0x1a0] sm:$0xff]
        %v1503 = vld [vmem:[%s1394 + $0x1a8] sm:$0xff]
        %v1504 = vld [vmem:[%s1394 + $0x1b0] sm:$0xff]
        %v1505 = vld [vmem:[%s1394 + $0x1b8] sm:$0xff]
        %v1506 = vld [vmem:[%s1394 + $0x1c0] sm:$0xff]
        %v1507 = vld [vmem:[%s1394 + $0x1c8] sm:$0xff]
        %v1508 = vld [vmem:[%s1394 + $0x1d0] sm:$0xff]
        %v1509 = vld [vmem:[%s1394 + $0x1d8] sm:$0xff]
        %v1510 = vld [vmem:[%s1394 + $0x1e0] sm:$0xff]
        %v1511 = vld [vmem:[%s1394 + $0x1e8] sm:$0xff]
        %v1512 = vld [vmem:[%s1394 + $0x1f0] sm:$0xff]
        %v1513 = vld [vmem:[%s1394 + $0x1f8] sm:$0xff]
        %v1514 = vld [vmem:[%s1394 + $0x200] sm:$0xff]
        %v1515 = vld [vmem:[%s1394 + $0x208] sm:$0xff]
        %v1516 = vld [vmem:[%s1394 + $0x210] sm:$0xff]
        %v1517 = vld [vmem:[%s1394 + $0x218] sm:$0xff]
        %v1518 = vld [vmem:[%s1394 + $0x220] sm:$0xff]
        %v1519 = vld [vmem:[%s1394 + $0x228] sm:$0xff]
        %v1520 = vld [vmem:[%s1394 + $0x230] sm:$0xff]
        %v1521 = vld [vmem:[%s1394 + $0x238] sm:$0xff]
        %v1522 = vld [vmem:[%s1394 + $0x240] sm:$0xff]
        %v1523 = vld [vmem:[%s1394 + $0x248] sm:$0xff]
        %v1524 = vld [vmem:[%s1394 + $0x250] sm:$0xff]
        %v1525 = vld [vmem:[%s1394 + $0x258] sm:$0xff]
        %v1526 = vld [vmem:[%s1394 + $0x260] sm:$0xff]
        %v1527 = vld [vmem:[%s1394 + $0x268] sm:$0xff]
        %v1528 = vld [vmem:[%s1394 + $0x270] sm:$0xff]
        %v1529 = vld [vmem:[%s1394 + $0x278] sm:$0xff]
        %v1530 = vld [vmem:[%s1394 + $0x280] sm:$0xff]
        %v1531 = vld [vmem:[%s1394 + $0x288] sm:$0xff]
        %v1532 = vld [vmem:[%s1394 + $0x290] sm:$0xff]
        %v1533 = vld [vmem:[%s1394 + $0x298] sm:$0xff]
        %v1534 = vld [vmem:[%s1394 + $0x2a0] sm:$0xff]
        %v1535 = vld [vmem:[%s1394 + $0x2a8] sm:$0xff]
        %v1536 = vld [vmem:[%s1394 + $0x2b0] sm:$0xff]
        %v1537 = vld [vmem:[%s1394 + $0x2b8] sm:$0xff]
        %v1538 = vld [vmem:[%s1394 + $0x2c0] sm:$0xff]
        %v1539 = vld [vmem:[%s1394 + $0x2c8] sm:$0xff]
        %v1540 = vld [vmem:[%s1394 + $0x2d0] sm:$0xff]
        %v1541 = vld [vmem:[%s1394 + $0x2d8] sm:$0xff]
        %v1542 = vld [vmem:[%s1394 + $0x2e0] sm:$0xff]
        %v1543 = vld [vmem:[%s1394 + $0x2e8] sm:$0xff]
        %v1544 = vld [vmem:[%s1394 + $0x2f0] sm:$0xff]
        %v1545 = vld [vmem:[%s1394 + $0x2f8] sm:$0xff]
        %v1546 = vld [vmem:[%s1394 + $0x300] sm:$0xff]
        %v1547 = vld [vmem:[%s1394 + $0x308] sm:$0xff]
        %v1548 = vld [vmem:[%s1394 + $0x310] sm:$0xff]
        %v1549 = vld [vmem:[%s1394 + $0x318] sm:$0xff]
        %v1550 = vld [vmem:[%s1394 + $0x320] sm:$0xff]
        %v1551 = vld [vmem:[%s1394 + $0x328] sm:$0xff]
        %v1552 = vld [vmem:[%s1394 + $0x330] sm:$0xff]
        %v1553 = vld [vmem:[%s1394 + $0x338] sm:$0xff]
        %v1554 = vld [vmem:[%s1394 + $0x340] sm:$0xff]
        %v1555 = vld [vmem:[%s1394 + $0x348] sm:$0xff]
        %v1556 = vld [vmem:[%s1394 + $0x350] sm:$0xff]
        %v1557 = vld [vmem:[%s1394 + $0x358] sm:$0xff]
        %v1558 = vld [vmem:[%s1394 + $0x360] sm:$0xff]
        %v1559 = vld [vmem:[%s1394 + $0x368] sm:$0xff]
        %v1560 = vld [vmem:[%s1394 + $0x370] sm:$0xff]
        %v1561 = vld [vmem:[%s1394 + $0x378] sm:$0xff]
        %v1562 = vld [vmem:[%s1394 + $0x380] sm:$0xff]
        %v1563 = vld [vmem:[%s1394 + $0x388] sm:$0xff]
        %v1564 = vld [vmem:[%s1394 + $0x390] sm:$0xff]
        %v1565 = vld [vmem:[%s1394 + $0x398] sm:$0xff]
        %v1566 = vld [vmem:[%s1394 + $0x3a0] sm:$0xff]
        %v1567 = vld [vmem:[%s1394 + $0x3a8] sm:$0xff]
        %v1568 = vld [vmem:[%s1394 + $0x3b0] sm:$0xff]
        %v1569 = vld [vmem:[%s1394 + $0x3b8] sm:$0xff]
        %v1570 = vld [vmem:[%s1394 + $0x3c0] sm:$0xff]
        %v1571 = vld [vmem:[%s1394 + $0x3c8] sm:$0xff]
        %v1572 = vld [vmem:[%s1394 + $0x3d0] sm:$0xff]
        %v1573 = vld [vmem:[%s1394 + $0x3d8] sm:$0xff]
        %v1574 = vld [vmem:[%s1394 + $0x3e0] sm:$0xff]
        %v1575 = vld [vmem:[%s1394 + $0x3e8] sm:$0xff]
        %v1576 = vld [vmem:[%s1394 + $0x3f0] sm:$0xff]
        %v1577 = vld [vmem:[%s1394 + $0x3f8] sm:$0xff]
        %v1578 = vld [vmem:[%s1394 + $0x400] sm:$0xff]
        %v1579 = vld [vmem:[%s1394 + $0x408] sm:$0xff]
        %v1580 = vld [vmem:[%s1394 + $0x410] sm:$0xff]
        %v1581 = vld [vmem:[%s1394 + $0x418] sm:$0xff]
        %v1582 = vld [vmem:[%s1394 + $0x420] sm:$0xff]
        %v1583 = vld [vmem:[%s1394 + $0x428] sm:$0xff]
        %v1584 = vld [vmem:[%s1394 + $0x430] sm:$0xff]
        %v1585 = vld [vmem:[%s1394 + $0x438] sm:$0xff]
        %v1586 = vld [vmem:[%s1394 + $0x440] sm:$0xff]
        %v1587 = vld [vmem:[%s1394 + $0x448] sm:$0xff]
        %v1588 = vld [vmem:[%s1394 + $0x450] sm:$0xff]
        %v1589 = vld [vmem:[%s1394 + $0x458] sm:$0xff]
        %v1590 = vld [vmem:[%s1394 + $0x460] sm:$0xff]
        %v1591 = vld [vmem:[%s1394 + $0x468] sm:$0xff]
        %v1592 = vld [vmem:[%s1394 + $0x470] sm:$0xff]
        %v1593 = vld [vmem:[%s1394 + $0x478] sm:$0xff]
        %v1594 = vld [vmem:[%s1394 + $0x480] sm:$0xff]
        %v1595 = vld [vmem:[%s1394 + $0x488] sm:$0xff]
        %v1596 = vld [vmem:[%s1394 + $0x490] sm:$0xff]
        %v1597 = vld [vmem:[%s1394 + $0x498] sm:$0xff]
        %v1598 = vld [vmem:[%s1394 + $0x4a0] sm:$0xff]
        %v1599 = vld [vmem:[%s1394 + $0x4a8] sm:$0xff]
        %v1600 = vld [vmem:[%s1394 + $0x4b0] sm:$0xff]
        %v1601 = vld [vmem:[%s1394 + $0x4b8] sm:$0xff]
        %v1602 = vld [vmem:[%s1394 + $0x4c0] sm:$0xff]
        %v1603 = vld [vmem:[%s1394 + $0x4c8] sm:$0xff]
        %v1604 = vld [vmem:[%s1394 + $0x4d0] sm:$0xff]
        %v1605 = vld [vmem:[%s1394 + $0x4d8] sm:$0xff]
        %v1606 = vld [vmem:[%s1394 + $0x4e0] sm:$0xff]
        %v1607 = vld [vmem:[%s1394 + $0x4e8] sm:$0xff]
        %v1608 = vld [vmem:[%s1394 + $0x4f0] sm:$0xff]
        %v1609 = vld [vmem:[%s1394 + $0x4f8] sm:$0xff]
        %v1610 = vld [vmem:[%s1394 + $0x500] sm:$0xff]
        %v1611 = vld [vmem:[%s1394 + $0x508] sm:$0xff]
        %v1612 = vld [vmem:[%s1394 + $0x510] sm:$0xff]
        %v1613 = vld [vmem:[%s1394 + $0x518] sm:$0xff]
        %v1614 = vld [vmem:[%s1394 + $0x520] sm:$0xff]
        %v1615 = vld [vmem:[%s1394 + $0x528] sm:$0xff]
        %v1616 = vld [vmem:[%s1394 + $0x530] sm:$0xff]
        %v1617 = vld [vmem:[%s1394 + $0x538] sm:$0xff]
        %v1618 = vld [vmem:[%s1394 + $0x540] sm:$0xff]
        %v1619 = vld [vmem:[%s1394 + $0x548] sm:$0xff]
        %v1620 = vld [vmem:[%s1394 + $0x550] sm:$0xff]
        %v1621 = vld [vmem:[%s1394 + $0x558] sm:$0xff]
        %v1622 = vld [vmem:[%s1394 + $0x560] sm:$0xff]
        %v1623 = vld [vmem:[%s1394 + $0x568] sm:$0xff]
        %v1624 = vld [vmem:[%s1394 + $0x570] sm:$0xff]
        %v1625 = vld [vmem:[%s1394 + $0x578] sm:$0xff]
        %v1626 = vld [vmem:[%s1394 + $0x580] sm:$0xff]
        %v1627 = vld [vmem:[%s1394 + $0x588] sm:$0xff]
        %v1628 = vld [vmem:[%s1394 + $0x590] sm:$0xff]
        %v1629 = vld [vmem:[%s1394 + $0x598] sm:$0xff]
        %v1630 = vld [vmem:[%s1394 + $0x5a0] sm:$0xff]
        %v1631 = vld [vmem:[%s1394 + $0x5a8] sm:$0xff]
        %v1632 = vld [vmem:[%s1394 + $0x5b0] sm:$0xff]
        %v1633 = vld [vmem:[%s1394 + $0x5b8] sm:$0xff]
        %v1634 = vld [vmem:[%s1394 + $0x5c0] sm:$0xff]
        %v1635 = vld [vmem:[%s1394 + $0x5c8] sm:$0xff]
        %v1636 = vld [vmem:[%s1394 + $0x5d0] sm:$0xff]
        %v1637 = vld [vmem:[%s1394 + $0x5d8] sm:$0xff]
        %v1638 = vld [vmem:[%s1394 + $0x5e0] sm:$0xff]
        %v1639 = vld [vmem:[%s1394 + $0x5e8] sm:$0xff]
        %v1640 = vld [vmem:[%s1394 + $0x5f0] sm:$0xff]
        %v1641 = vld [vmem:[%s1394 + $0x5f8] sm:$0xff]
        %v1642 = vld [vmem:[%s1394 + $0x600] sm:$0xff]
        %v1643 = vld [vmem:[%s1394 + $0x608] sm:$0xff]
        %v1644 = vld [vmem:[%s1394 + $0x610] sm:$0xff]
        %v1645 = vld [vmem:[%s1394 + $0x618] sm:$0xff]
        %v1646 = vld [vmem:[%s1394 + $0x620] sm:$0xff]
        %v1647 = vld [vmem:[%s1394 + $0x628] sm:$0xff]
        %v1648 = vld [vmem:[%s1394 + $0x630] sm:$0xff]
        %v1649 = vld [vmem:[%s1394 + $0x638] sm:$0xff]
        %v1650 = vld [vmem:[%s1394 + $0x640] sm:$0xff]
        %v1651 = vld [vmem:[%s1394 + $0x648] sm:$0xff]
        %v1652 = vld [vmem:[%s1394 + $0x650] sm:$0xff]
        %v1653 = vld [vmem:[%s1394 + $0x658] sm:$0xff]
        %v1654 = vld [vmem:[%s1394 + $0x660] sm:$0xff]
        %v1655 = vld [vmem:[%s1394 + $0x668] sm:$0xff]
        %v1656 = vld [vmem:[%s1394 + $0x670] sm:$0xff]
        %v1657 = vld [vmem:[%s1394 + $0x678] sm:$0xff]
        %v1658 = vld [vmem:[%s1394 + $0x680] sm:$0xff]
        %v1659 = vld [vmem:[%s1394 + $0x688] sm:$0xff]
        %v1660 = vld [vmem:[%s1394 + $0x690] sm:$0xff]
        %v1661 = vld [vmem:[%s1394 + $0x698] sm:$0xff]
        %v1662 = vld [vmem:[%s1394 + $0x6a0] sm:$0xff]
        %v1663 = vld [vmem:[%s1394 + $0x6a8] sm:$0xff]
        %v1664 = vld [vmem:[%s1394 + $0x6b0] sm:$0xff]
        %v1665 = vld [vmem:[%s1394 + $0x6b8] sm:$0xff]
        %v1666 = vld [vmem:[%s1394 + $0x6c0] sm:$0xff]
        %v1667 = vld [vmem:[%s1394 + $0x6c8] sm:$0xff]
        %v1668 = vld [vmem:[%s1394 + $0x6d0] sm:$0xff]
        %v1669 = vld [vmem:[%s1394 + $0x6d8] sm:$0xff]
        %v1670 = vld [vmem:[%s1394 + $0x6e0] sm:$0xff]
        %v1671 = vld [vmem:[%s1394 + $0x6e8] sm:$0xff]
        %v1672 = vld [vmem:[%s1394 + $0x6f0] sm:$0xff]
        %v1673 = vld [vmem:[%s1394 + $0x6f8] sm:$0xff]
        %v1674 = vld [vmem:[%s1394 + $0x700] sm:$0xff]
        %v1675 = vld [vmem:[%s1394 + $0x708] sm:$0xff]
        %v1676 = vld [vmem:[%s1394 + $0x710] sm:$0xff]
        %v1677 = vld [vmem:[%s1394 + $0x718] sm:$0xff]
        %v1678 = vld [vmem:[%s1394 + $0x720] sm:$0xff]
        %v1679 = vld [vmem:[%s1394 + $0x728] sm:$0xff]
        %v1680 = vld [vmem:[%s1394 + $0x730] sm:$0xff]
        %v1681 = vld [vmem:[%s1394 + $0x738] sm:$0xff]
        %v1682 = vld [vmem:[%s1394 + $0x740] sm:$0xff]
        %v1683 = vld [vmem:[%s1394 + $0x748] sm:$0xff]
        %v1684 = vld [vmem:[%s1394 + $0x750] sm:$0xff]
        %v1685 = vld [vmem:[%s1394 + $0x758] sm:$0xff]
        %v1686 = vld [vmem:[%s1394 + $0x760] sm:$0xff]
        %v1687 = vld [vmem:[%s1394 + $0x768] sm:$0xff]
        %v1688 = vld [vmem:[%s1394 + $0x770] sm:$0xff]
        %v1689 = vld [vmem:[%s1394 + $0x778] sm:$0xff]
        %v1690 = vld [vmem:[%s1394 + $0x780] sm:$0xff]
        %v1691 = vld [vmem:[%s1394 + $0x788] sm:$0xff]
        %v1692 = vld [vmem:[%s1394 + $0x790] sm:$0xff]
        %v1693 = vld [vmem:[%s1394 + $0x798] sm:$0xff]
        %v1694 = vld [vmem:[%s1394 + $0x7a0] sm:$0xff]
        %v1695 = vld [vmem:[%s1394 + $0x7a8] sm:$0xff]
        %v1696 = vld [vmem:[%s1394 + $0x7b0] sm:$0xff]
        %v1697 = vld [vmem:[%s1394 + $0x7b8] sm:$0xff]
        %v1698 = vld [vmem:[%s1394 + $0x7c0] sm:$0xff]
        %v1699 = vld [vmem:[%s1394 + $0x7c8] sm:$0xff]
        %v1700 = vld [vmem:[%s1394 + $0x7d0] sm:$0xff]
        %v1701 = vld [vmem:[%s1394 + $0x7d8] sm:$0xff]
        %v1702 = vld [vmem:[%s1394 + $0x7e0] sm:$0xff]
        %v1703 = vld [vmem:[%s1394 + $0x7e8] sm:$0xff]
        %v1704 = vld [vmem:[%s1394 + $0x7f0] sm:$0xff]
        %v1705 = vld [vmem:[%s1394 + $0x7f8] sm:$0xff]
        %v1706 = vld [vmem:[%s1394 + $0x800] sm:$0xff]
        %v1707 = vld [vmem:[%s1394 + $0x808] sm:$0xff]
        %v1708 = vld [vmem:[%s1394 + $0x810] sm:$0xff]
        %v1709 = vld [vmem:[%s1394 + $0x818] sm:$0xff]
        %v1710 = vld [vmem:[%s1394 + $0x820] sm:$0xff]
        %v1711 = vld [vmem:[%s1394 + $0x828] sm:$0xff]
        %v1712 = vld [vmem:[%s1394 + $0x830] sm:$0xff]
        %v1713 = vld [vmem:[%s1394 + $0x838] sm:$0xff]
        %v1714 = vld [vmem:[%s1394 + $0x840] sm:$0xff]
        %v1715 = vld [vmem:[%s1394 + $0x848] sm:$0xff]
        %v1716 = vld [vmem:[%s1394 + $0x850] sm:$0xff]
        %v1717 = vld [vmem:[%s1394 + $0x858] sm:$0xff]
        %v1718 = vld [vmem:[%s1394 + $0x860] sm:$0xff]
        %v1719 = vld [vmem:[%s1394 + $0x868] sm:$0xff]
        %v1720 = vld [vmem:[%s1394 + $0x870] sm:$0xff]
        %v1721 = vld [vmem:[%s1394 + $0x878] sm:$0xff]
        %v1722 = vld [vmem:[%s1394 + $0x880] sm:$0xff]
        %v1723 = vld [vmem:[%s1394 + $0x888] sm:$0xff]
        %v1724 = vld [vmem:[%s1394 + $0x890] sm:$0xff]
        %v1725 = vld [vmem:[%s1394 + $0x898] sm:$0xff]
        %v1726 = vld [vmem:[%s1394 + $0x8a0] sm:$0xff]
        %v1727 = vld [vmem:[%s1394 + $0x8a8] sm:$0xff]
        %v1728 = vld [vmem:[%s1394 + $0x8b0] sm:$0xff]
        %v1729 = vld [vmem:[%s1394 + $0x8b8] sm:$0xff]
        %v1730 = vld [vmem:[%s1394 + $0x8c0] sm:$0xff]
        %v1731 = vld [vmem:[%s1394 + $0x8c8] sm:$0xff]
        %v1732 = vld [vmem:[%s1394 + $0x8d0] sm:$0xff]
        %v1733 = vld [vmem:[%s1394 + $0x8d8] sm:$0xff]
        %v1734 = vld [vmem:[%s1394 + $0x8e0] sm:$0xff]
        %v1735 = vld [vmem:[%s1394 + $0x8e8] sm:$0xff]
        %v1736 = vld [vmem:[%s1394 + $0x8f0] sm:$0xff]
        %v1737 = vld [vmem:[%s1394 + $0x8f8] sm:$0xff]
        %v1738 = vld [vmem:[%s1427] sm:$0x3]
        %v1740 = vlaneseq
        %v1741 = vshrl.u32 %v1740, 7
        %v1742 = vsub.s32 0, %v1741
        %v1743 = vrot.slane %v1738, %v1742
        %v1744 = vlaneseq
        %v1745 = vshrl.u32 %v1744, 7
        %v1746 = vsub.s32 1, %v1745
        %v1747 = vrot.slane %v1738, %v1746
        %v1759 = vunpack.c.l.b16 %v1441
        %v1760 = vunpack.c.h.b16 %v1441
        %v1761 = vunpack.c.l.b16 %v1442
        %v1762 = vunpack.c.h.b16 %v1442
        %v1763 = vunpack.c.l.b16 %v1443
        %v1764 = vunpack.c.h.b16 %v1443
        %v1765 = vunpack.c.l.b16 %v1444
        %v1766 = vunpack.c.h.b16 %v1444
        %v1767 = vunpack.c.l.b16 %v1445
        %v1768 = vunpack.c.h.b16 %v1445
        %v1769 = vunpack.c.l.b16 %v1446
        %v1770 = vunpack.c.h.b16 %v1446
        %v1771 = vunpack.c.l.b16 %v1447
        %v1772 = vunpack.c.h.b16 %v1447
        %v1773 = vunpack.c.l.b16 %v1448
        %v1774 = vunpack.c.h.b16 %v1448
        %v1775 = vunpack.c.l.b16 %v1449
        %v1776 = vunpack.c.h.b16 %v1449
        %v1777 = vpack.c.b16 %v1759, %v1759
        %v1778 = vpack.c.b16 %v1760, %v1760
        %v1779 = vpack.c.b16 %v1761, %v1761
        %v1780 = vpack.c.b16 %v1762, %v1762
        %v1781 = vpack.c.b16 %v1763, %v1763
        %v1782 = vpack.c.b16 %v1764, %v1764
        %v1783 = vpack.c.b16 %v1765, %v1765
        %v1784 = vpack.c.b16 %v1766, %v1766
        %v1785 = vpack.c.b16 %v1767, %v1767
        %v1786 = vpack.c.b16 %v1768, %v1768
        %v1787 = vpack.c.b16 %v1769, %v1769
        %v1788 = vpack.c.b16 %v1770, %v1770
        %v1789 = vpack.c.b16 %v1771, %v1771
        %v1790 = vpack.c.b16 %v1772, %v1772
        %v1791 = vpack.c.b16 %v1773, %v1773
        %v1792 = vpack.c.b16 %v1774, %v1774
        %v1793 = vpack.c.b16 %v1775, %v1775
        %v1794 = vpack.c.b16 %v1776, %v1776
        %v2101 = vunpack.c.l.b16 %v1450
        %v2102 = vunpack.c.h.b16 %v1450
        %v2103 = vunpack.c.l.b16 %v1451
        %v2104 = vunpack.c.h.b16 %v1451
        %v2105 = vunpack.c.l.b16 %v1452
        %v2106 = vunpack.c.h.b16 %v1452
        %v2107 = vunpack.c.l.b16 %v1453
        %v2108 = vunpack.c.h.b16 %v1453
        %v2109 = vunpack.c.l.b16 %v1454
        %v2110 = vunpack.c.h.b16 %v1454
        %v2111 = vunpack.c.l.b16 %v1455
        %v2112 = vunpack.c.h.b16 %v1455
        %v2113 = vunpack.c.l.b16 %v1456
        %v2114 = vunpack.c.h.b16 %v1456
        %v2115 = vunpack.c.l.b16 %v1457
        %v2116 = vunpack.c.h.b16 %v1457
        %v2117 = vunpack.c.l.b16 %v1458
        %v2118 = vunpack.c.h.b16 %v1458
        %v2119 = vunpack.c.l.b16 %v1459
        %v2120 = vunpack.c.h.b16 %v1459
        %v2121 = vunpack.c.l.b16 %v1460
        %v2122 = vunpack.c.h.b16 %v1460
        %v2123 = vunpack.c.l.b16 %v1461
        %v2124 = vunpack.c.h.b16 %v1461
        %v2125 = vunpack.c.l.b16 %v1462
        %v2126 = vunpack.c.h.b16 %v1462
        %v2127 = vunpack.c.l.b16 %v1463
        %v2128 = vunpack.c.h.b16 %v1463
        %v2129 = vunpack.c.l.b16 %v1464
        %v2130 = vunpack.c.h.b16 %v1464
        %v2131 = vunpack.c.l.b16 %v1465
        %v2132 = vunpack.c.h.b16 %v1465
        %v2133 = vunpack.c.l.b16 %v1466
        %v2134 = vunpack.c.h.b16 %v1466
        %v2135 = vunpack.c.l.b16 %v1467
        %v2136 = vunpack.c.h.b16 %v1467
        %v2137 = vunpack.c.l.b16 %v1468
        %v2138 = vunpack.c.h.b16 %v1468
        %v2139 = vunpack.c.l.b16 %v1469
        %v2140 = vunpack.c.h.b16 %v1469
        %v2141 = vunpack.c.l.b16 %v1470
        %v2142 = vunpack.c.h.b16 %v1470
        %v2143 = vunpack.c.l.b16 %v1471
        %v2144 = vunpack.c.h.b16 %v1471
        %v2145 = vunpack.c.l.b16 %v1472
        %v2146 = vunpack.c.h.b16 %v1472
        %v2147 = vunpack.c.l.b16 %v1473
        %v2148 = vunpack.c.h.b16 %v1473
        %v2149 = vunpack.c.l.b16 %v1474
        %v2150 = vunpack.c.h.b16 %v1474
        %v2151 = vunpack.c.l.b16 %v1475
        %v2152 = vunpack.c.h.b16 %v1475
        %v2153 = vunpack.c.l.b16 %v1476
        %v2154 = vunpack.c.h.b16 %v1476
        %v2155 = vunpack.c.l.b16 %v1477
        %v2156 = vunpack.c.h.b16 %v1477
        %v2157 = vunpack.c.l.b16 %v1478
        %v2158 = vunpack.c.h.b16 %v1478
        %v2159 = vunpack.c.l.b16 %v1479
        %v2160 = vunpack.c.h.b16 %v1479
        %v2161 = vunpack.c.l.b16 %v1480
        %v2162 = vunpack.c.h.b16 %v1480
        %v2163 = vunpack.c.l.b16 %v1481
        %v2164 = vunpack.c.h.b16 %v1481
        %v2165 = vunpack.c.l.b16 %v1482
        %v2166 = vunpack.c.h.b16 %v1482
        %v2167 = vunpack.c.l.b16 %v1483
        %v2168 = vunpack.c.h.b16 %v1483
        %v2169 = vunpack.c.l.b16 %v1484
        %v2170 = vunpack.c.h.b16 %v1484
        %v2171 = vunpack.c.l.b16 %v1485
        %v2172 = vunpack.c.h.b16 %v1485
        %v2173 = vunpack.c.l.b16 %v1486
        %v2174 = vunpack.c.h.b16 %v1486
        %v2175 = vunpack.c.l.b16 %v1487
        %v2176 = vunpack.c.h.b16 %v1487
        %v2177 = vunpack.c.l.b16 %v1488
        %v2178 = vunpack.c.h.b16 %v1488
        %v2179 = vunpack.c.l.b16 %v1489
        %v2180 = vunpack.c.h.b16 %v1489
        %v2181 = vunpack.c.l.b16 %v1490
        %v2182 = vunpack.c.h.b16 %v1490
        %v2183 = vunpack.c.l.b16 %v1491
        %v2184 = vunpack.c.h.b16 %v1491
        %v2185 = vunpack.c.l.b16 %v1492
        %v2186 = vunpack.c.h.b16 %v1492
        %v2187 = vunpack.c.l.b16 %v1493
        %v2188 = vunpack.c.h.b16 %v1493
        %v2189 = vunpack.c.l.b16 %v1494
        %v2190 = vunpack.c.h.b16 %v1494
        %v2191 = vunpack.c.l.b16 %v1495
        %v2192 = vunpack.c.h.b16 %v1495
        %v2193 = vunpack.c.l.b16 %v1496
        %v2194 = vunpack.c.h.b16 %v1496
        %v2195 = vunpack.c.l.b16 %v1497
        %v2196 = vunpack.c.h.b16 %v1497
        %v2197 = vunpack.c.l.b16 %v1498
        %v2198 = vunpack.c.h.b16 %v1498
        %v2199 = vunpack.c.l.b16 %v1499
        %v2200 = vunpack.c.h.b16 %v1499
        %v2201 = vunpack.c.l.b16 %v1500
        %v2202 = vunpack.c.h.b16 %v1500
        %v2203 = vunpack.c.l.b16 %v1501
        %v2204 = vunpack.c.h.b16 %v1501
        %v2205 = vunpack.c.l.b16 %v1502
        %v2206 = vunpack.c.h.b16 %v1502
        %v2207 = vunpack.c.l.b16 %v1503
        %v2208 = vunpack.c.h.b16 %v1503
        %v2209 = vunpack.c.l.b16 %v1504
        %v2210 = vunpack.c.h.b16 %v1504
        %v2211 = vunpack.c.l.b16 %v1505
        %v2212 = vunpack.c.h.b16 %v1505
        %v2213 = vunpack.c.l.b16 %v1506
        %v2214 = vunpack.c.h.b16 %v1506
        %v2215 = vunpack.c.l.b16 %v1507
        %v2216 = vunpack.c.h.b16 %v1507
        %v2217 = vunpack.c.l.b16 %v1508
        %v2218 = vunpack.c.h.b16 %v1508
        %v2219 = vunpack.c.l.b16 %v1509
        %v2220 = vunpack.c.h.b16 %v1509
        %v2221 = vunpack.c.l.b16 %v1510
        %v2222 = vunpack.c.h.b16 %v1510
        %v2223 = vunpack.c.l.b16 %v1511
        %v2224 = vunpack.c.h.b16 %v1511
        %v2225 = vunpack.c.l.b16 %v1512
        %v2226 = vunpack.c.h.b16 %v1512
        %v2227 = vunpack.c.l.b16 %v1513
        %v2228 = vunpack.c.h.b16 %v1513
        %v2229 = vunpack.c.l.b16 %v1514
        %v2230 = vunpack.c.h.b16 %v1514
        %v2231 = vunpack.c.l.b16 %v1515
        %v2232 = vunpack.c.h.b16 %v1515
        %v2233 = vunpack.c.l.b16 %v1516
        %v2234 = vunpack.c.h.b16 %v1516
        %v2235 = vunpack.c.l.b16 %v1517
        %v2236 = vunpack.c.h.b16 %v1517
        %v2237 = vunpack.c.l.b16 %v1518
        %v2238 = vunpack.c.h.b16 %v1518
        %v2239 = vunpack.c.l.b16 %v1519
        %v2240 = vunpack.c.h.b16 %v1519
        %v2241 = vunpack.c.l.b16 %v1520
        %v2242 = vunpack.c.h.b16 %v1520
        %v2243 = vunpack.c.l.b16 %v1521
        %v2244 = vunpack.c.h.b16 %v1521
        %v2245 = vunpack.c.l.b16 %v1522
        %v2246 = vunpack.c.h.b16 %v1522
        %v2247 = vunpack.c.l.b16 %v1523
        %v2248 = vunpack.c.h.b16 %v1523
        %v2249 = vunpack.c.l.b16 %v1524
        %v2250 = vunpack.c.h.b16 %v1524
        %v2251 = vunpack.c.l.b16 %v1525
        %v2252 = vunpack.c.h.b16 %v1525
        %v2253 = vunpack.c.l.b16 %v1526
        %v2254 = vunpack.c.h.b16 %v1526
        %v2255 = vunpack.c.l.b16 %v1527
        %v2256 = vunpack.c.h.b16 %v1527
        %v2257 = vunpack.c.l.b16 %v1528
        %v2258 = vunpack.c.h.b16 %v1528
        %v2259 = vunpack.c.l.b16 %v1529
        %v2260 = vunpack.c.h.b16 %v1529
        %v2261 = vunpack.c.l.b16 %v1530
        %v2262 = vunpack.c.h.b16 %v1530
        %v2263 = vunpack.c.l.b16 %v1531
        %v2264 = vunpack.c.h.b16 %v1531
        %v2265 = vunpack.c.l.b16 %v1532
        %v2266 = vunpack.c.h.b16 %v1532
        %v2267 = vunpack.c.l.b16 %v1533
        %v2268 = vunpack.c.h.b16 %v1533
        %v2269 = vunpack.c.l.b16 %v1534
        %v2270 = vunpack.c.h.b16 %v1534
        %v2271 = vunpack.c.l.b16 %v1535
        %v2272 = vunpack.c.h.b16 %v1535
        %v2273 = vunpack.c.l.b16 %v1536
        %v2274 = vunpack.c.h.b16 %v1536
        %v2275 = vunpack.c.l.b16 %v1537
        %v2276 = vunpack.c.h.b16 %v1537
        %v2277 = vunpack.c.l.b16 %v1538
        %v2278 = vunpack.c.h.b16 %v1538
        %v2279 = vunpack.c.l.b16 %v1539
        %v2280 = vunpack.c.h.b16 %v1539
        %v2281 = vunpack.c.l.b16 %v1540
        %v2282 = vunpack.c.h.b16 %v1540
        %v2283 = vunpack.c.l.b16 %v1541
        %v2284 = vunpack.c.h.b16 %v1541
        %v2285 = vunpack.c.l.b16 %v1542
        %v2286 = vunpack.c.h.b16 %v1542
        %v2287 = vunpack.c.l.b16 %v1543
        %v2288 = vunpack.c.h.b16 %v1543
        %v2289 = vunpack.c.l.b16 %v1544
        %v2290 = vunpack.c.h.b16 %v1544
        %v2291 = vunpack.c.l.b16 %v1545
        %v2292 = vunpack.c.h.b16 %v1545
        %v2293 = vunpack.c.l.b16 %v1546
        %v2294 = vunpack.c.h.b16 %v1546
        %v2295 = vunpack.c.l.b16 %v1547
        %v2296 = vunpack.c.h.b16 %v1547
        %v2297 = vunpack.c.l.b16 %v1548
        %v2298 = vunpack.c.h.b16 %v1548
        %v2299 = vunpack.c.l.b16 %v1549
        %v2300 = vunpack.c.h.b16 %v1549
        %v2301 = vunpack.c.l.b16 %v1550
        %v2302 = vunpack.c.h.b16 %v1550
        %v2303 = vunpack.c.l.b16 %v1551
        %v2304 = vunpack.c.h.b16 %v1551
        %v2305 = vunpack.c.l.b16 %v1552
        %v2306 = vunpack.c.h.b16 %v1552
        %v2307 = vunpack.c.l.b16 %v1553
        %v2308 = vunpack.c.h.b16 %v1553
        %v2309 = vunpack.c.l.b16 %v1554
        %v2310 = vunpack.c.h.b16 %v1554
        %v2311 = vunpack.c.l.b16 %v1555
        %v2312 = vunpack.c.h.b16 %v1555
        %v2313 = vunpack.c.l.b16 %v1556
        %v2314 = vunpack.c.h.b16 %v1556
        %v2315 = vunpack.c.l.b16 %v1557
        %v2316 = vunpack.c.h.b16 %v1557
        %v2317 = vunpack.c.l.b16 %v1558
        %v2318 = vunpack.c.h.b16 %v1558
        %v2319 = vunpack.c.l.b16 %v1559
        %v2320 = vunpack.c.h.b16 %v1559
        %v2321 = vunpack.c.l.b16 %v1560
        %v2322 = vunpack.c.h.b16 %v1560
        %v2323 = vunpack.c.l.b16 %v1561
        %v2324 = vunpack.c.h.b16 %v1561
        %v2325 = vunpack.c.l.b16 %v1562
        %v2326 = vunpack.c.h.b16 %v1562
        %v2327 = vunpack.c.l.b16 %v1563
        %v2328 = vunpack.c.h.b16 %v1563
        %v2329 = vunpack.c.l.b16 %v1564
        %v2330 = vunpack.c.h.b16 %v1564
        %v2331 = vunpack.c.l.b16 %v1565
        %v2332 = vunpack.c.h.b16 %v1565
        %v2333 = vunpack.c.l.b16 %v1566
        %v2334 = vunpack.c.h.b16 %v1566
        %v2335 = vunpack.c.l.b16 %v1567
        %v2336 = vunpack.c.h.b16 %v1567
        %v2337 = vunpack.c.l.b16 %v1568
        %v2338 = vunpack.c.h.b16 %v1568
        %v2339 = vunpack.c.l.b16 %v1569
        %v2340 = vunpack.c.h.b16 %v1569
        %v2341 = vunpack.c.l.b16 %v1570
        %v2342 = vunpack.c.h.b16 %v1570
        %v2343 = vunpack.c.l.b16 %v1571
        %v2344 = vunpack.c.h.b16 %v1571
        %v2345 = vunpack.c.l.b16 %v1572
        %v2346 = vunpack.c.h.b16 %v1572
        %v2347 = vunpack.c.l.b16 %v1573
        %v2348 = vunpack.c.h.b16 %v1573
        %v2349 = vunpack.c.l.b16 %v1574
        %v2350 = vunpack.c.h.b16 %v1574
        %v2351 = vunpack.c.l.b16 %v1575
        %v2352 = vunpack.c.h.b16 %v1575
        %v2353 = vunpack.c.l.b16 %v1576
        %v2354 = vunpack.c.h.b16 %v1576
        %v2355 = vunpack.c.l.b16 %v1577
        %v2356 = vunpack.c.h.b16 %v1577
        %v2357 = vunpack.c.l.b16 %v1578
        %v2358 = vunpack.c.h.b16 %v1578
        %v2359 = vunpack.c.l.b16 %v1579
        %v2360 = vunpack.c.h.b16 %v1579
        %v2361 = vunpack.c.l.b16 %v1580
        %v2362 = vunpack.c.h.b16 %v1580
        %v2363 = vunpack.c.l.b16 %v1581
        %v2364 = vunpack.c.h.b16 %v1581
        %v2365 = vunpack.c.l.b16 %v1582
        %v2366 = vunpack.c.h.b16 %v1582
        %v2367 = vunpack.c.l.b16 %v1583
        %v2368 = vunpack.c.h.b16 %v1583
        %v2369 = vunpack.c.l.b16 %v1584
        %v2370 = vunpack.c.h.b16 %v1584
        %v2371 = vunpack.c.l.b16 %v1585
        %v2372 = vunpack.c.h.b16 %v1585
        %v2373 = vunpack.c.l.b16 %v1586
        %v2374 = vunpack.c.h.b16 %v1586
        %v2375 = vunpack.c.l.b16 %v1587
        %v2376 = vunpack.c.h.b16 %v1587
        %v2377 = vunpack.c.l.b16 %v1588
        %v2378 = vunpack.c.h.b16 %v1588
        %v2379 = vunpack.c.l.b16 %v1589
        %v2380 = vunpack.c.h.b16 %v1589
        %v2381 = vunpack.c.l.b16 %v1590
        %v2382 = vunpack.c.h.b16 %v1590
        %v2383 = vunpack.c.l.b16 %v1591
        %v2384 = vunpack.c.h.b16 %v1591
        %v2385 = vunpack.c.l.b16 %v1592
        %v2386 = vunpack.c.h.b16 %v1592
        %v2387 = vunpack.c.l.b16 %v1593
        %v2388 = vunpack.c.h.b16 %v1593
        %v2389 = vunpack.c.l.b16 %v1594
        %v2390 = vunpack.c.h.b16 %v1594
        %v2391 = vunpack.c.l.b16 %v1595
        %v2392 = vunpack.c.h.b16 %v1595
        %v2393 = vunpack.c.l.b16 %v1596
        %v2394 = vunpack.c.h.b16 %v1596
        %v2395 = vunpack.c.l.b16 %v1597
        %v2396 = vunpack.c.h.b16 %v1597
        %v2397 = vunpack.c.l.b16 %v1598
        %v2398 = vunpack.c.h.b16 %v1598
        %v2399 = vunpack.c.l.b16 %v1599
        %v2400 = vunpack.c.h.b16 %v1599
        %v2401 = vunpack.c.l.b16 %v1600
        %v2402 = vunpack.c.h.b16 %v1600
        %v2403 = vunpack.c.l.b16 %v1601
        %v2404 = vunpack.c.h.b16 %v1601
        %v2405 = vunpack.c.l.b16 %v1602
        %v2406 = vunpack.c.h.b16 %v1602
        %v2407 = vunpack.c.l.b16 %v1603
        %v2408 = vunpack.c.h.b16 %v1603
        %v2409 = vunpack.c.l.b16 %v1604
        %v2410 = vunpack.c.h.b16 %v1604
        %v2411 = vunpack.c.l.b16 %v1605
        %v2412 = vunpack.c.h.b16 %v1605
        %v2413 = vunpack.c.l.b16 %v1606
        %v2414 = vunpack.c.h.b16 %v1606
        %v2415 = vunpack.c.l.b16 %v1607
        %v2416 = vunpack.c.h.b16 %v1607
        %v2417 = vunpack.c.l.b16 %v1608
        %v2418 = vunpack.c.h.b16 %v1608
        %v2419 = vunpack.c.l.b16 %v1609
        %v2420 = vunpack.c.h.b16 %v1609
        %v2421 = vunpack.c.l.b16 %v1610
        %v2422 = vunpack.c.h.b16 %v1610
        %v2423 = vunpack.c.l.b16 %v1611
        %v2424 = vunpack.c.h.b16 %v1611
        %v2425 = vunpack.c.l.b16 %v1612
        %v2426 = vunpack.c.h.b16 %v1612
        %v2427 = vunpack.c.l.b16 %v1613
        %v2428 = vunpack.c.h.b16 %v1613
        %v2429 = vunpack.c.l.b16 %v1614
        %v2430 = vunpack.c.h.b16 %v1614
        %v2431 = vunpack.c.l.b16 %v1615
        %v2432 = vunpack.c.h.b16 %v1615
        %v2433 = vunpack.c.l.b16 %v1616
        %v2434 = vunpack.c.h.b16 %v1616
        %v2435 = vunpack.c.l.b16 %v1617
        %v2436 = vunpack.c.h.b16 %v1617
        %v2437 = vunpack.c.l.b16 %v1618
        %v2438 = vunpack.c.h.b16 %v1618
        %v2439 = vunpack.c.l.b16 %v1619
        %v2440 = vunpack.c.h.b16 %v1619
        %v2441 = vunpack.c.l.b16 %v1620
        %v2442 = vunpack.c.h.b16 %v1620
        %v2443 = vunpack.c.l.b16 %v1621
        %v2444 = vunpack.c.h.b16 %v1621
        %v2445 = vunpack.c.l.b16 %v1622
        %v2446 = vunpack.c.h.b16 %v1622
        %v2447 = vunpack.c.l.b16 %v1623
        %v2448 = vunpack.c.h.b16 %v1623
        %v2449 = vunpack.c.l.b16 %v1624
        %v2450 = vunpack.c.h.b16 %v1624
        %v2451 = vunpack.c.l.b16 %v1625
        %v2452 = vunpack.c.h.b16 %v1625
        %v2453 = vunpack.c.l.b16 %v1626
        %v2454 = vunpack.c.h.b16 %v1626
        %v2455 = vunpack.c.l.b16 %v1627
        %v2456 = vunpack.c.h.b16 %v1627
        %v2457 = vunpack.c.l.b16 %v1628
        %v2458 = vunpack.c.h.b16 %v1628
        %v2459 = vunpack.c.l.b16 %v1629
        %v2460 = vunpack.c.h.b16 %v1629
        %v2461 = vunpack.c.l.b16 %v1630
        %v2462 = vunpack.c.h.b16 %v1630
        %v2463 = vunpack.c.l.b16 %v1631
        %v2464 = vunpack.c.h.b16 %v1631
        %v2465 = vunpack.c.l.b16 %v1632
        %v2466 = vunpack.c.h.b16 %v1632
        %v2467 = vunpack.c.l.b16 %v1633
        %v2468 = vunpack.c.h.b16 %v1633
        %v2469 = vunpack.c.l.b16 %v1634
        %v2470 = vunpack.c.h.b16 %v1634
        %v2471 = vunpack.c.l.b16 %v1635
        %v2472 = vunpack.c.h.b16 %v1635
        %v2473 = vunpack.c.l.b16 %v1636
        %v2474 = vunpack.c.h.b16 %v1636
        %v2475 = vunpack.c.l.b16 %v1637
        %v2476 = vunpack.c.h.b16 %v1637
        %v2477 = vunpack.c.l.b16 %v1638
        %v2478 = vunpack.c.h.b16 %v1638
        %v2479 = vunpack.c.l.b16 %v1639
        %v2480 = vunpack.c.h.b16 %v1639
        %v2481 = vunpack.c.l.b16 %v1640
        %v2482 = vunpack.c.h.b16 %v1640
        %v2483 = vunpack.c.l.b16 %v1641
        %v2484 = vunpack.c.h.b16 %v1641
        %v2485 = vunpack.c.l.b16 %v1642
        %v2486 = vunpack.c.h.b16 %v1642
        %v2487 = vunpack.c.l.b16 %v1643
        %v2488 = vunpack.c.h.b16 %v1643
        %v2489 = vunpack.c.l.b16 %v1644
        %v2490 = vunpack.c.h.b16 %v1644
        %v2491 = vunpack.c.l.b16 %v1645
        %v2492 = vunpack.c.h.b16 %v1645
        %v2493 = vunpack.c.l.b16 %v1646
        %v2494 = vunpack.c.h.b16 %v1646
        %v2495 = vunpack.c.l.b16 %v1647
        %v2496 = vunpack.c.h.b16 %v1647
        %v2497 = vunpack.c.l.b16 %v1648
        %v2498 = vunpack.c.h.b16 %v1648
        %v2499 = vunpack.c.l.b16 %v1649
        %v2500 = vunpack.c.h.b16 %v1649
        %v2501 = vunpack.c.l.b16 %v1650
        %v2502 = vunpack.c.h.b16 %v1650
        %v2503 = vunpack.c.l.b16 %v1651
        %v2504 = vunpack.c.h.b16 %v1651
        %v2505 = vunpack.c.l.b16 %v1652
        %v2506 = vunpack.c.h.b16 %v1652
        %v2507 = vunpack.c.l.b16 %v1653
        %v2508 = vunpack.c.h.b16 %v1653
        %v2509 = vunpack.c.l.b16 %v1654
        %v2510 = vunpack.c.h.b16 %v1654
        %v2511 = vunpack.c.l.b16 %v1655
        %v2512 = vunpack.c.h.b16 %v1655
        %v2513 = vunpack.c.l.b16 %v1656
        %v2514 = vunpack.c.h.b16 %v1656
        %v2515 = vunpack.c.l.b16 %v1657
        %v2516 = vunpack.c.h.b16 %v1657
        %v2517 = vunpack.c.l.b16 %v1658
        %v2518 = vunpack.c.h.b16 %v1658
        %v2519 = vunpack.c.l.b16 %v1659
        %v2520 = vunpack.c.h.b16 %v1659
        %v2521 = vunpack.c.l.b16 %v1660
        %v2522 = vunpack.c.h.b16 %v1660
        %v2523 = vunpack.c.l.b16 %v1661
        %v2524 = vunpack.c.h.b16 %v1661
        %v2525 = vunpack.c.l.b16 %v1662
        %v2526 = vunpack.c.h.b16 %v1662
        %v2527 = vunpack.c.l.b16 %v1663
        %v2528 = vunpack.c.h.b16 %v1663
        %v2529 = vunpack.c.l.b16 %v1664
        %v2530 = vunpack.c.h.b16 %v1664
        %v2531 = vunpack.c.l.b16 %v1665
        %v2532 = vunpack.c.h.b16 %v1665
        %v2533 = vunpack.c.l.b16 %v1666
        %v2534 = vunpack.c.h.b16 %v1666
        %v2535 = vunpack.c.l.b16 %v1667
        %v2536 = vunpack.c.h.b16 %v1667
        %v2537 = vunpack.c.l.b16 %v1668
        %v2538 = vunpack.c.h.b16 %v1668
        %v2539 = vunpack.c.l.b16 %v1669
        %v2540 = vunpack.c.h.b16 %v1669
        %v2541 = vunpack.c.l.b16 %v1670
        %v2542 = vunpack.c.h.b16 %v1670
        %v2543 = vunpack.c.l.b16 %v1671
        %v2544 = vunpack.c.h.b16 %v1671
        %v2545 = vunpack.c.l.b16 %v1672
        %v2546 = vunpack.c.h.b16 %v1672
        %v2547 = vunpack.c.l.b16 %v1673
        %v2548 = vunpack.c.h.b16 %v1673
        %v2549 = vunpack.c.l.b16 %v1674
        %v2550 = vunpack.c.h.b16 %v1674
        %v2551 = vunpack.c.l.b16 %v1675
        %v2552 = vunpack.c.h.b16 %v1675
        %v2553 = vunpack.c.l.b16 %v1676
        %v2554 = vunpack.c.h.b16 %v1676
        %v2555 = vunpack.c.l.b16 %v1677
        %v2556 = vunpack.c.h.b16 %v1677
        %v2557 = vunpack.c.l.b16 %v1678
        %v2558 = vunpack.c.h.b16 %v1678
        %v2559 = vunpack.c.l.b16 %v1679
        %v2560 = vunpack.c.h.b16 %v1679
        %v2561 = vunpack.c.l.b16 %v1680
        %v2562 = vunpack.c.h.b16 %v1680
        %v2563 = vunpack.c.l.b16 %v1681
        %v2564 = vunpack.c.h.b16 %v1681
        %v2565 = vunpack.c.l.b16 %v1682
        %v2566 = vunpack.c.h.b16 %v1682
        %v2567 = vunpack.c.l.b16 %v1683
        %v2568 = vunpack.c.h.b16 %v1683
        %v2569 = vunpack.c.l.b16 %v1684
        %v2570 = vunpack.c.h.b16 %v1684
        %v2571 = vunpack.c.l.b16 %v1685
        %v2572 = vunpack.c.h.b16 %v1685
        %v2573 = vunpack.c.l.b16 %v1686
        %v2574 = vunpack.c.h.b16 %v1686
        %v2575 = vunpack.c.l.b16 %v1687
        %v2576 = vunpack.c.h.b16 %v1687
        %v2577 = vunpack.c.l.b16 %v1688
        %v2578 = vunpack.c.h.b16 %v1688
        %v2579 = vunpack.c.l.b16 %v1689
        %v2580 = vunpack.c.h.b16 %v1689
        %v2581 = vunpack.c.l.b16 %v1690
        %v2582 = vunpack.c.h.b16 %v1690
        %v2583 = vunpack.c.l.b16 %v1691
        %v2584 = vunpack.c.h.b16 %v1691
        %v2585 = vunpack.c.l.b16 %v1692
        %v2586 = vunpack.c.h.b16 %v1692
        %v2587 = vunpack.c.l.b16 %v1693
        %v2588 = vunpack.c.h.b16 %v1693
        %v2589 = vunpack.c.l.b16 %v1694
        %v2590 = vunpack.c.h.b16 %v1694
        %v2591 = vunpack.c.l.b16 %v1695
        %v2592 = vunpack.c.h.b16 %v1695
        %v2593 = vunpack.c.l.b16 %v1696
        %v2594 = vunpack.c.h.b16 %v1696
        %v2595 = vunpack.c.l.b16 %v1697
        %v2596 = vunpack.c.h.b16 %v1697
        %v2597 = vunpack.c.l.b16 %v1698
        %v2598 = vunpack.c.h.b16 %v1698
        %v2599 = vunpack.c.l.b16 %v1699
        %v2600 = vunpack.c.h.b16 %v1699
        %v2601 = vunpack.c.l.b16 %v1700
        %v2602 = vunpack.c.h.b16 %v1700
        %v2603 = vunpack.c.l.b16 %v1701
        %v2604 = vunpack.c.h.b16 %v1701
        %v2605 = vunpack.c.l.b16 %v1702
        %v2606 = vunpack.c.h.b16 %v1702
        %v2607 = vunpack.c.l.b16 %v1703
        %v2608 = vunpack.c.h.b16 %v1703
        %v2609 = vunpack.c.l.b16 %v1704
        %v2610 = vunpack.c.h.b16 %v1704
        %v2611 = vunpack.c.l.b16 %v1705
        %v2612 = vunpack.c.h.b16 %v1705
        %v2613 = vunpack.c.l.b16 %v1706
        %v2614 = vunpack.c.h.b16 %v1706
        %v2615 = vunpack.c.l.b16 %v1707
        %v2616 = vunpack.c.h.b16 %v1707
        %v2617 = vunpack.c.l.b16 %v1708
        %v2618 = vunpack.c.h.b16 %v1708
        %v2619 = vunpack.c.l.b16 %v1709
        %v2620 = vunpack.c.h.b16 %v1709
        %v2621 = vunpack.c.l.b16 %v1710
        %v2622 = vunpack.c.h.b16 %v1710
        %v2623 = vunpack.c.l.b16 %v1711
        %v2624 = vunpack.c.h.b16 %v1711
        %v2625 = vunpack.c.l.b16 %v1712
        %v2626 = vunpack.c.h.b16 %v1712
        %v2627 = vunpack.c.l.b16 %v1713
        %v2628 = vunpack.c.h.b16 %v1713
        %v2629 = vunpack.c.l.b16 %v1714
        %v2630 = vunpack.c.h.b16 %v1714
        %v2631 = vunpack.c.l.b16 %v1715
        %v2632 = vunpack.c.h.b16 %v1715
        %v2633 = vunpack.c.l.b16 %v1716
        %v2634 = vunpack.c.h.b16 %v1716
        %v2635 = vunpack.c.l.b16 %v1717
        %v2636 = vunpack.c.h.b16 %v1717
        %v2637 = vunpack.c.l.b16 %v1718
        %v2638 = vunpack.c.h.b16 %v1718
        %v2639 = vunpack.c.l.b16 %v1719
        %v2640 = vunpack.c.h.b16 %v1719
        %v2641 = vunpack.c.l.b16 %v1720
        %v2642 = vunpack.c.h.b16 %v1720
        %v2643 = vunpack.c.l.b16 %v1721
        %v2644 = vunpack.c.h.b16 %v1721
        %v2645 = vunpack.c.l.b16 %v1722
        %v2646 = vunpack.c.h.b16 %v1722
        %v2647 = vunpack.c.l.b16 %v1723
        %v2648 = vunpack.c.h.b16 %v1723
        %v2649 = vunpack.c.l.b16 %v1724
        %v2650 = vunpack.c.h.b16 %v1724
        %v2651 = vunpack.c.l.b16 %v1725
        %v2652 = vunpack.c.h.b16 %v1725
        %v2653 = vunpack.c.l.b16 %v1726
        %v2654 = vunpack.c.h.b16 %v1726
        %v2655 = vunpack.c.l.b16 %v1727
        %v2656 = vunpack.c.h.b16 %v1727
        %v2657 = vunpack.c.l.b16 %v1728
        %v2658 = vunpack.c.h.b16 %v1728
        %v2659 = vunpack.c.l.b16 %v1729
        %v2660 = vunpack.c.h.b16 %v1729
        %v2661 = vunpack.c.l.b16 %v1730
        %v2662 = vunpack.c.h.b16 %v1730
        %v2663 = vunpack.c.l.b16 %v1731
        %v2664 = vunpack.c.h.b16 %v1731
        %v2665 = vunpack.c.l.b16 %v1732
        %v2666 = vunpack.c.h.b16 %v1732
        %v2667 = vunpack.c.l.b16 %v1733
        %v2668 = vunpack.c.h.b16 %v1733
        %v2669 = vunpack.c.l.b16 %v1734
        %v2670 = vunpack.c.h.b16 %v1734
        %v2671 = vunpack.c.l.b16 %v1735
        %v2672 = vunpack.c.h.b16 %v1735
        %v2673 = vunpack.c.l.b16 %v1736
        %v2674 = vunpack.c.h.b16 %v1736
        %v2675 = vunpack.c.l.b16 %v1737
        %v2676 = vunpack.c.h.b16 %v1737
        %v2677 = vpack.c.b16 %v2103, %v2101
        %v2678 = vpack.c.b16 %v2104, %v2102
        %v2679 = vpack.c.b16 %v2107, %v2105
        %v2680 = vpack.c.b16 %v2108, %v2106
        %v2681 = vpack.c.b16 %v2111, %v2109
        %v2682 = vpack.c.b16 %v2112, %v2110
        %v2683 = vpack.c.b16 %v2115, %v2113
        %v2684 = vpack.c.b16 %v2116, %v2114
        %v2685 = vpack.c.b16 %v2119, %v2117
        %v2686 = vpack.c.b16 %v2120, %v2118
        %v2687 = vpack.c.b16 %v2123, %v2121
        %v2688 = vpack.c.b16 %v2124, %v2122
        %v2689 = vpack.c.b16 %v2127, %v2125
        %v2690 = vpack.c.b16 %v2128, %v2126
        %v2691 = vpack.c.b16 %v2131, %v2129
        %v2692 = vpack.c.b16 %v2132, %v2130
        %v2693 = vpack.c.b16 %v2135, %v2133
        %v2694 = vpack.c.b16 %v2136, %v2134
        %v2695 = vpack.c.b16 %v2139, %v2137
        %v2696 = vpack.c.b16 %v2140, %v2138
        %v2697 = vpack.c.b16 %v2143, %v2141
        %v2698 = vpack.c.b16 %v2144, %v2142
        %v2699 = vpack.c.b16 %v2147, %v2145
        %v2700 = vpack.c.b16 %v2148, %v2146
        %v2701 = vpack.c.b16 %v2151, %v2149
        %v2702 = vpack.c.b16 %v2152, %v2150
        %v2703 = vpack.c.b16 %v2155, %v2153
        %v2704 = vpack.c.b16 %v2156, %v2154
        %v2705 = vpack.c.b16 %v2159, %v2157
        %v2706 = vpack.c.b16 %v2160, %v2158
        %v2707 = vpack.c.b16 %v2163, %v2161
        %v2708 = vpack.c.b16 %v2164, %v2162
        %v2709 = vpack.c.b16 %v2167, %v2165
        %v2710 = vpack.c.b16 %v2168, %v2166
        %v2711 = vpack.c.b16 %v2171, %v2169
        %v2712 = vpack.c.b16 %v2172, %v2170
        %v2713 = vpack.c.b16 %v2175, %v2173
        %v2714 = vpack.c.b16 %v2176, %v2174
        %v2715 = vpack.c.b16 %v2179, %v2177
        %v2716 = vpack.c.b16 %v2180, %v2178
        %v2717 = vpack.c.b16 %v2183, %v2181
        %v2718 = vpack.c.b16 %v2184, %v2182
        %v2719 = vpack.c.b16 %v2187, %v2185
        %v2720 = vpack.c.b16 %v2188, %v2186
        %v2721 = vpack.c.b16 %v2191, %v2189
        %v2722 = vpack.c.b16 %v2192, %v2190
        %v2723 = vpack.c.b16 %v2195, %v2193
        %v2724 = vpack.c.b16 %v2196, %v2194
        %v2725 = vpack.c.b16 %v2199, %v2197
        %v2726 = vpack.c.b16 %v2200, %v2198
        %v2727 = vpack.c.b16 %v2203, %v2201
        %v2728 = vpack.c.b16 %v2204, %v2202
        %v2729 = vpack.c.b16 %v2207, %v2205
        %v2730 = vpack.c.b16 %v2208, %v2206
        %v2731 = vpack.c.b16 %v2211, %v2209
        %v2732 = vpack.c.b16 %v2212, %v2210
        %v2733 = vpack.c.b16 %v2215, %v2213
        %v2734 = vpack.c.b16 %v2216, %v2214
        %v2735 = vpack.c.b16 %v2219, %v2217
        %v2736 = vpack.c.b16 %v2220, %v2218
        %v2737 = vpack.c.b16 %v2223, %v2221
        %v2738 = vpack.c.b16 %v2224, %v2222
        %v2739 = vpack.c.b16 %v2227, %v2225
        %v2740 = vpack.c.b16 %v2228, %v2226
        %v2741 = vpack.c.b16 %v2231, %v2229
        %v2742 = vpack.c.b16 %v2232, %v2230
        %v2743 = vpack.c.b16 %v2235, %v2233
        %v2744 = vpack.c.b16 %v2236, %v2234
        %v2745 = vpack.c.b16 %v2239, %v2237
        %v2746 = vpack.c.b16 %v2240, %v2238
        %v2747 = vpack.c.b16 %v2243, %v2241
        %v2748 = vpack.c.b16 %v2244, %v2242
        %v2749 = vpack.c.b16 %v2247, %v2245
        %v2750 = vpack.c.b16 %v2248, %v2246
        %v2751 = vpack.c.b16 %v2251, %v2249
        %v2752 = vpack.c.b16 %v2252, %v2250
        %v2753 = vpack.c.b16 %v2255, %v2253
        %v2754 = vpack.c.b16 %v2256, %v2254
        %v2755 = vpack.c.b16 %v2259, %v2257
        %v2756 = vpack.c.b16 %v2260, %v2258
        %v2757 = vpack.c.b16 %v2263, %v2261
        %v2758 = vpack.c.b16 %v2264, %v2262
        %v2759 = vpack.c.b16 %v2267, %v2265
        %v2760 = vpack.c.b16 %v2268, %v2266
        %v2761 = vpack.c.b16 %v2271, %v2269
        %v2762 = vpack.c.b16 %v2272, %v2270
        %v2763 = vpack.c.b16 %v2275, %v2273
        %v2764 = vpack.c.b16 %v2276, %v2274
        %v2765 = vpack.c.b16 %v2279, %v2277
        %v2766 = vpack.c.b16 %v2280, %v2278
        %v2767 = vpack.c.b16 %v2283, %v2281
        %v2768 = vpack.c.b16 %v2284, %v2282
        %v2769 = vpack.c.b16 %v2287, %v2285
        %v2770 = vpack.c.b16 %v2288, %v2286
        %v2771 = vpack.c.b16 %v2291, %v2289
        %v2772 = vpack.c.b16 %v2292, %v2290
        %v2773 = vpack.c.b16 %v2295, %v2293
        %v2774 = vpack.c.b16 %v2296, %v2294
        %v2775 = vpack.c.b16 %v2299, %v2297
        %v2776 = vpack.c.b16 %v2300, %v2298
        %v2777 = vpack.c.b16 %v2303, %v2301
        %v2778 = vpack.c.b16 %v2304, %v2302
        %v2779 = vpack.c.b16 %v2307, %v2305
        %v2780 = vpack.c.b16 %v2308, %v2306
        %v2781 = vpack.c.b16 %v2311, %v2309
        %v2782 = vpack.c.b16 %v2312, %v2310
        %v2783 = vpack.c.b16 %v2315, %v2313
        %v2784 = vpack.c.b16 %v2316, %v2314
        %v2785 = vpack.c.b16 %v2319, %v2317
        %v2786 = vpack.c.b16 %v2320, %v2318
        %v2787 = vpack.c.b16 %v2323, %v2321
        %v2788 = vpack.c.b16 %v2324, %v2322
        %v2789 = vpack.c.b16 %v2327, %v2325
        %v2790 = vpack.c.b16 %v2328, %v2326
        %v2791 = vpack.c.b16 %v2331, %v2329
        %v2792 = vpack.c.b16 %v2332, %v2330
        %v2793 = vpack.c.b16 %v2335, %v2333
        %v2794 = vpack.c.b16 %v2336, %v2334
        %v2795 = vpack.c.b16 %v2339, %v2337
        %v2796 = vpack.c.b16 %v2340, %v2338
        %v2797 = vpack.c.b16 %v2343, %v2341
        %v2798 = vpack.c.b16 %v2344, %v2342
        %v2799 = vpack.c.b16 %v2347, %v2345
        %v2800 = vpack.c.b16 %v2348, %v2346
        %v2801 = vpack.c.b16 %v2351, %v2349
        %v2802 = vpack.c.b16 %v2352, %v2350
        %v2803 = vpack.c.b16 %v2355, %v2353
        %v2804 = vpack.c.b16 %v2356, %v2354
        %v2805 = vpack.c.b16 %v2359, %v2357
        %v2806 = vpack.c.b16 %v2360, %v2358
        %v2807 = vpack.c.b16 %v2363, %v2361
        %v2808 = vpack.c.b16 %v2364, %v2362
        %v2809 = vpack.c.b16 %v2367, %v2365
        %v2810 = vpack.c.b16 %v2368, %v2366
        %v2811 = vpack.c.b16 %v2371, %v2369
        %v2812 = vpack.c.b16 %v2372, %v2370
        %v2813 = vpack.c.b16 %v2375, %v2373
        %v2814 = vpack.c.b16 %v2376, %v2374
        %v2815 = vpack.c.b16 %v2379, %v2377
        %v2816 = vpack.c.b16 %v2380, %v2378
        %v2817 = vpack.c.b16 %v2383, %v2381
        %v2818 = vpack.c.b16 %v2384, %v2382
        %v2819 = vpack.c.b16 %v2387, %v2385
        %v2820 = vpack.c.b16 %v2388, %v2386
        %v2821 = vpack.c.b16 %v2391, %v2389
        %v2822 = vpack.c.b16 %v2392, %v2390
        %v2823 = vpack.c.b16 %v2395, %v2393
        %v2824 = vpack.c.b16 %v2396, %v2394
        %v2825 = vpack.c.b16 %v2399, %v2397
        %v2826 = vpack.c.b16 %v2400, %v2398
        %v2827 = vpack.c.b16 %v2403, %v2401
        %v2828 = vpack.c.b16 %v2404, %v2402
        %v2829 = vpack.c.b16 %v2407, %v2405
        %v2830 = vpack.c.b16 %v2408, %v2406
        %v2831 = vpack.c.b16 %v2411, %v2409
        %v2832 = vpack.c.b16 %v2412, %v2410
        %v2833 = vpack.c.b16 %v2415, %v2413
        %v2834 = vpack.c.b16 %v2416, %v2414
        %v2835 = vpack.c.b16 %v2419, %v2417
        %v2836 = vpack.c.b16 %v2420, %v2418
        %v2837 = vpack.c.b16 %v2423, %v2421
        %v2838 = vpack.c.b16 %v2424, %v2422
        %v2839 = vpack.c.b16 %v2427, %v2425
        %v2840 = vpack.c.b16 %v2428, %v2426
        %v2841 = vpack.c.b16 %v2431, %v2429
        %v2842 = vpack.c.b16 %v2432, %v2430
        %v2843 = vpack.c.b16 %v2435, %v2433
        %v2844 = vpack.c.b16 %v2436, %v2434
        %v2845 = vpack.c.b16 %v2439, %v2437
        %v2846 = vpack.c.b16 %v2440, %v2438
        %v2847 = vpack.c.b16 %v2443, %v2441
        %v2848 = vpack.c.b16 %v2444, %v2442
        %v2849 = vpack.c.b16 %v2447, %v2445
        %v2850 = vpack.c.b16 %v2448, %v2446
        %v2851 = vpack.c.b16 %v2451, %v2449
        %v2852 = vpack.c.b16 %v2452, %v2450
        %v2853 = vpack.c.b16 %v2455, %v2453
        %v2854 = vpack.c.b16 %v2456, %v2454
        %v2855 = vpack.c.b16 %v2459, %v2457
        %v2856 = vpack.c.b16 %v2460, %v2458
        %v2857 = vpack.c.b16 %v2463, %v2461
        %v2858 = vpack.c.b16 %v2464, %v2462
        %v2859 = vpack.c.b16 %v2467, %v2465
        %v2860 = vpack.c.b16 %v2468, %v2466
        %v2861 = vpack.c.b16 %v2471, %v2469
        %v2862 = vpack.c.b16 %v2472, %v2470
        %v2863 = vpack.c.b16 %v2475, %v2473
        %v2864 = vpack.c.b16 %v2476, %v2474
        %v2865 = vpack.c.b16 %v2479, %v2477
        %v2866 = vpack.c.b16 %v2480, %v2478
        %v2867 = vpack.c.b16 %v2483, %v2481
        %v2868 = vpack.c.b16 %v2484, %v2482
        %v2869 = vpack.c.b16 %v2487, %v2485
        %v2870 = vpack.c.b16 %v2488, %v2486
        %v2871 = vpack.c.b16 %v2491, %v2489
        %v2872 = vpack.c.b16 %v2492, %v2490
        %v2873 = vpack.c.b16 %v2495, %v2493
        %v2874 = vpack.c.b16 %v2496, %v2494
        %v2875 = vpack.c.b16 %v2499, %v2497
        %v2876 = vpack.c.b16 %v2500, %v2498
        %v2877 = vpack.c.b16 %v2503, %v2501
        %v2878 = vpack.c.b16 %v2504, %v2502
        %v2879 = vpack.c.b16 %v2507, %v2505
        %v2880 = vpack.c.b16 %v2508, %v2506
        %v2881 = vpack.c.b16 %v2511, %v2509
        %v2882 = vpack.c.b16 %v2512, %v2510
        %v2883 = vpack.c.b16 %v2515, %v2513
        %v2884 = vpack.c.b16 %v2516, %v2514
        %v2885 = vpack.c.b16 %v2519, %v2517
        %v2886 = vpack.c.b16 %v2520, %v2518
        %v2887 = vpack.c.b16 %v2523, %v2521
        %v2888 = vpack.c.b16 %v2524, %v2522
        %v2889 = vpack.c.b16 %v2527, %v2525
        %v2890 = vpack.c.b16 %v2528, %v2526
        %v2891 = vpack.c.b16 %v2531, %v2529
        %v2892 = vpack.c.b16 %v2532, %v2530
        %v2893 = vpack.c.b16 %v2535, %v2533
        %v2894 = vpack.c.b16 %v2536, %v2534
        %v2895 = vpack.c.b16 %v2539, %v2537
        %v2896 = vpack.c.b16 %v2540, %v2538
        %v2897 = vpack.c.b16 %v2543, %v2541
        %v2898 = vpack.c.b16 %v2544, %v2542
        %v2899 = vpack.c.b16 %v2547, %v2545
        %v2900 = vpack.c.b16 %v2548, %v2546
        %v2901 = vpack.c.b16 %v2551, %v2549
        %v2902 = vpack.c.b16 %v2552, %v2550
        %v2903 = vpack.c.b16 %v2555, %v2553
        %v2904 = vpack.c.b16 %v2556, %v2554
        %v2905 = vpack.c.b16 %v2559, %v2557
        %v2906 = vpack.c.b16 %v2560, %v2558
        %v2907 = vpack.c.b16 %v2563, %v2561
        %v2908 = vpack.c.b16 %v2564, %v2562
        %v2909 = vpack.c.b16 %v2567, %v2565
        %v2910 = vpack.c.b16 %v2568, %v2566
        %v2911 = vpack.c.b16 %v2571, %v2569
        %v2912 = vpack.c.b16 %v2572, %v2570
        %v2913 = vpack.c.b16 %v2575, %v2573
        %v2914 = vpack.c.b16 %v2576, %v2574
        %v2915 = vpack.c.b16 %v2579, %v2577
        %v2916 = vpack.c.b16 %v2580, %v2578
        %v2917 = vpack.c.b16 %v2583, %v2581
        %v2918 = vpack.c.b16 %v2584, %v2582
        %v2919 = vpack.c.b16 %v2587, %v2585
        %v2920 = vpack.c.b16 %v2588, %v2586
        %v2921 = vpack.c.b16 %v2591, %v2589
        %v2922 = vpack.c.b16 %v2592, %v2590
        %v2923 = vpack.c.b16 %v2595, %v2593
        %v2924 = vpack.c.b16 %v2596, %v2594
        %v2925 = vpack.c.b16 %v2599, %v2597
        %v2926 = vpack.c.b16 %v2600, %v2598
        %v2927 = vpack.c.b16 %v2603, %v2601
        %v2928 = vpack.c.b16 %v2604, %v2602
        %v2929 = vpack.c.b16 %v2607, %v2605
        %v2930 = vpack.c.b16 %v2608, %v2606
        %v2931 = vpack.c.b16 %v2611, %v2609
        %v2932 = vpack.c.b16 %v2612, %v2610
        %v2933 = vpack.c.b16 %v2615, %v2613
        %v2934 = vpack.c.b16 %v2616, %v2614
        %v2935 = vpack.c.b16 %v2619, %v2617
        %v2936 = vpack.c.b16 %v2620, %v2618
        %v2937 = vpack.c.b16 %v2623, %v2621
        %v2938 = vpack.c.b16 %v2624, %v2622
        %v2939 = vpack.c.b16 %v2627, %v2625
        %v2940 = vpack.c.b16 %v2628, %v2626
        %v2941 = vpack.c.b16 %v2631, %v2629
        %v2942 = vpack.c.b16 %v2632, %v2630
        %v2943 = vpack.c.b16 %v2635, %v2633
        %v2944 = vpack.c.b16 %v2636, %v2634
        %v2945 = vpack.c.b16 %v2639, %v2637
        %v2946 = vpack.c.b16 %v2640, %v2638
        %v2947 = vpack.c.b16 %v2643, %v2641
        %v2948 = vpack.c.b16 %v2644, %v2642
        %v2949 = vpack.c.b16 %v2647, %v2645
        %v2950 = vpack.c.b16 %v2648, %v2646
        %v2951 = vpack.c.b16 %v2651, %v2649
        %v2952 = vpack.c.b16 %v2652, %v2650
        %v2953 = vpack.c.b16 %v2655, %v2653
        %v2954 = vpack.c.b16 %v2656, %v2654
        %v2955 = vpack.c.b16 %v2659, %v2657
        %v2956 = vpack.c.b16 %v2660, %v2658
        %v2957 = vpack.c.b16 %v2663, %v2661
        %v2958 = vpack.c.b16 %v2664, %v2662
        %v2959 = vpack.c.b16 %v2667, %v2665
        %v2960 = vpack.c.b16 %v2668, %v2666
        %v2961 = vpack.c.b16 %v2671, %v2669
        %v2962 = vpack.c.b16 %v2672, %v2670
        %v2963 = vpack.c.b16 %v2675, %v2673
        %v2964 = vpack.c.b16 %v2676, %v2674
        %3253 = vmatprep.subr.bf16.mxu0 %v2678
        %3254 = vmatpush1.bf16.msra.mxu0 %v2677
        %3255 = vmatprep.subr.bf16.mxu0 %v2680
        %3256 = vmatpush1.bf16.msra.mxu0 %v2679
        %3257 = vmatprep.subr.bf16.mxu0 %v2682
        %3258 = vmatpush1.bf16.msra.mxu0 %v2681
        %3259 = vmatprep.subr.bf16.mxu0 %v2684
        %3260 = vmatpush1.bf16.msra.mxu0 %v2683
        %3261 = vmatprep.subr.bf16.mxu0 %v2686
        %3262 = vmatpush1.bf16.msra.mxu0 %v2685
        %3263 = vmatprep.subr.bf16.mxu0 %v2688
        %3264 = vmatpush1.bf16.msra.mxu0 %v2687
        %3265 = vmatprep.subr.bf16.mxu0 %v2690
        %3266 = vmatpush1.bf16.msra.mxu0 %v2689
        %3267 = vmatprep.subr.bf16.mxu0 %v2692
        %3268 = vmatpush1.bf16.msra.mxu0 %v2691
        %3269 = vmatprep.subr.bf16.mxu0 %v2694
        %3270 = vmatpush1.bf16.msra.mxu0 %v2693
        %3271 = vmatprep.subr.bf16.mxu0 %v2696
        %3272 = vmatpush1.bf16.msra.mxu0 %v2695
        %3273 = vmatprep.subr.bf16.mxu0 %v2698
        %3274 = vmatpush1.bf16.msra.mxu0 %v2697
        %3275 = vmatprep.subr.bf16.mxu0 %v2700
        %3276 = vmatpush1.bf16.msra.mxu0 %v2699
        %3277 = vmatprep.subr.bf16.mxu0 %v2702
        %3278 = vmatpush1.bf16.msra.mxu0 %v2701
        %3279 = vmatprep.subr.bf16.mxu0 %v2704
        %3280 = vmatpush1.bf16.msra.mxu0 %v2703
        %3281 = vmatprep.subr.bf16.mxu0 %v2706
        %3282 = vmatpush1.bf16.msra.mxu0 %v2705
        %3283 = vmatprep.subr.bf16.mxu0 %v2708
        %3284 = vmatpush1.bf16.msra.mxu0 %v2707
        %3285 = vmatprep.mubr.bf16.mxu0 %v1778
        %3286 = vmatmul.mubr.bf16.gmra.mrb[0].mxu0 %v1777
        %v3287 = vpop.f32.mrb[0].mxu0
        %v3288 = vadd.f32 %v1743, %v3287
        %v3289 = vpop.f32.mrb[0].mxu0
        %v3290 = vadd.f32 %v1747, %v3289
        %v3291 = vpop.f32.mrb[0].mxu0
        %v3292 = vpop.f32.mrb[0].mxu0
        %3293 = vdwg.mxu0
        %3294 = vmatprep.subr.bf16.mxu0 %v2710
        %3295 = vmatpush1.bf16.msra.mxu0 %v2709
        %3296 = vmatprep.subr.bf16.mxu0 %v2712
        %3297 = vmatpush1.bf16.msra.mxu0 %v2711
        %3298 = vmatprep.subr.bf16.mxu0 %v2714
        %3299 = vmatpush1.bf16.msra.mxu0 %v2713
        %3300 = vmatprep.subr.bf16.mxu0 %v2716
        %3301 = vmatpush1.bf16.msra.mxu0 %v2715
        %3302 = vmatprep.subr.bf16.mxu0 %v2718
        %3303 = vmatpush1.bf16.msra.mxu0 %v2717
        %3304 = vmatprep.subr.bf16.mxu0 %v2720
        %3305 = vmatpush1.bf16.msra.mxu0 %v2719
        %3306 = vmatprep.subr.bf16.mxu0 %v2722
        %3307 = vmatpush1.bf16.msra.mxu0 %v2721
        %3308 = vmatprep.subr.bf16.mxu0 %v2724
        %3309 = vmatpush1.bf16.msra.mxu0 %v2723
        %3310 = vmatprep.subr.bf16.mxu0 %v2726
        %3311 = vmatpush1.bf16.msra.mxu0 %v2725
        %3312 = vmatprep.subr.bf16.mxu0 %v2728
        %3313 = vmatpush1.bf16.msra.mxu0 %v2727
        %3314 = vmatprep.subr.bf16.mxu0 %v2730
        %3315 = vmatpush1.bf16.msra.mxu0 %v2729
        %3316 = vmatprep.subr.bf16.mxu0 %v2732
        %3317 = vmatpush1.bf16.msra.mxu0 %v2731
        %3318 = vmatprep.subr.bf16.mxu0 %v2734
        %3319 = vmatpush1.bf16.msra.mxu0 %v2733
        %3320 = vmatprep.subr.bf16.mxu0 %v2736
        %3321 = vmatpush1.bf16.msra.mxu0 %v2735
        %3322 = vmatprep.subr.bf16.mxu0 %v2738
        %3323 = vmatpush1.bf16.msra.mxu0 %v2737
        %3324 = vmatprep.subr.bf16.mxu0 %v2740
        %3325 = vmatpush1.bf16.msra.mxu0 %v2739
        %3326 = vmatprep.mubr.bf16.mxu0 %v1780
        %3327 = vmatmul.mubr.bf16.gmra.mrb[0].mxu0 %v1779
        %v3328 = vpop.f32.mrb[0].mxu0
        %v3329 = vadd.f32 %v3288, %v3328
        %v3330 = vpop.f32.mrb[0].mxu0
        %v3331 = vadd.f32 %v3290, %v3330
        %v3332 = vpop.f32.mrb[0].mxu0
        %v3333 = vpop.f32.mrb[0].mxu0
        %3334 = vdwg.mxu0
        %3335 = vmatprep.subr.bf16.mxu0 %v2742
        %3336 = vmatpush1.bf16.msra.mxu0 %v2741
        %3337 = vmatprep.subr.bf16.mxu0 %v2744
        %3338 = vmatpush1.bf16.msra.mxu0 %v2743
        %3339 = vmatprep.subr.bf16.mxu0 %v2746
        %3340 = vmatpush1.bf16.msra.mxu0 %v2745
        %3341 = vmatprep.subr.bf16.mxu0 %v2748
        %3342 = vmatpush1.bf16.msra.mxu0 %v2747
        %3343 = vmatprep.subr.bf16.mxu0 %v2750
        %3344 = vmatpush1.bf16.msra.mxu0 %v2749
        %3345 = vmatprep.subr.bf16.mxu0 %v2752
        %3346 = vmatpush1.bf16.msra.mxu0 %v2751
        %3347 = vmatprep.subr.bf16.mxu0 %v2754
        %3348 = vmatpush1.bf16.msra.mxu0 %v2753
        %3349 = vmatprep.subr.bf16.mxu0 %v2756
        %3350 = vmatpush1.bf16.msra.mxu0 %v2755
        %3351 = vmatprep.subr.bf16.mxu0 %v2758
        %3352 = vmatpush1.bf16.msra.mxu0 %v2757
        %3353 = vmatprep.subr.bf16.mxu0 %v2760
        %3354 = vmatpush1.bf16.msra.mxu0 %v2759
        %3355 = vmatprep.subr.bf16.mxu0 %v2762
        %3356 = vmatpush1.bf16.msra.mxu0 %v2761
        %3357 = vmatprep.subr.bf16.mxu0 %v2764
        %3358 = vmatpush1.bf16.msra.mxu0 %v2763
        %3359 = vmatprep.subr.bf16.mxu0 %v2766
        %3360 = vmatpush1.bf16.msra.mxu0 %v2765
        %3361 = vmatprep.subr.bf16.mxu0 %v2768
        %3362 = vmatpush1.bf16.msra.mxu0 %v2767
        %3363 = vmatprep.subr.bf16.mxu0 %v2770
        %3364 = vmatpush1.bf16.msra.mxu0 %v2769
        %3365 = vmatprep.subr.bf16.mxu0 %v2772
        %3366 = vmatpush1.bf16.msra.mxu0 %v2771
        %3367 = vmatprep.mubr.bf16.mxu0 %v1782
        %3368 = vmatmul.mubr.bf16.gmra.mrb[0].mxu0 %v1781
        %v3369 = vpop.f32.mrb[0].mxu0
        %v3370 = vadd.f32 %v3329, %v3369
        %v3371 = vpop.f32.mrb[0].mxu0
        %v3372 = vadd.f32 %v3331, %v3371
        %v3373 = vpop.f32.mrb[0].mxu0
        %v3374 = vpop.f32.mrb[0].mxu0
        %3375 = vdwg.mxu0
        %3376 = vmatprep.subr.bf16.mxu0 %v2774
        %3377 = vmatpush1.bf16.msra.mxu0 %v2773
        %3378 = vmatprep.subr.bf16.mxu0 %v2776
        %3379 = vmatpush1.bf16.msra.mxu0 %v2775
        %3380 = vmatprep.subr.bf16.mxu0 %v2778
        %3381 = vmatpush1.bf16.msra.mxu0 %v2777
        %3382 = vmatprep.subr.bf16.mxu0 %v2780
        %3383 = vmatpush1.bf16.msra.mxu0 %v2779
        %3384 = vmatprep.subr.bf16.mxu0 %v2782
        %3385 = vmatpush1.bf16.msra.mxu0 %v2781
        %3386 = vmatprep.subr.bf16.mxu0 %v2784
        %3387 = vmatpush1.bf16.msra.mxu0 %v2783
        %3388 = vmatprep.subr.bf16.mxu0 %v2786
        %3389 = vmatpush1.bf16.msra.mxu0 %v2785
        %3390 = vmatprep.subr.bf16.mxu0 %v2788
        %3391 = vmatpush1.bf16.msra.mxu0 %v2787
        %3392 = vmatprep.subr.bf16.mxu0 %v2790
        %3393 = vmatpush1.bf16.msra.mxu0 %v2789
        %3394 = vmatprep.subr.bf16.mxu0 %v2792
        %3395 = vmatpush1.bf16.msra.mxu0 %v2791
        %3396 = vmatprep.subr.bf16.mxu0 %v2794
        %3397 = vmatpush1.bf16.msra.mxu0 %v2793
        %3398 = vmatprep.subr.bf16.mxu0 %v2796
        %3399 = vmatpush1.bf16.msra.mxu0 %v2795
        %3400 = vmatprep.subr.bf16.mxu0 %v2798
        %3401 = vmatpush1.bf16.msra.mxu0 %v2797
        %3402 = vmatprep.subr.bf16.mxu0 %v2800
        %3403 = vmatpush1.bf16.msra.mxu0 %v2799
        %3404 = vmatprep.subr.bf16.mxu0 %v2802
        %3405 = vmatpush1.bf16.msra.mxu0 %v2801
        %3406 = vmatprep.subr.bf16.mxu0 %v2804
        %3407 = vmatpush1.bf16.msra.mxu0 %v2803
        %3408 = vmatprep.mubr.bf16.mxu0 %v1784
        %3409 = vmatmul.mubr.bf16.gmra.mrb[0].mxu0 %v1783
        %v3410 = vpop.f32.mrb[0].mxu0
        %v3411 = vadd.f32 %v3370, %v3410
        %v3412 = vpop.f32.mrb[0].mxu0
        %v3413 = vadd.f32 %v3372, %v3412
        %v3414 = vpop.f32.mrb[0].mxu0
        %v3415 = vpop.f32.mrb[0].mxu0
        %3416 = vdwg.mxu0
        %3417 = vmatprep.subr.bf16.mxu0 %v2806
        %3418 = vmatpush1.bf16.msra.mxu0 %v2805
        %3419 = vmatprep.subr.bf16.mxu0 %v2808
        %3420 = vmatpush1.bf16.msra.mxu0 %v2807
        %3421 = vmatprep.subr.bf16.mxu0 %v2810
        %3422 = vmatpush1.bf16.msra.mxu0 %v2809
        %3423 = vmatprep.subr.bf16.mxu0 %v2812
        %3424 = vmatpush1.bf16.msra.mxu0 %v2811
        %3425 = vmatprep.subr.bf16.mxu0 %v2814
        %3426 = vmatpush1.bf16.msra.mxu0 %v2813
        %3427 = vmatprep.subr.bf16.mxu0 %v2816
        %3428 = vmatpush1.bf16.msra.mxu0 %v2815
        %3429 = vmatprep.subr.bf16.mxu0 %v2818
        %3430 = vmatpush1.bf16.msra.mxu0 %v2817
        %3431 = vmatprep.subr.bf16.mxu0 %v2820
        %3432 = vmatpush1.bf16.msra.mxu0 %v2819
        %3433 = vmatprep.subr.bf16.mxu0 %v2822
        %3434 = vmatpush1.bf16.msra.mxu0 %v2821
        %3435 = vmatprep.subr.bf16.mxu0 %v2824
        %3436 = vmatpush1.bf16.msra.mxu0 %v2823
        %3437 = vmatprep.subr.bf16.mxu0 %v2826
        %3438 = vmatpush1.bf16.msra.mxu0 %v2825
        %3439 = vmatprep.subr.bf16.mxu0 %v2828
        %3440 = vmatpush1.bf16.msra.mxu0 %v2827
        %3441 = vmatprep.subr.bf16.mxu0 %v2830
        %3442 = vmatpush1.bf16.msra.mxu0 %v2829
        %3443 = vmatprep.subr.bf16.mxu0 %v2832
        %3444 = vmatpush1.bf16.msra.mxu0 %v2831
        %3445 = vmatprep.subr.bf16.mxu0 %v2834
        %3446 = vmatpush1.bf16.msra.mxu0 %v2833
        %3447 = vmatprep.subr.bf16.mxu0 %v2836
        %3448 = vmatpush1.bf16.msra.mxu0 %v2835
        %3449 = vmatprep.mubr.bf16.mxu0 %v1786
        %3450 = vmatmul.mubr.bf16.gmra.mrb[0].mxu0 %v1785
        %v3451 = vpop.f32.mrb[0].mxu0
        %v3452 = vadd.f32 %v3411, %v3451
        %v3453 = vpop.f32.mrb[0].mxu0
        %v3454 = vadd.f32 %v3413, %v3453
        %v3455 = vpop.f32.mrb[0].mxu0
        %v3456 = vpop.f32.mrb[0].mxu0
        %3457 = vdwg.mxu0
        %3458 = vmatprep.subr.bf16.mxu0 %v2838
        %3459 = vmatpush1.bf16.msra.mxu0 %v2837
        %3460 = vmatprep.subr.bf16.mxu0 %v2840
        %3461 = vmatpush1.bf16.msra.mxu0 %v2839
        %3462 = vmatprep.subr.bf16.mxu0 %v2842
        %3463 = vmatpush1.bf16.msra.mxu0 %v2841
        %3464 = vmatprep.subr.bf16.mxu0 %v2844
        %3465 = vmatpush1.bf16.msra.mxu0 %v2843
        %3466 = vmatprep.subr.bf16.mxu0 %v2846
        %3467 = vmatpush1.bf16.msra.mxu0 %v2845
        %3468 = vmatprep.subr.bf16.mxu0 %v2848
        %3469 = vmatpush1.bf16.msra.mxu0 %v2847
        %3470 = vmatprep.subr.bf16.mxu0 %v2850
        %3471 = vmatpush1.bf16.msra.mxu0 %v2849
        %3472 = vmatprep.subr.bf16.mxu0 %v2852
        %3473 = vmatpush1.bf16.msra.mxu0 %v2851
        %3474 = vmatprep.subr.bf16.mxu0 %v2854
        %3475 = vmatpush1.bf16.msra.mxu0 %v2853
        %3476 = vmatprep.subr.bf16.mxu0 %v2856
        %3477 = vmatpush1.bf16.msra.mxu0 %v2855
        %3478 = vmatprep.subr.bf16.mxu0 %v2858
        %3479 = vmatpush1.bf16.msra.mxu0 %v2857
        %3480 = vmatprep.subr.bf16.mxu0 %v2860
        %3481 = vmatpush1.bf16.msra.mxu0 %v2859
        %3482 = vmatprep.subr.bf16.mxu0 %v2862
        %3483 = vmatpush1.bf16.msra.mxu0 %v2861
        %3484 = vmatprep.subr.bf16.mxu0 %v2864
        %3485 = vmatpush1.bf16.msra.mxu0 %v2863
        %3486 = vmatprep.subr.bf16.mxu0 %v2866
        %3487 = vmatpush1.bf16.msra.mxu0 %v2865
        %3488 = vmatprep.subr.bf16.mxu0 %v2868
        %3489 = vmatpush1.bf16.msra.mxu0 %v2867
        %3490 = vmatprep.mubr.bf16.mxu0 %v1788
        %3491 = vmatmul.mubr.bf16.gmra.mrb[0].mxu0 %v1787
        %v3492 = vpop.f32.mrb[0].mxu0
        %v3493 = vadd.f32 %v3452, %v3492
        %v3494 = vpop.f32.mrb[0].mxu0
        %v3495 = vadd.f32 %v3454, %v3494
        %v3496 = vpop.f32.mrb[0].mxu0
        %v3497 = vpop.f32.mrb[0].mxu0
        %3498 = vdwg.mxu0
        %3499 = vmatprep.subr.bf16.mxu0 %v2870
        %3500 = vmatpush1.bf16.msra.mxu0 %v2869
        %3501 = vmatprep.subr.bf16.mxu0 %v2872
        %3502 = vmatpush1.bf16.msra.mxu0 %v2871
        %3503 = vmatprep.subr.bf16.mxu0 %v2874
        %3504 = vmatpush1.bf16.msra.mxu0 %v2873
        %3505 = vmatprep.subr.bf16.mxu0 %v2876
        %3506 = vmatpush1.bf16.msra.mxu0 %v2875
        %3507 = vmatprep.subr.bf16.mxu0 %v2878
        %3508 = vmatpush1.bf16.msra.mxu0 %v2877
        %3509 = vmatprep.subr.bf16.mxu0 %v2880
        %3510 = vmatpush1.bf16.msra.mxu0 %v2879
        %3511 = vmatprep.subr.bf16.mxu0 %v2882
        %3512 = vmatpush1.bf16.msra.mxu0 %v2881
        %3513 = vmatprep.subr.bf16.mxu0 %v2884
        %3514 = vmatpush1.bf16.msra.mxu0 %v2883
        %3515 = vmatprep.subr.bf16.mxu0 %v2886
        %3516 = vmatpush1.bf16.msra.mxu0 %v2885
        %3517 = vmatprep.subr.bf16.mxu0 %v2888
        %3518 = vmatpush1.bf16.msra.mxu0 %v2887
        %3519 = vmatprep.subr.bf16.mxu0 %v2890
        %3520 = vmatpush1.bf16.msra.mxu0 %v2889
        %3521 = vmatprep.subr.bf16.mxu0 %v2892
        %3522 = vmatpush1.bf16.msra.mxu0 %v2891
        %3523 = vmatprep.subr.bf16.mxu0 %v2894
        %3524 = vmatpush1.bf16.msra.mxu0 %v2893
        %3525 = vmatprep.subr.bf16.mxu0 %v2896
        %3526 = vmatpush1.bf16.msra.mxu0 %v2895
        %3527 = vmatprep.subr.bf16.mxu0 %v2898
        %3528 = vmatpush1.bf16.msra.mxu0 %v2897
        %3529 = vmatprep.subr.bf16.mxu0 %v2900
        %3530 = vmatpush1.bf16.msra.mxu0 %v2899
        %3531 = vmatprep.mubr.bf16.mxu0 %v1790
        %3532 = vmatmul.mubr.bf16.gmra.mrb[0].mxu0 %v1789
        %v3533 = vpop.f32.mrb[0].mxu0
        %v3534 = vadd.f32 %v3493, %v3533
        %v3535 = vpop.f32.mrb[0].mxu0
        %v3536 = vadd.f32 %v3495, %v3535
        %v3537 = vpop.f32.mrb[0].mxu0
        %v3538 = vpop.f32.mrb[0].mxu0
        %3539 = vdwg.mxu0
        %3540 = vmatprep.subr.bf16.mxu0 %v2902
        %3541 = vmatpush1.bf16.msra.mxu0 %v2901
        %3542 = vmatprep.subr.bf16.mxu0 %v2904
        %3543 = vmatpush1.bf16.msra.mxu0 %v2903
        %3544 = vmatprep.subr.bf16.mxu0 %v2906
        %3545 = vmatpush1.bf16.msra.mxu0 %v2905
        %3546 = vmatprep.subr.bf16.mxu0 %v2908
        %3547 = vmatpush1.bf16.msra.mxu0 %v2907
        %3548 = vmatprep.subr.bf16.mxu0 %v2910
        %3549 = vmatpush1.bf16.msra.mxu0 %v2909
        %3550 = vmatprep.subr.bf16.mxu0 %v2912
        %3551 = vmatpush1.bf16.msra.mxu0 %v2911
        %3552 = vmatprep.subr.bf16.mxu0 %v2914
        %3553 = vmatpush1.bf16.msra.mxu0 %v2913
        %3554 = vmatprep.subr.bf16.mxu0 %v2916
        %3555 = vmatpush1.bf16.msra.mxu0 %v2915
        %3556 = vmatprep.subr.bf16.mxu0 %v2918
        %3557 = vmatpush1.bf16.msra.mxu0 %v2917
        %3558 = vmatprep.subr.bf16.mxu0 %v2920
        %3559 = vmatpush1.bf16.msra.mxu0 %v2919
        %3560 = vmatprep.subr.bf16.mxu0 %v2922
        %3561 = vmatpush1.bf16.msra.mxu0 %v2921
        %3562 = vmatprep.subr.bf16.mxu0 %v2924
        %3563 = vmatpush1.bf16.msra.mxu0 %v2923
        %3564 = vmatprep.subr.bf16.mxu0 %v2926
        %3565 = vmatpush1.bf16.msra.mxu0 %v2925
        %3566 = vmatprep.subr.bf16.mxu0 %v2928
        %3567 = vmatpush1.bf16.msra.mxu0 %v2927
        %3568 = vmatprep.subr.bf16.mxu0 %v2930
        %3569 = vmatpush1.bf16.msra.mxu0 %v2929
        %3570 = vmatprep.subr.bf16.mxu0 %v2932
        %3571 = vmatpush1.bf16.msra.mxu0 %v2931
        %3572 = vmatprep.mubr.bf16.mxu0 %v1792
        %3573 = vmatmul.mubr.bf16.gmra.mrb[0].mxu0 %v1791
        %v3574 = vpop.f32.mrb[0].mxu0
        %v3575 = vadd.f32 %v3534, %v3574
        %v3576 = vpop.f32.mrb[0].mxu0
        %v3577 = vadd.f32 %v3536, %v3576
        %v3578 = vpop.f32.mrb[0].mxu0
        %v3579 = vpop.f32.mrb[0].mxu0
        %3580 = vdwg.mxu0
        %3581 = vmatprep.subr.bf16.mxu0 %v2934
        %3582 = vmatpush1.bf16.msra.mxu0 %v2933
        %3583 = vmatprep.subr.bf16.mxu0 %v2936
        %3584 = vmatpush1.bf16.msra.mxu0 %v2935
        %3585 = vmatprep.subr.bf16.mxu0 %v2938
        %3586 = vmatpush1.bf16.msra.mxu0 %v2937
        %3587 = vmatprep.subr.bf16.mxu0 %v2940
        %3588 = vmatpush1.bf16.msra.mxu0 %v2939
        %3589 = vmatprep.subr.bf16.mxu0 %v2942
        %3590 = vmatpush1.bf16.msra.mxu0 %v2941
        %3591 = vmatprep.subr.bf16.mxu0 %v2944
        %3592 = vmatpush1.bf16.msra.mxu0 %v2943
        %3593 = vmatprep.subr.bf16.mxu0 %v2946
        %3594 = vmatpush1.bf16.msra.mxu0 %v2945
        %3595 = vmatprep.subr.bf16.mxu0 %v2948
        %3596 = vmatpush1.bf16.msra.mxu0 %v2947
        %3597 = vmatprep.subr.bf16.mxu0 %v2950
        %3598 = vmatpush1.bf16.msra.mxu0 %v2949
        %3599 = vmatprep.subr.bf16.mxu0 %v2952
        %3600 = vmatpush1.bf16.msra.mxu0 %v2951
        %3601 = vmatprep.subr.bf16.mxu0 %v2954
        %3602 = vmatpush1.bf16.msra.mxu0 %v2953
        %3603 = vmatprep.subr.bf16.mxu0 %v2956
        %3604 = vmatpush1.bf16.msra.mxu0 %v2955
        %3605 = vmatprep.subr.bf16.mxu0 %v2958
        %3606 = vmatpush1.bf16.msra.mxu0 %v2957
        %3607 = vmatprep.subr.bf16.mxu0 %v2960
        %3608 = vmatpush1.bf16.msra.mxu0 %v2959
        %3609 = vmatprep.subr.bf16.mxu0 %v2962
        %3610 = vmatpush1.bf16.msra.mxu0 %v2961
        %3611 = vmatprep.subr.bf16.mxu0 %v2964
        %3612 = vmatpush1.bf16.msra.mxu0 %v2963
        %3613 = vmatprep.mubr.bf16.mxu0 %v1794
        %3614 = vmatmul.mubr.bf16.gmra.mrb[0].mxu0 %v1793
        %v3615 = vpop.f32.mrb[0].mxu0
        %v3616 = vadd.f32 %v3575, %v3615
        %v3617 = vpop.f32.mrb[0].mxu0
        %v3618 = vadd.f32 %v3577, %v3617
        %v3619 = vpop.f32.mrb[0].mxu0
        %v3620 = vpop.f32.mrb[0].mxu0
        %3621 = vdwg.mxu0
        %v3622 = vmax.f32 %v3616, 0.0
        %v3623 = vmax.f32 %v3618, 0.0
        %v3624 = vld [vmem:[#allocation2] sm:$0xff]
        %v3625 = vpack.c.bf16 %v3622, %v3622
        %v3626 = vpack.c.bf16 %v3623, %v3623
        %v3627 = vld [vmem:[%s1433] sm:$0xf]
        %v3628 = vld [vmem:[%s1433 + $0x4] sm:$0xf]
        %v3629 = vld [vmem:[%s1433 + $0x8] sm:$0xf]
        %v3630 = vld [vmem:[%s1433 + $0xc] sm:$0xf]
        %v3631 = vld [vmem:[%s1433 + $0x10] sm:$0xf]
        %v3632 = vld [vmem:[%s1433 + $0x14] sm:$0xf]
        %v3633 = vld [vmem:[%s1433 + $0x18] sm:$0xf]
        %v3634 = vld [vmem:[%s1433 + $0x1c] sm:$0xf]
        %v3635 = vld [vmem:[%s1433 + $0x20] sm:$0xf]
        %v3636 = vld [vmem:[%s1433 + $0x24] sm:$0xf]
        %v3637 = vld [vmem:[%s1433 + $0x28] sm:$0xf]
        %v3638 = vld [vmem:[%s1433 + $0x2c] sm:$0xf]
        %v3639 = vld [vmem:[%s1433 + $0x30] sm:$0xf]
        %v3640 = vld [vmem:[%s1433 + $0x34] sm:$0xf]
        %v3641 = vld [vmem:[%s1433 + $0x38] sm:$0xf]
        %v3642 = vld [vmem:[%s1433 + $0x3c] sm:$0xf]
        %v3643 = vld [vmem:[%s1433 + $0x40] sm:$0xf]
        %v3644 = vld [vmem:[%s1433 + $0x44] sm:$0xf]
        %v3645 = vld [vmem:[%s1433 + $0x48] sm:$0xf]
        %v3646 = vld [vmem:[%s1433 + $0x4c] sm:$0xf]
        %v3647 = vld [vmem:[%s1433 + $0x50] sm:$0xf]
        %v3648 = vld [vmem:[%s1433 + $0x54] sm:$0xf]
        %v3649 = vld [vmem:[%s1433 + $0x58] sm:$0xf]
        %v3650 = vld [vmem:[%s1433 + $0x5c] sm:$0xf]
        %v3651 = vld [vmem:[%s1433 + $0x60] sm:$0xf]
        %v3652 = vld [vmem:[%s1433 + $0x64] sm:$0xf]
        %v3653 = vld [vmem:[%s1433 + $0x68] sm:$0xf]
        %v3654 = vld [vmem:[%s1433 + $0x6c] sm:$0xf]
        %v3655 = vld [vmem:[%s1433 + $0x70] sm:$0xf]
        %v3656 = vld [vmem:[%s1433 + $0x74] sm:$0xf]
        %v3657 = vld [vmem:[%s1433 + $0x78] sm:$0xf]
        %v3658 = vld [vmem:[%s1433 + $0x7c] sm:$0xf]
        %v3691 = vunpack.c.l.b16 %v3627
        %v3692 = vunpack.c.l.b16 %v3628
        %v3693 = vunpack.c.l.b16 %v3629
        %v3694 = vunpack.c.l.b16 %v3630
        %v3695 = vunpack.c.l.b16 %v3631
        %v3696 = vunpack.c.l.b16 %v3632
        %v3697 = vunpack.c.l.b16 %v3633
        %v3698 = vunpack.c.l.b16 %v3634
        %v3699 = vunpack.c.l.b16 %v3635
        %v3700 = vunpack.c.l.b16 %v3636
        %v3701 = vunpack.c.l.b16 %v3637
        %v3702 = vunpack.c.l.b16 %v3638
        %v3703 = vunpack.c.l.b16 %v3639
        %v3704 = vunpack.c.l.b16 %v3640
        %v3705 = vunpack.c.l.b16 %v3641
        %v3706 = vunpack.c.l.b16 %v3642
        %v3707 = vunpack.c.l.b16 %v3643
        %v3708 = vunpack.c.l.b16 %v3644
        %v3709 = vunpack.c.l.b16 %v3645
        %v3710 = vunpack.c.l.b16 %v3646
        %v3711 = vunpack.c.l.b16 %v3647
        %v3712 = vunpack.c.l.b16 %v3648
        %v3713 = vunpack.c.l.b16 %v3649
        %v3714 = vunpack.c.l.b16 %v3650
        %v3715 = vunpack.c.l.b16 %v3651
        %v3716 = vunpack.c.l.b16 %v3652
        %v3717 = vunpack.c.l.b16 %v3653
        %v3718 = vunpack.c.l.b16 %v3654
        %v3719 = vunpack.c.l.b16 %v3655
        %v3720 = vunpack.c.l.b16 %v3656
        %v3721 = vunpack.c.l.b16 %v3657
        %v3722 = vunpack.c.l.b16 %v3658
        %v3723 = vpack.c.b16 %v3692, %v3691
        %v3724 = vpack.c.b16 %v3694, %v3693
        %v3725 = vpack.c.b16 %v3696, %v3695
        %v3726 = vpack.c.b16 %v3698, %v3697
        %v3727 = vpack.c.b16 %v3700, %v3699
        %v3728 = vpack.c.b16 %v3702, %v3701
        %v3729 = vpack.c.b16 %v3704, %v3703
        %v3730 = vpack.c.b16 %v3706, %v3705
        %v3731 = vpack.c.b16 %v3708, %v3707
        %v3732 = vpack.c.b16 %v3710, %v3709
        %v3733 = vpack.c.b16 %v3712, %v3711
        %v3734 = vpack.c.b16 %v3714, %v3713
        %v3735 = vpack.c.b16 %v3716, %v3715
        %v3736 = vpack.c.b16 %v3718, %v3717
        %v3737 = vpack.c.b16 %v3720, %v3719
        %v3738 = vpack.c.b16 %v3722, %v3721
        %3755 = vmatprep.subr.bf16.mxu0 0
        %3756 = vmatpush1.bf16.msra.mxu0 %v3723
        %3757 = vmatprep.subr.bf16.mxu0 0
        %3758 = vmatpush1.bf16.msra.mxu0 %v3724
        %3759 = vmatprep.subr.bf16.mxu0 0
        %3760 = vmatpush1.bf16.msra.mxu0 %v3725
        %3761 = vmatprep.subr.bf16.mxu0 0
        %3762 = vmatpush1.bf16.msra.mxu0 %v3726
        %3763 = vmatprep.subr.bf16.mxu0 0
        %3764 = vmatpush1.bf16.msra.mxu0 %v3727
        %3765 = vmatprep.subr.bf16.mxu0 0
        %3766 = vmatpush1.bf16.msra.mxu0 %v3728
        %3767 = vmatprep.subr.bf16.mxu0 0
        %3768 = vmatpush1.bf16.msra.mxu0 %v3729
        %3769 = vmatprep.subr.bf16.mxu0 0
        %3770 = vmatpush1.bf16.msra.mxu0 %v3730
        %3771 = vmatprep.subr.bf16.mxu0 0
        %3772 = vmatpush1.bf16.msra.mxu0 %v3731
        %3773 = vmatprep.subr.bf16.mxu0 0
        %3774 = vmatpush1.bf16.msra.mxu0 %v3732
        %3775 = vmatprep.subr.bf16.mxu0 0
        %3776 = vmatpush1.bf16.msra.mxu0 %v3733
        %3777 = vmatprep.subr.bf16.mxu0 0
        %3778 = vmatpush1.bf16.msra.mxu0 %v3734
        %3779 = vmatprep.subr.bf16.mxu0 0
        %3780 = vmatpush1.bf16.msra.mxu0 %v3735
        %3781 = vmatprep.subr.bf16.mxu0 0
        %3782 = vmatpush1.bf16.msra.mxu0 %v3736
        %3783 = vmatprep.subr.bf16.mxu0 0
        %3784 = vmatpush1.bf16.msra.mxu0 %v3737
        %3785 = vmatprep.subr.bf16.mxu0 0
        %3786 = vmatpush1.bf16.msra.mxu0 %v3738
        %3787 = vmatprep.mubr.bf16.mxu0 %v3626
        %3788 = vmatmul.mubr.bf16.gmra.mrb[0].mxu0 %v3625
        %v3789 = vpop.f32.mrb[0].mxu0
        %v3790 = vadd.f32 0.0, %v3789
        %v3791 = vpop.f32.mrb[0].mxu0
        %v3792 = vpop.f32.mrb[0].mxu0
        %v3793 = vpop.f32.mrb[0].mxu0
        %3794 = vdwg.mxu0
        %v3795 = vadd.f32 %v3624, %v3790
        %3796 = vst [vmem:[#allocation2] sm:$0xff] %v3795
        %p3797 = scmp.eq.s32.totalorder %s16, 1
        // Predicated region
        $region83: #{temp_embed_forward.9} parent=73 // pred_check
          %p3798 = pneg %p3797
        $region84: #{temp_embed_forward.9} parent=73 // pred_check_branch
          %3800 = sbr.rel (%p3798) target = $region86
        $region85: #{temp_embed_forward.9} parent=73 // pred_region
          %v3801 = vld [vmem:[#allocation2] sm:$0xff]
          %v3802 = vld [vmem:[%s4] sm:$0x1]
          %v3804 = vlaneseq
          %v3805 = vshrl.u32 %v3804, 7
          %v3806 = vsub.s32 0, %v3805
          %v3807 = vrot.slane %v3802, %v3806
          %v3809 = vadd.f32 %v3801, %v3807
          %v3810 = vsub.f32 0.0, %v3809
          %v3811 = vmul.f32 %v3810, 1.442695
          %v3812 = vpow.pop %v3811
          %v3813 = vadd.f32 %v3812, 1.0
          %v3814 = vrcp.pop %v3813
          %3815 = vst [vmem:[%s5] sm:$0xff] %v3814
        $region86: #{temp_embed_forward.9} parent=73 // pred_fallthru
          _
        // Predicated region
        $region87: #{temp_embed_forward.9} parent=73 // pred_check
          %p3816 = pneg %p149
        $region88: #{temp_embed_forward.9} parent=73 // pred_check_branch
          %3818 = sbr.rel (%p3816) target = $region90
        $region89: #{temp_embed_forward.9} parent=73 // pred_region
          _
        $region90: #{temp_embed_forward.9} parent=73 // pred_fallthru
          _
        // Predicated region
        $region91: #{temp_embed_forward.9} parent=73 // pred_check
          %p3819 = pneg %p149
        $region92: #{temp_embed_forward.9} parent=73 // pred_check_branch
          %3821 = sbr.rel (%p3819) target = $region94
        $region93: #{temp_embed_forward.9} parent=73 // pred_region
          _
        $region94: #{temp_embed_forward.9} parent=73 // pred_fallthru
          _
      $region74: #{temp_embed_forward.9} parent=5 // pred_fallthru
        _
      %p3822 = scmp.le.s32.totalorder 2, %s11
      // Predicated region
      $region95: #{temp_embed_forward.9} parent=5 // pred_check
        %p3823 = pneg %p3822
      $region96: #{temp_embed_forward.9} parent=5 // pred_check_branch
        %3825 = sbr.rel (%p3823) target = $region98
      $region97: #{temp_embed_forward.9} parent=5 // pred_region
        %s3826 = ssub.s32 %s11, 2
      $region98: #{temp_embed_forward.9} parent=5 // pred_fallthru
        _
    $region6: #{temp_embed_forward.9} parent=1 // loop_footer
      %s15 = sadd.s32 1, %s11
    $region7: #{temp_embed_forward.9} parent=1 // loop_footer_branch
      %10 = sbr.rel target = $region3
    $region8: #{temp_embed_forward.9} parent=1 // loop_exit
      _

</llo_original>
